<compile_context>
chip_gen: v7x
topology: tpu7x:2x2x1
jax: 0.10.0
libtpu: 0.0.40
codegen_flags: <defaults>
</compile_context>

<pallas_src>
import jax
import jax.numpy as jnp
from jax.experimental import pallas as pl
from jax.experimental.pallas import tpu as pltpu

# ---- model hyper-parameters (small, consistent with the module) ------------
LATENT = 32            # opt.latentdim
CHANNELS = 4           # opt.channels
IMG = 16               # opt.imageSize
DEPTH = 128            # self.depth
BN_EPS = 0.8           # nn.BatchNorm1d(output, 0.8) -> eps = 0.8
LRELU_SLOPE = 0.2
IMG_FLAT = CHANNELS * IMG * IMG          # 1024
GROUP = 8                                 # BN micro-batch per grid step
IN_PAD = 128                              # latent+1 = 33, padded to 128 lanes


def _generator_kernel(x_ref,
                      w1, b1, g1, be1,
                      w2, b2, g2, be2,
                      w3, b3, g3, be3,
                      w4, b4, g4, be4,
                      w5, b5,
                      out_ref):
    """One micro-batch (GROUP rows) of the generator MLP.

    Weights are bf16 (resident in VMEM across grid steps); all elementwise
    math (BN stats, rsqrt, LeakyReLU, tanh) is f32.
    """

    def lin_bn_lrelu(x_f32, w_ref, b_ref, g_ref, be_ref):
        # Linear: bf16 x bf16 -> f32 accumulation on the MXU.
        y = jnp.dot(x_f32.astype(jnp.bfloat16), w_ref[...],
                    preferred_element_type=jnp.float32) + b_ref[...]
        # BatchNorm1d (training-mode batch stats over the GROUP rows,
        # biased variance, eps=0.8), in f32.
        mean = jnp.mean(y, axis=0, keepdims=True)
        ctr = y - mean
        var = jnp.mean(ctr * ctr, axis=0, keepdims=True)
        y = ctr * jax.lax.rsqrt(var + BN_EPS) * g_ref[...] + be_ref[...]
        # LeakyReLU(0.2)
        return jnp.where(y > 0, y, LRELU_SLOPE * y)

    x = x_ref[...].astype(jnp.float32)
    h = lin_bn_lrelu(x, w1, b1, g1, be1)     # 128 (33 real) -> 128
    h = lin_bn_lrelu(h, w2, b2, g2, be2)     # 128 -> 256
    h = lin_bn_lrelu(h, w3, b3, g3, be3)     # 256 -> 512
    h = lin_bn_lrelu(h, w4, b4, g4, be4)     # 512 -> 1024
    out = jnp.dot(h.astype(jnp.bfloat16), w5[...],
                  preferred_element_type=jnp.float32) + b5[...]
    out_ref[...] = jnp.tanh(out)             # 1024 -> C*H*W, Tanh


def _init_linear(key, fan_in, fan_out):
    """Deterministic PyTorch-default-style init: U(-1/sqrt(fan_in), +1/sqrt(fan_in))."""
    kw, kb = jax.random.split(key)
    bound = 1.0 / jnp.sqrt(float(fan_in))
    w = jax.random.uniform(kw, (fan_in, fan_out), jnp.float32, -bound, bound)
    b = jax.random.uniform(kb, (1, fan_out), jnp.float32, -bound, bound)
    return w, b


def make_params(key):
    dims = [LATENT + 1, DEPTH, DEPTH * 2, DEPTH * 4, DEPTH * 8, IMG_FLAT]
    keys = jax.random.split(key, 5)
    params = []
    for i in range(4):                       # 4 Linear+BN+LeakyReLU blocks
        w, b = _init_linear(keys[i], dims[i], dims[i + 1])
        if i == 0:
            # Zero-pad the contraction dim 33 -> 128 (matches the zero-padded
            # input columns), giving a lane-aligned MXU tile for layer 1.
            w = jnp.pad(w, ((0, IN_PAD - dims[0]), (0, 0)))
        gamma = jnp.ones((1, dims[i + 1]), jnp.float32)
        beta = jnp.zeros((1, dims[i + 1]), jnp.float32)
        # Weight matrices in bf16 (DMA-bound kernel); small vectors stay f32.
        params += [w.astype(jnp.bfloat16), b, gamma, beta]
    w5, b5 = _init_linear(keys[4], dims[4], dims[5])     # final Linear
    params += [w5.astype(jnp.bfloat16), b5]
    return params
    # TODO(synk): optional fp8 (v7x) / int8 (v6e) quantization of w4/w5 with
    # per-column scales would cut weight DMA another ~2x; kept bf16 here for
    # portable accuracy across v5e/v6e/v7x.


def generator_forward(noise, labels, params):
    """noise: (B, LATENT) f32, labels: (B,) -> image (B, C, H, W).

    B must be a multiple of GROUP (=8).  Each group of 8 rows is an
    independent micro-batch: BN statistics are computed per group, exactly
    like running the reference module once per 8-row batch.
    """
    # gen_input = cat((labels.view(-1,1), noise), -1)   (glue, not the hot path)
    gen_input = jnp.concatenate(
        [labels.reshape(-1, 1).astype(jnp.float32), noise.astype(jnp.float32)],
        axis=-1)
    B = gen_input.shape[0]
    assert B % GROUP == 0, "batch must be a multiple of the BN micro-batch (8)"
    n_groups = B // GROUP

    # Zero-pad feature dim 33 -> 128 (w1 rows 33..127 are zero, so result is
    # unchanged).
    gen_input = jnp.pad(gen_input, ((0, 0), (0, IN_PAD - gen_input.shape[1])))

    # Constant index_map -> weight blocks stay resident in VMEM across the
    # whole grid (no per-group re-DMA of the ~3.4 MB of bf16 weights).
    def const_spec(arr):
        return pl.BlockSpec(arr.shape, lambda g: (0, 0))

    in_specs = [pl.BlockSpec((GROUP, IN_PAD), lambda g: (g, 0))]
    in_specs += [const_spec(p) for p in params]

    flat = pl.pallas_call(
        _generator_kernel,
        out_shape=jax.ShapeDtypeStruct((B, IMG_FLAT), jnp.float32),
        grid=(n_groups,),
        in_specs=in_specs,
        out_specs=pl.BlockSpec((GROUP, IMG_FLAT), lambda g: (g, 0)),
        compiler_params=pltpu.CompilerParams(
            dimension_semantics=("parallel",),      # v7x: split groups over 2 TCs
            vmem_limit_bytes=32 << 20),             # right-sized for v7x's 64 MiB
    )(gen_input, *params)

    # img.view(B, *img_shape)  -> NCHW
    return flat.reshape(B, CHANNELS, IMG, IMG)


if __name__ == "__main__":
    key = jax.random.PRNGKey(0)
    k_par, k_noise, k_lab = jax.random.split(key, 3)

    B = 16  # two micro-batches of 8 -> exercises the batch-group grid
    params = make_params(k_par)
    noise = jax.random.normal(k_noise, (B, LATENT), jnp.float32)
    labels = jax.random.randint(k_lab, (B,), 0, 10).astype(jnp.float32)

    img = generator_forward(noise, labels, params)
    jax.block_until_ready(img)

    assert img.shape == (B, CHANNELS, IMG, IMG)
    assert bool(jnp.all(jnp.isfinite(img)))
    assert bool(jnp.all(jnp.abs(img) <= 1.0 + 1e-6))  # tanh range
    print("KERNEL_OK")
</pallas_src>

<mosaic_0001>
module attributes {stable_mosaic.version = 11 : i64} {
  func.func @_generator_kernel(%arg0: i32, %arg1: memref<8x128xf32, #tpu.memory_space<vmem>>, %arg2: memref<128x128xbf16, #tpu.memory_space<vmem>>, %arg3: memref<1x128xf32, #tpu.memory_space<vmem>>, %arg4: memref<1x128xf32, #tpu.memory_space<vmem>>, %arg5: memref<1x128xf32, #tpu.memory_space<vmem>>, %arg6: memref<128x256xbf16, #tpu.memory_space<vmem>>, %arg7: memref<1x256xf32, #tpu.memory_space<vmem>>, %arg8: memref<1x256xf32, #tpu.memory_space<vmem>>, %arg9: memref<1x256xf32, #tpu.memory_space<vmem>>, %arg10: memref<256x512xbf16, #tpu.memory_space<vmem>>, %arg11: memref<1x512xf32, #tpu.memory_space<vmem>>, %arg12: memref<1x512xf32, #tpu.memory_space<vmem>>, %arg13: memref<1x512xf32, #tpu.memory_space<vmem>>, %arg14: memref<512x1024xbf16, #tpu.memory_space<vmem>>, %arg15: memref<1x1024xf32, #tpu.memory_space<vmem>>, %arg16: memref<1x1024xf32, #tpu.memory_space<vmem>>, %arg17: memref<1x1024xf32, #tpu.memory_space<vmem>>, %arg18: memref<1024x1024xbf16, #tpu.memory_space<vmem>>, %arg19: memref<1x1024xf32, #tpu.memory_space<vmem>>, %arg20: memref<8x1024xf32, #tpu.memory_space<vmem>>) attributes {dimension_semantics = [#tpu.dimension_semantics<parallel>], iteration_bounds = array<i64: 2>, scalar_prefetch = 0 : i64, scratch_operands = 0 : i64, tpu.core_type = #tpu.core_type<tc>, window_params = [{transform_indices = @transform_0, window_bounds = array<i64: 8, 128>}, {pipeline_mode = #tpu.pipeline_mode<synchronous>, transform_indices = @transform_1, window_bounds = array<i64: 128, 128>}, {pipeline_mode = #tpu.pipeline_mode<synchronous>, transform_indices = @transform_2, window_bounds = array<i64: 1, 128>}, {pipeline_mode = #tpu.pipeline_mode<synchronous>, transform_indices = @transform_3, window_bounds = array<i64: 1, 128>}, {pipeline_mode = #tpu.pipeline_mode<synchronous>, transform_indices = @transform_4, window_bounds = array<i64: 1, 128>}, {pipeline_mode = #tpu.pipeline_mode<synchronous>, transform_indices = @transform_5, window_bounds = array<i64: 128, 256>}, {pipeline_mode = #tpu.pipeline_mode<synchronous>, transform_indices = @transform_6, window_bounds = array<i64: 1, 256>}, {pipeline_mode = #tpu.pipeline_mode<synchronous>, transform_indices = @transform_7, window_bounds = array<i64: 1, 256>}, {pipeline_mode = #tpu.pipeline_mode<synchronous>, transform_indices = @transform_8, window_bounds = array<i64: 1, 256>}, {pipeline_mode = #tpu.pipeline_mode<synchronous>, transform_indices = @transform_9, window_bounds = array<i64: 256, 512>}, {pipeline_mode = #tpu.pipeline_mode<synchronous>, transform_indices = @transform_10, window_bounds = array<i64: 1, 512>}, {pipeline_mode = #tpu.pipeline_mode<synchronous>, transform_indices = @transform_11, window_bounds = array<i64: 1, 512>}, {pipeline_mode = #tpu.pipeline_mode<synchronous>, transform_indices = @transform_12, window_bounds = array<i64: 1, 512>}, {pipeline_mode = #tpu.pipeline_mode<synchronous>, transform_indices = @transform_13, window_bounds = array<i64: 512, 1024>}, {pipeline_mode = #tpu.pipeline_mode<synchronous>, transform_indices = @transform_14, window_bounds = array<i64: 1, 1024>}, {pipeline_mode = #tpu.pipeline_mode<synchronous>, transform_indices = @transform_15, window_bounds = array<i64: 1, 1024>}, {pipeline_mode = #tpu.pipeline_mode<synchronous>, transform_indices = @transform_16, window_bounds = array<i64: 1, 1024>}, {pipeline_mode = #tpu.pipeline_mode<synchronous>, transform_indices = @transform_17, window_bounds = array<i64: 1024, 1024>}, {pipeline_mode = #tpu.pipeline_mode<synchronous>, transform_indices = @transform_18, window_bounds = array<i64: 1, 1024>}, {transform_indices = @transform_19, window_bounds = array<i64: 8, 1024>}]} {
    %c0 = arith.constant 0 : index
    %c0_0 = arith.constant 0 : index
    %0 = vector.load %arg1[%c0, %c0_0] : memref<8x128xf32, #tpu.memory_space<vmem>>, vector<8x128xf32>
    %1 = arith.truncf %0 : vector<8x128xf32> to vector<8x128xbf16>
    %c0_1 = arith.constant 0 : index
    %c0_2 = arith.constant 0 : index
    %2 = vector.load %arg2[%c0_1, %c0_2] : memref<128x128xbf16, #tpu.memory_space<vmem>>, vector<128x128xbf16>
    %cst = arith.constant dense<0.000000e+00> : vector<8x128xf32>
    %3 = tpu.matmul %1, %2, %cst {dimension_numbers = #tpu.dot_dimension_numbers<[1], [0], [0], [1], [0, 0, 1, 1], [], []>} : vector<8x128xbf16>, vector<128x128xbf16>, vector<8x128xf32> -> vector<8x128xf32>
    %c0_3 = arith.constant 0 : index
    %c0_4 = arith.constant 0 : index
    %4 = vector.load %arg3[%c0_3, %c0_4] : memref<1x128xf32, #tpu.memory_space<vmem>>, vector<1x128xf32>
    %5 = vector.broadcast %4 : vector<1x128xf32> to vector<8x128xf32>
    %6 = arith.addf %3, %5 : vector<8x128xf32>
    %cst_5 = arith.constant dense<0.000000e+00> : vector<128xf32>
    %7 = vector.multi_reduction <add>, %6, %cst_5 [0] : vector<8x128xf32> to vector<128xf32>
    %8 = vector.shape_cast %7 : vector<128xf32> to vector<1x128xf32>
    %cst_6 = arith.constant 8.000000e+00 : f32
    %9 = vector.broadcast %cst_6 : f32 to vector<1x128xf32>
    %10 = arith.divf %8, %9 : vector<1x128xf32>
    %11 = vector.broadcast %10 : vector<1x128xf32> to vector<8x128xf32>
    %12 = arith.subf %6, %11 : vector<8x128xf32>
    %13 = arith.mulf %12, %12 : vector<8x128xf32>
    %cst_7 = arith.constant dense<0.000000e+00> : vector<128xf32>
    %14 = vector.multi_reduction <add>, %13, %cst_7 [0] : vector<8x128xf32> to vector<128xf32>
    %15 = vector.shape_cast %14 : vector<128xf32> to vector<1x128xf32>
    %cst_8 = arith.constant 8.000000e+00 : f32
    %16 = vector.broadcast %cst_8 : f32 to vector<1x128xf32>
    %17 = arith.divf %15, %16 : vector<1x128xf32>
    %cst_9 = arith.constant 8.000000e-01 : f32
    %18 = vector.broadcast %cst_9 : f32 to vector<1x128xf32>
    %19 = arith.addf %17, %18 : vector<1x128xf32>
    %20 = math.rsqrt %19 : vector<1x128xf32>
    %21 = vector.broadcast %20 : vector<1x128xf32> to vector<8x128xf32>
    %22 = arith.mulf %12, %21 : vector<8x128xf32>
    %c0_10 = arith.constant 0 : index
    %c0_11 = arith.constant 0 : index
    %23 = vector.load %arg4[%c0_10, %c0_11] : memref<1x128xf32, #tpu.memory_space<vmem>>, vector<1x128xf32>
    %24 = vector.broadcast %23 : vector<1x128xf32> to vector<8x128xf32>
    %25 = arith.mulf %22, %24 : vector<8x128xf32>
    %c0_12 = arith.constant 0 : index
    %c0_13 = arith.constant 0 : index
    %26 = vector.load %arg5[%c0_12, %c0_13] : memref<1x128xf32, #tpu.memory_space<vmem>>, vector<1x128xf32>
    %27 = vector.broadcast %26 : vector<1x128xf32> to vector<8x128xf32>
    %28 = arith.addf %25, %27 : vector<8x128xf32>
    %cst_14 = arith.constant 0.000000e+00 : f32
    %29 = vector.broadcast %cst_14 : f32 to vector<8x128xf32>
    %30 = arith.cmpf ogt, %28, %29 : vector<8x128xf32>
    %cst_15 = arith.constant 2.000000e-01 : f32
    %31 = vector.broadcast %cst_15 : f32 to vector<8x128xf32>
    %32 = arith.mulf %31, %28 : vector<8x128xf32>
    %33 = arith.select %30, %28, %32 : vector<8x128xi1>, vector<8x128xf32>
    %34 = arith.truncf %33 : vector<8x128xf32> to vector<8x128xbf16>
    %c0_16 = arith.constant 0 : index
    %c0_17 = arith.constant 0 : index
    %35 = vector.load %arg6[%c0_16, %c0_17] : memref<128x256xbf16, #tpu.memory_space<vmem>>, vector<128x256xbf16>
    %cst_18 = arith.constant dense<0.000000e+00> : vector<8x256xf32>
    %36 = tpu.matmul %34, %35, %cst_18 {dimension_numbers = #tpu.dot_dimension_numbers<[1], [0], [0], [1], [0, 0, 1, 1], [], []>} : vector<8x128xbf16>, vector<128x256xbf16>, vector<8x256xf32> -> vector<8x256xf32>
    %c0_19 = arith.constant 0 : index
    %c0_20 = arith.constant 0 : index
    %37 = vector.load %arg7[%c0_19, %c0_20] : memref<1x256xf32, #tpu.memory_space<vmem>>, vector<1x256xf32>
    %38 = vector.broadcast %37 : vector<1x256xf32> to vector<8x256xf32>
    %39 = arith.addf %36, %38 : vector<8x256xf32>
    %cst_21 = arith.constant dense<0.000000e+00> : vector<256xf32>
    %40 = vector.multi_reduction <add>, %39, %cst_21 [0] : vector<8x256xf32> to vector<256xf32>
    %41 = vector.shape_cast %40 : vector<256xf32> to vector<1x256xf32>
    %cst_22 = arith.constant 8.000000e+00 : f32
    %42 = vector.broadcast %cst_22 : f32 to vector<1x256xf32>
    %43 = arith.divf %41, %42 : vector<1x256xf32>
    %44 = vector.broadcast %43 : vector<1x256xf32> to vector<8x256xf32>
    %45 = arith.subf %39, %44 : vector<8x256xf32>
    %46 = arith.mulf %45, %45 : vector<8x256xf32>
    %cst_23 = arith.constant dense<0.000000e+00> : vector<256xf32>
    %47 = vector.multi_reduction <add>, %46, %cst_23 [0] : vector<8x256xf32> to vector<256xf32>
    %48 = vector.shape_cast %47 : vector<256xf32> to vector<1x256xf32>
    %cst_24 = arith.constant 8.000000e+00 : f32
    %49 = vector.broadcast %cst_24 : f32 to vector<1x256xf32>
    %50 = arith.divf %48, %49 : vector<1x256xf32>
    %cst_25 = arith.constant 8.000000e-01 : f32
    %51 = vector.broadcast %cst_25 : f32 to vector<1x256xf32>
    %52 = arith.addf %50, %51 : vector<1x256xf32>
    %53 = math.rsqrt %52 : vector<1x256xf32>
    %54 = vector.broadcast %53 : vector<1x256xf32> to vector<8x256xf32>
    %55 = arith.mulf %45, %54 : vector<8x256xf32>
    %c0_26 = arith.constant 0 : index
    %c0_27 = arith.constant 0 : index
    %56 = vector.load %arg8[%c0_26, %c0_27] : memref<1x256xf32, #tpu.memory_space<vmem>>, vector<1x256xf32>
    %57 = vector.broadcast %56 : vector<1x256xf32> to vector<8x256xf32>
    %58 = arith.mulf %55, %57 : vector<8x256xf32>
    %c0_28 = arith.constant 0 : index
    %c0_29 = arith.constant 0 : index
    %59 = vector.load %arg9[%c0_28, %c0_29] : memref<1x256xf32, #tpu.memory_space<vmem>>, vector<1x256xf32>
    %60 = vector.broadcast %59 : vector<1x256xf32> to vector<8x256xf32>
    %61 = arith.addf %58, %60 : vector<8x256xf32>
    %cst_30 = arith.constant 0.000000e+00 : f32
    %62 = vector.broadcast %cst_30 : f32 to vector<8x256xf32>
    %63 = arith.cmpf ogt, %61, %62 : vector<8x256xf32>
    %cst_31 = arith.constant 2.000000e-01 : f32
    %64 = vector.broadcast %cst_31 : f32 to vector<8x256xf32>
    %65 = arith.mulf %64, %61 : vector<8x256xf32>
    %66 = arith.select %63, %61, %65 : vector<8x256xi1>, vector<8x256xf32>
    %67 = arith.truncf %66 : vector<8x256xf32> to vector<8x256xbf16>
    %c0_32 = arith.constant 0 : index
    %c0_33 = arith.constant 0 : index
    %68 = vector.load %arg10[%c0_32, %c0_33] : memref<256x512xbf16, #tpu.memory_space<vmem>>, vector<256x512xbf16>
    %cst_34 = arith.constant dense<0.000000e+00> : vector<8x512xf32>
    %69 = tpu.matmul %67, %68, %cst_34 {dimension_numbers = #tpu.dot_dimension_numbers<[1], [0], [0], [1], [0, 0, 1, 1], [], []>} : vector<8x256xbf16>, vector<256x512xbf16>, vector<8x512xf32> -> vector<8x512xf32>
    %c0_35 = arith.constant 0 : index
    %c0_36 = arith.constant 0 : index
    %70 = vector.load %arg11[%c0_35, %c0_36] : memref<1x512xf32, #tpu.memory_space<vmem>>, vector<1x512xf32>
    %71 = vector.broadcast %70 : vector<1x512xf32> to vector<8x512xf32>
    %72 = arith.addf %69, %71 : vector<8x512xf32>
    %cst_37 = arith.constant dense<0.000000e+00> : vector<512xf32>
    %73 = vector.multi_reduction <add>, %72, %cst_37 [0] : vector<8x512xf32> to vector<512xf32>
    %74 = vector.shape_cast %73 : vector<512xf32> to vector<1x512xf32>
    %cst_38 = arith.constant 8.000000e+00 : f32
    %75 = vector.broadcast %cst_38 : f32 to vector<1x512xf32>
    %76 = arith.divf %74, %75 : vector<1x512xf32>
    %77 = vector.broadcast %76 : vector<1x512xf32> to vector<8x512xf32>
    %78 = arith.subf %72, %77 : vector<8x512xf32>
    %79 = arith.mulf %78, %78 : vector<8x512xf32>
    %cst_39 = arith.constant dense<0.000000e+00> : vector<512xf32>
    %80 = vector.multi_reduction <add>, %79, %cst_39 [0] : vector<8x512xf32> to vector<512xf32>
    %81 = vector.shape_cast %80 : vector<512xf32> to vector<1x512xf32>
    %cst_40 = arith.constant 8.000000e+00 : f32
    %82 = vector.broadcast %cst_40 : f32 to vector<1x512xf32>
    %83 = arith.divf %81, %82 : vector<1x512xf32>
    %cst_41 = arith.constant 8.000000e-01 : f32
    %84 = vector.broadcast %cst_41 : f32 to vector<1x512xf32>
    %85 = arith.addf %83, %84 : vector<1x512xf32>
    %86 = math.rsqrt %85 : vector<1x512xf32>
    %87 = vector.broadcast %86 : vector<1x512xf32> to vector<8x512xf32>
    %88 = arith.mulf %78, %87 : vector<8x512xf32>
    %c0_42 = arith.constant 0 : index
    %c0_43 = arith.constant 0 : index
    %89 = vector.load %arg12[%c0_42, %c0_43] : memref<1x512xf32, #tpu.memory_space<vmem>>, vector<1x512xf32>
    %90 = vector.broadcast %89 : vector<1x512xf32> to vector<8x512xf32>
    %91 = arith.mulf %88, %90 : vector<8x512xf32>
    %c0_44 = arith.constant 0 : index
    %c0_45 = arith.constant 0 : index
    %92 = vector.load %arg13[%c0_44, %c0_45] : memref<1x512xf32, #tpu.memory_space<vmem>>, vector<1x512xf32>
    %93 = vector.broadcast %92 : vector<1x512xf32> to vector<8x512xf32>
    %94 = arith.addf %91, %93 : vector<8x512xf32>
    %cst_46 = arith.constant 0.000000e+00 : f32
    %95 = vector.broadcast %cst_46 : f32 to vector<8x512xf32>
    %96 = arith.cmpf ogt, %94, %95 : vector<8x512xf32>
    %cst_47 = arith.constant 2.000000e-01 : f32
    %97 = vector.broadcast %cst_47 : f32 to vector<8x512xf32>
    %98 = arith.mulf %97, %94 : vector<8x512xf32>
    %99 = arith.select %96, %94, %98 : vector<8x512xi1>, vector<8x512xf32>
    %100 = arith.truncf %99 : vector<8x512xf32> to vector<8x512xbf16>
    %c0_48 = arith.constant 0 : index
    %c0_49 = arith.constant 0 : index
    %101 = vector.load %arg14[%c0_48, %c0_49] : memref<512x1024xbf16, #tpu.memory_space<vmem>>, vector<512x1024xbf16>
    %cst_50 = arith.constant dense<0.000000e+00> : vector<8x1024xf32>
    %102 = tpu.matmul %100, %101, %cst_50 {dimension_numbers = #tpu.dot_dimension_numbers<[1], [0], [0], [1], [0, 0, 1, 1], [], []>} : vector<8x512xbf16>, vector<512x1024xbf16>, vector<8x1024xf32> -> vector<8x1024xf32>
    %c0_51 = arith.constant 0 : index
    %c0_52 = arith.constant 0 : index
    %103 = vector.load %arg15[%c0_51, %c0_52] : memref<1x1024xf32, #tpu.memory_space<vmem>>, vector<1x1024xf32>
    %104 = vector.broadcast %103 : vector<1x1024xf32> to vector<8x1024xf32>
    %105 = arith.addf %102, %104 : vector<8x1024xf32>
    %cst_53 = arith.constant dense<0.000000e+00> : vector<1024xf32>
    %106 = vector.multi_reduction <add>, %105, %cst_53 [0] : vector<8x1024xf32> to vector<1024xf32>
    %107 = vector.shape_cast %106 : vector<1024xf32> to vector<1x1024xf32>
    %cst_54 = arith.constant 8.000000e+00 : f32
    %108 = vector.broadcast %cst_54 : f32 to vector<1x1024xf32>
    %109 = arith.divf %107, %108 : vector<1x1024xf32>
    %110 = vector.broadcast %109 : vector<1x1024xf32> to vector<8x1024xf32>
    %111 = arith.subf %105, %110 : vector<8x1024xf32>
    %112 = arith.mulf %111, %111 : vector<8x1024xf32>
    %cst_55 = arith.constant dense<0.000000e+00> : vector<1024xf32>
    %113 = vector.multi_reduction <add>, %112, %cst_55 [0] : vector<8x1024xf32> to vector<1024xf32>
    %114 = vector.shape_cast %113 : vector<1024xf32> to vector<1x1024xf32>
    %cst_56 = arith.constant 8.000000e+00 : f32
    %115 = vector.broadcast %cst_56 : f32 to vector<1x1024xf32>
    %116 = arith.divf %114, %115 : vector<1x1024xf32>
    %cst_57 = arith.constant 8.000000e-01 : f32
    %117 = vector.broadcast %cst_57 : f32 to vector<1x1024xf32>
    %118 = arith.addf %116, %117 : vector<1x1024xf32>
    %119 = math.rsqrt %118 : vector<1x1024xf32>
    %120 = vector.broadcast %119 : vector<1x1024xf32> to vector<8x1024xf32>
    %121 = arith.mulf %111, %120 : vector<8x1024xf32>
    %c0_58 = arith.constant 0 : index
    %c0_59 = arith.constant 0 : index
    %122 = vector.load %arg16[%c0_58, %c0_59] : memref<1x1024xf32, #tpu.memory_space<vmem>>, vector<1x1024xf32>
    %123 = vector.broadcast %122 : vector<1x1024xf32> to vector<8x1024xf32>
    %124 = arith.mulf %121, %123 : vector<8x1024xf32>
    %c0_60 = arith.constant 0 : index
    %c0_61 = arith.constant 0 : index
    %125 = vector.load %arg17[%c0_60, %c0_61] : memref<1x1024xf32, #tpu.memory_space<vmem>>, vector<1x1024xf32>
    %126 = vector.broadcast %125 : vector<1x1024xf32> to vector<8x1024xf32>
    %127 = arith.addf %124, %126 : vector<8x1024xf32>
    %cst_62 = arith.constant 0.000000e+00 : f32
    %128 = vector.broadcast %cst_62 : f32 to vector<8x1024xf32>
    %129 = arith.cmpf ogt, %127, %128 : vector<8x1024xf32>
    %cst_63 = arith.constant 2.000000e-01 : f32
    %130 = vector.broadcast %cst_63 : f32 to vector<8x1024xf32>
    %131 = arith.mulf %130, %127 : vector<8x1024xf32>
    %132 = arith.select %129, %127, %131 : vector<8x1024xi1>, vector<8x1024xf32>
    %133 = arith.truncf %132 : vector<8x1024xf32> to vector<8x1024xbf16>
    %c0_64 = arith.constant 0 : index
    %c0_65 = arith.constant 0 : index
    %134 = vector.load %arg18[%c0_64, %c0_65] : memref<1024x1024xbf16, #tpu.memory_space<vmem>>, vector<1024x1024xbf16>
    %cst_66 = arith.constant dense<0.000000e+00> : vector<8x1024xf32>
    %135 = tpu.matmul %133, %134, %cst_66 {dimension_numbers = #tpu.dot_dimension_numbers<[1], [0], [0], [1], [0, 0, 1, 1], [], []>} : vector<8x1024xbf16>, vector<1024x1024xbf16>, vector<8x1024xf32> -> vector<8x1024xf32>
    %c0_67 = arith.constant 0 : index
    %c0_68 = arith.constant 0 : index
    %136 = vector.load %arg19[%c0_67, %c0_68] : memref<1x1024xf32, #tpu.memory_space<vmem>>, vector<1x1024xf32>
    %137 = vector.broadcast %136 : vector<1x1024xf32> to vector<8x1024xf32>
    %138 = arith.addf %135, %137 : vector<8x1024xf32>
    %139 = math.tanh %138 : vector<8x1024xf32>
    %c0_69 = arith.constant 0 : index
    %c0_70 = arith.constant 0 : index
    %140 = vector.load %arg20[%c0_69, %c0_70] : memref<8x1024xf32, #tpu.memory_space<vmem>>, vector<8x1024xf32>
    tpu.vector_store %arg20[%c0_69, %c0_70], %139 {strides = array<i32>} : memref<8x1024xf32, #tpu.memory_space<vmem>>, vector<8x1024xf32>,
    return
  }
  func.func @transform_0(%arg0: i32) -> (i32, i32) {
    %c0_i32 = arith.constant 0 : i32
    %c0_i32_0 = arith.constant 0 : i32
    return %arg0, %c0_i32 : i32, i32
  }
  func.func @transform_1(%arg0: i32) -> (i32, i32) {
    %c0_i32 = arith.constant 0 : i32
    %c0_i32_0 = arith.constant 0 : i32
    %c0_i32_1 = arith.constant 0 : i32
    return %c0_i32, %c0_i32_0 : i32, i32
  }
  func.func @transform_2(%arg0: i32) -> (i32, i32) {
    %c0_i32 = arith.constant 0 : i32
    %c0_i32_0 = arith.constant 0 : i32
    %c0_i32_1 = arith.constant 0 : i32
    return %c0_i32, %c0_i32_0 : i32, i32
  }
  func.func @transform_3(%arg0: i32) -> (i32, i32) {
    %c0_i32 = arith.constant 0 : i32
    %c0_i32_0 = arith.constant 0 : i32
    %c0_i32_1 = arith.constant 0 : i32
    return %c0_i32, %c0_i32_0 : i32, i32
  }
  func.func @transform_4(%arg0: i32) -> (i32, i32) {
    %c0_i32 = arith.constant 0 : i32
    %c0_i32_0 = arith.constant 0 : i32
    %c0_i32_1 = arith.constant 0 : i32
    return %c0_i32, %c0_i32_0 : i32, i32
  }
  func.func @transform_5(%arg0: i32) -> (i32, i32) {
    %c0_i32 = arith.constant 0 : i32
    %c0_i32_0 = arith.constant 0 : i32
    %c0_i32_1 = arith.constant 0 : i32
    return %c0_i32, %c0_i32_0 : i32, i32
  }
  func.func @transform_6(%arg0: i32) -> (i32, i32) {
    %c0_i32 = arith.constant 0 : i32
    %c0_i32_0 = arith.constant 0 : i32
    %c0_i32_1 = arith.constant 0 : i32
    return %c0_i32, %c0_i32_0 : i32, i32
  }
  func.func @transform_7(%arg0: i32) -> (i32, i32) {
    %c0_i32 = arith.constant 0 : i32
    %c0_i32_0 = arith.constant 0 : i32
    %c0_i32_1 = arith.constant 0 : i32
    return %c0_i32, %c0_i32_0 : i32, i32
  }
  func.func @transform_8(%arg0: i32) -> (i32, i32) {
    %c0_i32 = arith.constant 0 : i32
    %c0_i32_0 = arith.constant 0 : i32
    %c0_i32_1 = arith.constant 0 : i32
    return %c0_i32, %c0_i32_0 : i32, i32
  }
  func.func @transform_9(%arg0: i32) -> (i32, i32) {
    %c0_i32 = arith.constant 0 : i32
    %c0_i32_0 = arith.constant 0 : i32
    %c0_i32_1 = arith.constant 0 : i32
    return %c0_i32, %c0_i32_0 : i32, i32
  }
  func.func @transform_10(%arg0: i32) -> (i32, i32) {
    %c0_i32 = arith.constant 0 : i32
    %c0_i32_0 = arith.constant 0 : i32
    %c0_i32_1 = arith.constant 0 : i32
    return %c0_i32, %c0_i32_0 : i32, i32
  }
  func.func @transform_11(%arg0: i32) -> (i32, i32) {
    %c0_i32 = arith.constant 0 : i32
    %c0_i32_0 = arith.constant 0 : i32
    %c0_i32_1 = arith.constant 0 : i32
    return %c0_i32, %c0_i32_0 : i32, i32
  }
  func.func @transform_12(%arg0: i32) -> (i32, i32) {
    %c0_i32 = arith.constant 0 : i32
    %c0_i32_0 = arith.constant 0 : i32
    %c0_i32_1 = arith.constant 0 : i32
    return %c0_i32, %c0_i32_0 : i32, i32
  }
  func.func @transform_13(%arg0: i32) -> (i32, i32) {
    %c0_i32 = arith.constant 0 : i32
    %c0_i32_0 = arith.constant 0 : i32
    %c0_i32_1 = arith.constant 0 : i32
    return %c0_i32, %c0_i32_0 : i32, i32
  }
  func.func @transform_14(%arg0: i32) -> (i32, i32) {
    %c0_i32 = arith.constant 0 : i32
    %c0_i32_0 = arith.constant 0 : i32
    %c0_i32_1 = arith.constant 0 : i32
    return %c0_i32, %c0_i32_0 : i32, i32
  }
  func.func @transform_15(%arg0: i32) -> (i32, i32) {
    %c0_i32 = arith.constant 0 : i32
    %c0_i32_0 = arith.constant 0 : i32
    %c0_i32_1 = arith.constant 0 : i32
    return %c0_i32, %c0_i32_0 : i32, i32
  }
  func.func @transform_16(%arg0: i32) -> (i32, i32) {
    %c0_i32 = arith.constant 0 : i32
    %c0_i32_0 = arith.constant 0 : i32
    %c0_i32_1 = arith.constant 0 : i32
    return %c0_i32, %c0_i32_0 : i32, i32
  }
  func.func @transform_17(%arg0: i32) -> (i32, i32) {
    %c0_i32 = arith.constant 0 : i32
    %c0_i32_0 = arith.constant 0 : i32
    %c0_i32_1 = arith.constant 0 : i32
    return %c0_i32, %c0_i32_0 : i32, i32
  }
  func.func @transform_18(%arg0: i32) -> (i32, i32) {
    %c0_i32 = arith.constant 0 : i32
    %c0_i32_0 = arith.constant 0 : i32
    %c0_i32_1 = arith.constant 0 : i32
    return %c0_i32, %c0_i32_0 : i32, i32
  }
  func.func @transform_19(%arg0: i32) -> (i32, i32) {
    %c0_i32 = arith.constant 0 : i32
    %c0_i32_0 = arith.constant 0 : i32
    return %arg0, %c0_i32 : i32, i32
  }
}

</mosaic_0001>

<llo_original>
// kernel: tpu_custom_call.1
$region0: #{tpu_custom_call.1}
  #allocation0 [shape = 'u32[]', space=smem, size = 0x4, offset = 0x4, fixed_abs, tag = 'smem constant byte address 0x4 - core index']
  #allocation1 [shape = 'u32[144,128]{1,0:T(1,128)}', space=vmem, size = 0x12000, scoped, tag = 'internal scratch']
  %s0 = inlined_call_operand.hbm [shape: f32[16,128], index: 0, kind: input, shape index: {}]
  %s1 = inlined_call_operand.hbm [shape: bf16[128,128], index: 1, kind: input, shape index: {}]
  %s2 = inlined_call_operand.hbm [shape: f32[1,128], index: 2, kind: input, shape index: {}]
  %s3 = inlined_call_operand.hbm [shape: f32[1,128], index: 3, kind: input, shape index: {}]
  %s4 = inlined_call_operand.hbm [shape: f32[1,128], index: 4, kind: input, shape index: {}]
  %s5 = inlined_call_operand.hbm [shape: bf16[128,256], index: 5, kind: input, shape index: {}]
  %s6 = inlined_call_operand.hbm [shape: f32[1,256], index: 6, kind: input, shape index: {}]
  %s7 = inlined_call_operand.hbm [shape: f32[1,256], index: 7, kind: input, shape index: {}]
  %s8 = inlined_call_operand.hbm [shape: f32[1,256], index: 8, kind: input, shape index: {}]
  %s9 = inlined_call_operand.hbm [shape: bf16[256,512], index: 9, kind: input, shape index: {}]
  %s10 = inlined_call_operand.hbm [shape: f32[1,512], index: 10, kind: input, shape index: {}]
  %s11 = inlined_call_operand.hbm [shape: f32[1,512], index: 11, kind: input, shape index: {}]
  %s12 = inlined_call_operand.hbm [shape: f32[1,512], index: 12, kind: input, shape index: {}]
  %s13 = inlined_call_operand.hbm [shape: bf16[512,1024], index: 13, kind: input, shape index: {}]
  %s14 = inlined_call_operand.hbm [shape: f32[1,1024], index: 14, kind: input, shape index: {}]
  %s15 = inlined_call_operand.hbm [shape: f32[1,1024], index: 15, kind: input, shape index: {}]
  %s16 = inlined_call_operand.hbm [shape: f32[1,1024], index: 16, kind: input, shape index: {}]
  %s17 = inlined_call_operand.hbm [shape: bf16[1024,1024], index: 17, kind: input, shape index: {}]
  %s18 = inlined_call_operand.hbm [shape: f32[1,1024], index: 18, kind: input, shape index: {}]
  %s19 = inlined_call_operand.hbm [shape: f32[16,1024], index: 19, kind: output, shape index: {}]
  %s20 = sld [smem:[#allocation0]]
  $region185: #{tpu_custom_call.1} parent=0
    _
  %s22 = ssub.s32 1, %s20
  %s23 = scalar_select 0, %s22, %s20
  $region1: #{tpu_custom_call.1} parent=0
    #allocation2 [shape = 'u8[8192]{0}', space=vmem, size = 0x2000, scoped, tag = 'input window, operand 0']
    #allocation3 [shape = 's32[2]{0}', space=sflag, size = 0x8, scoped, tag = 'scoped memory for tpu_custom_call.1']
    #allocation4 [shape = 's32[2]{0}', space=sflag, size = 0x8, scoped, tag = 'scoped memory for tpu_custom_call.1']
    #allocation5 [shape = 'u8[32768]{0}', space=vmem, size = 0x8000, scoped, tag = 'input window, operand 1, single buffered']
    #allocation6 [shape = 's32[1]{0}', space=sflag, size = 0x4, scoped, tag = 'scoped memory for tpu_custom_call.1']
    #allocation7 [shape = 'u8[512]{0}', space=vmem, size = 0x400, scoped, tag = 'input window, operand 2, single buffered']
    #allocation8 [shape = 'u8[512]{0}', space=vmem, size = 0x400, scoped, tag = 'input window, operand 3, single buffered']
    #allocation9 [shape = 's32[1]{0}', space=sflag, size = 0x4, scoped, tag = 'scoped memory for tpu_custom_call.1']
    #allocation10 [shape = 'u8[512]{0}', space=vmem, size = 0x400, scoped, tag = 'input window, operand 4, single buffered']
    #allocation11 [shape = 'u8[65536]{0}', space=vmem, size = 0x10000, scoped, tag = 'input window, operand 5, single buffered']
    #allocation12 [shape = 's32[1]{0}', space=sflag, size = 0x4, scoped, tag = 'scoped memory for tpu_custom_call.1']
    #allocation13 [shape = 'u8[1024]{0}', space=vmem, size = 0x400, scoped, tag = 'input window, operand 6, single buffered']
    #allocation14 [shape = 'u8[1024]{0}', space=vmem, size = 0x400, scoped, tag = 'input window, operand 7, single buffered']
    #allocation15 [shape = 's32[1]{0}', space=sflag, size = 0x4, scoped, tag = 'scoped memory for tpu_custom_call.1']
    #allocation16 [shape = 'u8[1024]{0}', space=vmem, size = 0x400, scoped, tag = 'input window, operand 8, single buffered']
    #allocation17 [shape = 'u8[262144]{0}', space=vmem, size = 0x40000, scoped, tag = 'input window, operand 9, single buffered']
    #allocation18 [shape = 's32[1]{0}', space=sflag, size = 0x4, scoped, tag = 'scoped memory for tpu_custom_call.1']
    #allocation19 [shape = 'u8[2048]{0}', space=vmem, size = 0x800, scoped, tag = 'input window, operand 10, single buffered']
    #allocation20 [shape = 'u8[2048]{0}', space=vmem, size = 0x800, scoped, tag = 'input window, operand 11, single buffered']
    #allocation21 [shape = 's32[1]{0}', space=sflag, size = 0x4, scoped, tag = 'scoped memory for tpu_custom_call.1']
    #allocation22 [shape = 'u8[2048]{0}', space=vmem, size = 0x800, scoped, tag = 'input window, operand 12, single buffered']
    #allocation23 [shape = 'u8[1048576]{0}', space=vmem, size = 0x100000, scoped, tag = 'input window, operand 13, single buffered']
    #allocation24 [shape = 's32[1]{0}', space=sflag, size = 0x4, scoped, tag = 'scoped memory for tpu_custom_call.1']
    #allocation25 [shape = 'u8[4096]{0}', space=vmem, size = 0x1000, scoped, tag = 'input window, operand 14, single buffered']
    #allocation26 [shape = 'u8[4096]{0}', space=vmem, size = 0x1000, scoped, tag = 'input window, operand 15, single buffered']
    #allocation27 [shape = 's32[1]{0}', space=sflag, size = 0x4, scoped, tag = 'scoped memory for tpu_custom_call.1']
    #allocation28 [shape = 'u8[4096]{0}', space=vmem, size = 0x1000, scoped, tag = 'input window, operand 16, single buffered']
    #allocation29 [shape = 'u8[2097152]{0}', space=vmem, size = 0x200000, scoped, tag = 'input window, operand 17, single buffered']
    #allocation30 [shape = 's32[1]{0}', space=sflag, size = 0x4, scoped, tag = 'scoped memory for tpu_custom_call.1']
    #allocation31 [shape = 'u8[4096]{0}', space=vmem, size = 0x1000, scoped, tag = 'input window, operand 18, single buffered']
    #allocation32 [shape = 'u8[65536]{0}', space=vmem, size = 0x10000, scoped, tag = 'output window, operand 0']
    %24 = vsyncpa [#allocation3], 0
    %s25 = scalar_lea.sflag [#allocation3], 1
    %26 = vsyncpa %s25, 0
    %27 = vsyncpa [#allocation6], 0
    %28 = vsyncpa [#allocation9], 0
    %29 = vsyncpa [#allocation12], 0
    %30 = vsyncpa [#allocation15], 0
    %31 = vsyncpa [#allocation18], 0
    %32 = vsyncpa [#allocation21], 0
    %33 = vsyncpa [#allocation24], 0
    %34 = vsyncpa [#allocation27], 0
    %35 = vsyncpa [#allocation30], 0
    %36 = vsyncpa [#allocation4], 0
    %s37 = scalar_lea.sflag [#allocation4], 1
    %38 = vsyncpa %s37, 0
    loop: start=0, step=1, limit=4
    $region2: #{tpu_custom_call.1} parent=1 // loop_pre_header
      _
    $region3: #{tpu_custom_call.1} parent=1 // loop_header
      %s40 = sphi 0, %s44
      %p41 = scmp.ge.s32.totalorder %s40, 4
      %s50 = sphi 0, %s52
      %s53 = sphi 0, %s50
      %s54 = sphi 0, %s53
      %s70 = sphi 0, %s54
      %s74 = sphi 0, %s74
      %s76 = sphi 0, %s74
      %s77 = sphi 0, %s76
      %s91 = sphi 0, %s77
      %s95 = sphi 0, %s95
      %s97 = sphi 0, %s95
      %s98 = sphi 0, %s97
      %s112 = sphi 0, %s98
      %s116 = sphi 0, %s116
      %s118 = sphi 0, %s116
      %s119 = sphi 0, %s118
      %s133 = sphi 0, %s119
      %s137 = sphi 0, %s137
      %s139 = sphi 0, %s137
      %s140 = sphi 0, %s139
      %s154 = sphi 0, %s140
      %s158 = sphi 0, %s158
      %s160 = sphi 0, %s158
      %s161 = sphi 0, %s160
      %s175 = sphi 0, %s161
      %s179 = sphi 0, %s179
      %s181 = sphi 0, %s179
      %s182 = sphi 0, %s181
      %s196 = sphi 0, %s182
      %s200 = sphi 0, %s200
      %s202 = sphi 0, %s200
      %s203 = sphi 0, %s202
      %s217 = sphi 0, %s203
      %s221 = sphi 0, %s221
      %s223 = sphi 0, %s221
      %s224 = sphi 0, %s223
      %s238 = sphi 0, %s224
      %s242 = sphi 0, %s242
      %s244 = sphi 0, %s242
      %s245 = sphi 0, %s244
      %s259 = sphi 0, %s245
      %s263 = sphi 0, %s263
      %s265 = sphi 0, %s263
      %s266 = sphi 0, %s265
      %s280 = sphi 0, %s266
      %s284 = sphi 0, %s284
      %s286 = sphi 0, %s284
      %s287 = sphi 0, %s286
      %s301 = sphi 0, %s287
      %s305 = sphi 0, %s305
      %s307 = sphi 0, %s305
      %s308 = sphi 0, %s307
      %s322 = sphi 0, %s308
      %s326 = sphi 0, %s326
      %s328 = sphi 0, %s326
      %s329 = sphi 0, %s328
      %s343 = sphi 0, %s329
      %s347 = sphi 0, %s347
      %s349 = sphi 0, %s347
      %s350 = sphi 0, %s349
      %s364 = sphi 0, %s350
      %s368 = sphi 0, %s368
      %s370 = sphi 0, %s368
      %s371 = sphi 0, %s370
      %s385 = sphi 0, %s371
      %s389 = sphi 0, %s389
      %s391 = sphi 0, %s389
      %s392 = sphi 0, %s391
      %s406 = sphi 0, %s392
      %s410 = sphi 0, %s410
      %s412 = sphi 0, %s410
      %s413 = sphi 0, %s412
      %s427 = sphi 0, %s413
      %s431 = sphi 0, %s431
      %s433 = sphi 0, %s431
      %s434 = sphi 0, %s433
      %s448 = sphi 0, %s434
      %s454 = sphi 0, %s456
      %s457 = sphi 0, %s454
      %s458 = sphi 0, %s457
      %s474 = sphi 0, %s458
    $region4: #{tpu_custom_call.1} parent=1 // loop_header_branch
      %43 = sbr.rel (%p41) target = $region8
    $region5: #{tpu_custom_call.1} parent=1 // loop_body
      %s45 = ssub.s32 %s40, 1
      %s46 = ssub.s32 %s40, 2
      %s47 = sadd.s32 %s40, 1
      %s48 = ssub.s32 %s40, %s47
      %p49 = scmp.eq.s32.totalorder %s48, 0
      %s51 = sadd.s32 %s50, 1
      %s52 = scalar_select %p49, %s50, %s51
      %p55 = pneg %p49
      %p56 = scmp.eq.s32.totalorder %s40, 1
      %p57 = por %p55, %p56
      %p58 = scmp.ne.s32.totalorder %s50, %s53
      %p59 = scmp.eq.s32.totalorder %s40, 0
      %p60 = por %p58, %p59
      %p61 = scmp.ne.s32.totalorder %s50, %s53
      %p62 = scmp.eq.s32.totalorder %s45, 1
      %p63 = por %p61, %p62
      %p64 = scmp.ne.s32.totalorder %s53, %s54
      %p65 = scmp.eq.s32.totalorder %s45, 0
      %p66 = por %p64, %p65
      %p67 = scmp.ne.s32.totalorder %s53, %s54
      %p68 = scmp.eq.s32.totalorder %s46, 1
      %p69 = por %p67, %p68
      %p71 = scmp.ne.s32.totalorder %s54, %s70
      %p72 = scmp.eq.s32.totalorder %s46, 0
      %p73 = por %p71, %p72
      %s75 = sadd.s32 %s74, 1
      %p78 = scmp.eq.s32.totalorder %s40, 1
      %p79 = scmp.ne.s32.totalorder %s74, %s76
      %p80 = scmp.eq.s32.totalorder %s40, 0
      %p81 = por %p79, %p80
      %p82 = scmp.ne.s32.totalorder %s74, %s76
      %p83 = scmp.eq.s32.totalorder %s45, 1
      %p84 = por %p82, %p83
      %p85 = scmp.ne.s32.totalorder %s76, %s77
      %p86 = scmp.eq.s32.totalorder %s45, 0
      %p87 = por %p85, %p86
      %p88 = scmp.ne.s32.totalorder %s76, %s77
      %p89 = scmp.eq.s32.totalorder %s46, 1
      %p90 = por %p88, %p89
      %p92 = scmp.ne.s32.totalorder %s77, %s91
      %p93 = scmp.eq.s32.totalorder %s46, 0
      %p94 = por %p92, %p93
      %s96 = sadd.s32 %s95, 1
      %p99 = scmp.eq.s32.totalorder %s40, 1
      %p100 = scmp.ne.s32.totalorder %s95, %s97
      %p101 = scmp.eq.s32.totalorder %s40, 0
      %p102 = por %p100, %p101
      %p103 = scmp.ne.s32.totalorder %s95, %s97
      %p104 = scmp.eq.s32.totalorder %s45, 1
      %p105 = por %p103, %p104
      %p106 = scmp.ne.s32.totalorder %s97, %s98
      %p107 = scmp.eq.s32.totalorder %s45, 0
      %p108 = por %p106, %p107
      %p109 = scmp.ne.s32.totalorder %s97, %s98
      %p110 = scmp.eq.s32.totalorder %s46, 1
      %p111 = por %p109, %p110
      %p113 = scmp.ne.s32.totalorder %s98, %s112
      %p114 = scmp.eq.s32.totalorder %s46, 0
      %p115 = por %p113, %p114
      %s117 = sadd.s32 %s116, 1
      %p120 = scmp.eq.s32.totalorder %s40, 1
      %p121 = scmp.ne.s32.totalorder %s116, %s118
      %p122 = scmp.eq.s32.totalorder %s40, 0
      %p123 = por %p121, %p122
      %p124 = scmp.ne.s32.totalorder %s116, %s118
      %p125 = scmp.eq.s32.totalorder %s45, 1
      %p126 = por %p124, %p125
      %p127 = scmp.ne.s32.totalorder %s118, %s119
      %p128 = scmp.eq.s32.totalorder %s45, 0
      %p129 = por %p127, %p128
      %p130 = scmp.ne.s32.totalorder %s118, %s119
      %p131 = scmp.eq.s32.totalorder %s46, 1
      %p132 = por %p130, %p131
      %p134 = scmp.ne.s32.totalorder %s119, %s133
      %p135 = scmp.eq.s32.totalorder %s46, 0
      %p136 = por %p134, %p135
      %s138 = sadd.s32 %s137, 1
      %p141 = scmp.eq.s32.totalorder %s40, 1
      %p142 = scmp.ne.s32.totalorder %s137, %s139
      %p143 = scmp.eq.s32.totalorder %s40, 0
      %p144 = por %p142, %p143
      %p145 = scmp.ne.s32.totalorder %s137, %s139
      %p146 = scmp.eq.s32.totalorder %s45, 1
      %p147 = por %p145, %p146
      %p148 = scmp.ne.s32.totalorder %s139, %s140
      %p149 = scmp.eq.s32.totalorder %s45, 0
      %p150 = por %p148, %p149
      %p151 = scmp.ne.s32.totalorder %s139, %s140
      %p152 = scmp.eq.s32.totalorder %s46, 1
      %p153 = por %p151, %p152
      %p155 = scmp.ne.s32.totalorder %s140, %s154
      %p156 = scmp.eq.s32.totalorder %s46, 0
      %p157 = por %p155, %p156
      %s159 = sadd.s32 %s158, 1
      %p162 = scmp.eq.s32.totalorder %s40, 1
      %p163 = scmp.ne.s32.totalorder %s158, %s160
      %p164 = scmp.eq.s32.totalorder %s40, 0
      %p165 = por %p163, %p164
      %p166 = scmp.ne.s32.totalorder %s158, %s160
      %p167 = scmp.eq.s32.totalorder %s45, 1
      %p168 = por %p166, %p167
      %p169 = scmp.ne.s32.totalorder %s160, %s161
      %p170 = scmp.eq.s32.totalorder %s45, 0
      %p171 = por %p169, %p170
      %p172 = scmp.ne.s32.totalorder %s160, %s161
      %p173 = scmp.eq.s32.totalorder %s46, 1
      %p174 = por %p172, %p173
      %p176 = scmp.ne.s32.totalorder %s161, %s175
      %p177 = scmp.eq.s32.totalorder %s46, 0
      %p178 = por %p176, %p177
      %s180 = sadd.s32 %s179, 1
      %p183 = scmp.eq.s32.totalorder %s40, 1
      %p184 = scmp.ne.s32.totalorder %s179, %s181
      %p185 = scmp.eq.s32.totalorder %s40, 0
      %p186 = por %p184, %p185
      %p187 = scmp.ne.s32.totalorder %s179, %s181
      %p188 = scmp.eq.s32.totalorder %s45, 1
      %p189 = por %p187, %p188
      %p190 = scmp.ne.s32.totalorder %s181, %s182
      %p191 = scmp.eq.s32.totalorder %s45, 0
      %p192 = por %p190, %p191
      %p193 = scmp.ne.s32.totalorder %s181, %s182
      %p194 = scmp.eq.s32.totalorder %s46, 1
      %p195 = por %p193, %p194
      %p197 = scmp.ne.s32.totalorder %s182, %s196
      %p198 = scmp.eq.s32.totalorder %s46, 0
      %p199 = por %p197, %p198
      %s201 = sadd.s32 %s200, 1
      %p204 = scmp.eq.s32.totalorder %s40, 1
      %p205 = scmp.ne.s32.totalorder %s200, %s202
      %p206 = scmp.eq.s32.totalorder %s40, 0
      %p207 = por %p205, %p206
      %p208 = scmp.ne.s32.totalorder %s200, %s202
      %p209 = scmp.eq.s32.totalorder %s45, 1
      %p210 = por %p208, %p209
      %p211 = scmp.ne.s32.totalorder %s202, %s203
      %p212 = scmp.eq.s32.totalorder %s45, 0
      %p213 = por %p211, %p212
      %p214 = scmp.ne.s32.totalorder %s202, %s203
      %p215 = scmp.eq.s32.totalorder %s46, 1
      %p216 = por %p214, %p215
      %p218 = scmp.ne.s32.totalorder %s203, %s217
      %p219 = scmp.eq.s32.totalorder %s46, 0
      %p220 = por %p218, %p219
      %s222 = sadd.s32 %s221, 1
      %p225 = scmp.eq.s32.totalorder %s40, 1
      %p226 = scmp.ne.s32.totalorder %s221, %s223
      %p227 = scmp.eq.s32.totalorder %s40, 0
      %p228 = por %p226, %p227
      %p229 = scmp.ne.s32.totalorder %s221, %s223
      %p230 = scmp.eq.s32.totalorder %s45, 1
      %p231 = por %p229, %p230
      %p232 = scmp.ne.s32.totalorder %s223, %s224
      %p233 = scmp.eq.s32.totalorder %s45, 0
      %p234 = por %p232, %p233
      %p235 = scmp.ne.s32.totalorder %s223, %s224
      %p236 = scmp.eq.s32.totalorder %s46, 1
      %p237 = por %p235, %p236
      %p239 = scmp.ne.s32.totalorder %s224, %s238
      %p240 = scmp.eq.s32.totalorder %s46, 0
      %p241 = por %p239, %p240
      %s243 = sadd.s32 %s242, 1
      %p246 = scmp.eq.s32.totalorder %s40, 1
      %p247 = scmp.ne.s32.totalorder %s242, %s244
      %p248 = scmp.eq.s32.totalorder %s40, 0
      %p249 = por %p247, %p248
      %p250 = scmp.ne.s32.totalorder %s242, %s244
      %p251 = scmp.eq.s32.totalorder %s45, 1
      %p252 = por %p250, %p251
      %p253 = scmp.ne.s32.totalorder %s244, %s245
      %p254 = scmp.eq.s32.totalorder %s45, 0
      %p255 = por %p253, %p254
      %p256 = scmp.ne.s32.totalorder %s244, %s245
      %p257 = scmp.eq.s32.totalorder %s46, 1
      %p258 = por %p256, %p257
      %p260 = scmp.ne.s32.totalorder %s245, %s259
      %p261 = scmp.eq.s32.totalorder %s46, 0
      %p262 = por %p260, %p261
      %s264 = sadd.s32 %s263, 1
      %p267 = scmp.eq.s32.totalorder %s40, 1
      %p268 = scmp.ne.s32.totalorder %s263, %s265
      %p269 = scmp.eq.s32.totalorder %s40, 0
      %p270 = por %p268, %p269
      %p271 = scmp.ne.s32.totalorder %s263, %s265
      %p272 = scmp.eq.s32.totalorder %s45, 1
      %p273 = por %p271, %p272
      %p274 = scmp.ne.s32.totalorder %s265, %s266
      %p275 = scmp.eq.s32.totalorder %s45, 0
      %p276 = por %p274, %p275
      %p277 = scmp.ne.s32.totalorder %s265, %s266
      %p278 = scmp.eq.s32.totalorder %s46, 1
      %p279 = por %p277, %p278
      %p281 = scmp.ne.s32.totalorder %s266, %s280
      %p282 = scmp.eq.s32.totalorder %s46, 0
      %p283 = por %p281, %p282
      %s285 = sadd.s32 %s284, 1
      %p288 = scmp.eq.s32.totalorder %s40, 1
      %p289 = scmp.ne.s32.totalorder %s284, %s286
      %p290 = scmp.eq.s32.totalorder %s40, 0
      %p291 = por %p289, %p290
      %p292 = scmp.ne.s32.totalorder %s284, %s286
      %p293 = scmp.eq.s32.totalorder %s45, 1
      %p294 = por %p292, %p293
      %p295 = scmp.ne.s32.totalorder %s286, %s287
      %p296 = scmp.eq.s32.totalorder %s45, 0
      %p297 = por %p295, %p296
      %p298 = scmp.ne.s32.totalorder %s286, %s287
      %p299 = scmp.eq.s32.totalorder %s46, 1
      %p300 = por %p298, %p299
      %p302 = scmp.ne.s32.totalorder %s287, %s301
      %p303 = scmp.eq.s32.totalorder %s46, 0
      %p304 = por %p302, %p303
      %s306 = sadd.s32 %s305, 1
      %p309 = scmp.eq.s32.totalorder %s40, 1
      %p310 = scmp.ne.s32.totalorder %s305, %s307
      %p311 = scmp.eq.s32.totalorder %s40, 0
      %p312 = por %p310, %p311
      %p313 = scmp.ne.s32.totalorder %s305, %s307
      %p314 = scmp.eq.s32.totalorder %s45, 1
      %p315 = por %p313, %p314
      %p316 = scmp.ne.s32.totalorder %s307, %s308
      %p317 = scmp.eq.s32.totalorder %s45, 0
      %p318 = por %p316, %p317
      %p319 = scmp.ne.s32.totalorder %s307, %s308
      %p320 = scmp.eq.s32.totalorder %s46, 1
      %p321 = por %p319, %p320
      %p323 = scmp.ne.s32.totalorder %s308, %s322
      %p324 = scmp.eq.s32.totalorder %s46, 0
      %p325 = por %p323, %p324
      %s327 = sadd.s32 %s326, 1
      %p330 = scmp.eq.s32.totalorder %s40, 1
      %p331 = scmp.ne.s32.totalorder %s326, %s328
      %p332 = scmp.eq.s32.totalorder %s40, 0
      %p333 = por %p331, %p332
      %p334 = scmp.ne.s32.totalorder %s326, %s328
      %p335 = scmp.eq.s32.totalorder %s45, 1
      %p336 = por %p334, %p335
      %p337 = scmp.ne.s32.totalorder %s328, %s329
      %p338 = scmp.eq.s32.totalorder %s45, 0
      %p339 = por %p337, %p338
      %p340 = scmp.ne.s32.totalorder %s328, %s329
      %p341 = scmp.eq.s32.totalorder %s46, 1
      %p342 = por %p340, %p341
      %p344 = scmp.ne.s32.totalorder %s329, %s343
      %p345 = scmp.eq.s32.totalorder %s46, 0
      %p346 = por %p344, %p345
      %s348 = sadd.s32 %s347, 1
      %p351 = scmp.eq.s32.totalorder %s40, 1
      %p352 = scmp.ne.s32.totalorder %s347, %s349
      %p353 = scmp.eq.s32.totalorder %s40, 0
      %p354 = por %p352, %p353
      %p355 = scmp.ne.s32.totalorder %s347, %s349
      %p356 = scmp.eq.s32.totalorder %s45, 1
      %p357 = por %p355, %p356
      %p358 = scmp.ne.s32.totalorder %s349, %s350
      %p359 = scmp.eq.s32.totalorder %s45, 0
      %p360 = por %p358, %p359
      %p361 = scmp.ne.s32.totalorder %s349, %s350
      %p362 = scmp.eq.s32.totalorder %s46, 1
      %p363 = por %p361, %p362
      %p365 = scmp.ne.s32.totalorder %s350, %s364
      %p366 = scmp.eq.s32.totalorder %s46, 0
      %p367 = por %p365, %p366
      %s369 = sadd.s32 %s368, 1
      %p372 = scmp.eq.s32.totalorder %s40, 1
      %p373 = scmp.ne.s32.totalorder %s368, %s370
      %p374 = scmp.eq.s32.totalorder %s40, 0
      %p375 = por %p373, %p374
      %p376 = scmp.ne.s32.totalorder %s368, %s370
      %p377 = scmp.eq.s32.totalorder %s45, 1
      %p378 = por %p376, %p377
      %p379 = scmp.ne.s32.totalorder %s370, %s371
      %p380 = scmp.eq.s32.totalorder %s45, 0
      %p381 = por %p379, %p380
      %p382 = scmp.ne.s32.totalorder %s370, %s371
      %p383 = scmp.eq.s32.totalorder %s46, 1
      %p384 = por %p382, %p383
      %p386 = scmp.ne.s32.totalorder %s371, %s385
      %p387 = scmp.eq.s32.totalorder %s46, 0
      %p388 = por %p386, %p387
      %s390 = sadd.s32 %s389, 1
      %p393 = scmp.eq.s32.totalorder %s40, 1
      %p394 = scmp.ne.s32.totalorder %s389, %s391
      %p395 = scmp.eq.s32.totalorder %s40, 0
      %p396 = por %p394, %p395
      %p397 = scmp.ne.s32.totalorder %s389, %s391
      %p398 = scmp.eq.s32.totalorder %s45, 1
      %p399 = por %p397, %p398
      %p400 = scmp.ne.s32.totalorder %s391, %s392
      %p401 = scmp.eq.s32.totalorder %s45, 0
      %p402 = por %p400, %p401
      %p403 = scmp.ne.s32.totalorder %s391, %s392
      %p404 = scmp.eq.s32.totalorder %s46, 1
      %p405 = por %p403, %p404
      %p407 = scmp.ne.s32.totalorder %s392, %s406
      %p408 = scmp.eq.s32.totalorder %s46, 0
      %p409 = por %p407, %p408
      %s411 = sadd.s32 %s410, 1
      %p414 = scmp.eq.s32.totalorder %s40, 1
      %p415 = scmp.ne.s32.totalorder %s410, %s412
      %p416 = scmp.eq.s32.totalorder %s40, 0
      %p417 = por %p415, %p416
      %p418 = scmp.ne.s32.totalorder %s410, %s412
      %p419 = scmp.eq.s32.totalorder %s45, 1
      %p420 = por %p418, %p419
      %p421 = scmp.ne.s32.totalorder %s412, %s413
      %p422 = scmp.eq.s32.totalorder %s45, 0
      %p423 = por %p421, %p422
      %p424 = scmp.ne.s32.totalorder %s412, %s413
      %p425 = scmp.eq.s32.totalorder %s46, 1
      %p426 = por %p424, %p425
      %p428 = scmp.ne.s32.totalorder %s413, %s427
      %p429 = scmp.eq.s32.totalorder %s46, 0
      %p430 = por %p428, %p429
      %s432 = sadd.s32 %s431, 1
      %p435 = scmp.eq.s32.totalorder %s40, 1
      %p436 = scmp.ne.s32.totalorder %s431, %s433
      %p437 = scmp.eq.s32.totalorder %s40, 0
      %p438 = por %p436, %p437
      %p439 = scmp.ne.s32.totalorder %s431, %s433
      %p440 = scmp.eq.s32.totalorder %s45, 1
      %p441 = por %p439, %p440
      %p442 = scmp.ne.s32.totalorder %s433, %s434
      %p443 = scmp.eq.s32.totalorder %s45, 0
      %p444 = por %p442, %p443
      %p445 = scmp.ne.s32.totalorder %s433, %s434
      %p446 = scmp.eq.s32.totalorder %s46, 1
      %p447 = por %p445, %p446
      %p449 = scmp.ne.s32.totalorder %s434, %s448
      %p450 = scmp.eq.s32.totalorder %s46, 0
      %p451 = por %p449, %p450
      %s452 = ssub.s32 %s40, %s47
      %p453 = scmp.eq.s32.totalorder %s452, 0
      %s455 = sadd.s32 %s454, 1
      %s456 = scalar_select %p453, %s454, %s455
      %p459 = pneg %p453
      %p460 = scmp.eq.s32.totalorder %s40, 1
      %p461 = por %p459, %p460
      %p462 = scmp.ne.s32.totalorder %s454, %s457
      %p463 = scmp.eq.s32.totalorder %s40, 0
      %p464 = por %p462, %p463
      %p465 = scmp.ne.s32.totalorder %s454, %s457
      %p466 = scmp.eq.s32.totalorder %s45, 1
      %p467 = por %p465, %p466
      %p468 = scmp.ne.s32.totalorder %s457, %s458
      %p469 = scmp.eq.s32.totalorder %s45, 0
      %p470 = por %p468, %p469
      %p471 = scmp.ne.s32.totalorder %s457, %s458
      %p472 = scmp.eq.s32.totalorder %s46, 1
      %p473 = por %p471, %p472
      %p475 = scmp.ne.s32.totalorder %s458, %s474
      %p476 = scmp.eq.s32.totalorder %s46, 0
      %p477 = por %p475, %p476
      %p478 = scmp.le.s32.totalorder 1, %s40
      %p479 = scmp.lt.s32.totalorder %s40, 3
      %p480 = pnand %p478, %p479
      %p481 = pneg %p480
      // Predicated region
      $region9: #{tpu_custom_call.1} parent=5 // pred_check
        _
      $region10: #{tpu_custom_call.1} parent=5 // pred_check_branch
        %483 = sbr.rel (%p480) target = $region12
      $region11: #{tpu_custom_call.1} parent=5 // pred_region
        %s484 = ssub.s32 %s40, 1
        // Predicated region
        $region13: #{tpu_custom_call.1} parent=11 // pred_check
          %p485 = pneg %p87
        $region14: #{tpu_custom_call.1} parent=11 // pred_check_branch
          %487 = sbr.rel (%p485) target = $region16
        $region15: #{tpu_custom_call.1} parent=11 // pred_region
          %s489 = ssub.s32 1024, 1024
          %490 = vsyncadd [#allocation6], %s489
          %s491 = sshll.u32 [#allocation5], 4
          %s492 = int_to_ptr.vmem [resolvable:$true] %s491
          %497 = dma.hbm_to_vmem [thread:$0]  %s1, 1024, %s492, [#allocation6], 64, 64, 4
        $region16: #{tpu_custom_call.1} parent=11 // pred_fallthru
          _
        // Predicated region
        $region17: #{tpu_custom_call.1} parent=11 // pred_check
          %p498 = pneg %p108
        $region18: #{tpu_custom_call.1} parent=11 // pred_check_branch
          %500 = sbr.rel (%p498) target = $region20
        $region19: #{tpu_custom_call.1} parent=11 // pred_region
          %s502 = ssub.s32 16, 16
          %503 = vsyncadd [#allocation6], %s502
          %s505 = sshll.u32 [#allocation7], 4
          %s506 = int_to_ptr.vmem [resolvable:$true] %s505
          %508 = dma.hbm_to_vmem [thread:$0]  %s2, 16, %s506, [#allocation6]
        $region20: #{tpu_custom_call.1} parent=11 // pred_fallthru
          _
        // Predicated region
        $region21: #{tpu_custom_call.1} parent=11 // pred_check
          %p509 = pneg %p129
        $region22: #{tpu_custom_call.1} parent=11 // pred_check_branch
          %511 = sbr.rel (%p509) target = $region24
        $region23: #{tpu_custom_call.1} parent=11 // pred_region
          %s513 = ssub.s32 16, 16
          %514 = vsyncadd [#allocation9], %s513
          %s516 = sshll.u32 [#allocation8], 4
          %s517 = int_to_ptr.vmem [resolvable:$true] %s516
          %519 = dma.hbm_to_vmem [thread:$0]  %s3, 16, %s517, [#allocation9]
        $region24: #{tpu_custom_call.1} parent=11 // pred_fallthru
          _
        // Predicated region
        $region25: #{tpu_custom_call.1} parent=11 // pred_check
          %p520 = pneg %p150
        $region26: #{tpu_custom_call.1} parent=11 // pred_check_branch
          %522 = sbr.rel (%p520) target = $region28
        $region27: #{tpu_custom_call.1} parent=11 // pred_region
          %s524 = ssub.s32 16, 16
          %525 = vsyncadd [#allocation9], %s524
          %s527 = sshll.u32 [#allocation10], 4
          %s528 = int_to_ptr.vmem [resolvable:$true] %s527
          %530 = dma.hbm_to_vmem [thread:$0]  %s4, 16, %s528, [#allocation9]
        $region28: #{tpu_custom_call.1} parent=11 // pred_fallthru
          _
        // Predicated region
        $region29: #{tpu_custom_call.1} parent=11 // pred_check
          %p531 = pneg %p171
        $region30: #{tpu_custom_call.1} parent=11 // pred_check_branch
          %533 = sbr.rel (%p531) target = $region32
        $region31: #{tpu_custom_call.1} parent=11 // pred_region
          %s535 = ssub.s32 2048, 2048
          %536 = vsyncadd [#allocation12], %s535
          %s537 = sshll.u32 [#allocation11], 4
          %s538 = int_to_ptr.vmem [resolvable:$true] %s537
          %543 = dma.hbm_to_vmem [thread:$0]  %s5, 2048, %s538, [#allocation12], 128, 128, 8
        $region32: #{tpu_custom_call.1} parent=11 // pred_fallthru
          _
        // Predicated region
        $region33: #{tpu_custom_call.1} parent=11 // pred_check
          %p544 = pneg %p192
        $region34: #{tpu_custom_call.1} parent=11 // pred_check_branch
          %546 = sbr.rel (%p544) target = $region36
        $region35: #{tpu_custom_call.1} parent=11 // pred_region
          %s548 = ssub.s32 32, 32
          %549 = vsyncadd [#allocation12], %s548
          %s551 = sshll.u32 [#allocation13], 4
          %s552 = int_to_ptr.vmem [resolvable:$true] %s551
          %554 = dma.hbm_to_vmem [thread:$0]  %s6, 32, %s552, [#allocation12]
        $region36: #{tpu_custom_call.1} parent=11 // pred_fallthru
          _
        // Predicated region
        $region37: #{tpu_custom_call.1} parent=11 // pred_check
          %p555 = pneg %p213
        $region38: #{tpu_custom_call.1} parent=11 // pred_check_branch
          %557 = sbr.rel (%p555) target = $region40
        $region39: #{tpu_custom_call.1} parent=11 // pred_region
          %s559 = ssub.s32 32, 32
          %560 = vsyncadd [#allocation15], %s559
          %s562 = sshll.u32 [#allocation14], 4
          %s563 = int_to_ptr.vmem [resolvable:$true] %s562
          %565 = dma.hbm_to_vmem [thread:$0]  %s7, 32, %s563, [#allocation15]
        $region40: #{tpu_custom_call.1} parent=11 // pred_fallthru
          _
        // Predicated region
        $region41: #{tpu_custom_call.1} parent=11 // pred_check
          %p566 = pneg %p234
        $region42: #{tpu_custom_call.1} parent=11 // pred_check_branch
          %568 = sbr.rel (%p566) target = $region44
        $region43: #{tpu_custom_call.1} parent=11 // pred_region
          %s570 = ssub.s32 32, 32
          %571 = vsyncadd [#allocation15], %s570
          %s573 = sshll.u32 [#allocation16], 4
          %s574 = int_to_ptr.vmem [resolvable:$true] %s573
          %576 = dma.hbm_to_vmem [thread:$0]  %s8, 32, %s574, [#allocation15]
        $region44: #{tpu_custom_call.1} parent=11 // pred_fallthru
          _
        // Predicated region
        $region45: #{tpu_custom_call.1} parent=11 // pred_check
          %p577 = pneg %p255
        $region46: #{tpu_custom_call.1} parent=11 // pred_check_branch
          %579 = sbr.rel (%p577) target = $region48
        $region47: #{tpu_custom_call.1} parent=11 // pred_region
          %s581 = ssub.s32 8192, 8192
          %582 = vsyncadd [#allocation18], %s581
          %s583 = sshll.u32 [#allocation17], 4
          %s584 = int_to_ptr.vmem [resolvable:$true] %s583
          %589 = dma.hbm_to_vmem [thread:$0]  %s9, 8192, %s584, [#allocation18], 256, 256, 16
        $region48: #{tpu_custom_call.1} parent=11 // pred_fallthru
          _
        // Predicated region
        $region49: #{tpu_custom_call.1} parent=11 // pred_check
          %p590 = pneg %p276
        $region50: #{tpu_custom_call.1} parent=11 // pred_check_branch
          %592 = sbr.rel (%p590) target = $region52
        $region51: #{tpu_custom_call.1} parent=11 // pred_region
          %s594 = ssub.s32 64, 64
          %595 = vsyncadd [#allocation18], %s594
          %s597 = sshll.u32 [#allocation19], 4
          %s598 = int_to_ptr.vmem [resolvable:$true] %s597
          %600 = dma.hbm_to_vmem [thread:$0]  %s10, 64, %s598, [#allocation18]
        $region52: #{tpu_custom_call.1} parent=11 // pred_fallthru
          _
        // Predicated region
        $region53: #{tpu_custom_call.1} parent=11 // pred_check
          %p601 = pneg %p297
        $region54: #{tpu_custom_call.1} parent=11 // pred_check_branch
          %603 = sbr.rel (%p601) target = $region56
        $region55: #{tpu_custom_call.1} parent=11 // pred_region
          %s605 = ssub.s32 64, 64
          %606 = vsyncadd [#allocation21], %s605
          %s608 = sshll.u32 [#allocation20], 4
          %s609 = int_to_ptr.vmem [resolvable:$true] %s608
          %611 = dma.hbm_to_vmem [thread:$0]  %s11, 64, %s609, [#allocation21]
        $region56: #{tpu_custom_call.1} parent=11 // pred_fallthru
          _
        // Predicated region
        $region57: #{tpu_custom_call.1} parent=11 // pred_check
          %p612 = pneg %p318
        $region58: #{tpu_custom_call.1} parent=11 // pred_check_branch
          %614 = sbr.rel (%p612) target = $region60
        $region59: #{tpu_custom_call.1} parent=11 // pred_region
          %s616 = ssub.s32 64, 64
          %617 = vsyncadd [#allocation21], %s616
          %s619 = sshll.u32 [#allocation22], 4
          %s620 = int_to_ptr.vmem [resolvable:$true] %s619
          %622 = dma.hbm_to_vmem [thread:$0]  %s12, 64, %s620, [#allocation21]
        $region60: #{tpu_custom_call.1} parent=11 // pred_fallthru
          _
        // Predicated region
        $region61: #{tpu_custom_call.1} parent=11 // pred_check
          %p623 = pneg %p339
        $region62: #{tpu_custom_call.1} parent=11 // pred_check_branch
          %625 = sbr.rel (%p623) target = $region64
        $region63: #{tpu_custom_call.1} parent=11 // pred_region
          %s627 = ssub.s32 32768, 32768
          %628 = vsyncadd [#allocation24], %s627
          %s629 = sshll.u32 [#allocation23], 4
          %s630 = int_to_ptr.vmem [resolvable:$true] %s629
          %635 = dma.hbm_to_vmem [thread:$0]  %s13, 32768, %s630, [#allocation24], 512, 512, 32
        $region64: #{tpu_custom_call.1} parent=11 // pred_fallthru
          _
        // Predicated region
        $region65: #{tpu_custom_call.1} parent=11 // pred_check
          %p636 = pneg %p360
        $region66: #{tpu_custom_call.1} parent=11 // pred_check_branch
          %638 = sbr.rel (%p636) target = $region68
        $region67: #{tpu_custom_call.1} parent=11 // pred_region
          %s640 = ssub.s32 128, 128
          %641 = vsyncadd [#allocation24], %s640
          %s643 = sshll.u32 [#allocation25], 4
          %s644 = int_to_ptr.vmem [resolvable:$true] %s643
          %646 = dma.hbm_to_vmem [thread:$0]  %s14, 128, %s644, [#allocation24]
        $region68: #{tpu_custom_call.1} parent=11 // pred_fallthru
          _
        // Predicated region
        $region69: #{tpu_custom_call.1} parent=11 // pred_check
          %p647 = pneg %p381
        $region70: #{tpu_custom_call.1} parent=11 // pred_check_branch
          %649 = sbr.rel (%p647) target = $region72
        $region71: #{tpu_custom_call.1} parent=11 // pred_region
          %s651 = ssub.s32 128, 128
          %652 = vsyncadd [#allocation27], %s651
          %s654 = sshll.u32 [#allocation26], 4
          %s655 = int_to_ptr.vmem [resolvable:$true] %s654
          %657 = dma.hbm_to_vmem [thread:$0]  %s15, 128, %s655, [#allocation27]
        $region72: #{tpu_custom_call.1} parent=11 // pred_fallthru
          _
        // Predicated region
        $region73: #{tpu_custom_call.1} parent=11 // pred_check
          %p658 = pneg %p402
        $region74: #{tpu_custom_call.1} parent=11 // pred_check_branch
          %660 = sbr.rel (%p658) target = $region76
        $region75: #{tpu_custom_call.1} parent=11 // pred_region
          %s662 = ssub.s32 128, 128
          %663 = vsyncadd [#allocation27], %s662
          %s665 = sshll.u32 [#allocation28], 4
          %s666 = int_to_ptr.vmem [resolvable:$true] %s665
          %668 = dma.hbm_to_vmem [thread:$0]  %s16, 128, %s666, [#allocation27]
        $region76: #{tpu_custom_call.1} parent=11 // pred_fallthru
          _
        // Predicated region
        $region77: #{tpu_custom_call.1} parent=11 // pred_check
          %p669 = pneg %p423
        $region78: #{tpu_custom_call.1} parent=11 // pred_check_branch
          %671 = sbr.rel (%p669) target = $region80
        $region79: #{tpu_custom_call.1} parent=11 // pred_region
          %s673 = ssub.s32 65536, 65536
          %674 = vsyncadd [#allocation30], %s673
          %s675 = sshll.u32 [#allocation29], 4
          %s676 = int_to_ptr.vmem [resolvable:$true] %s675
          %681 = dma.hbm_to_vmem [thread:$0]  %s17, 65536, %s676, [#allocation30], 512, 512, 32
        $region80: #{tpu_custom_call.1} parent=11 // pred_fallthru
          _
        // Predicated region
        $region81: #{tpu_custom_call.1} parent=11 // pred_check
          %p682 = pneg %p444
        $region82: #{tpu_custom_call.1} parent=11 // pred_check_branch
          %684 = sbr.rel (%p682) target = $region84
        $region83: #{tpu_custom_call.1} parent=11 // pred_region
          %s686 = ssub.s32 128, 128
          %687 = vsyncadd [#allocation30], %s686
          %s689 = sshll.u32 [#allocation31], 4
          %s690 = int_to_ptr.vmem [resolvable:$true] %s689
          %692 = dma.hbm_to_vmem [thread:$0]  %s18, 128, %s690, [#allocation30]
        $region84: #{tpu_custom_call.1} parent=11 // pred_fallthru
          _
      $region12: #{tpu_custom_call.1} parent=5 // pred_fallthru
        _
      %p693 = scmp.lt.s32.totalorder %s40, 2
      // Predicated region
      $region85: #{tpu_custom_call.1} parent=5 // pred_check
        %p694 = pneg %p693
      $region86: #{tpu_custom_call.1} parent=5 // pred_check_branch
        %696 = sbr.rel (%p694) target = $region88
      $region87: #{tpu_custom_call.1} parent=5 // pred_region
        // Predicated region
        $region89: #{tpu_custom_call.1} parent=87 // pred_check
          %p697 = pneg %p60
        $region90: #{tpu_custom_call.1} parent=87 // pred_check_branch
          %699 = sbr.rel (%p697) target = $region92
        $region91: #{tpu_custom_call.1} parent=87 // pred_region
          %s700 = sand.u32 %s50, 1
          %s701 = scalar_lea.sflag [#allocation3], %s700
          %s702 = sand.u32 %s50, 1
          %s703 = smul.addr %s702, 8
          %s704 = scalar_lea.vmem [#allocation2], %s703
          %s706 = ssub.s32 128, 128
          %707 = vsyncadd %s701, %s706
          %s708 = smul.addr %s40, 128
          %s709 = scalar_lea.hbm %s0, %s708
          %s711 = sshll.u32 %s704, 4
          %s712 = int_to_ptr.vmem [resolvable:$true] %s711
          %714 = dma.hbm_to_vmem [thread:$0]  %s709, 128, %s712, %s701
        $region92: #{tpu_custom_call.1} parent=87 // pred_fallthru
          _
      $region88: #{tpu_custom_call.1} parent=5 // pred_fallthru
        _
      %p715 = scmp.le.s32.totalorder 1, %s40
      %p716 = scmp.lt.s32.totalorder %s40, 3
      %p717 = pnand %p715, %p716
      %p718 = pneg %p717
      // Predicated region
      $region93: #{tpu_custom_call.1} parent=5 // pred_check
        _
      $region94: #{tpu_custom_call.1} parent=5 // pred_check_branch
        %720 = sbr.rel (%p717) target = $region96
      $region95: #{tpu_custom_call.1} parent=5 // pred_region
        %s721 = ssub.s32 %s40, 1
        %s722 = sand.u32 %s53, 1
        %s723 = scalar_lea.sflag [#allocation3], %s722
        %s724 = sand.u32 %s53, 1
        %s725 = smul.addr %s724, 8
        %s726 = scalar_lea.vmem [#allocation2], %s725
        // Predicated region
        $region97: #{tpu_custom_call.1} parent=95 // pred_check
          %p727 = pneg %p66
        $region98: #{tpu_custom_call.1} parent=95 // pred_check_branch
          %729 = sbr.rel (%p727) target = $region100
        $region99: #{tpu_custom_call.1} parent=95 // pred_region
          %730 = dma.done %s723, 128
        $region100: #{tpu_custom_call.1} parent=95 // pred_fallthru
          _
        // Predicated region
        $region101: #{tpu_custom_call.1} parent=95 // pred_check
          %p731 = pneg %p87
        $region102: #{tpu_custom_call.1} parent=95 // pred_check_branch
          %733 = sbr.rel (%p731) target = $region104
        $region103: #{tpu_custom_call.1} parent=95 // pred_region
          %734 = dma.done [#allocation6], 1024
        $region104: #{tpu_custom_call.1} parent=95 // pred_fallthru
          _
        // Predicated region
        $region105: #{tpu_custom_call.1} parent=95 // pred_check
          %p735 = pneg %p108
        $region106: #{tpu_custom_call.1} parent=95 // pred_check_branch
          %737 = sbr.rel (%p735) target = $region108
        $region107: #{tpu_custom_call.1} parent=95 // pred_region
          %738 = dma.done [#allocation6], 16
        $region108: #{tpu_custom_call.1} parent=95 // pred_fallthru
          _
        // Predicated region
        $region109: #{tpu_custom_call.1} parent=95 // pred_check
          %p739 = pneg %p129
        $region110: #{tpu_custom_call.1} parent=95 // pred_check_branch
          %741 = sbr.rel (%p739) target = $region112
        $region111: #{tpu_custom_call.1} parent=95 // pred_region
          %742 = dma.done [#allocation9], 16
        $region112: #{tpu_custom_call.1} parent=95 // pred_fallthru
          _
        // Predicated region
        $region113: #{tpu_custom_call.1} parent=95 // pred_check
          %p743 = pneg %p150
        $region114: #{tpu_custom_call.1} parent=95 // pred_check_branch
          %745 = sbr.rel (%p743) target = $region116
        $region115: #{tpu_custom_call.1} parent=95 // pred_region
          %746 = dma.done [#allocation9], 16
        $region116: #{tpu_custom_call.1} parent=95 // pred_fallthru
          _
        // Predicated region
        $region117: #{tpu_custom_call.1} parent=95 // pred_check
          %p747 = pneg %p171
        $region118: #{tpu_custom_call.1} parent=95 // pred_check_branch
          %749 = sbr.rel (%p747) target = $region120
        $region119: #{tpu_custom_call.1} parent=95 // pred_region
          %750 = dma.done [#allocation12], 2048
        $region120: #{tpu_custom_call.1} parent=95 // pred_fallthru
          _
        // Predicated region
        $region121: #{tpu_custom_call.1} parent=95 // pred_check
          %p751 = pneg %p192
        $region122: #{tpu_custom_call.1} parent=95 // pred_check_branch
          %753 = sbr.rel (%p751) target = $region124
        $region123: #{tpu_custom_call.1} parent=95 // pred_region
          %754 = dma.done [#allocation12], 32
        $region124: #{tpu_custom_call.1} parent=95 // pred_fallthru
          _
        // Predicated region
        $region125: #{tpu_custom_call.1} parent=95 // pred_check
          %p755 = pneg %p213
        $region126: #{tpu_custom_call.1} parent=95 // pred_check_branch
          %757 = sbr.rel (%p755) target = $region128
        $region127: #{tpu_custom_call.1} parent=95 // pred_region
          %758 = dma.done [#allocation15], 32
        $region128: #{tpu_custom_call.1} parent=95 // pred_fallthru
          _
        // Predicated region
        $region129: #{tpu_custom_call.1} parent=95 // pred_check
          %p759 = pneg %p234
        $region130: #{tpu_custom_call.1} parent=95 // pred_check_branch
          %761 = sbr.rel (%p759) target = $region132
        $region131: #{tpu_custom_call.1} parent=95 // pred_region
          %762 = dma.done [#allocation15], 32
        $region132: #{tpu_custom_call.1} parent=95 // pred_fallthru
          _
        // Predicated region
        $region133: #{tpu_custom_call.1} parent=95 // pred_check
          %p763 = pneg %p255
        $region134: #{tpu_custom_call.1} parent=95 // pred_check_branch
          %765 = sbr.rel (%p763) target = $region136
        $region135: #{tpu_custom_call.1} parent=95 // pred_region
          %766 = dma.done [#allocation18], 8192
        $region136: #{tpu_custom_call.1} parent=95 // pred_fallthru
          _
        // Predicated region
        $region137: #{tpu_custom_call.1} parent=95 // pred_check
          %p767 = pneg %p276
        $region138: #{tpu_custom_call.1} parent=95 // pred_check_branch
          %769 = sbr.rel (%p767) target = $region140
        $region139: #{tpu_custom_call.1} parent=95 // pred_region
          %770 = dma.done [#allocation18], 64
        $region140: #{tpu_custom_call.1} parent=95 // pred_fallthru
          _
        // Predicated region
        $region141: #{tpu_custom_call.1} parent=95 // pred_check
          %p771 = pneg %p297
        $region142: #{tpu_custom_call.1} parent=95 // pred_check_branch
          %773 = sbr.rel (%p771) target = $region144
        $region143: #{tpu_custom_call.1} parent=95 // pred_region
          %774 = dma.done [#allocation21], 64
        $region144: #{tpu_custom_call.1} parent=95 // pred_fallthru
          _
        // Predicated region
        $region145: #{tpu_custom_call.1} parent=95 // pred_check
          %p775 = pneg %p318
        $region146: #{tpu_custom_call.1} parent=95 // pred_check_branch
          %777 = sbr.rel (%p775) target = $region148
        $region147: #{tpu_custom_call.1} parent=95 // pred_region
          %778 = dma.done [#allocation21], 64
        $region148: #{tpu_custom_call.1} parent=95 // pred_fallthru
          _
        // Predicated region
        $region149: #{tpu_custom_call.1} parent=95 // pred_check
          %p779 = pneg %p339
        $region150: #{tpu_custom_call.1} parent=95 // pred_check_branch
          %781 = sbr.rel (%p779) target = $region152
        $region151: #{tpu_custom_call.1} parent=95 // pred_region
          %782 = dma.done [#allocation24], 32768
        $region152: #{tpu_custom_call.1} parent=95 // pred_fallthru
          _
        // Predicated region
        $region153: #{tpu_custom_call.1} parent=95 // pred_check
          %p783 = pneg %p360
        $region154: #{tpu_custom_call.1} parent=95 // pred_check_branch
          %785 = sbr.rel (%p783) target = $region156
        $region155: #{tpu_custom_call.1} parent=95 // pred_region
          %786 = dma.done [#allocation24], 128
        $region156: #{tpu_custom_call.1} parent=95 // pred_fallthru
          _
        // Predicated region
        $region157: #{tpu_custom_call.1} parent=95 // pred_check
          %p787 = pneg %p381
        $region158: #{tpu_custom_call.1} parent=95 // pred_check_branch
          %789 = sbr.rel (%p787) target = $region160
        $region159: #{tpu_custom_call.1} parent=95 // pred_region
          %790 = dma.done [#allocation27], 128
        $region160: #{tpu_custom_call.1} parent=95 // pred_fallthru
          _
        // Predicated region
        $region161: #{tpu_custom_call.1} parent=95 // pred_check
          %p791 = pneg %p402
        $region162: #{tpu_custom_call.1} parent=95 // pred_check_branch
          %793 = sbr.rel (%p791) target = $region164
        $region163: #{tpu_custom_call.1} parent=95 // pred_region
          %794 = dma.done [#allocation27], 128
        $region164: #{tpu_custom_call.1} parent=95 // pred_fallthru
          _
        // Predicated region
        $region165: #{tpu_custom_call.1} parent=95 // pred_check
          %p795 = pneg %p423
        $region166: #{tpu_custom_call.1} parent=95 // pred_check_branch
          %797 = sbr.rel (%p795) target = $region168
        $region167: #{tpu_custom_call.1} parent=95 // pred_region
          %798 = dma.done [#allocation30], 65536
        $region168: #{tpu_custom_call.1} parent=95 // pred_fallthru
          _
        // Predicated region
        $region169: #{tpu_custom_call.1} parent=95 // pred_check
          %p799 = pneg %p444
        $region170: #{tpu_custom_call.1} parent=95 // pred_check_branch
          %801 = sbr.rel (%p799) target = $region172
        $region171: #{tpu_custom_call.1} parent=95 // pred_region
          %802 = dma.done [#allocation30], 128
        $region172: #{tpu_custom_call.1} parent=95 // pred_fallthru
          _
        %s803 = sand.u32 %s53, 1
        %s804 = scalar_lea.sflag [#allocation3], %s803
        %s805 = sand.u32 %s53, 1
        %s806 = smul.addr %s805, 8
        %s807 = scalar_lea.vmem [#allocation2], %s806
        %p808 = pneg %p66
        %p809 = pneg %p63
        %p810 = pneg %p87
        %p811 = pneg %p84
        %p812 = pneg %p108
        %p813 = pneg %p105
        %p814 = pneg %p129
        %p815 = pneg %p126
        %p816 = pneg %p150
        %p817 = pneg %p147
        %p818 = pneg %p171
        %p819 = pneg %p168
        %p820 = pneg %p192
        %p821 = pneg %p189
        %p822 = pneg %p213
        %p823 = pneg %p210
        %p824 = pneg %p234
        %p825 = pneg %p231
        %p826 = pneg %p255
        %p827 = pneg %p252
        %p828 = pneg %p276
        %p829 = pneg %p273
        %p830 = pneg %p297
        %p831 = pneg %p294
        %p832 = pneg %p318
        %p833 = pneg %p315
        %p834 = pneg %p339
        %p835 = pneg %p336
        %p836 = pneg %p360
        %p837 = pneg %p357
        %p838 = pneg %p381
        %p839 = pneg %p378
        %p840 = pneg %p402
        %p841 = pneg %p399
        %p842 = pneg %p423
        %p843 = pneg %p420
        %p844 = pneg %p444
        %p845 = pneg %p441
        %p846 = pneg %p470
        %p847 = pneg %p467
        %s848 = sand.u32 %s457, 1
        %s849 = scalar_lea.sflag [#allocation4], %s848
        %s850 = sand.u32 %s457, 1
        %s851 = smul.addr %s850, 64
        %s852 = scalar_lea.vmem [#allocation32], %s851
        %v854 = vld [vmem:[%s726] sm:$0xff]
        %v855 = vpack.c.bf16 %v854, %v854
        %v856 = vld [vmem:[#allocation5] sm:$0xf]
        %v857 = vld [vmem:[#allocation5 + $0x4] sm:$0xf]
        %v858 = vld [vmem:[#allocation5 + $0x8] sm:$0xf]
        %v859 = vld [vmem:[#allocation5 + $0xc] sm:$0xf]
        %v860 = vld [vmem:[#allocation5 + $0x10] sm:$0xf]
        %v861 = vld [vmem:[#allocation5 + $0x14] sm:$0xf]
        %v862 = vld [vmem:[#allocation5 + $0x18] sm:$0xf]
        %v863 = vld [vmem:[#allocation5 + $0x1c] sm:$0xf]
        %v864 = vld [vmem:[#allocation5 + $0x20] sm:$0xf]
        %v865 = vld [vmem:[#allocation5 + $0x24] sm:$0xf]
        %v866 = vld [vmem:[#allocation5 + $0x28] sm:$0xf]
        %v867 = vld [vmem:[#allocation5 + $0x2c] sm:$0xf]
        %v868 = vld [vmem:[#allocation5 + $0x30] sm:$0xf]
        %v869 = vld [vmem:[#allocation5 + $0x34] sm:$0xf]
        %v870 = vld [vmem:[#allocation5 + $0x38] sm:$0xf]
        %v871 = vld [vmem:[#allocation5 + $0x3c] sm:$0xf]
        %v872 = vld [vmem:[#allocation7] sm:$0x1]
        %v874 = vlaneseq
        %v875 = vshrl.u32 %v874, 7
        %v876 = vsub.s32 0, %v875
        %v877 = vrot.slane %v872, %v876
        %v895 = vunpack.c.l.b16 %v856
        %v896 = vunpack.c.l.b16 %v857
        %v897 = vunpack.c.l.b16 %v858
        %v898 = vunpack.c.l.b16 %v859
        %v899 = vunpack.c.l.b16 %v860
        %v900 = vunpack.c.l.b16 %v861
        %v901 = vunpack.c.l.b16 %v862
        %v902 = vunpack.c.l.b16 %v863
        %v903 = vunpack.c.l.b16 %v864
        %v904 = vunpack.c.l.b16 %v865
        %v905 = vunpack.c.l.b16 %v866
        %v906 = vunpack.c.l.b16 %v867
        %v907 = vunpack.c.l.b16 %v868
        %v908 = vunpack.c.l.b16 %v869
        %v909 = vunpack.c.l.b16 %v870
        %v910 = vunpack.c.l.b16 %v871
        %v911 = vpack.c.b16 %v896, %v895
        %v912 = vpack.c.b16 %v898, %v897
        %v913 = vpack.c.b16 %v900, %v899
        %v914 = vpack.c.b16 %v902, %v901
        %v915 = vpack.c.b16 %v904, %v903
        %v916 = vpack.c.b16 %v906, %v905
        %v917 = vpack.c.b16 %v908, %v907
        %v918 = vpack.c.b16 %v910, %v909
        %927 = vmatprep.subr.bf16.mxu0 0
        %928 = vmatpush1.bf16.msra.mxu0 %v911
        %929 = vmatprep.subr.bf16.mxu0 0
        %930 = vmatpush1.bf16.msra.mxu0 %v912
        %931 = vmatprep.subr.bf16.mxu0 0
        %932 = vmatpush1.bf16.msra.mxu0 %v913
        %933 = vmatprep.subr.bf16.mxu0 0
        %934 = vmatpush1.bf16.msra.mxu0 %v914
        %935 = vmatprep.subr.bf16.mxu0 0
        %936 = vmatpush1.bf16.msra.mxu0 %v915
        %937 = vmatprep.subr.bf16.mxu0 0
        %938 = vmatpush1.bf16.msra.mxu0 %v916
        %939 = vmatprep.subr.bf16.mxu0 0
        %940 = vmatpush1.bf16.msra.mxu0 %v917
        %941 = vmatprep.subr.bf16.mxu0 0
        %942 = vmatpush1.bf16.msra.mxu0 %v918
        %943 = vmatprep.subr.bf16.mxu0 0
        %944 = vmatpush1.bf16.msra.mxu0 0
        %945 = vmatprep.subr.bf16.mxu0 0
        %946 = vmatpush1.bf16.msra.mxu0 0
        %947 = vmatprep.subr.bf16.mxu0 0
        %948 = vmatpush1.bf16.msra.mxu0 0
        %949 = vmatprep.subr.bf16.mxu0 0
        %950 = vmatpush1.bf16.msra.mxu0 0
        %951 = vmatprep.subr.bf16.mxu0 0
        %952 = vmatpush1.bf16.msra.mxu0 0
        %953 = vmatprep.subr.bf16.mxu0 0
        %954 = vmatpush1.bf16.msra.mxu0 0
        %955 = vmatprep.subr.bf16.mxu0 0
        %956 = vmatpush1.bf16.msra.mxu0 0
        %957 = vmatprep.subr.bf16.mxu0 0
        %958 = vmatpush1.bf16.msra.mxu0 0
        %959 = vmatprep.mubr.bf16.mxu0 0
        %960 = vmatmul.mubr.bf16.gmra.mrb[0].mxu0 %v855
        %v961 = vpop.f32.mrb[0].mxu0
        %v962 = vadd.f32 %v877, %v961
        %v963 = vpop.f32.mrb[0].mxu0
        %v964 = vpop.f32.mrb[0].mxu0
        %v965 = vpop.f32.mrb[0].mxu0
        %966 = vdwg.mxu0
        %v967 = vrot.slane %v962, 4
        %v968 = vadd.f32 %v962, %v967
        %v969 = vrot.slane %v968, 2
        %v970 = vadd.f32 %v968, %v969
        %v971 = vrot.slane %v970, 1
        %v972 = vadd.f32 %v970, %v971
        %v973 = vrcp.pop 8.0
        %v974 = vmul.f32 %v972, %v973
        %v975 = vsub.f32 %v962, %v974
        %v976 = vmul.f32 %v975, %v975
        %v977 = vrot.slane %v976, 4
        %v978 = vadd.f32 %v976, %v977
        %v979 = vrot.slane %v978, 2
        %v980 = vadd.f32 %v978, %v979
        %v981 = vrot.slane %v980, 1
        %v982 = vadd.f32 %v980, %v981
        %v983 = vmul.f32 %v982, %v973
        %v984 = vadd.f32 %v983, 0.8
        %v985 = vrsqrt.pop %v984
        %v986 = vmul.f32 %v975, %v985
        %v987 = vld [vmem:[#allocation8] sm:$0x1]
        %v989 = vlaneseq
        %v990 = vshrl.u32 %v989, 7
        %v991 = vsub.s32 0, %v990
        %v992 = vrot.slane %v987, %v991
        %v994 = vmul.f32 %v986, %v992
        %v995 = vld [vmem:[#allocation10] sm:$0x1]
        %v997 = vlaneseq
        %v998 = vshrl.u32 %v997, 7
        %v999 = vsub.s32 0, %v998
        %v1000 = vrot.slane %v995, %v999
        %v1002 = vadd.f32 %v994, %v1000
        %vm1003 = vcmp.gt.f32.partialorder %v1002, 0.0
        %v1004 = vmul.f32 %v1002, 0.2
        %v1005 = vsel %vm1003, %v1002, %v1004
        %v1006 = vpack.c.bf16 %v1005, %v1005
        %v1007 = vld [vmem:[#allocation11] sm:$0xff]
        %v1008 = vld [vmem:[#allocation11 + $0x8] sm:$0xff]
        %v1009 = vld [vmem:[#allocation11 + $0x10] sm:$0xff]
        %v1010 = vld [vmem:[#allocation11 + $0x18] sm:$0xff]
        %v1011 = vld [vmem:[#allocation11 + $0x20] sm:$0xff]
        %v1012 = vld [vmem:[#allocation11 + $0x28] sm:$0xff]
        %v1013 = vld [vmem:[#allocation11 + $0x30] sm:$0xff]
        %v1014 = vld [vmem:[#allocation11 + $0x38] sm:$0xff]
        %v1015 = vld [vmem:[#allocation11 + $0x40] sm:$0xff]
        %v1016 = vld [vmem:[#allocation11 + $0x48] sm:$0xff]
        %v1017 = vld [vmem:[#allocation11 + $0x50] sm:$0xff]
        %v1018 = vld [vmem:[#allocation11 + $0x58] sm:$0xff]
        %v1019 = vld [vmem:[#allocation11 + $0x60] sm:$0xff]
        %v1020 = vld [vmem:[#allocation11 + $0x68] sm:$0xff]
        %v1021 = vld [vmem:[#allocation11 + $0x70] sm:$0xff]
        %v1022 = vld [vmem:[#allocation11 + $0x78] sm:$0xff]
        %v1023 = vld [vmem:[#allocation13] sm:$0x3]
        %v1025 = vlaneseq
        %v1026 = vshrl.u32 %v1025, 7
        %v1027 = vsub.s32 0, %v1026
        %v1028 = vrot.slane %v1023, %v1027
        %v1029 = vlaneseq
        %v1030 = vshrl.u32 %v1029, 7
        %v1031 = vsub.s32 1, %v1030
        %v1032 = vrot.slane %v1023, %v1031
        %v1051 = vunpack.c.l.b16 %v1007
        %v1052 = vunpack.c.h.b16 %v1007
        %v1053 = vunpack.c.l.b16 %v1008
        %v1054 = vunpack.c.h.b16 %v1008
        %v1055 = vunpack.c.l.b16 %v1009
        %v1056 = vunpack.c.h.b16 %v1009
        %v1057 = vunpack.c.l.b16 %v1010
        %v1058 = vunpack.c.h.b16 %v1010
        %v1059 = vunpack.c.l.b16 %v1011
        %v1060 = vunpack.c.h.b16 %v1011
        %v1061 = vunpack.c.l.b16 %v1012
        %v1062 = vunpack.c.h.b16 %v1012
        %v1063 = vunpack.c.l.b16 %v1013
        %v1064 = vunpack.c.h.b16 %v1013
        %v1065 = vunpack.c.l.b16 %v1014
        %v1066 = vunpack.c.h.b16 %v1014
        %v1067 = vunpack.c.l.b16 %v1015
        %v1068 = vunpack.c.h.b16 %v1015
        %v1069 = vunpack.c.l.b16 %v1016
        %v1070 = vunpack.c.h.b16 %v1016
        %v1071 = vunpack.c.l.b16 %v1017
        %v1072 = vunpack.c.h.b16 %v1017
        %v1073 = vunpack.c.l.b16 %v1018
        %v1074 = vunpack.c.h.b16 %v1018
        %v1075 = vunpack.c.l.b16 %v1019
        %v1076 = vunpack.c.h.b16 %v1019
        %v1077 = vunpack.c.l.b16 %v1020
        %v1078 = vunpack.c.h.b16 %v1020
        %v1079 = vunpack.c.l.b16 %v1021
        %v1080 = vunpack.c.h.b16 %v1021
        %v1081 = vunpack.c.l.b16 %v1022
        %v1082 = vunpack.c.h.b16 %v1022
        %v1083 = vpack.c.b16 %v1053, %v1051
        %v1084 = vpack.c.b16 %v1054, %v1052
        %v1085 = vpack.c.b16 %v1057, %v1055
        %v1086 = vpack.c.b16 %v1058, %v1056
        %v1087 = vpack.c.b16 %v1061, %v1059
        %v1088 = vpack.c.b16 %v1062, %v1060
        %v1089 = vpack.c.b16 %v1065, %v1063
        %v1090 = vpack.c.b16 %v1066, %v1064
        %v1091 = vpack.c.b16 %v1069, %v1067
        %v1092 = vpack.c.b16 %v1070, %v1068
        %v1093 = vpack.c.b16 %v1073, %v1071
        %v1094 = vpack.c.b16 %v1074, %v1072
        %v1095 = vpack.c.b16 %v1077, %v1075
        %v1096 = vpack.c.b16 %v1078, %v1076
        %v1097 = vpack.c.b16 %v1081, %v1079
        %v1098 = vpack.c.b16 %v1082, %v1080
        %1115 = vmatprep.subr.bf16.mxu0 %v1084
        %1116 = vmatpush1.bf16.msra.mxu0 %v1083
        %1117 = vmatprep.subr.bf16.mxu0 %v1086
        %1118 = vmatpush1.bf16.msra.mxu0 %v1085
        %1119 = vmatprep.subr.bf16.mxu0 %v1088
        %1120 = vmatpush1.bf16.msra.mxu0 %v1087
        %1121 = vmatprep.subr.bf16.mxu0 %v1090
        %1122 = vmatpush1.bf16.msra.mxu0 %v1089
        %1123 = vmatprep.subr.bf16.mxu0 %v1092
        %1124 = vmatpush1.bf16.msra.mxu0 %v1091
        %1125 = vmatprep.subr.bf16.mxu0 %v1094
        %1126 = vmatpush1.bf16.msra.mxu0 %v1093
        %1127 = vmatprep.subr.bf16.mxu0 %v1096
        %1128 = vmatpush1.bf16.msra.mxu0 %v1095
        %1129 = vmatprep.subr.bf16.mxu0 %v1098
        %1130 = vmatpush1.bf16.msra.mxu0 %v1097
        %1131 = vmatprep.subr.bf16.mxu0 0
        %1132 = vmatpush1.bf16.msra.mxu0 0
        %1133 = vmatprep.subr.bf16.mxu0 0
        %1134 = vmatpush1.bf16.msra.mxu0 0
        %1135 = vmatprep.subr.bf16.mxu0 0
        %1136 = vmatpush1.bf16.msra.mxu0 0
        %1137 = vmatprep.subr.bf16.mxu0 0
        %1138 = vmatpush1.bf16.msra.mxu0 0
        %1139 = vmatprep.subr.bf16.mxu0 0
        %1140 = vmatpush1.bf16.msra.mxu0 0
        %1141 = vmatprep.subr.bf16.mxu0 0
        %1142 = vmatpush1.bf16.msra.mxu0 0
        %1143 = vmatprep.subr.bf16.mxu0 0
        %1144 = vmatpush1.bf16.msra.mxu0 0
        %1145 = vmatprep.subr.bf16.mxu0 0
        %1146 = vmatpush1.bf16.msra.mxu0 0
        %1147 = vmatprep.mubr.bf16.mxu0 0
        %1148 = vmatmul.mubr.bf16.gmra.mrb[0].mxu0 %v1006
        %v1149 = vpop.f32.mrb[0].mxu0
        %v1150 = vadd.f32 %v1028, %v1149
        %v1151 = vpop.f32.mrb[0].mxu0
        %v1152 = vadd.f32 %v1032, %v1151
        %v1153 = vpop.f32.mrb[0].mxu0
        %v1154 = vpop.f32.mrb[0].mxu0
        %1155 = vdwg.mxu0
        %v1156 = vrot.slane %v1150, 4
        %v1157 = vadd.f32 %v1150, %v1156
        %v1158 = vrot.slane %v1157, 2
        %v1159 = vadd.f32 %v1157, %v1158
        %v1160 = vrot.slane %v1159, 1
        %v1161 = vadd.f32 %v1159, %v1160
        %v1162 = vrot.slane %v1152, 4
        %v1163 = vadd.f32 %v1152, %v1162
        %v1164 = vrot.slane %v1163, 2
        %v1165 = vadd.f32 %v1163, %v1164
        %v1166 = vrot.slane %v1165, 1
        %v1167 = vadd.f32 %v1165, %v1166
        %v1168 = vmul.f32 %v1161, %v973
        %v1169 = vmul.f32 %v1167, %v973
        %v1170 = vsub.f32 %v1150, %v1168
        %v1171 = vsub.f32 %v1152, %v1169
        %v1172 = vmul.f32 %v1170, %v1170
        %v1173 = vmul.f32 %v1171, %v1171
        %v1174 = vrot.slane %v1172, 4
        %v1175 = vadd.f32 %v1172, %v1174
        %v1176 = vrot.slane %v1175, 2
        %v1177 = vadd.f32 %v1175, %v1176
        %v1178 = vrot.slane %v1177, 1
        %v1179 = vadd.f32 %v1177, %v1178
        %v1180 = vrot.slane %v1173, 4
        %v1181 = vadd.f32 %v1173, %v1180
        %v1182 = vrot.slane %v1181, 2
        %v1183 = vadd.f32 %v1181, %v1182
        %v1184 = vrot.slane %v1183, 1
        %v1185 = vadd.f32 %v1183, %v1184
        %v1186 = vmul.f32 %v1179, %v973
        %v1187 = vmul.f32 %v1185, %v973
        %v1188 = vadd.f32 %v1186, 0.8
        %v1189 = vadd.f32 %v1187, 0.8
        %v1190 = vrsqrt.pop %v1188
        %v1191 = vrsqrt.pop %v1189
        %v1192 = vmul.f32 %v1170, %v1190
        %v1193 = vmul.f32 %v1171, %v1191
        %v1194 = vld [vmem:[#allocation14] sm:$0x3]
        %v1196 = vlaneseq
        %v1197 = vshrl.u32 %v1196, 7
        %v1198 = vsub.s32 0, %v1197
        %v1199 = vrot.slane %v1194, %v1198
        %v1200 = vlaneseq
        %v1201 = vshrl.u32 %v1200, 7
        %v1202 = vsub.s32 1, %v1201
        %v1203 = vrot.slane %v1194, %v1202
        %v1206 = vmul.f32 %v1192, %v1199
        %v1207 = vmul.f32 %v1193, %v1203
        %v1208 = vld [vmem:[#allocation16] sm:$0x3]
        %v1210 = vlaneseq
        %v1211 = vshrl.u32 %v1210, 7
        %v1212 = vsub.s32 0, %v1211
        %v1213 = vrot.slane %v1208, %v1212
        %v1214 = vlaneseq
        %v1215 = vshrl.u32 %v1214, 7
        %v1216 = vsub.s32 1, %v1215
        %v1217 = vrot.slane %v1208, %v1216
        %v1220 = vadd.f32 %v1206, %v1213
        %v1221 = vadd.f32 %v1207, %v1217
        %vm1222 = vcmp.gt.f32.partialorder %v1220, 0.0
        %vm1223 = vcmp.gt.f32.partialorder %v1221, 0.0
        %v1224 = vmul.f32 %v1220, 0.2
        %v1225 = vmul.f32 %v1221, 0.2
        %v1226 = vsel %vm1222, %v1220, %v1224
        %v1227 = vsel %vm1223, %v1221, %v1225
        %v1228 = vpack.c.bf16 %v1226, %v1226
        %v1229 = vpack.c.bf16 %v1227, %v1227
        %v1230 = vld [vmem:[#allocation17] sm:$0xff]
        %v1231 = vld [vmem:[#allocation17 + $0x8] sm:$0xff]
        %v1232 = vld [vmem:[#allocation17 + $0x10] sm:$0xff]
        %v1233 = vld [vmem:[#allocation17 + $0x18] sm:$0xff]
        %v1234 = vld [vmem:[#allocation17 + $0x20] sm:$0xff]
        %v1235 = vld [vmem:[#allocation17 + $0x28] sm:$0xff]
        %v1236 = vld [vmem:[#allocation17 + $0x30] sm:$0xff]
        %v1237 = vld [vmem:[#allocation17 + $0x38] sm:$0xff]
        %v1238 = vld [vmem:[#allocation17 + $0x40] sm:$0xff]
        %v1239 = vld [vmem:[#allocation17 + $0x48] sm:$0xff]
        %v1240 = vld [vmem:[#allocation17 + $0x50] sm:$0xff]
        %v1241 = vld [vmem:[#allocation17 + $0x58] sm:$0xff]
        %v1242 = vld [vmem:[#allocation17 + $0x60] sm:$0xff]
        %v1243 = vld [vmem:[#allocation17 + $0x68] sm:$0xff]
        %v1244 = vld [vmem:[#allocation17 + $0x70] sm:$0xff]
        %v1245 = vld [vmem:[#allocation17 + $0x78] sm:$0xff]
        %v1246 = vld [vmem:[#allocation17 + $0x80] sm:$0xff]
        %v1247 = vld [vmem:[#allocation17 + $0x88] sm:$0xff]
        %v1248 = vld [vmem:[#allocation17 + $0x90] sm:$0xff]
        %v1249 = vld [vmem:[#allocation17 + $0x98] sm:$0xff]
        %v1250 = vld [vmem:[#allocation17 + $0xa0] sm:$0xff]
        %v1251 = vld [vmem:[#allocation17 + $0xa8] sm:$0xff]
        %v1252 = vld [vmem:[#allocation17 + $0xb0] sm:$0xff]
        %v1253 = vld [vmem:[#allocation17 + $0xb8] sm:$0xff]
        %v1254 = vld [vmem:[#allocation17 + $0xc0] sm:$0xff]
        %v1255 = vld [vmem:[#allocation17 + $0xc8] sm:$0xff]
        %v1256 = vld [vmem:[#allocation17 + $0xd0] sm:$0xff]
        %v1257 = vld [vmem:[#allocation17 + $0xd8] sm:$0xff]
        %v1258 = vld [vmem:[#allocation17 + $0xe0] sm:$0xff]
        %v1259 = vld [vmem:[#allocation17 + $0xe8] sm:$0xff]
        %v1260 = vld [vmem:[#allocation17 + $0xf0] sm:$0xff]
        %v1261 = vld [vmem:[#allocation17 + $0xf8] sm:$0xff]
        %v1262 = vld [vmem:[#allocation17 + $0x100] sm:$0xff]
        %v1263 = vld [vmem:[#allocation17 + $0x108] sm:$0xff]
        %v1264 = vld [vmem:[#allocation17 + $0x110] sm:$0xff]
        %v1265 = vld [vmem:[#allocation17 + $0x118] sm:$0xff]
        %v1266 = vld [vmem:[#allocation17 + $0x120] sm:$0xff]
        %v1267 = vld [vmem:[#allocation17 + $0x128] sm:$0xff]
        %v1268 = vld [vmem:[#allocation17 + $0x130] sm:$0xff]
        %v1269 = vld [vmem:[#allocation17 + $0x138] sm:$0xff]
        %v1270 = vld [vmem:[#allocation17 + $0x140] sm:$0xff]
        %v1271 = vld [vmem:[#allocation17 + $0x148] sm:$0xff]
        %v1272 = vld [vmem:[#allocation17 + $0x150] sm:$0xff]
        %v1273 = vld [vmem:[#allocation17 + $0x158] sm:$0xff]
        %v1274 = vld [vmem:[#allocation17 + $0x160] sm:$0xff]
        %v1275 = vld [vmem:[#allocation17 + $0x168] sm:$0xff]
        %v1276 = vld [vmem:[#allocation17 + $0x170] sm:$0xff]
        %v1277 = vld [vmem:[#allocation17 + $0x178] sm:$0xff]
        %v1278 = vld [vmem:[#allocation17 + $0x180] sm:$0xff]
        %v1279 = vld [vmem:[#allocation17 + $0x188] sm:$0xff]
        %v1280 = vld [vmem:[#allocation17 + $0x190] sm:$0xff]
        %v1281 = vld [vmem:[#allocation17 + $0x198] sm:$0xff]
        %v1282 = vld [vmem:[#allocation17 + $0x1a0] sm:$0xff]
        %v1283 = vld [vmem:[#allocation17 + $0x1a8] sm:$0xff]
        %v1284 = vld [vmem:[#allocation17 + $0x1b0] sm:$0xff]
        %v1285 = vld [vmem:[#allocation17 + $0x1b8] sm:$0xff]
        %v1286 = vld [vmem:[#allocation17 + $0x1c0] sm:$0xff]
        %v1287 = vld [vmem:[#allocation17 + $0x1c8] sm:$0xff]
        %v1288 = vld [vmem:[#allocation17 + $0x1d0] sm:$0xff]
        %v1289 = vld [vmem:[#allocation17 + $0x1d8] sm:$0xff]
        %v1290 = vld [vmem:[#allocation17 + $0x1e0] sm:$0xff]
        %v1291 = vld [vmem:[#allocation17 + $0x1e8] sm:$0xff]
        %v1292 = vld [vmem:[#allocation17 + $0x1f0] sm:$0xff]
        %v1293 = vld [vmem:[#allocation17 + $0x1f8] sm:$0xff]
        %v1294 = vld [vmem:[#allocation19] sm:$0xf]
        %v1296 = vlaneseq
        %v1297 = vshrl.u32 %v1296, 7
        %v1298 = vsub.s32 0, %v1297
        %v1299 = vrot.slane %v1294, %v1298
        %v1300 = vlaneseq
        %v1301 = vshrl.u32 %v1300, 7
        %v1302 = vsub.s32 1, %v1301
        %v1303 = vrot.slane %v1294, %v1302
        %v1304 = vlaneseq
        %v1305 = vshrl.u32 %v1304, 7
        %v1306 = vsub.s32 2, %v1305
        %v1307 = vrot.slane %v1294, %v1306
        %v1308 = vlaneseq
        %v1309 = vshrl.u32 %v1308, 7
        %v1310 = vsub.s32 3, %v1309
        %v1311 = vrot.slane %v1294, %v1310
        %v1380 = vunpack.c.l.b16 %v1230
        %v1381 = vunpack.c.h.b16 %v1230
        %v1382 = vunpack.c.l.b16 %v1231
        %v1383 = vunpack.c.h.b16 %v1231
        %v1384 = vunpack.c.l.b16 %v1232
        %v1385 = vunpack.c.h.b16 %v1232
        %v1386 = vunpack.c.l.b16 %v1233
        %v1387 = vunpack.c.h.b16 %v1233
        %v1388 = vunpack.c.l.b16 %v1234
        %v1389 = vunpack.c.h.b16 %v1234
        %v1390 = vunpack.c.l.b16 %v1235
        %v1391 = vunpack.c.h.b16 %v1235
        %v1392 = vunpack.c.l.b16 %v1236
        %v1393 = vunpack.c.h.b16 %v1236
        %v1394 = vunpack.c.l.b16 %v1237
        %v1395 = vunpack.c.h.b16 %v1237
        %v1396 = vunpack.c.l.b16 %v1238
        %v1397 = vunpack.c.h.b16 %v1238
        %v1398 = vunpack.c.l.b16 %v1239
        %v1399 = vunpack.c.h.b16 %v1239
        %v1400 = vunpack.c.l.b16 %v1240
        %v1401 = vunpack.c.h.b16 %v1240
        %v1402 = vunpack.c.l.b16 %v1241
        %v1403 = vunpack.c.h.b16 %v1241
        %v1404 = vunpack.c.l.b16 %v1242
        %v1405 = vunpack.c.h.b16 %v1242
        %v1406 = vunpack.c.l.b16 %v1243
        %v1407 = vunpack.c.h.b16 %v1243
        %v1408 = vunpack.c.l.b16 %v1244
        %v1409 = vunpack.c.h.b16 %v1244
        %v1410 = vunpack.c.l.b16 %v1245
        %v1411 = vunpack.c.h.b16 %v1245
        %v1412 = vunpack.c.l.b16 %v1246
        %v1413 = vunpack.c.h.b16 %v1246
        %v1414 = vunpack.c.l.b16 %v1247
        %v1415 = vunpack.c.h.b16 %v1247
        %v1416 = vunpack.c.l.b16 %v1248
        %v1417 = vunpack.c.h.b16 %v1248
        %v1418 = vunpack.c.l.b16 %v1249
        %v1419 = vunpack.c.h.b16 %v1249
        %v1420 = vunpack.c.l.b16 %v1250
        %v1421 = vunpack.c.h.b16 %v1250
        %v1422 = vunpack.c.l.b16 %v1251
        %v1423 = vunpack.c.h.b16 %v1251
        %v1424 = vunpack.c.l.b16 %v1252
        %v1425 = vunpack.c.h.b16 %v1252
        %v1426 = vunpack.c.l.b16 %v1253
        %v1427 = vunpack.c.h.b16 %v1253
        %v1428 = vunpack.c.l.b16 %v1254
        %v1429 = vunpack.c.h.b16 %v1254
        %v1430 = vunpack.c.l.b16 %v1255
        %v1431 = vunpack.c.h.b16 %v1255
        %v1432 = vunpack.c.l.b16 %v1256
        %v1433 = vunpack.c.h.b16 %v1256
        %v1434 = vunpack.c.l.b16 %v1257
        %v1435 = vunpack.c.h.b16 %v1257
        %v1436 = vunpack.c.l.b16 %v1258
        %v1437 = vunpack.c.h.b16 %v1258
        %v1438 = vunpack.c.l.b16 %v1259
        %v1439 = vunpack.c.h.b16 %v1259
        %v1440 = vunpack.c.l.b16 %v1260
        %v1441 = vunpack.c.h.b16 %v1260
        %v1442 = vunpack.c.l.b16 %v1261
        %v1443 = vunpack.c.h.b16 %v1261
        %v1444 = vunpack.c.l.b16 %v1262
        %v1445 = vunpack.c.h.b16 %v1262
        %v1446 = vunpack.c.l.b16 %v1263
        %v1447 = vunpack.c.h.b16 %v1263
        %v1448 = vunpack.c.l.b16 %v1264
        %v1449 = vunpack.c.h.b16 %v1264
        %v1450 = vunpack.c.l.b16 %v1265
        %v1451 = vunpack.c.h.b16 %v1265
        %v1452 = vunpack.c.l.b16 %v1266
        %v1453 = vunpack.c.h.b16 %v1266
        %v1454 = vunpack.c.l.b16 %v1267
        %v1455 = vunpack.c.h.b16 %v1267
        %v1456 = vunpack.c.l.b16 %v1268
        %v1457 = vunpack.c.h.b16 %v1268
        %v1458 = vunpack.c.l.b16 %v1269
        %v1459 = vunpack.c.h.b16 %v1269
        %v1460 = vunpack.c.l.b16 %v1270
        %v1461 = vunpack.c.h.b16 %v1270
        %v1462 = vunpack.c.l.b16 %v1271
        %v1463 = vunpack.c.h.b16 %v1271
        %v1464 = vunpack.c.l.b16 %v1272
        %v1465 = vunpack.c.h.b16 %v1272
        %v1466 = vunpack.c.l.b16 %v1273
        %v1467 = vunpack.c.h.b16 %v1273
        %v1468 = vunpack.c.l.b16 %v1274
        %v1469 = vunpack.c.h.b16 %v1274
        %v1470 = vunpack.c.l.b16 %v1275
        %v1471 = vunpack.c.h.b16 %v1275
        %v1472 = vunpack.c.l.b16 %v1276
        %v1473 = vunpack.c.h.b16 %v1276
        %v1474 = vunpack.c.l.b16 %v1277
        %v1475 = vunpack.c.h.b16 %v1277
        %v1476 = vunpack.c.l.b16 %v1278
        %v1477 = vunpack.c.h.b16 %v1278
        %v1478 = vunpack.c.l.b16 %v1279
        %v1479 = vunpack.c.h.b16 %v1279
        %v1480 = vunpack.c.l.b16 %v1280
        %v1481 = vunpack.c.h.b16 %v1280
        %v1482 = vunpack.c.l.b16 %v1281
        %v1483 = vunpack.c.h.b16 %v1281
        %v1484 = vunpack.c.l.b16 %v1282
        %v1485 = vunpack.c.h.b16 %v1282
        %v1486 = vunpack.c.l.b16 %v1283
        %v1487 = vunpack.c.h.b16 %v1283
        %v1488 = vunpack.c.l.b16 %v1284
        %v1489 = vunpack.c.h.b16 %v1284
        %v1490 = vunpack.c.l.b16 %v1285
        %v1491 = vunpack.c.h.b16 %v1285
        %v1492 = vunpack.c.l.b16 %v1286
        %v1493 = vunpack.c.h.b16 %v1286
        %v1494 = vunpack.c.l.b16 %v1287
        %v1495 = vunpack.c.h.b16 %v1287
        %v1496 = vunpack.c.l.b16 %v1288
        %v1497 = vunpack.c.h.b16 %v1288
        %v1498 = vunpack.c.l.b16 %v1289
        %v1499 = vunpack.c.h.b16 %v1289
        %v1500 = vunpack.c.l.b16 %v1290
        %v1501 = vunpack.c.h.b16 %v1290
        %v1502 = vunpack.c.l.b16 %v1291
        %v1503 = vunpack.c.h.b16 %v1291
        %v1504 = vunpack.c.l.b16 %v1292
        %v1505 = vunpack.c.h.b16 %v1292
        %v1506 = vunpack.c.l.b16 %v1293
        %v1507 = vunpack.c.h.b16 %v1293
        %v1508 = vpack.c.b16 %v1384, %v1380
        %v1509 = vpack.c.b16 %v1385, %v1381
        %v1510 = vpack.c.b16 %v1386, %v1382
        %v1511 = vpack.c.b16 %v1387, %v1383
        %v1512 = vpack.c.b16 %v1392, %v1388
        %v1513 = vpack.c.b16 %v1393, %v1389
        %v1514 = vpack.c.b16 %v1394, %v1390
        %v1515 = vpack.c.b16 %v1395, %v1391
        %v1516 = vpack.c.b16 %v1400, %v1396
        %v1517 = vpack.c.b16 %v1401, %v1397
        %v1518 = vpack.c.b16 %v1402, %v1398
        %v1519 = vpack.c.b16 %v1403, %v1399
        %v1520 = vpack.c.b16 %v1408, %v1404
        %v1521 = vpack.c.b16 %v1409, %v1405
        %v1522 = vpack.c.b16 %v1410, %v1406
        %v1523 = vpack.c.b16 %v1411, %v1407
        %v1524 = vpack.c.b16 %v1416, %v1412
        %v1525 = vpack.c.b16 %v1417, %v1413
        %v1526 = vpack.c.b16 %v1418, %v1414
        %v1527 = vpack.c.b16 %v1419, %v1415
        %v1528 = vpack.c.b16 %v1424, %v1420
        %v1529 = vpack.c.b16 %v1425, %v1421
        %v1530 = vpack.c.b16 %v1426, %v1422
        %v1531 = vpack.c.b16 %v1427, %v1423
        %v1532 = vpack.c.b16 %v1432, %v1428
        %v1533 = vpack.c.b16 %v1433, %v1429
        %v1534 = vpack.c.b16 %v1434, %v1430
        %v1535 = vpack.c.b16 %v1435, %v1431
        %v1536 = vpack.c.b16 %v1440, %v1436
        %v1537 = vpack.c.b16 %v1441, %v1437
        %v1538 = vpack.c.b16 %v1442, %v1438
        %v1539 = vpack.c.b16 %v1443, %v1439
        %v1540 = vpack.c.b16 %v1448, %v1444
        %v1541 = vpack.c.b16 %v1449, %v1445
        %v1542 = vpack.c.b16 %v1450, %v1446
        %v1543 = vpack.c.b16 %v1451, %v1447
        %v1544 = vpack.c.b16 %v1456, %v1452
        %v1545 = vpack.c.b16 %v1457, %v1453
        %v1546 = vpack.c.b16 %v1458, %v1454
        %v1547 = vpack.c.b16 %v1459, %v1455
        %v1548 = vpack.c.b16 %v1464, %v1460
        %v1549 = vpack.c.b16 %v1465, %v1461
        %v1550 = vpack.c.b16 %v1466, %v1462
        %v1551 = vpack.c.b16 %v1467, %v1463
        %v1552 = vpack.c.b16 %v1472, %v1468
        %v1553 = vpack.c.b16 %v1473, %v1469
        %v1554 = vpack.c.b16 %v1474, %v1470
        %v1555 = vpack.c.b16 %v1475, %v1471
        %v1556 = vpack.c.b16 %v1480, %v1476
        %v1557 = vpack.c.b16 %v1481, %v1477
        %v1558 = vpack.c.b16 %v1482, %v1478
        %v1559 = vpack.c.b16 %v1483, %v1479
        %v1560 = vpack.c.b16 %v1488, %v1484
        %v1561 = vpack.c.b16 %v1489, %v1485
        %v1562 = vpack.c.b16 %v1490, %v1486
        %v1563 = vpack.c.b16 %v1491, %v1487
        %v1564 = vpack.c.b16 %v1496, %v1492
        %v1565 = vpack.c.b16 %v1497, %v1493
        %v1566 = vpack.c.b16 %v1498, %v1494
        %v1567 = vpack.c.b16 %v1499, %v1495
        %v1568 = vpack.c.b16 %v1504, %v1500
        %v1569 = vpack.c.b16 %v1505, %v1501
        %v1570 = vpack.c.b16 %v1506, %v1502
        %v1571 = vpack.c.b16 %v1507, %v1503
        %1636 = vmatprep.subr.bf16.mxu0 %v1509
        %1637 = vmatpush1.bf16.msra.mxu0 %v1508
        %1638 = vmatprep.subr.bf16.mxu0 %v1513
        %1639 = vmatpush1.bf16.msra.mxu0 %v1512
        %1640 = vmatprep.subr.bf16.mxu0 %v1517
        %1641 = vmatpush1.bf16.msra.mxu0 %v1516
        %1642 = vmatprep.subr.bf16.mxu0 %v1521
        %1643 = vmatpush1.bf16.msra.mxu0 %v1520
        %1644 = vmatprep.subr.bf16.mxu0 %v1525
        %1645 = vmatpush1.bf16.msra.mxu0 %v1524
        %1646 = vmatprep.subr.bf16.mxu0 %v1529
        %1647 = vmatpush1.bf16.msra.mxu0 %v1528
        %1648 = vmatprep.subr.bf16.mxu0 %v1533
        %1649 = vmatpush1.bf16.msra.mxu0 %v1532
        %1650 = vmatprep.subr.bf16.mxu0 %v1537
        %1651 = vmatpush1.bf16.msra.mxu0 %v1536
        %1652 = vmatprep.subr.bf16.mxu0 %v1541
        %1653 = vmatpush1.bf16.msra.mxu0 %v1540
        %1654 = vmatprep.subr.bf16.mxu0 %v1545
        %1655 = vmatpush1.bf16.msra.mxu0 %v1544
        %1656 = vmatprep.subr.bf16.mxu0 %v1549
        %1657 = vmatpush1.bf16.msra.mxu0 %v1548
        %1658 = vmatprep.subr.bf16.mxu0 %v1553
        %1659 = vmatpush1.bf16.msra.mxu0 %v1552
        %1660 = vmatprep.subr.bf16.mxu0 %v1557
        %1661 = vmatpush1.bf16.msra.mxu0 %v1556
        %1662 = vmatprep.subr.bf16.mxu0 %v1561
        %1663 = vmatpush1.bf16.msra.mxu0 %v1560
        %1664 = vmatprep.subr.bf16.mxu0 %v1565
        %1665 = vmatpush1.bf16.msra.mxu0 %v1564
        %1666 = vmatprep.subr.bf16.mxu0 %v1569
        %1667 = vmatpush1.bf16.msra.mxu0 %v1568
        %1668 = vmatprep.mubr.bf16.mxu0 %v1229
        %1669 = vmatmul.mubr.bf16.gmra.mrb[0].mxu0 %v1228
        %v1670 = vpop.f32.mrb[0].mxu0
        %v1671 = vadd.f32 %v1299, %v1670
        %v1672 = vpop.f32.mrb[0].mxu0
        %v1673 = vadd.f32 %v1303, %v1672
        %v1674 = vpop.f32.mrb[0].mxu0
        %v1675 = vpop.f32.mrb[0].mxu0
        %1676 = vdwg.mxu0
        %1677 = vmatprep.subr.bf16.mxu0 %v1511
        %1678 = vmatpush1.bf16.msra.mxu0 %v1510
        %1679 = vmatprep.subr.bf16.mxu0 %v1515
        %1680 = vmatpush1.bf16.msra.mxu0 %v1514
        %1681 = vmatprep.subr.bf16.mxu0 %v1519
        %1682 = vmatpush1.bf16.msra.mxu0 %v1518
        %1683 = vmatprep.subr.bf16.mxu0 %v1523
        %1684 = vmatpush1.bf16.msra.mxu0 %v1522
        %1685 = vmatprep.subr.bf16.mxu0 %v1527
        %1686 = vmatpush1.bf16.msra.mxu0 %v1526
        %1687 = vmatprep.subr.bf16.mxu0 %v1531
        %1688 = vmatpush1.bf16.msra.mxu0 %v1530
        %1689 = vmatprep.subr.bf16.mxu0 %v1535
        %1690 = vmatpush1.bf16.msra.mxu0 %v1534
        %1691 = vmatprep.subr.bf16.mxu0 %v1539
        %1692 = vmatpush1.bf16.msra.mxu0 %v1538
        %1693 = vmatprep.subr.bf16.mxu0 %v1543
        %1694 = vmatpush1.bf16.msra.mxu0 %v1542
        %1695 = vmatprep.subr.bf16.mxu0 %v1547
        %1696 = vmatpush1.bf16.msra.mxu0 %v1546
        %1697 = vmatprep.subr.bf16.mxu0 %v1551
        %1698 = vmatpush1.bf16.msra.mxu0 %v1550
        %1699 = vmatprep.subr.bf16.mxu0 %v1555
        %1700 = vmatpush1.bf16.msra.mxu0 %v1554
        %1701 = vmatprep.subr.bf16.mxu0 %v1559
        %1702 = vmatpush1.bf16.msra.mxu0 %v1558
        %1703 = vmatprep.subr.bf16.mxu0 %v1563
        %1704 = vmatpush1.bf16.msra.mxu0 %v1562
        %1705 = vmatprep.subr.bf16.mxu0 %v1567
        %1706 = vmatpush1.bf16.msra.mxu0 %v1566
        %1707 = vmatprep.subr.bf16.mxu0 %v1571
        %1708 = vmatpush1.bf16.msra.mxu0 %v1570
        %1709 = vmatprep.mubr.bf16.mxu0 %v1229
        %1710 = vmatmul.mubr.bf16.gmra.mrb[0].mxu0 %v1228
        %v1711 = vpop.f32.mrb[0].mxu0
        %v1712 = vadd.f32 %v1307, %v1711
        %v1713 = vpop.f32.mrb[0].mxu0
        %v1714 = vadd.f32 %v1311, %v1713
        %v1715 = vpop.f32.mrb[0].mxu0
        %v1716 = vpop.f32.mrb[0].mxu0
        %1717 = vdwg.mxu0
        %v1718 = vrot.slane %v1671, 4
        %v1719 = vadd.f32 %v1671, %v1718
        %v1720 = vrot.slane %v1719, 2
        %v1721 = vadd.f32 %v1719, %v1720
        %v1722 = vrot.slane %v1721, 1
        %v1723 = vadd.f32 %v1721, %v1722
        %v1724 = vrot.slane %v1673, 4
        %v1725 = vadd.f32 %v1673, %v1724
        %v1726 = vrot.slane %v1725, 2
        %v1727 = vadd.f32 %v1725, %v1726
        %v1728 = vrot.slane %v1727, 1
        %v1729 = vadd.f32 %v1727, %v1728
        %v1730 = vrot.slane %v1712, 4
        %v1731 = vadd.f32 %v1712, %v1730
        %v1732 = vrot.slane %v1731, 2
        %v1733 = vadd.f32 %v1731, %v1732
        %v1734 = vrot.slane %v1733, 1
        %v1735 = vadd.f32 %v1733, %v1734
        %v1736 = vrot.slane %v1714, 4
        %v1737 = vadd.f32 %v1714, %v1736
        %v1738 = vrot.slane %v1737, 2
        %v1739 = vadd.f32 %v1737, %v1738
        %v1740 = vrot.slane %v1739, 1
        %v1741 = vadd.f32 %v1739, %v1740
        %v1742 = vmul.f32 %v1723, %v973
        %v1743 = vmul.f32 %v1729, %v973
        %v1744 = vmul.f32 %v1735, %v973
        %v1745 = vmul.f32 %v1741, %v973
        %v1746 = vsub.f32 %v1671, %v1742
        %v1747 = vsub.f32 %v1673, %v1743
        %v1748 = vsub.f32 %v1712, %v1744
        %v1749 = vsub.f32 %v1714, %v1745
        %v1750 = vmul.f32 %v1746, %v1746
        %v1751 = vmul.f32 %v1747, %v1747
        %v1752 = vmul.f32 %v1748, %v1748
        %v1753 = vmul.f32 %v1749, %v1749
        %v1754 = vrot.slane %v1750, 4
        %v1755 = vadd.f32 %v1750, %v1754
        %v1756 = vrot.slane %v1755, 2
        %v1757 = vadd.f32 %v1755, %v1756
        %v1758 = vrot.slane %v1757, 1
        %v1759 = vadd.f32 %v1757, %v1758
        %v1760 = vrot.slane %v1751, 4
        %v1761 = vadd.f32 %v1751, %v1760
        %v1762 = vrot.slane %v1761, 2
        %v1763 = vadd.f32 %v1761, %v1762
        %v1764 = vrot.slane %v1763, 1
        %v1765 = vadd.f32 %v1763, %v1764
        %v1766 = vrot.slane %v1752, 4
        %v1767 = vadd.f32 %v1752, %v1766
        %v1768 = vrot.slane %v1767, 2
        %v1769 = vadd.f32 %v1767, %v1768
        %v1770 = vrot.slane %v1769, 1
        %v1771 = vadd.f32 %v1769, %v1770
        %v1772 = vrot.slane %v1753, 4
        %v1773 = vadd.f32 %v1753, %v1772
        %v1774 = vrot.slane %v1773, 2
        %v1775 = vadd.f32 %v1773, %v1774
        %v1776 = vrot.slane %v1775, 1
        %v1777 = vadd.f32 %v1775, %v1776
        %v1778 = vmul.f32 %v1759, %v973
        %v1779 = vmul.f32 %v1765, %v973
        %v1780 = vmul.f32 %v1771, %v973
        %v1781 = vmul.f32 %v1777, %v973
        %v1782 = vadd.f32 %v1778, 0.8
        %v1783 = vadd.f32 %v1779, 0.8
        %v1784 = vadd.f32 %v1780, 0.8
        %v1785 = vadd.f32 %v1781, 0.8
        %v1786 = vrsqrt.pop %v1782
        %v1787 = vrsqrt.pop %v1783
        %v1788 = vrsqrt.pop %v1784
        %v1789 = vrsqrt.pop %v1785
        %v1790 = vmul.f32 %v1746, %v1786
        %v1791 = vmul.f32 %v1747, %v1787
        %v1792 = vmul.f32 %v1748, %v1788
        %v1793 = vmul.f32 %v1749, %v1789
        %v1794 = vld [vmem:[#allocation20] sm:$0xf]
        %v1796 = vlaneseq
        %v1797 = vshrl.u32 %v1796, 7
        %v1798 = vsub.s32 0, %v1797
        %v1799 = vrot.slane %v1794, %v1798
        %v1800 = vlaneseq
        %v1801 = vshrl.u32 %v1800, 7
        %v1802 = vsub.s32 1, %v1801
        %v1803 = vrot.slane %v1794, %v1802
        %v1804 = vlaneseq
        %v1805 = vshrl.u32 %v1804, 7
        %v1806 = vsub.s32 2, %v1805
        %v1807 = vrot.slane %v1794, %v1806
        %v1808 = vlaneseq
        %v1809 = vshrl.u32 %v1808, 7
        %v1810 = vsub.s32 3, %v1809
        %v1811 = vrot.slane %v1794, %v1810
        %v1816 = vmul.f32 %v1790, %v1799
        %v1817 = vmul.f32 %v1791, %v1803
        %v1818 = vmul.f32 %v1792, %v1807
        %v1819 = vmul.f32 %v1793, %v1811
        %v1820 = vld [vmem:[#allocation22] sm:$0xf]
        %v1822 = vlaneseq
        %v1823 = vshrl.u32 %v1822, 7
        %v1824 = vsub.s32 0, %v1823
        %v1825 = vrot.slane %v1820, %v1824
        %v1826 = vlaneseq
        %v1827 = vshrl.u32 %v1826, 7
        %v1828 = vsub.s32 1, %v1827
        %v1829 = vrot.slane %v1820, %v1828
        %v1830 = vlaneseq
        %v1831 = vshrl.u32 %v1830, 7
        %v1832 = vsub.s32 2, %v1831
        %v1833 = vrot.slane %v1820, %v1832
        %v1834 = vlaneseq
        %v1835 = vshrl.u32 %v1834, 7
        %v1836 = vsub.s32 3, %v1835
        %v1837 = vrot.slane %v1820, %v1836
        %v1842 = vadd.f32 %v1816, %v1825
        %v1843 = vadd.f32 %v1817, %v1829
        %v1844 = vadd.f32 %v1818, %v1833
        %v1845 = vadd.f32 %v1819, %v1837
        %vm1846 = vcmp.gt.f32.partialorder %v1842, 0.0
        %vm1847 = vcmp.gt.f32.partialorder %v1843, 0.0
        %vm1848 = vcmp.gt.f32.partialorder %v1844, 0.0
        %vm1849 = vcmp.gt.f32.partialorder %v1845, 0.0
        %v1850 = vmul.f32 %v1842, 0.2
        %v1851 = vmul.f32 %v1843, 0.2
        %v1852 = vmul.f32 %v1844, 0.2
        %v1853 = vmul.f32 %v1845, 0.2
        %v1854 = vsel %vm1846, %v1842, %v1850
        %v1855 = vsel %vm1847, %v1843, %v1851
        %v1856 = vsel %vm1848, %v1844, %v1852
        %v1857 = vsel %vm1849, %v1845, %v1853
        %v1858 = vpack.c.bf16 %v1854, %v1854
        %v1859 = vpack.c.bf16 %v1855, %v1855
        %v1860 = vpack.c.bf16 %v1856, %v1856
        %v1861 = vpack.c.bf16 %v1857, %v1857
        %v1862 = vld [vmem:[#allocation23] sm:$0xff]
        %v1863 = vld [vmem:[#allocation23 + $0x8] sm:$0xff]
        %v1864 = vld [vmem:[#allocation23 + $0x10] sm:$0xff]
        %v1865 = vld [vmem:[#allocation23 + $0x18] sm:$0xff]
        %v1866 = vld [vmem:[#allocation23 + $0x20] sm:$0xff]
        %v1867 = vld [vmem:[#allocation23 + $0x28] sm:$0xff]
        %v1868 = vld [vmem:[#allocation23 + $0x30] sm:$0xff]
        %v1869 = vld [vmem:[#allocation23 + $0x38] sm:$0xff]
        %v1870 = vld [vmem:[#allocation23 + $0x40] sm:$0xff]
        %v1871 = vld [vmem:[#allocation23 + $0x48] sm:$0xff]
        %v1872 = vld [vmem:[#allocation23 + $0x50] sm:$0xff]
        %v1873 = vld [vmem:[#allocation23 + $0x58] sm:$0xff]
        %v1874 = vld [vmem:[#allocation23 + $0x60] sm:$0xff]
        %v1875 = vld [vmem:[#allocation23 + $0x68] sm:$0xff]
        %v1876 = vld [vmem:[#allocation23 + $0x70] sm:$0xff]
        %v1877 = vld [vmem:[#allocation23 + $0x78] sm:$0xff]
        %v1878 = vld [vmem:[#allocation23 + $0x80] sm:$0xff]
        %v1879 = vld [vmem:[#allocation23 + $0x88] sm:$0xff]
        %v1880 = vld [vmem:[#allocation23 + $0x90] sm:$0xff]
        %v1881 = vld [vmem:[#allocation23 + $0x98] sm:$0xff]
        %v1882 = vld [vmem:[#allocation23 + $0xa0] sm:$0xff]
        %v1883 = vld [vmem:[#allocation23 + $0xa8] sm:$0xff]
        %v1884 = vld [vmem:[#allocation23 + $0xb0] sm:$0xff]
        %v1885 = vld [vmem:[#allocation23 + $0xb8] sm:$0xff]
        %v1886 = vld [vmem:[#allocation23 + $0xc0] sm:$0xff]
        %v1887 = vld [vmem:[#allocation23 + $0xc8] sm:$0xff]
        %v1888 = vld [vmem:[#allocation23 + $0xd0] sm:$0xff]
        %v1889 = vld [vmem:[#allocation23 + $0xd8] sm:$0xff]
        %v1890 = vld [vmem:[#allocation23 + $0xe0] sm:$0xff]
        %v1891 = vld [vmem:[#allocation23 + $0xe8] sm:$0xff]
        %v1892 = vld [vmem:[#allocation23 + $0xf0] sm:$0xff]
        %v1893 = vld [vmem:[#allocation23 + $0xf8] sm:$0xff]
        %v1894 = vld [vmem:[#allocation23 + $0x100] sm:$0xff]
        %v1895 = vld [vmem:[#allocation23 + $0x108] sm:$0xff]
        %v1896 = vld [vmem:[#allocation23 + $0x110] sm:$0xff]
        %v1897 = vld [vmem:[#allocation23 + $0x118] sm:$0xff]
        %v1898 = vld [vmem:[#allocation23 + $0x120] sm:$0xff]
        %v1899 = vld [vmem:[#allocation23 + $0x128] sm:$0xff]
        %v1900 = vld [vmem:[#allocation23 + $0x130] sm:$0xff]
        %v1901 = vld [vmem:[#allocation23 + $0x138] sm:$0xff]
        %v1902 = vld [vmem:[#allocation23 + $0x140] sm:$0xff]
        %v1903 = vld [vmem:[#allocation23 + $0x148] sm:$0xff]
        %v1904 = vld [vmem:[#allocation23 + $0x150] sm:$0xff]
        %v1905 = vld [vmem:[#allocation23 + $0x158] sm:$0xff]
        %v1906 = vld [vmem:[#allocation23 + $0x160] sm:$0xff]
        %v1907 = vld [vmem:[#allocation23 + $0x168] sm:$0xff]
        %v1908 = vld [vmem:[#allocation23 + $0x170] sm:$0xff]
        %v1909 = vld [vmem:[#allocation23 + $0x178] sm:$0xff]
        %v1910 = vld [vmem:[#allocation23 + $0x180] sm:$0xff]
        %v1911 = vld [vmem:[#allocation23 + $0x188] sm:$0xff]
        %v1912 = vld [vmem:[#allocation23 + $0x190] sm:$0xff]
        %v1913 = vld [vmem:[#allocation23 + $0x198] sm:$0xff]
        %v1914 = vld [vmem:[#allocation23 + $0x1a0] sm:$0xff]
        %v1915 = vld [vmem:[#allocation23 + $0x1a8] sm:$0xff]
        %v1916 = vld [vmem:[#allocation23 + $0x1b0] sm:$0xff]
        %v1917 = vld [vmem:[#allocation23 + $0x1b8] sm:$0xff]
        %v1918 = vld [vmem:[#allocation23 + $0x1c0] sm:$0xff]
        %v1919 = vld [vmem:[#allocation23 + $0x1c8] sm:$0xff]
        %v1920 = vld [vmem:[#allocation23 + $0x1d0] sm:$0xff]
        %v1921 = vld [vmem:[#allocation23 + $0x1d8] sm:$0xff]
        %v1922 = vld [vmem:[#allocation23 + $0x1e0] sm:$0xff]
        %v1923 = vld [vmem:[#allocation23 + $0x1e8] sm:$0xff]
        %v1924 = vld [vmem:[#allocation23 + $0x1f0] sm:$0xff]
        %v1925 = vld [vmem:[#allocation23 + $0x1f8] sm:$0xff]
        %v1926 = vld [vmem:[#allocation23 + $0x200] sm:$0xff]
        %v1927 = vld [vmem:[#allocation23 + $0x208] sm:$0xff]
        %v1928 = vld [vmem:[#allocation23 + $0x210] sm:$0xff]
        %v1929 = vld [vmem:[#allocation23 + $0x218] sm:$0xff]
        %v1930 = vld [vmem:[#allocation23 + $0x220] sm:$0xff]
        %v1931 = vld [vmem:[#allocation23 + $0x228] sm:$0xff]
        %v1932 = vld [vmem:[#allocation23 + $0x230] sm:$0xff]
        %v1933 = vld [vmem:[#allocation23 + $0x238] sm:$0xff]
        %v1934 = vld [vmem:[#allocation23 + $0x240] sm:$0xff]
        %v1935 = vld [vmem:[#allocation23 + $0x248] sm:$0xff]
        %v1936 = vld [vmem:[#allocation23 + $0x250] sm:$0xff]
        %v1937 = vld [vmem:[#allocation23 + $0x258] sm:$0xff]
        %v1938 = vld [vmem:[#allocation23 + $0x260] sm:$0xff]
        %v1939 = vld [vmem:[#allocation23 + $0x268] sm:$0xff]
        %v1940 = vld [vmem:[#allocation23 + $0x270] sm:$0xff]
        %v1941 = vld [vmem:[#allocation23 + $0x278] sm:$0xff]
        %v1942 = vld [vmem:[#allocation23 + $0x280] sm:$0xff]
        %v1943 = vld [vmem:[#allocation23 + $0x288] sm:$0xff]
        %v1944 = vld [vmem:[#allocation23 + $0x290] sm:$0xff]
        %v1945 = vld [vmem:[#allocation23 + $0x298] sm:$0xff]
        %v1946 = vld [vmem:[#allocation23 + $0x2a0] sm:$0xff]
        %v1947 = vld [vmem:[#allocation23 + $0x2a8] sm:$0xff]
        %v1948 = vld [vmem:[#allocation23 + $0x2b0] sm:$0xff]
        %v1949 = vld [vmem:[#allocation23 + $0x2b8] sm:$0xff]
        %v1950 = vld [vmem:[#allocation23 + $0x2c0] sm:$0xff]
        %v1951 = vld [vmem:[#allocation23 + $0x2c8] sm:$0xff]
        %v1952 = vld [vmem:[#allocation23 + $0x2d0] sm:$0xff]
        %v1953 = vld [vmem:[#allocation23 + $0x2d8] sm:$0xff]
        %v1954 = vld [vmem:[#allocation23 + $0x2e0] sm:$0xff]
        %v1955 = vld [vmem:[#allocation23 + $0x2e8] sm:$0xff]
        %v1956 = vld [vmem:[#allocation23 + $0x2f0] sm:$0xff]
        %v1957 = vld [vmem:[#allocation23 + $0x2f8] sm:$0xff]
        %v1958 = vld [vmem:[#allocation23 + $0x300] sm:$0xff]
        %v1959 = vld [vmem:[#allocation23 + $0x308] sm:$0xff]
        %v1960 = vld [vmem:[#allocation23 + $0x310] sm:$0xff]
        %v1961 = vld [vmem:[#allocation23 + $0x318] sm:$0xff]
        %v1962 = vld [vmem:[#allocation23 + $0x320] sm:$0xff]
        %v1963 = vld [vmem:[#allocation23 + $0x328] sm:$0xff]
        %v1964 = vld [vmem:[#allocation23 + $0x330] sm:$0xff]
        %v1965 = vld [vmem:[#allocation23 + $0x338] sm:$0xff]
        %v1966 = vld [vmem:[#allocation23 + $0x340] sm:$0xff]
        %v1967 = vld [vmem:[#allocation23 + $0x348] sm:$0xff]
        %v1968 = vld [vmem:[#allocation23 + $0x350] sm:$0xff]
        %v1969 = vld [vmem:[#allocation23 + $0x358] sm:$0xff]
        %v1970 = vld [vmem:[#allocation23 + $0x360] sm:$0xff]
        %v1971 = vld [vmem:[#allocation23 + $0x368] sm:$0xff]
        %v1972 = vld [vmem:[#allocation23 + $0x370] sm:$0xff]
        %v1973 = vld [vmem:[#allocation23 + $0x378] sm:$0xff]
        %v1974 = vld [vmem:[#allocation23 + $0x380] sm:$0xff]
        %v1975 = vld [vmem:[#allocation23 + $0x388] sm:$0xff]
        %v1976 = vld [vmem:[#allocation23 + $0x390] sm:$0xff]
        %v1977 = vld [vmem:[#allocation23 + $0x398] sm:$0xff]
        %v1978 = vld [vmem:[#allocation23 + $0x3a0] sm:$0xff]
        %v1979 = vld [vmem:[#allocation23 + $0x3a8] sm:$0xff]
        %v1980 = vld [vmem:[#allocation23 + $0x3b0] sm:$0xff]
        %v1981 = vld [vmem:[#allocation23 + $0x3b8] sm:$0xff]
        %v1982 = vld [vmem:[#allocation23 + $0x3c0] sm:$0xff]
        %v1983 = vld [vmem:[#allocation23 + $0x3c8] sm:$0xff]
        %v1984 = vld [vmem:[#allocation23 + $0x3d0] sm:$0xff]
        %v1985 = vld [vmem:[#allocation23 + $0x3d8] sm:$0xff]
        %v1986 = vld [vmem:[#allocation23 + $0x3e0] sm:$0xff]
        %v1987 = vld [vmem:[#allocation23 + $0x3e8] sm:$0xff]
        %v1988 = vld [vmem:[#allocation23 + $0x3f0] sm:$0xff]
        %v1989 = vld [vmem:[#allocation23 + $0x3f8] sm:$0xff]
        %v1990 = vld [vmem:[#allocation23 + $0x400] sm:$0xff]
        %v1991 = vld [vmem:[#allocation23 + $0x408] sm:$0xff]
        %v1992 = vld [vmem:[#allocation23 + $0x410] sm:$0xff]
        %v1993 = vld [vmem:[#allocation23 + $0x418] sm:$0xff]
        %v1994 = vld [vmem:[#allocation23 + $0x420] sm:$0xff]
        %v1995 = vld [vmem:[#allocation23 + $0x428] sm:$0xff]
        %v1996 = vld [vmem:[#allocation23 + $0x430] sm:$0xff]
        %v1997 = vld [vmem:[#allocation23 + $0x438] sm:$0xff]
        %v1998 = vld [vmem:[#allocation23 + $0x440] sm:$0xff]
        %v1999 = vld [vmem:[#allocation23 + $0x448] sm:$0xff]
        %v2000 = vld [vmem:[#allocation23 + $0x450] sm:$0xff]
        %v2001 = vld [vmem:[#allocation23 + $0x458] sm:$0xff]
        %v2002 = vld [vmem:[#allocation23 + $0x460] sm:$0xff]
        %v2003 = vld [vmem:[#allocation23 + $0x468] sm:$0xff]
        %v2004 = vld [vmem:[#allocation23 + $0x470] sm:$0xff]
        %v2005 = vld [vmem:[#allocation23 + $0x478] sm:$0xff]
        %v2006 = vld [vmem:[#allocation23 + $0x480] sm:$0xff]
        %v2007 = vld [vmem:[#allocation23 + $0x488] sm:$0xff]
        %v2008 = vld [vmem:[#allocation23 + $0x490] sm:$0xff]
        %v2009 = vld [vmem:[#allocation23 + $0x498] sm:$0xff]
        %v2010 = vld [vmem:[#allocation23 + $0x4a0] sm:$0xff]
        %v2011 = vld [vmem:[#allocation23 + $0x4a8] sm:$0xff]
        %v2012 = vld [vmem:[#allocation23 + $0x4b0] sm:$0xff]
        %v2013 = vld [vmem:[#allocation23 + $0x4b8] sm:$0xff]
        %v2014 = vld [vmem:[#allocation23 + $0x4c0] sm:$0xff]
        %v2015 = vld [vmem:[#allocation23 + $0x4c8] sm:$0xff]
        %v2016 = vld [vmem:[#allocation23 + $0x4d0] sm:$0xff]
        %v2017 = vld [vmem:[#allocation23 + $0x4d8] sm:$0xff]
        %v2018 = vld [vmem:[#allocation23 + $0x4e0] sm:$0xff]
        %v2019 = vld [vmem:[#allocation23 + $0x4e8] sm:$0xff]
        %v2020 = vld [vmem:[#allocation23 + $0x4f0] sm:$0xff]
        %v2021 = vld [vmem:[#allocation23 + $0x4f8] sm:$0xff]
        %v2022 = vld [vmem:[#allocation23 + $0x500] sm:$0xff]
        %v2023 = vld [vmem:[#allocation23 + $0x508] sm:$0xff]
        %v2024 = vld [vmem:[#allocation23 + $0x510] sm:$0xff]
        %v2025 = vld [vmem:[#allocation23 + $0x518] sm:$0xff]
        %v2026 = vld [vmem:[#allocation23 + $0x520] sm:$0xff]
        %v2027 = vld [vmem:[#allocation23 + $0x528] sm:$0xff]
        %v2028 = vld [vmem:[#allocation23 + $0x530] sm:$0xff]
        %v2029 = vld [vmem:[#allocation23 + $0x538] sm:$0xff]
        %v2030 = vld [vmem:[#allocation23 + $0x540] sm:$0xff]
        %v2031 = vld [vmem:[#allocation23 + $0x548] sm:$0xff]
        %v2032 = vld [vmem:[#allocation23 + $0x550] sm:$0xff]
        %v2033 = vld [vmem:[#allocation23 + $0x558] sm:$0xff]
        %v2034 = vld [vmem:[#allocation23 + $0x560] sm:$0xff]
        %v2035 = vld [vmem:[#allocation23 + $0x568] sm:$0xff]
        %v2036 = vld [vmem:[#allocation23 + $0x570] sm:$0xff]
        %v2037 = vld [vmem:[#allocation23 + $0x578] sm:$0xff]
        %v2038 = vld [vmem:[#allocation23 + $0x580] sm:$0xff]
        %v2039 = vld [vmem:[#allocation23 + $0x588] sm:$0xff]
        %v2040 = vld [vmem:[#allocation23 + $0x590] sm:$0xff]
        %v2041 = vld [vmem:[#allocation23 + $0x598] sm:$0xff]
        %v2042 = vld [vmem:[#allocation23 + $0x5a0] sm:$0xff]
        %v2043 = vld [vmem:[#allocation23 + $0x5a8] sm:$0xff]
        %v2044 = vld [vmem:[#allocation23 + $0x5b0] sm:$0xff]
        %v2045 = vld [vmem:[#allocation23 + $0x5b8] sm:$0xff]
        %v2046 = vld [vmem:[#allocation23 + $0x5c0] sm:$0xff]
        %v2047 = vld [vmem:[#allocation23 + $0x5c8] sm:$0xff]
        %v2048 = vld [vmem:[#allocation23 + $0x5d0] sm:$0xff]
        %v2049 = vld [vmem:[#allocation23 + $0x5d8] sm:$0xff]
        %v2050 = vld [vmem:[#allocation23 + $0x5e0] sm:$0xff]
        %v2051 = vld [vmem:[#allocation23 + $0x5e8] sm:$0xff]
        %v2052 = vld [vmem:[#allocation23 + $0x5f0] sm:$0xff]
        %v2053 = vld [vmem:[#allocation23 + $0x5f8] sm:$0xff]
        %v2054 = vld [vmem:[#allocation23 + $0x600] sm:$0xff]
        %v2055 = vld [vmem:[#allocation23 + $0x608] sm:$0xff]
        %v2056 = vld [vmem:[#allocation23 + $0x610] sm:$0xff]
        %v2057 = vld [vmem:[#allocation23 + $0x618] sm:$0xff]
        %v2058 = vld [vmem:[#allocation23 + $0x620] sm:$0xff]
        %v2059 = vld [vmem:[#allocation23 + $0x628] sm:$0xff]
        %v2060 = vld [vmem:[#allocation23 + $0x630] sm:$0xff]
        %v2061 = vld [vmem:[#allocation23 + $0x638] sm:$0xff]
        %v2062 = vld [vmem:[#allocation23 + $0x640] sm:$0xff]
        %v2063 = vld [vmem:[#allocation23 + $0x648] sm:$0xff]
        %v2064 = vld [vmem:[#allocation23 + $0x650] sm:$0xff]
        %v2065 = vld [vmem:[#allocation23 + $0x658] sm:$0xff]
        %v2066 = vld [vmem:[#allocation23 + $0x660] sm:$0xff]
        %v2067 = vld [vmem:[#allocation23 + $0x668] sm:$0xff]
        %v2068 = vld [vmem:[#allocation23 + $0x670] sm:$0xff]
        %v2069 = vld [vmem:[#allocation23 + $0x678] sm:$0xff]
        %v2070 = vld [vmem:[#allocation23 + $0x680] sm:$0xff]
        %v2071 = vld [vmem:[#allocation23 + $0x688] sm:$0xff]
        %v2072 = vld [vmem:[#allocation23 + $0x690] sm:$0xff]
        %v2073 = vld [vmem:[#allocation23 + $0x698] sm:$0xff]
        %v2074 = vld [vmem:[#allocation23 + $0x6a0] sm:$0xff]
        %v2075 = vld [vmem:[#allocation23 + $0x6a8] sm:$0xff]
        %v2076 = vld [vmem:[#allocation23 + $0x6b0] sm:$0xff]
        %v2077 = vld [vmem:[#allocation23 + $0x6b8] sm:$0xff]
        %v2078 = vld [vmem:[#allocation23 + $0x6c0] sm:$0xff]
        %v2079 = vld [vmem:[#allocation23 + $0x6c8] sm:$0xff]
        %v2080 = vld [vmem:[#allocation23 + $0x6d0] sm:$0xff]
        %v2081 = vld [vmem:[#allocation23 + $0x6d8] sm:$0xff]
        %v2082 = vld [vmem:[#allocation23 + $0x6e0] sm:$0xff]
        %v2083 = vld [vmem:[#allocation23 + $0x6e8] sm:$0xff]
        %v2084 = vld [vmem:[#allocation23 + $0x6f0] sm:$0xff]
        %v2085 = vld [vmem:[#allocation23 + $0x6f8] sm:$0xff]
        %v2086 = vld [vmem:[#allocation23 + $0x700] sm:$0xff]
        %v2087 = vld [vmem:[#allocation23 + $0x708] sm:$0xff]
        %v2088 = vld [vmem:[#allocation23 + $0x710] sm:$0xff]
        %v2089 = vld [vmem:[#allocation23 + $0x718] sm:$0xff]
        %v2090 = vld [vmem:[#allocation23 + $0x720] sm:$0xff]
        %v2091 = vld [vmem:[#allocation23 + $0x728] sm:$0xff]
        %v2092 = vld [vmem:[#allocation23 + $0x730] sm:$0xff]
        %v2093 = vld [vmem:[#allocation23 + $0x738] sm:$0xff]
        %v2094 = vld [vmem:[#allocation23 + $0x740] sm:$0xff]
        %v2095 = vld [vmem:[#allocation23 + $0x748] sm:$0xff]
        %v2096 = vld [vmem:[#allocation23 + $0x750] sm:$0xff]
        %v2097 = vld [vmem:[#allocation23 + $0x758] sm:$0xff]
        %v2098 = vld [vmem:[#allocation23 + $0x760] sm:$0xff]
        %v2099 = vld [vmem:[#allocation23 + $0x768] sm:$0xff]
        %v2100 = vld [vmem:[#allocation23 + $0x770] sm:$0xff]
        %v2101 = vld [vmem:[#allocation23 + $0x778] sm:$0xff]
        %v2102 = vld [vmem:[#allocation23 + $0x780] sm:$0xff]
        %v2103 = vld [vmem:[#allocation23 + $0x788] sm:$0xff]
        %v2104 = vld [vmem:[#allocation23 + $0x790] sm:$0xff]
        %v2105 = vld [vmem:[#allocation23 + $0x798] sm:$0xff]
        %v2106 = vld [vmem:[#allocation23 + $0x7a0] sm:$0xff]
        %v2107 = vld [vmem:[#allocation23 + $0x7a8] sm:$0xff]
        %v2108 = vld [vmem:[#allocation23 + $0x7b0] sm:$0xff]
        %v2109 = vld [vmem:[#allocation23 + $0x7b8] sm:$0xff]
        %v2110 = vld [vmem:[#allocation23 + $0x7c0] sm:$0xff]
        %v2111 = vld [vmem:[#allocation23 + $0x7c8] sm:$0xff]
        %v2112 = vld [vmem:[#allocation23 + $0x7d0] sm:$0xff]
        %v2113 = vld [vmem:[#allocation23 + $0x7d8] sm:$0xff]
        %v2114 = vld [vmem:[#allocation23 + $0x7e0] sm:$0xff]
        %v2115 = vld [vmem:[#allocation23 + $0x7e8] sm:$0xff]
        %v2116 = vld [vmem:[#allocation23 + $0x7f0] sm:$0xff]
        %v2117 = vld [vmem:[#allocation23 + $0x7f8] sm:$0xff]
        %v2118 = vld [vmem:[#allocation25] sm:$0xff]
        %v2120 = vlaneseq
        %v2121 = vshrl.u32 %v2120, 7
        %v2122 = vsub.s32 0, %v2121
        %v2123 = vrot.slane %v2118, %v2122
        %v2124 = vlaneseq
        %v2125 = vshrl.u32 %v2124, 7
        %v2126 = vsub.s32 1, %v2125
        %v2127 = vrot.slane %v2118, %v2126
        %v2128 = vlaneseq
        %v2129 = vshrl.u32 %v2128, 7
        %v2130 = vsub.s32 2, %v2129
        %v2131 = vrot.slane %v2118, %v2130
        %v2132 = vlaneseq
        %v2133 = vshrl.u32 %v2132, 7
        %v2134 = vsub.s32 3, %v2133
        %v2135 = vrot.slane %v2118, %v2134
        %v2136 = vlaneseq
        %v2137 = vshrl.u32 %v2136, 7
        %v2138 = vsub.s32 4, %v2137
        %v2139 = vrot.slane %v2118, %v2138
        %v2140 = vlaneseq
        %v2141 = vshrl.u32 %v2140, 7
        %v2142 = vsub.s32 5, %v2141
        %v2143 = vrot.slane %v2118, %v2142
        %v2144 = vlaneseq
        %v2145 = vshrl.u32 %v2144, 7
        %v2146 = vsub.s32 6, %v2145
        %v2147 = vrot.slane %v2118, %v2146
        %v2148 = vlaneseq
        %v2149 = vshrl.u32 %v2148, 7
        %v2150 = vsub.s32 7, %v2149
        %v2151 = vrot.slane %v2118, %v2150
        %v2416 = vunpack.c.l.b16 %v1862
        %v2417 = vunpack.c.h.b16 %v1862
        %v2418 = vunpack.c.l.b16 %v1863
        %v2419 = vunpack.c.h.b16 %v1863
        %v2420 = vunpack.c.l.b16 %v1864
        %v2421 = vunpack.c.h.b16 %v1864
        %v2422 = vunpack.c.l.b16 %v1865
        %v2423 = vunpack.c.h.b16 %v1865
        %v2424 = vunpack.c.l.b16 %v1866
        %v2425 = vunpack.c.h.b16 %v1866
        %v2426 = vunpack.c.l.b16 %v1867
        %v2427 = vunpack.c.h.b16 %v1867
        %v2428 = vunpack.c.l.b16 %v1868
        %v2429 = vunpack.c.h.b16 %v1868
        %v2430 = vunpack.c.l.b16 %v1869
        %v2431 = vunpack.c.h.b16 %v1869
        %v2432 = vunpack.c.l.b16 %v1870
        %v2433 = vunpack.c.h.b16 %v1870
        %v2434 = vunpack.c.l.b16 %v1871
        %v2435 = vunpack.c.h.b16 %v1871
        %v2436 = vunpack.c.l.b16 %v1872
        %v2437 = vunpack.c.h.b16 %v1872
        %v2438 = vunpack.c.l.b16 %v1873
        %v2439 = vunpack.c.h.b16 %v1873
        %v2440 = vunpack.c.l.b16 %v1874
        %v2441 = vunpack.c.h.b16 %v1874
        %v2442 = vunpack.c.l.b16 %v1875
        %v2443 = vunpack.c.h.b16 %v1875
        %v2444 = vunpack.c.l.b16 %v1876
        %v2445 = vunpack.c.h.b16 %v1876
        %v2446 = vunpack.c.l.b16 %v1877
        %v2447 = vunpack.c.h.b16 %v1877
        %v2448 = vunpack.c.l.b16 %v1878
        %v2449 = vunpack.c.h.b16 %v1878
        %v2450 = vunpack.c.l.b16 %v1879
        %v2451 = vunpack.c.h.b16 %v1879
        %v2452 = vunpack.c.l.b16 %v1880
        %v2453 = vunpack.c.h.b16 %v1880
        %v2454 = vunpack.c.l.b16 %v1881
        %v2455 = vunpack.c.h.b16 %v1881
        %v2456 = vunpack.c.l.b16 %v1882
        %v2457 = vunpack.c.h.b16 %v1882
        %v2458 = vunpack.c.l.b16 %v1883
        %v2459 = vunpack.c.h.b16 %v1883
        %v2460 = vunpack.c.l.b16 %v1884
        %v2461 = vunpack.c.h.b16 %v1884
        %v2462 = vunpack.c.l.b16 %v1885
        %v2463 = vunpack.c.h.b16 %v1885
        %v2464 = vunpack.c.l.b16 %v1886
        %v2465 = vunpack.c.h.b16 %v1886
        %v2466 = vunpack.c.l.b16 %v1887
        %v2467 = vunpack.c.h.b16 %v1887
        %v2468 = vunpack.c.l.b16 %v1888
        %v2469 = vunpack.c.h.b16 %v1888
        %v2470 = vunpack.c.l.b16 %v1889
        %v2471 = vunpack.c.h.b16 %v1889
        %v2472 = vunpack.c.l.b16 %v1890
        %v2473 = vunpack.c.h.b16 %v1890
        %v2474 = vunpack.c.l.b16 %v1891
        %v2475 = vunpack.c.h.b16 %v1891
        %v2476 = vunpack.c.l.b16 %v1892
        %v2477 = vunpack.c.h.b16 %v1892
        %v2478 = vunpack.c.l.b16 %v1893
        %v2479 = vunpack.c.h.b16 %v1893
        %v2480 = vunpack.c.l.b16 %v1894
        %v2481 = vunpack.c.h.b16 %v1894
        %v2482 = vunpack.c.l.b16 %v1895
        %v2483 = vunpack.c.h.b16 %v1895
        %v2484 = vunpack.c.l.b16 %v1896
        %v2485 = vunpack.c.h.b16 %v1896
        %v2486 = vunpack.c.l.b16 %v1897
        %v2487 = vunpack.c.h.b16 %v1897
        %v2488 = vunpack.c.l.b16 %v1898
        %v2489 = vunpack.c.h.b16 %v1898
        %v2490 = vunpack.c.l.b16 %v1899
        %v2491 = vunpack.c.h.b16 %v1899
        %v2492 = vunpack.c.l.b16 %v1900
        %v2493 = vunpack.c.h.b16 %v1900
        %v2494 = vunpack.c.l.b16 %v1901
        %v2495 = vunpack.c.h.b16 %v1901
        %v2496 = vunpack.c.l.b16 %v1902
        %v2497 = vunpack.c.h.b16 %v1902
        %v2498 = vunpack.c.l.b16 %v1903
        %v2499 = vunpack.c.h.b16 %v1903
        %v2500 = vunpack.c.l.b16 %v1904
        %v2501 = vunpack.c.h.b16 %v1904
        %v2502 = vunpack.c.l.b16 %v1905
        %v2503 = vunpack.c.h.b16 %v1905
        %v2504 = vunpack.c.l.b16 %v1906
        %v2505 = vunpack.c.h.b16 %v1906
        %v2506 = vunpack.c.l.b16 %v1907
        %v2507 = vunpack.c.h.b16 %v1907
        %v2508 = vunpack.c.l.b16 %v1908
        %v2509 = vunpack.c.h.b16 %v1908
        %v2510 = vunpack.c.l.b16 %v1909
        %v2511 = vunpack.c.h.b16 %v1909
        %v2512 = vunpack.c.l.b16 %v1910
        %v2513 = vunpack.c.h.b16 %v1910
        %v2514 = vunpack.c.l.b16 %v1911
        %v2515 = vunpack.c.h.b16 %v1911
        %v2516 = vunpack.c.l.b16 %v1912
        %v2517 = vunpack.c.h.b16 %v1912
        %v2518 = vunpack.c.l.b16 %v1913
        %v2519 = vunpack.c.h.b16 %v1913
        %v2520 = vunpack.c.l.b16 %v1914
        %v2521 = vunpack.c.h.b16 %v1914
        %v2522 = vunpack.c.l.b16 %v1915
        %v2523 = vunpack.c.h.b16 %v1915
        %v2524 = vunpack.c.l.b16 %v1916
        %v2525 = vunpack.c.h.b16 %v1916
        %v2526 = vunpack.c.l.b16 %v1917
        %v2527 = vunpack.c.h.b16 %v1917
        %v2528 = vunpack.c.l.b16 %v1918
        %v2529 = vunpack.c.h.b16 %v1918
        %v2530 = vunpack.c.l.b16 %v1919
        %v2531 = vunpack.c.h.b16 %v1919
        %v2532 = vunpack.c.l.b16 %v1920
        %v2533 = vunpack.c.h.b16 %v1920
        %v2534 = vunpack.c.l.b16 %v1921
        %v2535 = vunpack.c.h.b16 %v1921
        %v2536 = vunpack.c.l.b16 %v1922
        %v2537 = vunpack.c.h.b16 %v1922
        %v2538 = vunpack.c.l.b16 %v1923
        %v2539 = vunpack.c.h.b16 %v1923
        %v2540 = vunpack.c.l.b16 %v1924
        %v2541 = vunpack.c.h.b16 %v1924
        %v2542 = vunpack.c.l.b16 %v1925
        %v2543 = vunpack.c.h.b16 %v1925
        %v2544 = vunpack.c.l.b16 %v1926
        %v2545 = vunpack.c.h.b16 %v1926
        %v2546 = vunpack.c.l.b16 %v1927
        %v2547 = vunpack.c.h.b16 %v1927
        %v2548 = vunpack.c.l.b16 %v1928
        %v2549 = vunpack.c.h.b16 %v1928
        %v2550 = vunpack.c.l.b16 %v1929
        %v2551 = vunpack.c.h.b16 %v1929
        %v2552 = vunpack.c.l.b16 %v1930
        %v2553 = vunpack.c.h.b16 %v1930
        %v2554 = vunpack.c.l.b16 %v1931
        %v2555 = vunpack.c.h.b16 %v1931
        %v2556 = vunpack.c.l.b16 %v1932
        %v2557 = vunpack.c.h.b16 %v1932
        %v2558 = vunpack.c.l.b16 %v1933
        %v2559 = vunpack.c.h.b16 %v1933
        %v2560 = vunpack.c.l.b16 %v1934
        %v2561 = vunpack.c.h.b16 %v1934
        %v2562 = vunpack.c.l.b16 %v1935
        %v2563 = vunpack.c.h.b16 %v1935
        %v2564 = vunpack.c.l.b16 %v1936
        %v2565 = vunpack.c.h.b16 %v1936
        %v2566 = vunpack.c.l.b16 %v1937
        %v2567 = vunpack.c.h.b16 %v1937
        %v2568 = vunpack.c.l.b16 %v1938
        %v2569 = vunpack.c.h.b16 %v1938
        %v2570 = vunpack.c.l.b16 %v1939
        %v2571 = vunpack.c.h.b16 %v1939
        %v2572 = vunpack.c.l.b16 %v1940
        %v2573 = vunpack.c.h.b16 %v1940
        %v2574 = vunpack.c.l.b16 %v1941
        %v2575 = vunpack.c.h.b16 %v1941
        %v2576 = vunpack.c.l.b16 %v1942
        %v2577 = vunpack.c.h.b16 %v1942
        %v2578 = vunpack.c.l.b16 %v1943
        %v2579 = vunpack.c.h.b16 %v1943
        %v2580 = vunpack.c.l.b16 %v1944
        %v2581 = vunpack.c.h.b16 %v1944
        %v2582 = vunpack.c.l.b16 %v1945
        %v2583 = vunpack.c.h.b16 %v1945
        %v2584 = vunpack.c.l.b16 %v1946
        %v2585 = vunpack.c.h.b16 %v1946
        %v2586 = vunpack.c.l.b16 %v1947
        %v2587 = vunpack.c.h.b16 %v1947
        %v2588 = vunpack.c.l.b16 %v1948
        %v2589 = vunpack.c.h.b16 %v1948
        %v2590 = vunpack.c.l.b16 %v1949
        %v2591 = vunpack.c.h.b16 %v1949
        %v2592 = vunpack.c.l.b16 %v1950
        %v2593 = vunpack.c.h.b16 %v1950
        %v2594 = vunpack.c.l.b16 %v1951
        %v2595 = vunpack.c.h.b16 %v1951
        %v2596 = vunpack.c.l.b16 %v1952
        %v2597 = vunpack.c.h.b16 %v1952
        %v2598 = vunpack.c.l.b16 %v1953
        %v2599 = vunpack.c.h.b16 %v1953
        %v2600 = vunpack.c.l.b16 %v1954
        %v2601 = vunpack.c.h.b16 %v1954
        %v2602 = vunpack.c.l.b16 %v1955
        %v2603 = vunpack.c.h.b16 %v1955
        %v2604 = vunpack.c.l.b16 %v1956
        %v2605 = vunpack.c.h.b16 %v1956
        %v2606 = vunpack.c.l.b16 %v1957
        %v2607 = vunpack.c.h.b16 %v1957
        %v2608 = vunpack.c.l.b16 %v1958
        %v2609 = vunpack.c.h.b16 %v1958
        %v2610 = vunpack.c.l.b16 %v1959
        %v2611 = vunpack.c.h.b16 %v1959
        %v2612 = vunpack.c.l.b16 %v1960
        %v2613 = vunpack.c.h.b16 %v1960
        %v2614 = vunpack.c.l.b16 %v1961
        %v2615 = vunpack.c.h.b16 %v1961
        %v2616 = vunpack.c.l.b16 %v1962
        %v2617 = vunpack.c.h.b16 %v1962
        %v2618 = vunpack.c.l.b16 %v1963
        %v2619 = vunpack.c.h.b16 %v1963
        %v2620 = vunpack.c.l.b16 %v1964
        %v2621 = vunpack.c.h.b16 %v1964
        %v2622 = vunpack.c.l.b16 %v1965
        %v2623 = vunpack.c.h.b16 %v1965
        %v2624 = vunpack.c.l.b16 %v1966
        %v2625 = vunpack.c.h.b16 %v1966
        %v2626 = vunpack.c.l.b16 %v1967
        %v2627 = vunpack.c.h.b16 %v1967
        %v2628 = vunpack.c.l.b16 %v1968
        %v2629 = vunpack.c.h.b16 %v1968
        %v2630 = vunpack.c.l.b16 %v1969
        %v2631 = vunpack.c.h.b16 %v1969
        %v2632 = vunpack.c.l.b16 %v1970
        %v2633 = vunpack.c.h.b16 %v1970
        %v2634 = vunpack.c.l.b16 %v1971
        %v2635 = vunpack.c.h.b16 %v1971
        %v2636 = vunpack.c.l.b16 %v1972
        %v2637 = vunpack.c.h.b16 %v1972
        %v2638 = vunpack.c.l.b16 %v1973
        %v2639 = vunpack.c.h.b16 %v1973
        %v2640 = vunpack.c.l.b16 %v1974
        %v2641 = vunpack.c.h.b16 %v1974
        %v2642 = vunpack.c.l.b16 %v1975
        %v2643 = vunpack.c.h.b16 %v1975
        %v2644 = vunpack.c.l.b16 %v1976
        %v2645 = vunpack.c.h.b16 %v1976
        %v2646 = vunpack.c.l.b16 %v1977
        %v2647 = vunpack.c.h.b16 %v1977
        %v2648 = vunpack.c.l.b16 %v1978
        %v2649 = vunpack.c.h.b16 %v1978
        %v2650 = vunpack.c.l.b16 %v1979
        %v2651 = vunpack.c.h.b16 %v1979
        %v2652 = vunpack.c.l.b16 %v1980
        %v2653 = vunpack.c.h.b16 %v1980
        %v2654 = vunpack.c.l.b16 %v1981
        %v2655 = vunpack.c.h.b16 %v1981
        %v2656 = vunpack.c.l.b16 %v1982
        %v2657 = vunpack.c.h.b16 %v1982
        %v2658 = vunpack.c.l.b16 %v1983
        %v2659 = vunpack.c.h.b16 %v1983
        %v2660 = vunpack.c.l.b16 %v1984
        %v2661 = vunpack.c.h.b16 %v1984
        %v2662 = vunpack.c.l.b16 %v1985
        %v2663 = vunpack.c.h.b16 %v1985
        %v2664 = vunpack.c.l.b16 %v1986
        %v2665 = vunpack.c.h.b16 %v1986
        %v2666 = vunpack.c.l.b16 %v1987
        %v2667 = vunpack.c.h.b16 %v1987
        %v2668 = vunpack.c.l.b16 %v1988
        %v2669 = vunpack.c.h.b16 %v1988
        %v2670 = vunpack.c.l.b16 %v1989
        %v2671 = vunpack.c.h.b16 %v1989
        %v2672 = vunpack.c.l.b16 %v1990
        %v2673 = vunpack.c.h.b16 %v1990
        %v2674 = vunpack.c.l.b16 %v1991
        %v2675 = vunpack.c.h.b16 %v1991
        %v2676 = vunpack.c.l.b16 %v1992
        %v2677 = vunpack.c.h.b16 %v1992
        %v2678 = vunpack.c.l.b16 %v1993
        %v2679 = vunpack.c.h.b16 %v1993
        %v2680 = vunpack.c.l.b16 %v1994
        %v2681 = vunpack.c.h.b16 %v1994
        %v2682 = vunpack.c.l.b16 %v1995
        %v2683 = vunpack.c.h.b16 %v1995
        %v2684 = vunpack.c.l.b16 %v1996
        %v2685 = vunpack.c.h.b16 %v1996
        %v2686 = vunpack.c.l.b16 %v1997
        %v2687 = vunpack.c.h.b16 %v1997
        %v2688 = vunpack.c.l.b16 %v1998
        %v2689 = vunpack.c.h.b16 %v1998
        %v2690 = vunpack.c.l.b16 %v1999
        %v2691 = vunpack.c.h.b16 %v1999
        %v2692 = vunpack.c.l.b16 %v2000
        %v2693 = vunpack.c.h.b16 %v2000
        %v2694 = vunpack.c.l.b16 %v2001
        %v2695 = vunpack.c.h.b16 %v2001
        %v2696 = vunpack.c.l.b16 %v2002
        %v2697 = vunpack.c.h.b16 %v2002
        %v2698 = vunpack.c.l.b16 %v2003
        %v2699 = vunpack.c.h.b16 %v2003
        %v2700 = vunpack.c.l.b16 %v2004
        %v2701 = vunpack.c.h.b16 %v2004
        %v2702 = vunpack.c.l.b16 %v2005
        %v2703 = vunpack.c.h.b16 %v2005
        %v2704 = vunpack.c.l.b16 %v2006
        %v2705 = vunpack.c.h.b16 %v2006
        %v2706 = vunpack.c.l.b16 %v2007
        %v2707 = vunpack.c.h.b16 %v2007
        %v2708 = vunpack.c.l.b16 %v2008
        %v2709 = vunpack.c.h.b16 %v2008
        %v2710 = vunpack.c.l.b16 %v2009
        %v2711 = vunpack.c.h.b16 %v2009
        %v2712 = vunpack.c.l.b16 %v2010
        %v2713 = vunpack.c.h.b16 %v2010
        %v2714 = vunpack.c.l.b16 %v2011
        %v2715 = vunpack.c.h.b16 %v2011
        %v2716 = vunpack.c.l.b16 %v2012
        %v2717 = vunpack.c.h.b16 %v2012
        %v2718 = vunpack.c.l.b16 %v2013
        %v2719 = vunpack.c.h.b16 %v2013
        %v2720 = vunpack.c.l.b16 %v2014
        %v2721 = vunpack.c.h.b16 %v2014
        %v2722 = vunpack.c.l.b16 %v2015
        %v2723 = vunpack.c.h.b16 %v2015
        %v2724 = vunpack.c.l.b16 %v2016
        %v2725 = vunpack.c.h.b16 %v2016
        %v2726 = vunpack.c.l.b16 %v2017
        %v2727 = vunpack.c.h.b16 %v2017
        %v2728 = vunpack.c.l.b16 %v2018
        %v2729 = vunpack.c.h.b16 %v2018
        %v2730 = vunpack.c.l.b16 %v2019
        %v2731 = vunpack.c.h.b16 %v2019
        %v2732 = vunpack.c.l.b16 %v2020
        %v2733 = vunpack.c.h.b16 %v2020
        %v2734 = vunpack.c.l.b16 %v2021
        %v2735 = vunpack.c.h.b16 %v2021
        %v2736 = vunpack.c.l.b16 %v2022
        %v2737 = vunpack.c.h.b16 %v2022
        %v2738 = vunpack.c.l.b16 %v2023
        %v2739 = vunpack.c.h.b16 %v2023
        %v2740 = vunpack.c.l.b16 %v2024
        %v2741 = vunpack.c.h.b16 %v2024
        %v2742 = vunpack.c.l.b16 %v2025
        %v2743 = vunpack.c.h.b16 %v2025
        %v2744 = vunpack.c.l.b16 %v2026
        %v2745 = vunpack.c.h.b16 %v2026
        %v2746 = vunpack.c.l.b16 %v2027
        %v2747 = vunpack.c.h.b16 %v2027
        %v2748 = vunpack.c.l.b16 %v2028
        %v2749 = vunpack.c.h.b16 %v2028
        %v2750 = vunpack.c.l.b16 %v2029
        %v2751 = vunpack.c.h.b16 %v2029
        %v2752 = vunpack.c.l.b16 %v2030
        %v2753 = vunpack.c.h.b16 %v2030
        %v2754 = vunpack.c.l.b16 %v2031
        %v2755 = vunpack.c.h.b16 %v2031
        %v2756 = vunpack.c.l.b16 %v2032
        %v2757 = vunpack.c.h.b16 %v2032
        %v2758 = vunpack.c.l.b16 %v2033
        %v2759 = vunpack.c.h.b16 %v2033
        %v2760 = vunpack.c.l.b16 %v2034
        %v2761 = vunpack.c.h.b16 %v2034
        %v2762 = vunpack.c.l.b16 %v2035
        %v2763 = vunpack.c.h.b16 %v2035
        %v2764 = vunpack.c.l.b16 %v2036
        %v2765 = vunpack.c.h.b16 %v2036
        %v2766 = vunpack.c.l.b16 %v2037
        %v2767 = vunpack.c.h.b16 %v2037
        %v2768 = vunpack.c.l.b16 %v2038
        %v2769 = vunpack.c.h.b16 %v2038
        %v2770 = vunpack.c.l.b16 %v2039
        %v2771 = vunpack.c.h.b16 %v2039
        %v2772 = vunpack.c.l.b16 %v2040
        %v2773 = vunpack.c.h.b16 %v2040
        %v2774 = vunpack.c.l.b16 %v2041
        %v2775 = vunpack.c.h.b16 %v2041
        %v2776 = vunpack.c.l.b16 %v2042
        %v2777 = vunpack.c.h.b16 %v2042
        %v2778 = vunpack.c.l.b16 %v2043
        %v2779 = vunpack.c.h.b16 %v2043
        %v2780 = vunpack.c.l.b16 %v2044
        %v2781 = vunpack.c.h.b16 %v2044
        %v2782 = vunpack.c.l.b16 %v2045
        %v2783 = vunpack.c.h.b16 %v2045
        %v2784 = vunpack.c.l.b16 %v2046
        %v2785 = vunpack.c.h.b16 %v2046
        %v2786 = vunpack.c.l.b16 %v2047
        %v2787 = vunpack.c.h.b16 %v2047
        %v2788 = vunpack.c.l.b16 %v2048
        %v2789 = vunpack.c.h.b16 %v2048
        %v2790 = vunpack.c.l.b16 %v2049
        %v2791 = vunpack.c.h.b16 %v2049
        %v2792 = vunpack.c.l.b16 %v2050
        %v2793 = vunpack.c.h.b16 %v2050
        %v2794 = vunpack.c.l.b16 %v2051
        %v2795 = vunpack.c.h.b16 %v2051
        %v2796 = vunpack.c.l.b16 %v2052
        %v2797 = vunpack.c.h.b16 %v2052
        %v2798 = vunpack.c.l.b16 %v2053
        %v2799 = vunpack.c.h.b16 %v2053
        %v2800 = vunpack.c.l.b16 %v2054
        %v2801 = vunpack.c.h.b16 %v2054
        %v2802 = vunpack.c.l.b16 %v2055
        %v2803 = vunpack.c.h.b16 %v2055
        %v2804 = vunpack.c.l.b16 %v2056
        %v2805 = vunpack.c.h.b16 %v2056
        %v2806 = vunpack.c.l.b16 %v2057
        %v2807 = vunpack.c.h.b16 %v2057
        %v2808 = vunpack.c.l.b16 %v2058
        %v2809 = vunpack.c.h.b16 %v2058
        %v2810 = vunpack.c.l.b16 %v2059
        %v2811 = vunpack.c.h.b16 %v2059
        %v2812 = vunpack.c.l.b16 %v2060
        %v2813 = vunpack.c.h.b16 %v2060
        %v2814 = vunpack.c.l.b16 %v2061
        %v2815 = vunpack.c.h.b16 %v2061
        %v2816 = vunpack.c.l.b16 %v2062
        %v2817 = vunpack.c.h.b16 %v2062
        %v2818 = vunpack.c.l.b16 %v2063
        %v2819 = vunpack.c.h.b16 %v2063
        %v2820 = vunpack.c.l.b16 %v2064
        %v2821 = vunpack.c.h.b16 %v2064
        %v2822 = vunpack.c.l.b16 %v2065
        %v2823 = vunpack.c.h.b16 %v2065
        %v2824 = vunpack.c.l.b16 %v2066
        %v2825 = vunpack.c.h.b16 %v2066
        %v2826 = vunpack.c.l.b16 %v2067
        %v2827 = vunpack.c.h.b16 %v2067
        %v2828 = vunpack.c.l.b16 %v2068
        %v2829 = vunpack.c.h.b16 %v2068
        %v2830 = vunpack.c.l.b16 %v2069
        %v2831 = vunpack.c.h.b16 %v2069
        %v2832 = vunpack.c.l.b16 %v2070
        %v2833 = vunpack.c.h.b16 %v2070
        %v2834 = vunpack.c.l.b16 %v2071
        %v2835 = vunpack.c.h.b16 %v2071
        %v2836 = vunpack.c.l.b16 %v2072
        %v2837 = vunpack.c.h.b16 %v2072
        %v2838 = vunpack.c.l.b16 %v2073
        %v2839 = vunpack.c.h.b16 %v2073
        %v2840 = vunpack.c.l.b16 %v2074
        %v2841 = vunpack.c.h.b16 %v2074
        %v2842 = vunpack.c.l.b16 %v2075
        %v2843 = vunpack.c.h.b16 %v2075
        %v2844 = vunpack.c.l.b16 %v2076
        %v2845 = vunpack.c.h.b16 %v2076
        %v2846 = vunpack.c.l.b16 %v2077
        %v2847 = vunpack.c.h.b16 %v2077
        %v2848 = vunpack.c.l.b16 %v2078
        %v2849 = vunpack.c.h.b16 %v2078
        %v2850 = vunpack.c.l.b16 %v2079
        %v2851 = vunpack.c.h.b16 %v2079
        %v2852 = vunpack.c.l.b16 %v2080
        %v2853 = vunpack.c.h.b16 %v2080
        %v2854 = vunpack.c.l.b16 %v2081
        %v2855 = vunpack.c.h.b16 %v2081
        %v2856 = vunpack.c.l.b16 %v2082
        %v2857 = vunpack.c.h.b16 %v2082
        %v2858 = vunpack.c.l.b16 %v2083
        %v2859 = vunpack.c.h.b16 %v2083
        %v2860 = vunpack.c.l.b16 %v2084
        %v2861 = vunpack.c.h.b16 %v2084
        %v2862 = vunpack.c.l.b16 %v2085
        %v2863 = vunpack.c.h.b16 %v2085
        %v2864 = vunpack.c.l.b16 %v2086
        %v2865 = vunpack.c.h.b16 %v2086
        %v2866 = vunpack.c.l.b16 %v2087
        %v2867 = vunpack.c.h.b16 %v2087
        %v2868 = vunpack.c.l.b16 %v2088
        %v2869 = vunpack.c.h.b16 %v2088
        %v2870 = vunpack.c.l.b16 %v2089
        %v2871 = vunpack.c.h.b16 %v2089
        %v2872 = vunpack.c.l.b16 %v2090
        %v2873 = vunpack.c.h.b16 %v2090
        %v2874 = vunpack.c.l.b16 %v2091
        %v2875 = vunpack.c.h.b16 %v2091
        %v2876 = vunpack.c.l.b16 %v2092
        %v2877 = vunpack.c.h.b16 %v2092
        %v2878 = vunpack.c.l.b16 %v2093
        %v2879 = vunpack.c.h.b16 %v2093
        %v2880 = vunpack.c.l.b16 %v2094
        %v2881 = vunpack.c.h.b16 %v2094
        %v2882 = vunpack.c.l.b16 %v2095
        %v2883 = vunpack.c.h.b16 %v2095
        %v2884 = vunpack.c.l.b16 %v2096
        %v2885 = vunpack.c.h.b16 %v2096
        %v2886 = vunpack.c.l.b16 %v2097
        %v2887 = vunpack.c.h.b16 %v2097
        %v2888 = vunpack.c.l.b16 %v2098
        %v2889 = vunpack.c.h.b16 %v2098
        %v2890 = vunpack.c.l.b16 %v2099
        %v2891 = vunpack.c.h.b16 %v2099
        %v2892 = vunpack.c.l.b16 %v2100
        %v2893 = vunpack.c.h.b16 %v2100
        %v2894 = vunpack.c.l.b16 %v2101
        %v2895 = vunpack.c.h.b16 %v2101
        %v2896 = vunpack.c.l.b16 %v2102
        %v2897 = vunpack.c.h.b16 %v2102
        %v2898 = vunpack.c.l.b16 %v2103
        %v2899 = vunpack.c.h.b16 %v2103
        %v2900 = vunpack.c.l.b16 %v2104
        %v2901 = vunpack.c.h.b16 %v2104
        %v2902 = vunpack.c.l.b16 %v2105
        %v2903 = vunpack.c.h.b16 %v2105
        %v2904 = vunpack.c.l.b16 %v2106
        %v2905 = vunpack.c.h.b16 %v2106
        %v2906 = vunpack.c.l.b16 %v2107
        %v2907 = vunpack.c.h.b16 %v2107
        %v2908 = vunpack.c.l.b16 %v2108
        %v2909 = vunpack.c.h.b16 %v2108
        %v2910 = vunpack.c.l.b16 %v2109
        %v2911 = vunpack.c.h.b16 %v2109
        %v2912 = vunpack.c.l.b16 %v2110
        %v2913 = vunpack.c.h.b16 %v2110
        %v2914 = vunpack.c.l.b16 %v2111
        %v2915 = vunpack.c.h.b16 %v2111
        %v2916 = vunpack.c.l.b16 %v2112
        %v2917 = vunpack.c.h.b16 %v2112
        %v2918 = vunpack.c.l.b16 %v2113
        %v2919 = vunpack.c.h.b16 %v2113
        %v2920 = vunpack.c.l.b16 %v2114
        %v2921 = vunpack.c.h.b16 %v2114
        %v2922 = vunpack.c.l.b16 %v2115
        %v2923 = vunpack.c.h.b16 %v2115
        %v2924 = vunpack.c.l.b16 %v2116
        %v2925 = vunpack.c.h.b16 %v2116
        %v2926 = vunpack.c.l.b16 %v2117
        %v2927 = vunpack.c.h.b16 %v2117
        %v2928 = vpack.c.b16 %v2424, %v2416
        %v2929 = vpack.c.b16 %v2425, %v2417
        %v2930 = vpack.c.b16 %v2426, %v2418
        %v2931 = vpack.c.b16 %v2427, %v2419
        %v2932 = vpack.c.b16 %v2428, %v2420
        %v2933 = vpack.c.b16 %v2429, %v2421
        %v2934 = vpack.c.b16 %v2430, %v2422
        %v2935 = vpack.c.b16 %v2431, %v2423
        %v2936 = vpack.c.b16 %v2440, %v2432
        %v2937 = vpack.c.b16 %v2441, %v2433
        %v2938 = vpack.c.b16 %v2442, %v2434
        %v2939 = vpack.c.b16 %v2443, %v2435
        %v2940 = vpack.c.b16 %v2444, %v2436
        %v2941 = vpack.c.b16 %v2445, %v2437
        %v2942 = vpack.c.b16 %v2446, %v2438
        %v2943 = vpack.c.b16 %v2447, %v2439
        %v2944 = vpack.c.b16 %v2456, %v2448
        %v2945 = vpack.c.b16 %v2457, %v2449
        %v2946 = vpack.c.b16 %v2458, %v2450
        %v2947 = vpack.c.b16 %v2459, %v2451
        %v2948 = vpack.c.b16 %v2460, %v2452
        %v2949 = vpack.c.b16 %v2461, %v2453
        %v2950 = vpack.c.b16 %v2462, %v2454
        %v2951 = vpack.c.b16 %v2463, %v2455
        %v2952 = vpack.c.b16 %v2472, %v2464
        %v2953 = vpack.c.b16 %v2473, %v2465
        %v2954 = vpack.c.b16 %v2474, %v2466
        %v2955 = vpack.c.b16 %v2475, %v2467
        %v2956 = vpack.c.b16 %v2476, %v2468
        %v2957 = vpack.c.b16 %v2477, %v2469
        %v2958 = vpack.c.b16 %v2478, %v2470
        %v2959 = vpack.c.b16 %v2479, %v2471
        %v2960 = vpack.c.b16 %v2488, %v2480
        %v2961 = vpack.c.b16 %v2489, %v2481
        %v2962 = vpack.c.b16 %v2490, %v2482
        %v2963 = vpack.c.b16 %v2491, %v2483
        %v2964 = vpack.c.b16 %v2492, %v2484
        %v2965 = vpack.c.b16 %v2493, %v2485
        %v2966 = vpack.c.b16 %v2494, %v2486
        %v2967 = vpack.c.b16 %v2495, %v2487
        %v2968 = vpack.c.b16 %v2504, %v2496
        %v2969 = vpack.c.b16 %v2505, %v2497
        %v2970 = vpack.c.b16 %v2506, %v2498
        %v2971 = vpack.c.b16 %v2507, %v2499
        %v2972 = vpack.c.b16 %v2508, %v2500
        %v2973 = vpack.c.b16 %v2509, %v2501
        %v2974 = vpack.c.b16 %v2510, %v2502
        %v2975 = vpack.c.b16 %v2511, %v2503
        %v2976 = vpack.c.b16 %v2520, %v2512
        %v2977 = vpack.c.b16 %v2521, %v2513
        %v2978 = vpack.c.b16 %v2522, %v2514
        %v2979 = vpack.c.b16 %v2523, %v2515
        %v2980 = vpack.c.b16 %v2524, %v2516
        %v2981 = vpack.c.b16 %v2525, %v2517
        %v2982 = vpack.c.b16 %v2526, %v2518
        %v2983 = vpack.c.b16 %v2527, %v2519
        %v2984 = vpack.c.b16 %v2536, %v2528
        %v2985 = vpack.c.b16 %v2537, %v2529
        %v2986 = vpack.c.b16 %v2538, %v2530
        %v2987 = vpack.c.b16 %v2539, %v2531
        %v2988 = vpack.c.b16 %v2540, %v2532
        %v2989 = vpack.c.b16 %v2541, %v2533
        %v2990 = vpack.c.b16 %v2542, %v2534
        %v2991 = vpack.c.b16 %v2543, %v2535
        %v2992 = vpack.c.b16 %v2552, %v2544
        %v2993 = vpack.c.b16 %v2553, %v2545
        %v2994 = vpack.c.b16 %v2554, %v2546
        %v2995 = vpack.c.b16 %v2555, %v2547
        %v2996 = vpack.c.b16 %v2556, %v2548
        %v2997 = vpack.c.b16 %v2557, %v2549
        %v2998 = vpack.c.b16 %v2558, %v2550
        %v2999 = vpack.c.b16 %v2559, %v2551
        %v3000 = vpack.c.b16 %v2568, %v2560
        %v3001 = vpack.c.b16 %v2569, %v2561
        %v3002 = vpack.c.b16 %v2570, %v2562
        %v3003 = vpack.c.b16 %v2571, %v2563
        %v3004 = vpack.c.b16 %v2572, %v2564
        %v3005 = vpack.c.b16 %v2573, %v2565
        %v3006 = vpack.c.b16 %v2574, %v2566
        %v3007 = vpack.c.b16 %v2575, %v2567
        %v3008 = vpack.c.b16 %v2584, %v2576
        %v3009 = vpack.c.b16 %v2585, %v2577
        %v3010 = vpack.c.b16 %v2586, %v2578
        %v3011 = vpack.c.b16 %v2587, %v2579
        %v3012 = vpack.c.b16 %v2588, %v2580
        %v3013 = vpack.c.b16 %v2589, %v2581
        %v3014 = vpack.c.b16 %v2590, %v2582
        %v3015 = vpack.c.b16 %v2591, %v2583
        %v3016 = vpack.c.b16 %v2600, %v2592
        %v3017 = vpack.c.b16 %v2601, %v2593
        %v3018 = vpack.c.b16 %v2602, %v2594
        %v3019 = vpack.c.b16 %v2603, %v2595
        %v3020 = vpack.c.b16 %v2604, %v2596
        %v3021 = vpack.c.b16 %v2605, %v2597
        %v3022 = vpack.c.b16 %v2606, %v2598
        %v3023 = vpack.c.b16 %v2607, %v2599
        %v3024 = vpack.c.b16 %v2616, %v2608
        %v3025 = vpack.c.b16 %v2617, %v2609
        %v3026 = vpack.c.b16 %v2618, %v2610
        %v3027 = vpack.c.b16 %v2619, %v2611
        %v3028 = vpack.c.b16 %v2620, %v2612
        %v3029 = vpack.c.b16 %v2621, %v2613
        %v3030 = vpack.c.b16 %v2622, %v2614
        %v3031 = vpack.c.b16 %v2623, %v2615
        %v3032 = vpack.c.b16 %v2632, %v2624
        %v3033 = vpack.c.b16 %v2633, %v2625
        %v3034 = vpack.c.b16 %v2634, %v2626
        %v3035 = vpack.c.b16 %v2635, %v2627
        %v3036 = vpack.c.b16 %v2636, %v2628
        %v3037 = vpack.c.b16 %v2637, %v2629
        %v3038 = vpack.c.b16 %v2638, %v2630
        %v3039 = vpack.c.b16 %v2639, %v2631
        %v3040 = vpack.c.b16 %v2648, %v2640
        %v3041 = vpack.c.b16 %v2649, %v2641
        %v3042 = vpack.c.b16 %v2650, %v2642
        %v3043 = vpack.c.b16 %v2651, %v2643
        %v3044 = vpack.c.b16 %v2652, %v2644
        %v3045 = vpack.c.b16 %v2653, %v2645
        %v3046 = vpack.c.b16 %v2654, %v2646
        %v3047 = vpack.c.b16 %v2655, %v2647
        %v3048 = vpack.c.b16 %v2664, %v2656
        %v3049 = vpack.c.b16 %v2665, %v2657
        %v3050 = vpack.c.b16 %v2666, %v2658
        %v3051 = vpack.c.b16 %v2667, %v2659
        %v3052 = vpack.c.b16 %v2668, %v2660
        %v3053 = vpack.c.b16 %v2669, %v2661
        %v3054 = vpack.c.b16 %v2670, %v2662
        %v3055 = vpack.c.b16 %v2671, %v2663
        %v3056 = vpack.c.b16 %v2680, %v2672
        %v3057 = vpack.c.b16 %v2681, %v2673
        %v3058 = vpack.c.b16 %v2682, %v2674
        %v3059 = vpack.c.b16 %v2683, %v2675
        %v3060 = vpack.c.b16 %v2684, %v2676
        %v3061 = vpack.c.b16 %v2685, %v2677
        %v3062 = vpack.c.b16 %v2686, %v2678
        %v3063 = vpack.c.b16 %v2687, %v2679
        %v3064 = vpack.c.b16 %v2696, %v2688
        %v3065 = vpack.c.b16 %v2697, %v2689
        %v3066 = vpack.c.b16 %v2698, %v2690
        %v3067 = vpack.c.b16 %v2699, %v2691
        %v3068 = vpack.c.b16 %v2700, %v2692
        %v3069 = vpack.c.b16 %v2701, %v2693
        %v3070 = vpack.c.b16 %v2702, %v2694
        %v3071 = vpack.c.b16 %v2703, %v2695
        %v3072 = vpack.c.b16 %v2712, %v2704
        %v3073 = vpack.c.b16 %v2713, %v2705
        %v3074 = vpack.c.b16 %v2714, %v2706
        %v3075 = vpack.c.b16 %v2715, %v2707
        %v3076 = vpack.c.b16 %v2716, %v2708
        %v3077 = vpack.c.b16 %v2717, %v2709
        %v3078 = vpack.c.b16 %v2718, %v2710
        %v3079 = vpack.c.b16 %v2719, %v2711
        %v3080 = vpack.c.b16 %v2728, %v2720
        %v3081 = vpack.c.b16 %v2729, %v2721
        %v3082 = vpack.c.b16 %v2730, %v2722
        %v3083 = vpack.c.b16 %v2731, %v2723
        %v3084 = vpack.c.b16 %v2732, %v2724
        %v3085 = vpack.c.b16 %v2733, %v2725
        %v3086 = vpack.c.b16 %v2734, %v2726
        %v3087 = vpack.c.b16 %v2735, %v2727
        %v3088 = vpack.c.b16 %v2744, %v2736
        %v3089 = vpack.c.b16 %v2745, %v2737
        %v3090 = vpack.c.b16 %v2746, %v2738
        %v3091 = vpack.c.b16 %v2747, %v2739
        %v3092 = vpack.c.b16 %v2748, %v2740
        %v3093 = vpack.c.b16 %v2749, %v2741
        %v3094 = vpack.c.b16 %v2750, %v2742
        %v3095 = vpack.c.b16 %v2751, %v2743
        %v3096 = vpack.c.b16 %v2760, %v2752
        %v3097 = vpack.c.b16 %v2761, %v2753
        %v3098 = vpack.c.b16 %v2762, %v2754
        %v3099 = vpack.c.b16 %v2763, %v2755
        %v3100 = vpack.c.b16 %v2764, %v2756
        %v3101 = vpack.c.b16 %v2765, %v2757
        %v3102 = vpack.c.b16 %v2766, %v2758
        %v3103 = vpack.c.b16 %v2767, %v2759
        %v3104 = vpack.c.b16 %v2776, %v2768
        %v3105 = vpack.c.b16 %v2777, %v2769
        %v3106 = vpack.c.b16 %v2778, %v2770
        %v3107 = vpack.c.b16 %v2779, %v2771
        %v3108 = vpack.c.b16 %v2780, %v2772
        %v3109 = vpack.c.b16 %v2781, %v2773
        %v3110 = vpack.c.b16 %v2782, %v2774
        %v3111 = vpack.c.b16 %v2783, %v2775
        %v3112 = vpack.c.b16 %v2792, %v2784
        %v3113 = vpack.c.b16 %v2793, %v2785
        %v3114 = vpack.c.b16 %v2794, %v2786
        %v3115 = vpack.c.b16 %v2795, %v2787
        %v3116 = vpack.c.b16 %v2796, %v2788
        %v3117 = vpack.c.b16 %v2797, %v2789
        %v3118 = vpack.c.b16 %v2798, %v2790
        %v3119 = vpack.c.b16 %v2799, %v2791
        %v3120 = vpack.c.b16 %v2808, %v2800
        %v3121 = vpack.c.b16 %v2809, %v2801
        %v3122 = vpack.c.b16 %v2810, %v2802
        %v3123 = vpack.c.b16 %v2811, %v2803
        %v3124 = vpack.c.b16 %v2812, %v2804
        %v3125 = vpack.c.b16 %v2813, %v2805
        %v3126 = vpack.c.b16 %v2814, %v2806
        %v3127 = vpack.c.b16 %v2815, %v2807
        %v3128 = vpack.c.b16 %v2824, %v2816
        %v3129 = vpack.c.b16 %v2825, %v2817
        %v3130 = vpack.c.b16 %v2826, %v2818
        %v3131 = vpack.c.b16 %v2827, %v2819
        %v3132 = vpack.c.b16 %v2828, %v2820
        %v3133 = vpack.c.b16 %v2829, %v2821
        %v3134 = vpack.c.b16 %v2830, %v2822
        %v3135 = vpack.c.b16 %v2831, %v2823
        %v3136 = vpack.c.b16 %v2840, %v2832
        %v3137 = vpack.c.b16 %v2841, %v2833
        %v3138 = vpack.c.b16 %v2842, %v2834
        %v3139 = vpack.c.b16 %v2843, %v2835
        %v3140 = vpack.c.b16 %v2844, %v2836
        %v3141 = vpack.c.b16 %v2845, %v2837
        %v3142 = vpack.c.b16 %v2846, %v2838
        %v3143 = vpack.c.b16 %v2847, %v2839
        %v3144 = vpack.c.b16 %v2856, %v2848
        %v3145 = vpack.c.b16 %v2857, %v2849
        %v3146 = vpack.c.b16 %v2858, %v2850
        %v3147 = vpack.c.b16 %v2859, %v2851
        %v3148 = vpack.c.b16 %v2860, %v2852
        %v3149 = vpack.c.b16 %v2861, %v2853
        %v3150 = vpack.c.b16 %v2862, %v2854
        %v3151 = vpack.c.b16 %v2863, %v2855
        %v3152 = vpack.c.b16 %v2872, %v2864
        %v3153 = vpack.c.b16 %v2873, %v2865
        %v3154 = vpack.c.b16 %v2874, %v2866
        %v3155 = vpack.c.b16 %v2875, %v2867
        %v3156 = vpack.c.b16 %v2876, %v2868
        %v3157 = vpack.c.b16 %v2877, %v2869
        %v3158 = vpack.c.b16 %v2878, %v2870
        %v3159 = vpack.c.b16 %v2879, %v2871
        %v3160 = vpack.c.b16 %v2888, %v2880
        %v3161 = vpack.c.b16 %v2889, %v2881
        %v3162 = vpack.c.b16 %v2890, %v2882
        %v3163 = vpack.c.b16 %v2891, %v2883
        %v3164 = vpack.c.b16 %v2892, %v2884
        %v3165 = vpack.c.b16 %v2893, %v2885
        %v3166 = vpack.c.b16 %v2894, %v2886
        %v3167 = vpack.c.b16 %v2895, %v2887
        %v3168 = vpack.c.b16 %v2904, %v2896
        %v3169 = vpack.c.b16 %v2905, %v2897
        %v3170 = vpack.c.b16 %v2906, %v2898
        %v3171 = vpack.c.b16 %v2907, %v2899
        %v3172 = vpack.c.b16 %v2908, %v2900
        %v3173 = vpack.c.b16 %v2909, %v2901
        %v3174 = vpack.c.b16 %v2910, %v2902
        %v3175 = vpack.c.b16 %v2911, %v2903
        %v3176 = vpack.c.b16 %v2920, %v2912
        %v3177 = vpack.c.b16 %v2921, %v2913
        %v3178 = vpack.c.b16 %v2922, %v2914
        %v3179 = vpack.c.b16 %v2923, %v2915
        %v3180 = vpack.c.b16 %v2924, %v2916
        %v3181 = vpack.c.b16 %v2925, %v2917
        %v3182 = vpack.c.b16 %v2926, %v2918
        %v3183 = vpack.c.b16 %v2927, %v2919
        %3440 = vmatprep.subr.bf16.mxu0 %v2929
        %3441 = vmatpush1.bf16.msra.mxu0 %v2928
        %3442 = vmatprep.subr.bf16.mxu0 %v2937
        %3443 = vmatpush1.bf16.msra.mxu0 %v2936
        %3444 = vmatprep.subr.bf16.mxu0 %v2945
        %3445 = vmatpush1.bf16.msra.mxu0 %v2944
        %3446 = vmatprep.subr.bf16.mxu0 %v2953
        %3447 = vmatpush1.bf16.msra.mxu0 %v2952
        %3448 = vmatprep.subr.bf16.mxu0 %v2961
        %3449 = vmatpush1.bf16.msra.mxu0 %v2960
        %3450 = vmatprep.subr.bf16.mxu0 %v2969
        %3451 = vmatpush1.bf16.msra.mxu0 %v2968
        %3452 = vmatprep.subr.bf16.mxu0 %v2977
        %3453 = vmatpush1.bf16.msra.mxu0 %v2976
        %3454 = vmatprep.subr.bf16.mxu0 %v2985
        %3455 = vmatpush1.bf16.msra.mxu0 %v2984
        %3456 = vmatprep.subr.bf16.mxu0 %v2993
        %3457 = vmatpush1.bf16.msra.mxu0 %v2992
        %3458 = vmatprep.subr.bf16.mxu0 %v3001
        %3459 = vmatpush1.bf16.msra.mxu0 %v3000
        %3460 = vmatprep.subr.bf16.mxu0 %v3009
        %3461 = vmatpush1.bf16.msra.mxu0 %v3008
        %3462 = vmatprep.subr.bf16.mxu0 %v3017
        %3463 = vmatpush1.bf16.msra.mxu0 %v3016
        %3464 = vmatprep.subr.bf16.mxu0 %v3025
        %3465 = vmatpush1.bf16.msra.mxu0 %v3024
        %3466 = vmatprep.subr.bf16.mxu0 %v3033
        %3467 = vmatpush1.bf16.msra.mxu0 %v3032
        %3468 = vmatprep.subr.bf16.mxu0 %v3041
        %3469 = vmatpush1.bf16.msra.mxu0 %v3040
        %3470 = vmatprep.subr.bf16.mxu0 %v3049
        %3471 = vmatpush1.bf16.msra.mxu0 %v3048
        %3472 = vmatprep.mubr.bf16.mxu0 %v1859
        %3473 = vmatmul.mubr.bf16.gmra.mrb[0].mxu0 %v1858
        %v3474 = vpop.f32.mrb[0].mxu0
        %v3475 = vadd.f32 %v2123, %v3474
        %v3476 = vpop.f32.mrb[0].mxu0
        %v3477 = vadd.f32 %v2127, %v3476
        %v3478 = vpop.f32.mrb[0].mxu0
        %v3479 = vpop.f32.mrb[0].mxu0
        %3480 = vdwg.mxu0
        %3481 = vmatprep.subr.bf16.mxu0 %v3057
        %3482 = vmatpush1.bf16.msra.mxu0 %v3056
        %3483 = vmatprep.subr.bf16.mxu0 %v3065
        %3484 = vmatpush1.bf16.msra.mxu0 %v3064
        %3485 = vmatprep.subr.bf16.mxu0 %v3073
        %3486 = vmatpush1.bf16.msra.mxu0 %v3072
        %3487 = vmatprep.subr.bf16.mxu0 %v3081
        %3488 = vmatpush1.bf16.msra.mxu0 %v3080
        %3489 = vmatprep.subr.bf16.mxu0 %v3089
        %3490 = vmatpush1.bf16.msra.mxu0 %v3088
        %3491 = vmatprep.subr.bf16.mxu0 %v3097
        %3492 = vmatpush1.bf16.msra.mxu0 %v3096
        %3493 = vmatprep.subr.bf16.mxu0 %v3105
        %3494 = vmatpush1.bf16.msra.mxu0 %v3104
        %3495 = vmatprep.subr.bf16.mxu0 %v3113
        %3496 = vmatpush1.bf16.msra.mxu0 %v3112
        %3497 = vmatprep.subr.bf16.mxu0 %v3121
        %3498 = vmatpush1.bf16.msra.mxu0 %v3120
        %3499 = vmatprep.subr.bf16.mxu0 %v3129
        %3500 = vmatpush1.bf16.msra.mxu0 %v3128
        %3501 = vmatprep.subr.bf16.mxu0 %v3137
        %3502 = vmatpush1.bf16.msra.mxu0 %v3136
        %3503 = vmatprep.subr.bf16.mxu0 %v3145
        %3504 = vmatpush1.bf16.msra.mxu0 %v3144
        %3505 = vmatprep.subr.bf16.mxu0 %v3153
        %3506 = vmatpush1.bf16.msra.mxu0 %v3152
        %3507 = vmatprep.subr.bf16.mxu0 %v3161
        %3508 = vmatpush1.bf16.msra.mxu0 %v3160
        %3509 = vmatprep.subr.bf16.mxu0 %v3169
        %3510 = vmatpush1.bf16.msra.mxu0 %v3168
        %3511 = vmatprep.subr.bf16.mxu0 %v3177
        %3512 = vmatpush1.bf16.msra.mxu0 %v3176
        %3513 = vmatprep.mubr.bf16.mxu0 %v1861
        %3514 = vmatmul.mubr.bf16.gmra.mrb[0].mxu0 %v1860
        %v3515 = vpop.f32.mrb[0].mxu0
        %v3516 = vadd.f32 %v3475, %v3515
        %v3517 = vpop.f32.mrb[0].mxu0
        %v3518 = vadd.f32 %v3477, %v3517
        %v3519 = vpop.f32.mrb[0].mxu0
        %v3520 = vpop.f32.mrb[0].mxu0
        %3521 = vdwg.mxu0
        %3522 = vmatprep.subr.bf16.mxu0 %v2931
        %3523 = vmatpush1.bf16.msra.mxu0 %v2930
        %3524 = vmatprep.subr.bf16.mxu0 %v2939
        %3525 = vmatpush1.bf16.msra.mxu0 %v2938
        %3526 = vmatprep.subr.bf16.mxu0 %v2947
        %3527 = vmatpush1.bf16.msra.mxu0 %v2946
        %3528 = vmatprep.subr.bf16.mxu0 %v2955
        %3529 = vmatpush1.bf16.msra.mxu0 %v2954
        %3530 = vmatprep.subr.bf16.mxu0 %v2963
        %3531 = vmatpush1.bf16.msra.mxu0 %v2962
        %3532 = vmatprep.subr.bf16.mxu0 %v2971
        %3533 = vmatpush1.bf16.msra.mxu0 %v2970
        %3534 = vmatprep.subr.bf16.mxu0 %v2979
        %3535 = vmatpush1.bf16.msra.mxu0 %v2978
        %3536 = vmatprep.subr.bf16.mxu0 %v2987
        %3537 = vmatpush1.bf16.msra.mxu0 %v2986
        %3538 = vmatprep.subr.bf16.mxu0 %v2995
        %3539 = vmatpush1.bf16.msra.mxu0 %v2994
        %3540 = vmatprep.subr.bf16.mxu0 %v3003
        %3541 = vmatpush1.bf16.msra.mxu0 %v3002
        %3542 = vmatprep.subr.bf16.mxu0 %v3011
        %3543 = vmatpush1.bf16.msra.mxu0 %v3010
        %3544 = vmatprep.subr.bf16.mxu0 %v3019
        %3545 = vmatpush1.bf16.msra.mxu0 %v3018
        %3546 = vmatprep.subr.bf16.mxu0 %v3027
        %3547 = vmatpush1.bf16.msra.mxu0 %v3026
        %3548 = vmatprep.subr.bf16.mxu0 %v3035
        %3549 = vmatpush1.bf16.msra.mxu0 %v3034
        %3550 = vmatprep.subr.bf16.mxu0 %v3043
        %3551 = vmatpush1.bf16.msra.mxu0 %v3042
        %3552 = vmatprep.subr.bf16.mxu0 %v3051
        %3553 = vmatpush1.bf16.msra.mxu0 %v3050
        %3554 = vmatprep.mubr.bf16.mxu0 %v1859
        %3555 = vmatmul.mubr.bf16.gmra.mrb[0].mxu0 %v1858
        %v3556 = vpop.f32.mrb[0].mxu0
        %v3557 = vadd.f32 %v2131, %v3556
        %v3558 = vpop.f32.mrb[0].mxu0
        %v3559 = vadd.f32 %v2135, %v3558
        %v3560 = vpop.f32.mrb[0].mxu0
        %v3561 = vpop.f32.mrb[0].mxu0
        %3562 = vdwg.mxu0
        %3563 = vmatprep.subr.bf16.mxu0 %v3059
        %3564 = vmatpush1.bf16.msra.mxu0 %v3058
        %3565 = vmatprep.subr.bf16.mxu0 %v3067
        %3566 = vmatpush1.bf16.msra.mxu0 %v3066
        %3567 = vmatprep.subr.bf16.mxu0 %v3075
        %3568 = vmatpush1.bf16.msra.mxu0 %v3074
        %3569 = vmatprep.subr.bf16.mxu0 %v3083
        %3570 = vmatpush1.bf16.msra.mxu0 %v3082
        %3571 = vmatprep.subr.bf16.mxu0 %v3091
        %3572 = vmatpush1.bf16.msra.mxu0 %v3090
        %3573 = vmatprep.subr.bf16.mxu0 %v3099
        %3574 = vmatpush1.bf16.msra.mxu0 %v3098
        %3575 = vmatprep.subr.bf16.mxu0 %v3107
        %3576 = vmatpush1.bf16.msra.mxu0 %v3106
        %3577 = vmatprep.subr.bf16.mxu0 %v3115
        %3578 = vmatpush1.bf16.msra.mxu0 %v3114
        %3579 = vmatprep.subr.bf16.mxu0 %v3123
        %3580 = vmatpush1.bf16.msra.mxu0 %v3122
        %3581 = vmatprep.subr.bf16.mxu0 %v3131
        %3582 = vmatpush1.bf16.msra.mxu0 %v3130
        %3583 = vmatprep.subr.bf16.mxu0 %v3139
        %3584 = vmatpush1.bf16.msra.mxu0 %v3138
        %3585 = vmatprep.subr.bf16.mxu0 %v3147
        %3586 = vmatpush1.bf16.msra.mxu0 %v3146
        %3587 = vmatprep.subr.bf16.mxu0 %v3155
        %3588 = vmatpush1.bf16.msra.mxu0 %v3154
        %3589 = vmatprep.subr.bf16.mxu0 %v3163
        %3590 = vmatpush1.bf16.msra.mxu0 %v3162
        %3591 = vmatprep.subr.bf16.mxu0 %v3171
        %3592 = vmatpush1.bf16.msra.mxu0 %v3170
        %3593 = vmatprep.subr.bf16.mxu0 %v3179
        %3594 = vmatpush1.bf16.msra.mxu0 %v3178
        %3595 = vmatprep.mubr.bf16.mxu0 %v1861
        %3596 = vmatmul.mubr.bf16.gmra.mrb[0].mxu0 %v1860
        %v3597 = vpop.f32.mrb[0].mxu0
        %v3598 = vadd.f32 %v3557, %v3597
        %v3599 = vpop.f32.mrb[0].mxu0
        %v3600 = vadd.f32 %v3559, %v3599
        %v3601 = vpop.f32.mrb[0].mxu0
        %v3602 = vpop.f32.mrb[0].mxu0
        %3603 = vdwg.mxu0
        %3604 = vmatprep.subr.bf16.mxu0 %v2933
        %3605 = vmatpush1.bf16.msra.mxu0 %v2932
        %3606 = vmatprep.subr.bf16.mxu0 %v2941
        %3607 = vmatpush1.bf16.msra.mxu0 %v2940
        %3608 = vmatprep.subr.bf16.mxu0 %v2949
        %3609 = vmatpush1.bf16.msra.mxu0 %v2948
        %3610 = vmatprep.subr.bf16.mxu0 %v2957
        %3611 = vmatpush1.bf16.msra.mxu0 %v2956
        %3612 = vmatprep.subr.bf16.mxu0 %v2965
        %3613 = vmatpush1.bf16.msra.mxu0 %v2964
        %3614 = vmatprep.subr.bf16.mxu0 %v2973
        %3615 = vmatpush1.bf16.msra.mxu0 %v2972
        %3616 = vmatprep.subr.bf16.mxu0 %v2981
        %3617 = vmatpush1.bf16.msra.mxu0 %v2980
        %3618 = vmatprep.subr.bf16.mxu0 %v2989
        %3619 = vmatpush1.bf16.msra.mxu0 %v2988
        %3620 = vmatprep.subr.bf16.mxu0 %v2997
        %3621 = vmatpush1.bf16.msra.mxu0 %v2996
        %3622 = vmatprep.subr.bf16.mxu0 %v3005
        %3623 = vmatpush1.bf16.msra.mxu0 %v3004
        %3624 = vmatprep.subr.bf16.mxu0 %v3013
        %3625 = vmatpush1.bf16.msra.mxu0 %v3012
        %3626 = vmatprep.subr.bf16.mxu0 %v3021
        %3627 = vmatpush1.bf16.msra.mxu0 %v3020
        %3628 = vmatprep.subr.bf16.mxu0 %v3029
        %3629 = vmatpush1.bf16.msra.mxu0 %v3028
        %3630 = vmatprep.subr.bf16.mxu0 %v3037
        %3631 = vmatpush1.bf16.msra.mxu0 %v3036
        %3632 = vmatprep.subr.bf16.mxu0 %v3045
        %3633 = vmatpush1.bf16.msra.mxu0 %v3044
        %3634 = vmatprep.subr.bf16.mxu0 %v3053
        %3635 = vmatpush1.bf16.msra.mxu0 %v3052
        %3636 = vmatprep.mubr.bf16.mxu0 %v1859
        %3637 = vmatmul.mubr.bf16.gmra.mrb[0].mxu0 %v1858
        %v3638 = vpop.f32.mrb[0].mxu0
        %v3639 = vadd.f32 %v2139, %v3638
        %v3640 = vpop.f32.mrb[0].mxu0
        %v3641 = vadd.f32 %v2143, %v3640
        %v3642 = vpop.f32.mrb[0].mxu0
        %v3643 = vpop.f32.mrb[0].mxu0
        %3644 = vdwg.mxu0
        %3645 = vmatprep.subr.bf16.mxu0 %v3061
        %3646 = vmatpush1.bf16.msra.mxu0 %v3060
        %3647 = vmatprep.subr.bf16.mxu0 %v3069
        %3648 = vmatpush1.bf16.msra.mxu0 %v3068
        %3649 = vmatprep.subr.bf16.mxu0 %v3077
        %3650 = vmatpush1.bf16.msra.mxu0 %v3076
        %3651 = vmatprep.subr.bf16.mxu0 %v3085
        %3652 = vmatpush1.bf16.msra.mxu0 %v3084
        %3653 = vmatprep.subr.bf16.mxu0 %v3093
        %3654 = vmatpush1.bf16.msra.mxu0 %v3092
        %3655 = vmatprep.subr.bf16.mxu0 %v3101
        %3656 = vmatpush1.bf16.msra.mxu0 %v3100
        %3657 = vmatprep.subr.bf16.mxu0 %v3109
        %3658 = vmatpush1.bf16.msra.mxu0 %v3108
        %3659 = vmatprep.subr.bf16.mxu0 %v3117
        %3660 = vmatpush1.bf16.msra.mxu0 %v3116
        %3661 = vmatprep.subr.bf16.mxu0 %v3125
        %3662 = vmatpush1.bf16.msra.mxu0 %v3124
        %3663 = vmatprep.subr.bf16.mxu0 %v3133
        %3664 = vmatpush1.bf16.msra.mxu0 %v3132
        %3665 = vmatprep.subr.bf16.mxu0 %v3141
        %3666 = vmatpush1.bf16.msra.mxu0 %v3140
        %3667 = vmatprep.subr.bf16.mxu0 %v3149
        %3668 = vmatpush1.bf16.msra.mxu0 %v3148
        %3669 = vmatprep.subr.bf16.mxu0 %v3157
        %3670 = vmatpush1.bf16.msra.mxu0 %v3156
        %3671 = vmatprep.subr.bf16.mxu0 %v3165
        %3672 = vmatpush1.bf16.msra.mxu0 %v3164
        %3673 = vmatprep.subr.bf16.mxu0 %v3173
        %3674 = vmatpush1.bf16.msra.mxu0 %v3172
        %3675 = vmatprep.subr.bf16.mxu0 %v3181
        %3676 = vmatpush1.bf16.msra.mxu0 %v3180
        %3677 = vmatprep.mubr.bf16.mxu0 %v1861
        %3678 = vmatmul.mubr.bf16.gmra.mrb[0].mxu0 %v1860
        %v3679 = vpop.f32.mrb[0].mxu0
        %v3680 = vadd.f32 %v3639, %v3679
        %v3681 = vpop.f32.mrb[0].mxu0
        %v3682 = vadd.f32 %v3641, %v3681
        %v3683 = vpop.f32.mrb[0].mxu0
        %v3684 = vpop.f32.mrb[0].mxu0
        %3685 = vdwg.mxu0
        %3686 = vmatprep.subr.bf16.mxu0 %v2935
        %3687 = vmatpush1.bf16.msra.mxu0 %v2934
        %3688 = vmatprep.subr.bf16.mxu0 %v2943
        %3689 = vmatpush1.bf16.msra.mxu0 %v2942
        %3690 = vmatprep.subr.bf16.mxu0 %v2951
        %3691 = vmatpush1.bf16.msra.mxu0 %v2950
        %3692 = vmatprep.subr.bf16.mxu0 %v2959
        %3693 = vmatpush1.bf16.msra.mxu0 %v2958
        %3694 = vmatprep.subr.bf16.mxu0 %v2967
        %3695 = vmatpush1.bf16.msra.mxu0 %v2966
        %3696 = vmatprep.subr.bf16.mxu0 %v2975
        %3697 = vmatpush1.bf16.msra.mxu0 %v2974
        %3698 = vmatprep.subr.bf16.mxu0 %v2983
        %3699 = vmatpush1.bf16.msra.mxu0 %v2982
        %3700 = vmatprep.subr.bf16.mxu0 %v2991
        %3701 = vmatpush1.bf16.msra.mxu0 %v2990
        %3702 = vmatprep.subr.bf16.mxu0 %v2999
        %3703 = vmatpush1.bf16.msra.mxu0 %v2998
        %3704 = vmatprep.subr.bf16.mxu0 %v3007
        %3705 = vmatpush1.bf16.msra.mxu0 %v3006
        %3706 = vmatprep.subr.bf16.mxu0 %v3015
        %3707 = vmatpush1.bf16.msra.mxu0 %v3014
        %3708 = vmatprep.subr.bf16.mxu0 %v3023
        %3709 = vmatpush1.bf16.msra.mxu0 %v3022
        %3710 = vmatprep.subr.bf16.mxu0 %v3031
        %3711 = vmatpush1.bf16.msra.mxu0 %v3030
        %3712 = vmatprep.subr.bf16.mxu0 %v3039
        %3713 = vmatpush1.bf16.msra.mxu0 %v3038
        %3714 = vmatprep.subr.bf16.mxu0 %v3047
        %3715 = vmatpush1.bf16.msra.mxu0 %v3046
        %3716 = vmatprep.subr.bf16.mxu0 %v3055
        %3717 = vmatpush1.bf16.msra.mxu0 %v3054
        %3718 = vmatprep.mubr.bf16.mxu0 %v1859
        %3719 = vmatmul.mubr.bf16.gmra.mrb[0].mxu0 %v1858
        %v3720 = vpop.f32.mrb[0].mxu0
        %v3721 = vadd.f32 %v2147, %v3720
        %v3722 = vpop.f32.mrb[0].mxu0
        %v3723 = vadd.f32 %v2151, %v3722
        %v3724 = vpop.f32.mrb[0].mxu0
        %v3725 = vpop.f32.mrb[0].mxu0
        %3726 = vdwg.mxu0
        %3727 = vmatprep.subr.bf16.mxu0 %v3063
        %3728 = vmatpush1.bf16.msra.mxu0 %v3062
        %3729 = vmatprep.subr.bf16.mxu0 %v3071
        %3730 = vmatpush1.bf16.msra.mxu0 %v3070
        %3731 = vmatprep.subr.bf16.mxu0 %v3079
        %3732 = vmatpush1.bf16.msra.mxu0 %v3078
        %3733 = vmatprep.subr.bf16.mxu0 %v3087
        %3734 = vmatpush1.bf16.msra.mxu0 %v3086
        %3735 = vmatprep.subr.bf16.mxu0 %v3095
        %3736 = vmatpush1.bf16.msra.mxu0 %v3094
        %3737 = vmatprep.subr.bf16.mxu0 %v3103
        %3738 = vmatpush1.bf16.msra.mxu0 %v3102
        %3739 = vmatprep.subr.bf16.mxu0 %v3111
        %3740 = vmatpush1.bf16.msra.mxu0 %v3110
        %3741 = vmatprep.subr.bf16.mxu0 %v3119
        %3742 = vmatpush1.bf16.msra.mxu0 %v3118
        %3743 = vmatprep.subr.bf16.mxu0 %v3127
        %3744 = vmatpush1.bf16.msra.mxu0 %v3126
        %3745 = vmatprep.subr.bf16.mxu0 %v3135
        %3746 = vmatpush1.bf16.msra.mxu0 %v3134
        %3747 = vmatprep.subr.bf16.mxu0 %v3143
        %3748 = vmatpush1.bf16.msra.mxu0 %v3142
        %3749 = vmatprep.subr.bf16.mxu0 %v3151
        %3750 = vmatpush1.bf16.msra.mxu0 %v3150
        %3751 = vmatprep.subr.bf16.mxu0 %v3159
        %3752 = vmatpush1.bf16.msra.mxu0 %v3158
        %3753 = vmatprep.subr.bf16.mxu0 %v3167
        %3754 = vmatpush1.bf16.msra.mxu0 %v3166
        %3755 = vmatprep.subr.bf16.mxu0 %v3175
        %3756 = vmatpush1.bf16.msra.mxu0 %v3174
        %3757 = vmatprep.subr.bf16.mxu0 %v3183
        %3758 = vmatpush1.bf16.msra.mxu0 %v3182
        %3759 = vmatprep.mubr.bf16.mxu0 %v1861
        %3760 = vmatmul.mubr.bf16.gmra.mrb[0].mxu0 %v1860
        %v3761 = vpop.f32.mrb[0].mxu0
        %v3762 = vadd.f32 %v3721, %v3761
        %v3763 = vpop.f32.mrb[0].mxu0
        %v3764 = vadd.f32 %v3723, %v3763
        %v3765 = vpop.f32.mrb[0].mxu0
        %v3766 = vpop.f32.mrb[0].mxu0
        %3767 = vdwg.mxu0
        %v3768 = vrot.slane %v3516, 4
        %v3769 = vadd.f32 %v3516, %v3768
        %v3770 = vrot.slane %v3769, 2
        %v3771 = vadd.f32 %v3769, %v3770
        %v3772 = vrot.slane %v3771, 1
        %v3773 = vadd.f32 %v3771, %v3772
        %v3774 = vrot.slane %v3518, 4
        %v3775 = vadd.f32 %v3518, %v3774
        %v3776 = vrot.slane %v3775, 2
        %v3777 = vadd.f32 %v3775, %v3776
        %v3778 = vrot.slane %v3777, 1
        %v3779 = vadd.f32 %v3777, %v3778
        %v3780 = vrot.slane %v3598, 4
        %v3781 = vadd.f32 %v3598, %v3780
        %v3782 = vrot.slane %v3781, 2
        %v3783 = vadd.f32 %v3781, %v3782
        %v3784 = vrot.slane %v3783, 1
        %v3785 = vadd.f32 %v3783, %v3784
        %v3786 = vrot.slane %v3600, 4
        %v3787 = vadd.f32 %v3600, %v3786
        %v3788 = vrot.slane %v3787, 2
        %v3789 = vadd.f32 %v3787, %v3788
        %v3790 = vrot.slane %v3789, 1
        %v3791 = vadd.f32 %v3789, %v3790
        %v3792 = vrot.slane %v3680, 4
        %v3793 = vadd.f32 %v3680, %v3792
        %v3794 = vrot.slane %v3793, 2
        %v3795 = vadd.f32 %v3793, %v3794
        %v3796 = vrot.slane %v3795, 1
        %v3797 = vadd.f32 %v3795, %v3796
        %v3798 = vrot.slane %v3682, 4
        %v3799 = vadd.f32 %v3682, %v3798
        %v3800 = vrot.slane %v3799, 2
        %v3801 = vadd.f32 %v3799, %v3800
        %v3802 = vrot.slane %v3801, 1
        %v3803 = vadd.f32 %v3801, %v3802
        %v3804 = vrot.slane %v3762, 4
        %v3805 = vadd.f32 %v3762, %v3804
        %v3806 = vrot.slane %v3805, 2
        %v3807 = vadd.f32 %v3805, %v3806
        %v3808 = vrot.slane %v3807, 1
        %v3809 = vadd.f32 %v3807, %v3808
        %v3810 = vrot.slane %v3764, 4
        %v3811 = vadd.f32 %v3764, %v3810
        %v3812 = vrot.slane %v3811, 2
        %v3813 = vadd.f32 %v3811, %v3812
        %v3814 = vrot.slane %v3813, 1
        %v3815 = vadd.f32 %v3813, %v3814
        %v3816 = vmul.f32 %v3773, %v973
        %v3817 = vmul.f32 %v3779, %v973
        %v3818 = vmul.f32 %v3785, %v973
        %v3819 = vmul.f32 %v3791, %v973
        %v3820 = vmul.f32 %v3797, %v973
        %v3821 = vmul.f32 %v3803, %v973
        %v3822 = vmul.f32 %v3809, %v973
        %v3823 = vmul.f32 %v3815, %v973
        %v3824 = vsub.f32 %v3516, %v3816
        %v3825 = vsub.f32 %v3518, %v3817
        %v3826 = vsub.f32 %v3598, %v3818
        %v3827 = vsub.f32 %v3600, %v3819
        %v3828 = vsub.f32 %v3680, %v3820
        %v3829 = vsub.f32 %v3682, %v3821
        %v3830 = vsub.f32 %v3762, %v3822
        %v3831 = vsub.f32 %v3764, %v3823
        %v3832 = vmul.f32 %v3824, %v3824
        %v3833 = vmul.f32 %v3825, %v3825
        %v3834 = vmul.f32 %v3826, %v3826
        %v3835 = vmul.f32 %v3827, %v3827
        %v3836 = vmul.f32 %v3828, %v3828
        %v3837 = vmul.f32 %v3829, %v3829
        %v3838 = vmul.f32 %v3830, %v3830
        %v3839 = vmul.f32 %v3831, %v3831
        %v3840 = vrot.slane %v3832, 4
        %v3841 = vadd.f32 %v3832, %v3840
        %v3842 = vrot.slane %v3841, 2
        %v3843 = vadd.f32 %v3841, %v3842
        %v3844 = vrot.slane %v3843, 1
        %v3845 = vadd.f32 %v3843, %v3844
        %v3846 = vrot.slane %v3833, 4
        %v3847 = vadd.f32 %v3833, %v3846
        %v3848 = vrot.slane %v3847, 2
        %v3849 = vadd.f32 %v3847, %v3848
        %v3850 = vrot.slane %v3849, 1
        %v3851 = vadd.f32 %v3849, %v3850
        %v3852 = vrot.slane %v3834, 4
        %v3853 = vadd.f32 %v3834, %v3852
        %v3854 = vrot.slane %v3853, 2
        %v3855 = vadd.f32 %v3853, %v3854
        %v3856 = vrot.slane %v3855, 1
        %v3857 = vadd.f32 %v3855, %v3856
        %v3858 = vrot.slane %v3835, 4
        %v3859 = vadd.f32 %v3835, %v3858
        %v3860 = vrot.slane %v3859, 2
        %v3861 = vadd.f32 %v3859, %v3860
        %v3862 = vrot.slane %v3861, 1
        %v3863 = vadd.f32 %v3861, %v3862
        %v3864 = vrot.slane %v3836, 4
        %v3865 = vadd.f32 %v3836, %v3864
        %v3866 = vrot.slane %v3865, 2
        %v3867 = vadd.f32 %v3865, %v3866
        %v3868 = vrot.slane %v3867, 1
        %v3869 = vadd.f32 %v3867, %v3868
        %v3870 = vrot.slane %v3837, 4
        %v3871 = vadd.f32 %v3837, %v3870
        %v3872 = vrot.slane %v3871, 2
        %v3873 = vadd.f32 %v3871, %v3872
        %v3874 = vrot.slane %v3873, 1
        %v3875 = vadd.f32 %v3873, %v3874
        %v3876 = vrot.slane %v3838, 4
        %v3877 = vadd.f32 %v3838, %v3876
        %v3878 = vrot.slane %v3877, 2
        %v3879 = vadd.f32 %v3877, %v3878
        %v3880 = vrot.slane %v3879, 1
        %v3881 = vadd.f32 %v3879, %v3880
        %v3882 = vrot.slane %v3839, 4
        %v3883 = vadd.f32 %v3839, %v3882
        %v3884 = vrot.slane %v3883, 2
        %v3885 = vadd.f32 %v3883, %v3884
        %v3886 = vrot.slane %v3885, 1
        %v3887 = vadd.f32 %v3885, %v3886
        %v3888 = vmul.f32 %v3845, %v973
        %v3889 = vmul.f32 %v3851, %v973
        %v3890 = vmul.f32 %v3857, %v973
        %v3891 = vmul.f32 %v3863, %v973
        %v3892 = vmul.f32 %v3869, %v973
        %v3893 = vmul.f32 %v3875, %v973
        %v3894 = vmul.f32 %v3881, %v973
        %v3895 = vmul.f32 %v3887, %v973
        %v3896 = vadd.f32 %v3888, 0.8
        %v3897 = vadd.f32 %v3889, 0.8
        %v3898 = vadd.f32 %v3890, 0.8
        %v3899 = vadd.f32 %v3891, 0.8
        %v3900 = vadd.f32 %v3892, 0.8
        %v3901 = vadd.f32 %v3893, 0.8
        %v3902 = vadd.f32 %v3894, 0.8
        %v3903 = vadd.f32 %v3895, 0.8
        %v3904 = vrsqrt.pop %v3896
        %v3905 = vrsqrt.pop %v3897
        %v3906 = vrsqrt.pop %v3898
        %v3907 = vrsqrt.pop %v3899
        %v3908 = vrsqrt.pop %v3900
        %v3909 = vrsqrt.pop %v3901
        %v3910 = vrsqrt.pop %v3902
        %v3911 = vrsqrt.pop %v3903
        %v3912 = vmul.f32 %v3824, %v3904
        %v3913 = vmul.f32 %v3825, %v3905
        %v3914 = vmul.f32 %v3826, %v3906
        %v3915 = vmul.f32 %v3827, %v3907
        %v3916 = vmul.f32 %v3828, %v3908
        %v3917 = vmul.f32 %v3829, %v3909
        %v3918 = vmul.f32 %v3830, %v3910
        %v3919 = vmul.f32 %v3831, %v3911
        %v3920 = vld [vmem:[#allocation26] sm:$0xff]
        %v3922 = vlaneseq
        %v3923 = vshrl.u32 %v3922, 7
        %v3924 = vsub.s32 0, %v3923
        %v3925 = vrot.slane %v3920, %v3924
        %v3926 = vlaneseq
        %v3927 = vshrl.u32 %v3926, 7
        %v3928 = vsub.s32 1, %v3927
        %v3929 = vrot.slane %v3920, %v3928
        %v3930 = vlaneseq
        %v3931 = vshrl.u32 %v3930, 7
        %v3932 = vsub.s32 2, %v3931
        %v3933 = vrot.slane %v3920, %v3932
        %v3934 = vlaneseq
        %v3935 = vshrl.u32 %v3934, 7
        %v3936 = vsub.s32 3, %v3935
        %v3937 = vrot.slane %v3920, %v3936
        %v3938 = vlaneseq
        %v3939 = vshrl.u32 %v3938, 7
        %v3940 = vsub.s32 4, %v3939
        %v3941 = vrot.slane %v3920, %v3940
        %v3942 = vlaneseq
        %v3943 = vshrl.u32 %v3942, 7
        %v3944 = vsub.s32 5, %v3943
        %v3945 = vrot.slane %v3920, %v3944
        %v3946 = vlaneseq
        %v3947 = vshrl.u32 %v3946, 7
        %v3948 = vsub.s32 6, %v3947
        %v3949 = vrot.slane %v3920, %v3948
        %v3950 = vlaneseq
        %v3951 = vshrl.u32 %v3950, 7
        %v3952 = vsub.s32 7, %v3951
        %v3953 = vrot.slane %v3920, %v3952
        %v3962 = vmul.f32 %v3912, %v3925
        %v3963 = vmul.f32 %v3913, %v3929
        %v3964 = vmul.f32 %v3914, %v3933
        %v3965 = vmul.f32 %v3915, %v3937
        %v3966 = vmul.f32 %v3916, %v3941
        %v3967 = vmul.f32 %v3917, %v3945
        %v3968 = vmul.f32 %v3918, %v3949
        %v3969 = vmul.f32 %v3919, %v3953
        %v3970 = vld [vmem:[#allocation28] sm:$0xff]
        %v3972 = vlaneseq
        %v3973 = vshrl.u32 %v3972, 7
        %v3974 = vsub.s32 0, %v3973
        %v3975 = vrot.slane %v3970, %v3974
        %v3976 = vlaneseq
        %v3977 = vshrl.u32 %v3976, 7
        %v3978 = vsub.s32 1, %v3977
        %v3979 = vrot.slane %v3970, %v3978
        %v3980 = vlaneseq
        %v3981 = vshrl.u32 %v3980, 7
        %v3982 = vsub.s32 2, %v3981
        %v3983 = vrot.slane %v3970, %v3982
        %v3984 = vlaneseq
        %v3985 = vshrl.u32 %v3984, 7
        %v3986 = vsub.s32 3, %v3985
        %v3987 = vrot.slane %v3970, %v3986
        %v3988 = vlaneseq
        %v3989 = vshrl.u32 %v3988, 7
        %v3990 = vsub.s32 4, %v3989
        %v3991 = vrot.slane %v3970, %v3990
        %v3992 = vlaneseq
        %v3993 = vshrl.u32 %v3992, 7
        %v3994 = vsub.s32 5, %v3993
        %v3995 = vrot.slane %v3970, %v3994
        %v3996 = vlaneseq
        %v3997 = vshrl.u32 %v3996, 7
        %v3998 = vsub.s32 6, %v3997
        %v3999 = vrot.slane %v3970, %v3998
        %v4000 = vlaneseq
        %v4001 = vshrl.u32 %v4000, 7
        %v4002 = vsub.s32 7, %v4001
        %v4003 = vrot.slane %v3970, %v4002
        %v4012 = vadd.f32 %v3962, %v3975
        %v4013 = vadd.f32 %v3963, %v3979
        %v4014 = vadd.f32 %v3964, %v3983
        %v4015 = vadd.f32 %v3965, %v3987
        %v4016 = vadd.f32 %v3966, %v3991
        %v4017 = vadd.f32 %v3967, %v3995
        %v4018 = vadd.f32 %v3968, %v3999
        %v4019 = vadd.f32 %v3969, %v4003
        %vm4020 = vcmp.gt.f32.partialorder %v4012, 0.0
        %vm4021 = vcmp.gt.f32.partialorder %v4013, 0.0
        %vm4022 = vcmp.gt.f32.partialorder %v4014, 0.0
        %vm4023 = vcmp.gt.f32.partialorder %v4015, 0.0
        %vm4024 = vcmp.gt.f32.partialorder %v4016, 0.0
        %vm4025 = vcmp.gt.f32.partialorder %v4017, 0.0
        %vm4026 = vcmp.gt.f32.partialorder %v4018, 0.0
        %vm4027 = vcmp.gt.f32.partialorder %v4019, 0.0
        %v4028 = vmul.f32 %v4012, 0.2
        %v4029 = vmul.f32 %v4013, 0.2
        %v4030 = vmul.f32 %v4014, 0.2
        %v4031 = vmul.f32 %v4015, 0.2
        %v4032 = vmul.f32 %v4016, 0.2
        %v4033 = vmul.f32 %v4017, 0.2
        %v4034 = vmul.f32 %v4018, 0.2
        %v4035 = vmul.f32 %v4019, 0.2
        %v4036 = vsel %vm4020, %v4012, %v4028
        %v4037 = vsel %vm4021, %v4013, %v4029
        %v4038 = vsel %vm4022, %v4014, %v4030
        %v4039 = vsel %vm4023, %v4015, %v4031
        %v4040 = vsel %vm4024, %v4016, %v4032
        %v4041 = vsel %vm4025, %v4017, %v4033
        %v4042 = vsel %vm4026, %v4018, %v4034
        %v4043 = vsel %vm4027, %v4019, %v4035
        %v4044 = vpack.c.bf16 %v4036, %v4036
        %v4045 = vpack.c.bf16 %v4037, %v4037
        %v4046 = vpack.c.bf16 %v4038, %v4038
        %v4047 = vpack.c.bf16 %v4039, %v4039
        %v4048 = vpack.c.bf16 %v4040, %v4040
        %v4049 = vpack.c.bf16 %v4041, %v4041
        %v4050 = vpack.c.bf16 %v4042, %v4042
        %v4051 = vpack.c.bf16 %v4043, %v4043
        %v4052 = vld [vmem:[#allocation29] sm:$0xff]
        %v4053 = vld [vmem:[#allocation29 + $0x8] sm:$0xff]
        %v4054 = vld [vmem:[#allocation29 + $0x10] sm:$0xff]
        %v4055 = vld [vmem:[#allocation29 + $0x18] sm:$0xff]
        %v4056 = vld [vmem:[#allocation29 + $0x20] sm:$0xff]
        %v4057 = vld [vmem:[#allocation29 + $0x28] sm:$0xff]
        %v4058 = vld [vmem:[#allocation29 + $0x30] sm:$0xff]
        %v4059 = vld [vmem:[#allocation29 + $0x38] sm:$0xff]
        %v4060 = vld [vmem:[#allocation29 + $0x40] sm:$0xff]
        %v4061 = vld [vmem:[#allocation29 + $0x48] sm:$0xff]
        %v4062 = vld [vmem:[#allocation29 + $0x50] sm:$0xff]
        %v4063 = vld [vmem:[#allocation29 + $0x58] sm:$0xff]
        %v4064 = vld [vmem:[#allocation29 + $0x60] sm:$0xff]
        %v4065 = vld [vmem:[#allocation29 + $0x68] sm:$0xff]
        %v4066 = vld [vmem:[#allocation29 + $0x70] sm:$0xff]
        %v4067 = vld [vmem:[#allocation29 + $0x78] sm:$0xff]
        %v4068 = vld [vmem:[#allocation29 + $0x80] sm:$0xff]
        %v4069 = vld [vmem:[#allocation29 + $0x88] sm:$0xff]
        %v4070 = vld [vmem:[#allocation29 + $0x90] sm:$0xff]
        %v4071 = vld [vmem:[#allocation29 + $0x98] sm:$0xff]
        %v4072 = vld [vmem:[#allocation29 + $0xa0] sm:$0xff]
        %v4073 = vld [vmem:[#allocation29 + $0xa8] sm:$0xff]
        %v4074 = vld [vmem:[#allocation29 + $0xb0] sm:$0xff]
        %v4075 = vld [vmem:[#allocation29 + $0xb8] sm:$0xff]
        %v4076 = vld [vmem:[#allocation29 + $0xc0] sm:$0xff]
        %v4077 = vld [vmem:[#allocation29 + $0xc8] sm:$0xff]
        %v4078 = vld [vmem:[#allocation29 + $0xd0] sm:$0xff]
        %v4079 = vld [vmem:[#allocation29 + $0xd8] sm:$0xff]
        %v4080 = vld [vmem:[#allocation29 + $0xe0] sm:$0xff]
        %v4081 = vld [vmem:[#allocation29 + $0xe8] sm:$0xff]
        %v4082 = vld [vmem:[#allocation29 + $0xf0] sm:$0xff]
        %v4083 = vld [vmem:[#allocation29 + $0xf8] sm:$0xff]
        %v4084 = vld [vmem:[#allocation29 + $0x100] sm:$0xff]
        %v4085 = vld [vmem:[#allocation29 + $0x108] sm:$0xff]
        %v4086 = vld [vmem:[#allocation29 + $0x110] sm:$0xff]
        %v4087 = vld [vmem:[#allocation29 + $0x118] sm:$0xff]
        %v4088 = vld [vmem:[#allocation29 + $0x120] sm:$0xff]
        %v4089 = vld [vmem:[#allocation29 + $0x128] sm:$0xff]
        %v4090 = vld [vmem:[#allocation29 + $0x130] sm:$0xff]
        %v4091 = vld [vmem:[#allocation29 + $0x138] sm:$0xff]
        %v4092 = vld [vmem:[#allocation29 + $0x140] sm:$0xff]
        %v4093 = vld [vmem:[#allocation29 + $0x148] sm:$0xff]
        %v4094 = vld [vmem:[#allocation29 + $0x150] sm:$0xff]
        %v4095 = vld [vmem:[#allocation29 + $0x158] sm:$0xff]
        %v4096 = vld [vmem:[#allocation29 + $0x160] sm:$0xff]
        %v4097 = vld [vmem:[#allocation29 + $0x168] sm:$0xff]
        %v4098 = vld [vmem:[#allocation29 + $0x170] sm:$0xff]
        %v4099 = vld [vmem:[#allocation29 + $0x178] sm:$0xff]
        %v4100 = vld [vmem:[#allocation29 + $0x180] sm:$0xff]
        %v4101 = vld [vmem:[#allocation29 + $0x188] sm:$0xff]
        %v4102 = vld [vmem:[#allocation29 + $0x190] sm:$0xff]
        %v4103 = vld [vmem:[#allocation29 + $0x198] sm:$0xff]
        %v4104 = vld [vmem:[#allocation29 + $0x1a0] sm:$0xff]
        %v4105 = vld [vmem:[#allocation29 + $0x1a8] sm:$0xff]
        %v4106 = vld [vmem:[#allocation29 + $0x1b0] sm:$0xff]
        %v4107 = vld [vmem:[#allocation29 + $0x1b8] sm:$0xff]
        %v4108 = vld [vmem:[#allocation29 + $0x1c0] sm:$0xff]
        %v4109 = vld [vmem:[#allocation29 + $0x1c8] sm:$0xff]
        %v4110 = vld [vmem:[#allocation29 + $0x1d0] sm:$0xff]
        %v4111 = vld [vmem:[#allocation29 + $0x1d8] sm:$0xff]
        %v4112 = vld [vmem:[#allocation29 + $0x1e0] sm:$0xff]
        %v4113 = vld [vmem:[#allocation29 + $0x1e8] sm:$0xff]
        %v4114 = vld [vmem:[#allocation29 + $0x1f0] sm:$0xff]
        %v4115 = vld [vmem:[#allocation29 + $0x1f8] sm:$0xff]
        %v4116 = vld [vmem:[#allocation29 + $0x200] sm:$0xff]
        %v4117 = vld [vmem:[#allocation29 + $0x208] sm:$0xff]
        %v4118 = vld [vmem:[#allocation29 + $0x210] sm:$0xff]
        %v4119 = vld [vmem:[#allocation29 + $0x218] sm:$0xff]
        %v4120 = vld [vmem:[#allocation29 + $0x220] sm:$0xff]
        %v4121 = vld [vmem:[#allocation29 + $0x228] sm:$0xff]
        %v4122 = vld [vmem:[#allocation29 + $0x230] sm:$0xff]
        %v4123 = vld [vmem:[#allocation29 + $0x238] sm:$0xff]
        %v4124 = vld [vmem:[#allocation29 + $0x240] sm:$0xff]
        %v4125 = vld [vmem:[#allocation29 + $0x248] sm:$0xff]
        %v4126 = vld [vmem:[#allocation29 + $0x250] sm:$0xff]
        %v4127 = vld [vmem:[#allocation29 + $0x258] sm:$0xff]
        %v4128 = vld [vmem:[#allocation29 + $0x260] sm:$0xff]
        %v4129 = vld [vmem:[#allocation29 + $0x268] sm:$0xff]
        %v4130 = vld [vmem:[#allocation29 + $0x270] sm:$0xff]
        %v4131 = vld [vmem:[#allocation29 + $0x278] sm:$0xff]
        %v4132 = vld [vmem:[#allocation29 + $0x280] sm:$0xff]
        %v4133 = vld [vmem:[#allocation29 + $0x288] sm:$0xff]
        %v4134 = vld [vmem:[#allocation29 + $0x290] sm:$0xff]
        %v4135 = vld [vmem:[#allocation29 + $0x298] sm:$0xff]
        %v4136 = vld [vmem:[#allocation29 + $0x2a0] sm:$0xff]
        %v4137 = vld [vmem:[#allocation29 + $0x2a8] sm:$0xff]
        %v4138 = vld [vmem:[#allocation29 + $0x2b0] sm:$0xff]
        %v4139 = vld [vmem:[#allocation29 + $0x2b8] sm:$0xff]
        %v4140 = vld [vmem:[#allocation29 + $0x2c0] sm:$0xff]
        %v4141 = vld [vmem:[#allocation29 + $0x2c8] sm:$0xff]
        %v4142 = vld [vmem:[#allocation29 + $0x2d0] sm:$0xff]
        %v4143 = vld [vmem:[#allocation29 + $0x2d8] sm:$0xff]
        %v4144 = vld [vmem:[#allocation29 + $0x2e0] sm:$0xff]
        %v4145 = vld [vmem:[#allocation29 + $0x2e8] sm:$0xff]
        %v4146 = vld [vmem:[#allocation29 + $0x2f0] sm:$0xff]
        %v4147 = vld [vmem:[#allocation29 + $0x2f8] sm:$0xff]
        %v4148 = vld [vmem:[#allocation29 + $0x300] sm:$0xff]
        %v4149 = vld [vmem:[#allocation29 + $0x308] sm:$0xff]
        %v4150 = vld [vmem:[#allocation29 + $0x310] sm:$0xff]
        %v4151 = vld [vmem:[#allocation29 + $0x318] sm:$0xff]
        %v4152 = vld [vmem:[#allocation29 + $0x320] sm:$0xff]
        %v4153 = vld [vmem:[#allocation29 + $0x328] sm:$0xff]
        %v4154 = vld [vmem:[#allocation29 + $0x330] sm:$0xff]
        %v4155 = vld [vmem:[#allocation29 + $0x338] sm:$0xff]
        %v4156 = vld [vmem:[#allocation29 + $0x340] sm:$0xff]
        %v4157 = vld [vmem:[#allocation29 + $0x348] sm:$0xff]
        %v4158 = vld [vmem:[#allocation29 + $0x350] sm:$0xff]
        %v4159 = vld [vmem:[#allocation29 + $0x358] sm:$0xff]
        %v4160 = vld [vmem:[#allocation29 + $0x360] sm:$0xff]
        %v4161 = vld [vmem:[#allocation29 + $0x368] sm:$0xff]
        %v4162 = vld [vmem:[#allocation29 + $0x370] sm:$0xff]
        %v4163 = vld [vmem:[#allocation29 + $0x378] sm:$0xff]
        %v4164 = vld [vmem:[#allocation29 + $0x380] sm:$0xff]
        %v4165 = vld [vmem:[#allocation29 + $0x388] sm:$0xff]
        %v4166 = vld [vmem:[#allocation29 + $0x390] sm:$0xff]
        %v4167 = vld [vmem:[#allocation29 + $0x398] sm:$0xff]
        %v4168 = vld [vmem:[#allocation29 + $0x3a0] sm:$0xff]
        %v4169 = vld [vmem:[#allocation29 + $0x3a8] sm:$0xff]
        %v4170 = vld [vmem:[#allocation29 + $0x3b0] sm:$0xff]
        %v4171 = vld [vmem:[#allocation29 + $0x3b8] sm:$0xff]
        %v4172 = vld [vmem:[#allocation29 + $0x3c0] sm:$0xff]
        %v4173 = vld [vmem:[#allocation29 + $0x3c8] sm:$0xff]
        %v4174 = vld [vmem:[#allocation29 + $0x3d0] sm:$0xff]
        %v4175 = vld [vmem:[#allocation29 + $0x3d8] sm:$0xff]
        %v4176 = vld [vmem:[#allocation29 + $0x3e0] sm:$0xff]
        %v4177 = vld [vmem:[#allocation29 + $0x3e8] sm:$0xff]
        %v4178 = vld [vmem:[#allocation29 + $0x3f0] sm:$0xff]
        %v4179 = vld [vmem:[#allocation29 + $0x3f8] sm:$0xff]
        %v4180 = vld [vmem:[#allocation29 + $0x400] sm:$0xff]
        %v4181 = vld [vmem:[#allocation29 + $0x408] sm:$0xff]
        %v4182 = vld [vmem:[#allocation29 + $0x410] sm:$0xff]
        %v4183 = vld [vmem:[#allocation29 + $0x418] sm:$0xff]
        %v4184 = vld [vmem:[#allocation29 + $0x420] sm:$0xff]
        %v4185 = vld [vmem:[#allocation29 + $0x428] sm:$0xff]
        %v4186 = vld [vmem:[#allocation29 + $0x430] sm:$0xff]
        %v4187 = vld [vmem:[#allocation29 + $0x438] sm:$0xff]
        %v4188 = vld [vmem:[#allocation29 + $0x440] sm:$0xff]
        %v4189 = vld [vmem:[#allocation29 + $0x448] sm:$0xff]
        %v4190 = vld [vmem:[#allocation29 + $0x450] sm:$0xff]
        %v4191 = vld [vmem:[#allocation29 + $0x458] sm:$0xff]
        %v4192 = vld [vmem:[#allocation29 + $0x460] sm:$0xff]
        %v4193 = vld [vmem:[#allocation29 + $0x468] sm:$0xff]
        %v4194 = vld [vmem:[#allocation29 + $0x470] sm:$0xff]
        %v4195 = vld [vmem:[#allocation29 + $0x478] sm:$0xff]
        %v4196 = vld [vmem:[#allocation29 + $0x480] sm:$0xff]
        %v4197 = vld [vmem:[#allocation29 + $0x488] sm:$0xff]
        %v4198 = vld [vmem:[#allocation29 + $0x490] sm:$0xff]
        %v4199 = vld [vmem:[#allocation29 + $0x498] sm:$0xff]
        %v4200 = vld [vmem:[#allocation29 + $0x4a0] sm:$0xff]
        %v4201 = vld [vmem:[#allocation29 + $0x4a8] sm:$0xff]
        %v4202 = vld [vmem:[#allocation29 + $0x4b0] sm:$0xff]
        %v4203 = vld [vmem:[#allocation29 + $0x4b8] sm:$0xff]
        %v4204 = vld [vmem:[#allocation29 + $0x4c0] sm:$0xff]
        %v4205 = vld [vmem:[#allocation29 + $0x4c8] sm:$0xff]
        %v4206 = vld [vmem:[#allocation29 + $0x4d0] sm:$0xff]
        %v4207 = vld [vmem:[#allocation29 + $0x4d8] sm:$0xff]
        %v4208 = vld [vmem:[#allocation29 + $0x4e0] sm:$0xff]
        %v4209 = vld [vmem:[#allocation29 + $0x4e8] sm:$0xff]
        %v4210 = vld [vmem:[#allocation29 + $0x4f0] sm:$0xff]
        %v4211 = vld [vmem:[#allocation29 + $0x4f8] sm:$0xff]
        %v4212 = vld [vmem:[#allocation29 + $0x500] sm:$0xff]
        %v4213 = vld [vmem:[#allocation29 + $0x508] sm:$0xff]
        %v4214 = vld [vmem:[#allocation29 + $0x510] sm:$0xff]
        %v4215 = vld [vmem:[#allocation29 + $0x518] sm:$0xff]
        %v4216 = vld [vmem:[#allocation29 + $0x520] sm:$0xff]
        %v4217 = vld [vmem:[#allocation29 + $0x528] sm:$0xff]
        %v4218 = vld [vmem:[#allocation29 + $0x530] sm:$0xff]
        %v4219 = vld [vmem:[#allocation29 + $0x538] sm:$0xff]
        %v4220 = vld [vmem:[#allocation29 + $0x540] sm:$0xff]
        %v4221 = vld [vmem:[#allocation29 + $0x548] sm:$0xff]
        %v4222 = vld [vmem:[#allocation29 + $0x550] sm:$0xff]
        %v4223 = vld [vmem:[#allocation29 + $0x558] sm:$0xff]
        %v4224 = vld [vmem:[#allocation29 + $0x560] sm:$0xff]
        %v4225 = vld [vmem:[#allocation29 + $0x568] sm:$0xff]
        %v4226 = vld [vmem:[#allocation29 + $0x570] sm:$0xff]
        %v4227 = vld [vmem:[#allocation29 + $0x578] sm:$0xff]
        %v4228 = vld [vmem:[#allocation29 + $0x580] sm:$0xff]
        %v4229 = vld [vmem:[#allocation29 + $0x588] sm:$0xff]
        %v4230 = vld [vmem:[#allocation29 + $0x590] sm:$0xff]
        %v4231 = vld [vmem:[#allocation29 + $0x598] sm:$0xff]
        %v4232 = vld [vmem:[#allocation29 + $0x5a0] sm:$0xff]
        %v4233 = vld [vmem:[#allocation29 + $0x5a8] sm:$0xff]
        %v4234 = vld [vmem:[#allocation29 + $0x5b0] sm:$0xff]
        %v4235 = vld [vmem:[#allocation29 + $0x5b8] sm:$0xff]
        %v4236 = vld [vmem:[#allocation29 + $0x5c0] sm:$0xff]
        %v4237 = vld [vmem:[#allocation29 + $0x5c8] sm:$0xff]
        %v4238 = vld [vmem:[#allocation29 + $0x5d0] sm:$0xff]
        %v4239 = vld [vmem:[#allocation29 + $0x5d8] sm:$0xff]
        %v4240 = vld [vmem:[#allocation29 + $0x5e0] sm:$0xff]
        %v4241 = vld [vmem:[#allocation29 + $0x5e8] sm:$0xff]
        %v4242 = vld [vmem:[#allocation29 + $0x5f0] sm:$0xff]
        %v4243 = vld [vmem:[#allocation29 + $0x5f8] sm:$0xff]
        %v4244 = vld [vmem:[#allocation29 + $0x600] sm:$0xff]
        %v4245 = vld [vmem:[#allocation29 + $0x608] sm:$0xff]
        %v4246 = vld [vmem:[#allocation29 + $0x610] sm:$0xff]
        %v4247 = vld [vmem:[#allocation29 + $0x618] sm:$0xff]
        %v4248 = vld [vmem:[#allocation29 + $0x620] sm:$0xff]
        %v4249 = vld [vmem:[#allocation29 + $0x628] sm:$0xff]
        %v4250 = vld [vmem:[#allocation29 + $0x630] sm:$0xff]
        %v4251 = vld [vmem:[#allocation29 + $0x638] sm:$0xff]
        %v4252 = vld [vmem:[#allocation29 + $0x640] sm:$0xff]
        %v4253 = vld [vmem:[#allocation29 + $0x648] sm:$0xff]
        %v4254 = vld [vmem:[#allocation29 + $0x650] sm:$0xff]
        %v4255 = vld [vmem:[#allocation29 + $0x658] sm:$0xff]
        %v4256 = vld [vmem:[#allocation29 + $0x660] sm:$0xff]
        %v4257 = vld [vmem:[#allocation29 + $0x668] sm:$0xff]
        %v4258 = vld [vmem:[#allocation29 + $0x670] sm:$0xff]
        %v4259 = vld [vmem:[#allocation29 + $0x678] sm:$0xff]
        %v4260 = vld [vmem:[#allocation29 + $0x680] sm:$0xff]
        %v4261 = vld [vmem:[#allocation29 + $0x688] sm:$0xff]
        %v4262 = vld [vmem:[#allocation29 + $0x690] sm:$0xff]
        %v4263 = vld [vmem:[#allocation29 + $0x698] sm:$0xff]
        %v4264 = vld [vmem:[#allocation29 + $0x6a0] sm:$0xff]
        %v4265 = vld [vmem:[#allocation29 + $0x6a8] sm:$0xff]
        %v4266 = vld [vmem:[#allocation29 + $0x6b0] sm:$0xff]
        %v4267 = vld [vmem:[#allocation29 + $0x6b8] sm:$0xff]
        %v4268 = vld [vmem:[#allocation29 + $0x6c0] sm:$0xff]
        %v4269 = vld [vmem:[#allocation29 + $0x6c8] sm:$0xff]
        %v4270 = vld [vmem:[#allocation29 + $0x6d0] sm:$0xff]
        %v4271 = vld [vmem:[#allocation29 + $0x6d8] sm:$0xff]
        %v4272 = vld [vmem:[#allocation29 + $0x6e0] sm:$0xff]
        %v4273 = vld [vmem:[#allocation29 + $0x6e8] sm:$0xff]
        %v4274 = vld [vmem:[#allocation29 + $0x6f0] sm:$0xff]
        %v4275 = vld [vmem:[#allocation29 + $0x6f8] sm:$0xff]
        %v4276 = vld [vmem:[#allocation29 + $0x700] sm:$0xff]
        %v4277 = vld [vmem:[#allocation29 + $0x708] sm:$0xff]
        %v4278 = vld [vmem:[#allocation29 + $0x710] sm:$0xff]
        %v4279 = vld [vmem:[#allocation29 + $0x718] sm:$0xff]
        %v4280 = vld [vmem:[#allocation29 + $0x720] sm:$0xff]
        %v4281 = vld [vmem:[#allocation29 + $0x728] sm:$0xff]
        %v4282 = vld [vmem:[#allocation29 + $0x730] sm:$0xff]
        %v4283 = vld [vmem:[#allocation29 + $0x738] sm:$0xff]
        %v4284 = vld [vmem:[#allocation29 + $0x740] sm:$0xff]
        %v4285 = vld [vmem:[#allocation29 + $0x748] sm:$0xff]
        %v4286 = vld [vmem:[#allocation29 + $0x750] sm:$0xff]
        %v4287 = vld [vmem:[#allocation29 + $0x758] sm:$0xff]
        %v4288 = vld [vmem:[#allocation29 + $0x760] sm:$0xff]
        %v4289 = vld [vmem:[#allocation29 + $0x768] sm:$0xff]
        %v4290 = vld [vmem:[#allocation29 + $0x770] sm:$0xff]
        %v4291 = vld [vmem:[#allocation29 + $0x778] sm:$0xff]
        %v4292 = vld [vmem:[#allocation29 + $0x780] sm:$0xff]
        %v4293 = vld [vmem:[#allocation29 + $0x788] sm:$0xff]
        %v4294 = vld [vmem:[#allocation29 + $0x790] sm:$0xff]
        %v4295 = vld [vmem:[#allocation29 + $0x798] sm:$0xff]
        %v4296 = vld [vmem:[#allocation29 + $0x7a0] sm:$0xff]
        %v4297 = vld [vmem:[#allocation29 + $0x7a8] sm:$0xff]
        %v4298 = vld [vmem:[#allocation29 + $0x7b0] sm:$0xff]
        %v4299 = vld [vmem:[#allocation29 + $0x7b8] sm:$0xff]
        %v4300 = vld [vmem:[#allocation29 + $0x7c0] sm:$0xff]
        %v4301 = vld [vmem:[#allocation29 + $0x7c8] sm:$0xff]
        %v4302 = vld [vmem:[#allocation29 + $0x7d0] sm:$0xff]
        %v4303 = vld [vmem:[#allocation29 + $0x7d8] sm:$0xff]
        %v4304 = vld [vmem:[#allocation29 + $0x7e0] sm:$0xff]
        %v4305 = vld [vmem:[#allocation29 + $0x7e8] sm:$0xff]
        %v4306 = vld [vmem:[#allocation29 + $0x7f0] sm:$0xff]
        %v4307 = vld [vmem:[#allocation29 + $0x7f8] sm:$0xff]
        %v4308 = vld [vmem:[#allocation29 + $0x800] sm:$0xff]
        %v4309 = vld [vmem:[#allocation29 + $0x808] sm:$0xff]
        %v4310 = vld [vmem:[#allocation29 + $0x810] sm:$0xff]
        %v4311 = vld [vmem:[#allocation29 + $0x818] sm:$0xff]
        %v4312 = vld [vmem:[#allocation29 + $0x820] sm:$0xff]
        %v4313 = vld [vmem:[#allocation29 + $0x828] sm:$0xff]
        %v4314 = vld [vmem:[#allocation29 + $0x830] sm:$0xff]
        %v4315 = vld [vmem:[#allocation29 + $0x838] sm:$0xff]
        %v4316 = vld [vmem:[#allocation29 + $0x840] sm:$0xff]
        %v4317 = vld [vmem:[#allocation29 + $0x848] sm:$0xff]
        %v4318 = vld [vmem:[#allocation29 + $0x850] sm:$0xff]
        %v4319 = vld [vmem:[#allocation29 + $0x858] sm:$0xff]
        %v4320 = vld [vmem:[#allocation29 + $0x860] sm:$0xff]
        %v4321 = vld [vmem:[#allocation29 + $0x868] sm:$0xff]
        %v4322 = vld [vmem:[#allocation29 + $0x870] sm:$0xff]
        %v4323 = vld [vmem:[#allocation29 + $0x878] sm:$0xff]
        %v4324 = vld [vmem:[#allocation29 + $0x880] sm:$0xff]
        %v4325 = vld [vmem:[#allocation29 + $0x888] sm:$0xff]
        %v4326 = vld [vmem:[#allocation29 + $0x890] sm:$0xff]
        %v4327 = vld [vmem:[#allocation29 + $0x898] sm:$0xff]
        %v4328 = vld [vmem:[#allocation29 + $0x8a0] sm:$0xff]
        %v4329 = vld [vmem:[#allocation29 + $0x8a8] sm:$0xff]
        %v4330 = vld [vmem:[#allocation29 + $0x8b0] sm:$0xff]
        %v4331 = vld [vmem:[#allocation29 + $0x8b8] sm:$0xff]
        %v4332 = vld [vmem:[#allocation29 + $0x8c0] sm:$0xff]
        %v4333 = vld [vmem:[#allocation29 + $0x8c8] sm:$0xff]
        %v4334 = vld [vmem:[#allocation29 + $0x8d0] sm:$0xff]
        %v4335 = vld [vmem:[#allocation29 + $0x8d8] sm:$0xff]
        %v4336 = vld [vmem:[#allocation29 + $0x8e0] sm:$0xff]
        %v4337 = vld [vmem:[#allocation29 + $0x8e8] sm:$0xff]
        %v4338 = vld [vmem:[#allocation29 + $0x8f0] sm:$0xff]
        %v4339 = vld [vmem:[#allocation29 + $0x8f8] sm:$0xff]
        %v4340 = vld [vmem:[#allocation29 + $0x900] sm:$0xff]
        %v4341 = vld [vmem:[#allocation29 + $0x908] sm:$0xff]
        %v4342 = vld [vmem:[#allocation29 + $0x910] sm:$0xff]
        %v4343 = vld [vmem:[#allocation29 + $0x918] sm:$0xff]
        %v4344 = vld [vmem:[#allocation29 + $0x920] sm:$0xff]
        %v4345 = vld [vmem:[#allocation29 + $0x928] sm:$0xff]
        %v4346 = vld [vmem:[#allocation29 + $0x930] sm:$0xff]
        %v4347 = vld [vmem:[#allocation29 + $0x938] sm:$0xff]
        %v4348 = vld [vmem:[#allocation29 + $0x940] sm:$0xff]
        %v4349 = vld [vmem:[#allocation29 + $0x948] sm:$0xff]
        %v4350 = vld [vmem:[#allocation29 + $0x950] sm:$0xff]
        %v4351 = vld [vmem:[#allocation29 + $0x958] sm:$0xff]
        %v4352 = vld [vmem:[#allocation29 + $0x960] sm:$0xff]
        %v4353 = vld [vmem:[#allocation29 + $0x968] sm:$0xff]
        %v4354 = vld [vmem:[#allocation29 + $0x970] sm:$0xff]
        %v4355 = vld [vmem:[#allocation29 + $0x978] sm:$0xff]
        %v4356 = vld [vmem:[#allocation29 + $0x980] sm:$0xff]
        %v4357 = vld [vmem:[#allocation29 + $0x988] sm:$0xff]
        %v4358 = vld [vmem:[#allocation29 + $0x990] sm:$0xff]
        %v4359 = vld [vmem:[#allocation29 + $0x998] sm:$0xff]
        %v4360 = vld [vmem:[#allocation29 + $0x9a0] sm:$0xff]
        %v4361 = vld [vmem:[#allocation29 + $0x9a8] sm:$0xff]
        %v4362 = vld [vmem:[#allocation29 + $0x9b0] sm:$0xff]
        %v4363 = vld [vmem:[#allocation29 + $0x9b8] sm:$0xff]
        %v4364 = vld [vmem:[#allocation29 + $0x9c0] sm:$0xff]
        %v4365 = vld [vmem:[#allocation29 + $0x9c8] sm:$0xff]
        %v4366 = vld [vmem:[#allocation29 + $0x9d0] sm:$0xff]
        %v4367 = vld [vmem:[#allocation29 + $0x9d8] sm:$0xff]
        %v4368 = vld [vmem:[#allocation29 + $0x9e0] sm:$0xff]
        %v4369 = vld [vmem:[#allocation29 + $0x9e8] sm:$0xff]
        %v4370 = vld [vmem:[#allocation29 + $0x9f0] sm:$0xff]
        %v4371 = vld [vmem:[#allocation29 + $0x9f8] sm:$0xff]
        %v4372 = vld [vmem:[#allocation29 + $0xa00] sm:$0xff]
        %v4373 = vld [vmem:[#allocation29 + $0xa08] sm:$0xff]
        %v4374 = vld [vmem:[#allocation29 + $0xa10] sm:$0xff]
        %v4375 = vld [vmem:[#allocation29 + $0xa18] sm:$0xff]
        %v4376 = vld [vmem:[#allocation29 + $0xa20] sm:$0xff]
        %v4377 = vld [vmem:[#allocation29 + $0xa28] sm:$0xff]
        %v4378 = vld [vmem:[#allocation29 + $0xa30] sm:$0xff]
        %v4379 = vld [vmem:[#allocation29 + $0xa38] sm:$0xff]
        %v4380 = vld [vmem:[#allocation29 + $0xa40] sm:$0xff]
        %v4381 = vld [vmem:[#allocation29 + $0xa48] sm:$0xff]
        %v4382 = vld [vmem:[#allocation29 + $0xa50] sm:$0xff]
        %v4383 = vld [vmem:[#allocation29 + $0xa58] sm:$0xff]
        %v4384 = vld [vmem:[#allocation29 + $0xa60] sm:$0xff]
        %v4385 = vld [vmem:[#allocation29 + $0xa68] sm:$0xff]
        %v4386 = vld [vmem:[#allocation29 + $0xa70] sm:$0xff]
        %v4387 = vld [vmem:[#allocation29 + $0xa78] sm:$0xff]
        %v4388 = vld [vmem:[#allocation29 + $0xa80] sm:$0xff]
        %v4389 = vld [vmem:[#allocation29 + $0xa88] sm:$0xff]
        %v4390 = vld [vmem:[#allocation29 + $0xa90] sm:$0xff]
        %v4391 = vld [vmem:[#allocation29 + $0xa98] sm:$0xff]
        %v4392 = vld [vmem:[#allocation29 + $0xaa0] sm:$0xff]
        %v4393 = vld [vmem:[#allocation29 + $0xaa8] sm:$0xff]
        %v4394 = vld [vmem:[#allocation29 + $0xab0] sm:$0xff]
        %v4395 = vld [vmem:[#allocation29 + $0xab8] sm:$0xff]
        %v4396 = vld [vmem:[#allocation29 + $0xac0] sm:$0xff]
        %v4397 = vld [vmem:[#allocation29 + $0xac8] sm:$0xff]
        %v4398 = vld [vmem:[#allocation29 + $0xad0] sm:$0xff]
        %v4399 = vld [vmem:[#allocation29 + $0xad8] sm:$0xff]
        %v4400 = vld [vmem:[#allocation29 + $0xae0] sm:$0xff]
        %v4401 = vld [vmem:[#allocation29 + $0xae8] sm:$0xff]
        %v4402 = vld [vmem:[#allocation29 + $0xaf0] sm:$0xff]
        %v4403 = vld [vmem:[#allocation29 + $0xaf8] sm:$0xff]
        %v4404 = vld [vmem:[#allocation29 + $0xb00] sm:$0xff]
        %v4405 = vld [vmem:[#allocation29 + $0xb08] sm:$0xff]
        %v4406 = vld [vmem:[#allocation29 + $0xb10] sm:$0xff]
        %v4407 = vld [vmem:[#allocation29 + $0xb18] sm:$0xff]
        %v4408 = vld [vmem:[#allocation29 + $0xb20] sm:$0xff]
        %v4409 = vld [vmem:[#allocation29 + $0xb28] sm:$0xff]
        %v4410 = vld [vmem:[#allocation29 + $0xb30] sm:$0xff]
        %v4411 = vld [vmem:[#allocation29 + $0xb38] sm:$0xff]
        %v4412 = vld [vmem:[#allocation29 + $0xb40] sm:$0xff]
        %v4413 = vld [vmem:[#allocation29 + $0xb48] sm:$0xff]
        %v4414 = vld [vmem:[#allocation29 + $0xb50] sm:$0xff]
        %v4415 = vld [vmem:[#allocation29 + $0xb58] sm:$0xff]
        %v4416 = vld [vmem:[#allocation29 + $0xb60] sm:$0xff]
        %v4417 = vld [vmem:[#allocation29 + $0xb68] sm:$0xff]
        %v4418 = vld [vmem:[#allocation29 + $0xb70] sm:$0xff]
        %v4419 = vld [vmem:[#allocation29 + $0xb78] sm:$0xff]
        %v4420 = vld [vmem:[#allocation29 + $0xb80] sm:$0xff]
        %v4421 = vld [vmem:[#allocation29 + $0xb88] sm:$0xff]
        %v4422 = vld [vmem:[#allocation29 + $0xb90] sm:$0xff]
        %v4423 = vld [vmem:[#allocation29 + $0xb98] sm:$0xff]
        %v4424 = vld [vmem:[#allocation29 + $0xba0] sm:$0xff]
        %v4425 = vld [vmem:[#allocation29 + $0xba8] sm:$0xff]
        %v4426 = vld [vmem:[#allocation29 + $0xbb0] sm:$0xff]
        %v4427 = vld [vmem:[#allocation29 + $0xbb8] sm:$0xff]
        %v4428 = vld [vmem:[#allocation29 + $0xbc0] sm:$0xff]
        %v4429 = vld [vmem:[#allocation29 + $0xbc8] sm:$0xff]
        %v4430 = vld [vmem:[#allocation29 + $0xbd0] sm:$0xff]
        %v4431 = vld [vmem:[#allocation29 + $0xbd8] sm:$0xff]
        %v4432 = vld [vmem:[#allocation29 + $0xbe0] sm:$0xff]
        %v4433 = vld [vmem:[#allocation29 + $0xbe8] sm:$0xff]
        %v4434 = vld [vmem:[#allocation29 + $0xbf0] sm:$0xff]
        %v4435 = vld [vmem:[#allocation29 + $0xbf8] sm:$0xff]
        %v4436 = vld [vmem:[#allocation29 + $0xc00] sm:$0xff]
        %v4437 = vld [vmem:[#allocation29 + $0xc08] sm:$0xff]
        %v4438 = vld [vmem:[#allocation29 + $0xc10] sm:$0xff]
        %v4439 = vld [vmem:[#allocation29 + $0xc18] sm:$0xff]
        %v4440 = vld [vmem:[#allocation29 + $0xc20] sm:$0xff]
        %v4441 = vld [vmem:[#allocation29 + $0xc28] sm:$0xff]
        %v4442 = vld [vmem:[#allocation29 + $0xc30] sm:$0xff]
        %v4443 = vld [vmem:[#allocation29 + $0xc38] sm:$0xff]
        %v4444 = vld [vmem:[#allocation29 + $0xc40] sm:$0xff]
        %v4445 = vld [vmem:[#allocation29 + $0xc48] sm:$0xff]
        %v4446 = vld [vmem:[#allocation29 + $0xc50] sm:$0xff]
        %v4447 = vld [vmem:[#allocation29 + $0xc58] sm:$0xff]
        %v4448 = vld [vmem:[#allocation29 + $0xc60] sm:$0xff]
        %v4449 = vld [vmem:[#allocation29 + $0xc68] sm:$0xff]
        %v4450 = vld [vmem:[#allocation29 + $0xc70] sm:$0xff]
        %v4451 = vld [vmem:[#allocation29 + $0xc78] sm:$0xff]
        %v4452 = vld [vmem:[#allocation29 + $0xc80] sm:$0xff]
        %v4453 = vld [vmem:[#allocation29 + $0xc88] sm:$0xff]
        %v4454 = vld [vmem:[#allocation29 + $0xc90] sm:$0xff]
        %v4455 = vld [vmem:[#allocation29 + $0xc98] sm:$0xff]
        %v4456 = vld [vmem:[#allocation29 + $0xca0] sm:$0xff]
        %v4457 = vld [vmem:[#allocation29 + $0xca8] sm:$0xff]
        %v4458 = vld [vmem:[#allocation29 + $0xcb0] sm:$0xff]
        %v4459 = vld [vmem:[#allocation29 + $0xcb8] sm:$0xff]
        %v4460 = vld [vmem:[#allocation29 + $0xcc0] sm:$0xff]
        %v4461 = vld [vmem:[#allocation29 + $0xcc8] sm:$0xff]
        %v4462 = vld [vmem:[#allocation29 + $0xcd0] sm:$0xff]
        %v4463 = vld [vmem:[#allocation29 + $0xcd8] sm:$0xff]
        %v4464 = vld [vmem:[#allocation29 + $0xce0] sm:$0xff]
        %v4465 = vld [vmem:[#allocation29 + $0xce8] sm:$0xff]
        %v4466 = vld [vmem:[#allocation29 + $0xcf0] sm:$0xff]
        %v4467 = vld [vmem:[#allocation29 + $0xcf8] sm:$0xff]
        %v4468 = vld [vmem:[#allocation29 + $0xd00] sm:$0xff]
        %v4469 = vld [vmem:[#allocation29 + $0xd08] sm:$0xff]
        %v4470 = vld [vmem:[#allocation29 + $0xd10] sm:$0xff]
        %v4471 = vld [vmem:[#allocation29 + $0xd18] sm:$0xff]
        %v4472 = vld [vmem:[#allocation29 + $0xd20] sm:$0xff]
        %v4473 = vld [vmem:[#allocation29 + $0xd28] sm:$0xff]
        %v4474 = vld [vmem:[#allocation29 + $0xd30] sm:$0xff]
        %v4475 = vld [vmem:[#allocation29 + $0xd38] sm:$0xff]
        %v4476 = vld [vmem:[#allocation29 + $0xd40] sm:$0xff]
        %v4477 = vld [vmem:[#allocation29 + $0xd48] sm:$0xff]
        %v4478 = vld [vmem:[#allocation29 + $0xd50] sm:$0xff]
        %v4479 = vld [vmem:[#allocation29 + $0xd58] sm:$0xff]
        %v4480 = vld [vmem:[#allocation29 + $0xd60] sm:$0xff]
        %v4481 = vld [vmem:[#allocation29 + $0xd68] sm:$0xff]
        %v4482 = vld [vmem:[#allocation29 + $0xd70] sm:$0xff]
        %v4483 = vld [vmem:[#allocation29 + $0xd78] sm:$0xff]
        %v4484 = vld [vmem:[#allocation29 + $0xd80] sm:$0xff]
        %v4485 = vld [vmem:[#allocation29 + $0xd88] sm:$0xff]
        %v4486 = vld [vmem:[#allocation29 + $0xd90] sm:$0xff]
        %v4487 = vld [vmem:[#allocation29 + $0xd98] sm:$0xff]
        %v4488 = vld [vmem:[#allocation29 + $0xda0] sm:$0xff]
        %v4489 = vld [vmem:[#allocation29 + $0xda8] sm:$0xff]
        %v4490 = vld [vmem:[#allocation29 + $0xdb0] sm:$0xff]
        %v4491 = vld [vmem:[#allocation29 + $0xdb8] sm:$0xff]
        %v4492 = vld [vmem:[#allocation29 + $0xdc0] sm:$0xff]
        %v4493 = vld [vmem:[#allocation29 + $0xdc8] sm:$0xff]
        %v4494 = vld [vmem:[#allocation29 + $0xdd0] sm:$0xff]
        %v4495 = vld [vmem:[#allocation29 + $0xdd8] sm:$0xff]
        %v4496 = vld [vmem:[#allocation29 + $0xde0] sm:$0xff]
        %v4497 = vld [vmem:[#allocation29 + $0xde8] sm:$0xff]
        %v4498 = vld [vmem:[#allocation29 + $0xdf0] sm:$0xff]
        %v4499 = vld [vmem:[#allocation29 + $0xdf8] sm:$0xff]
        %v4500 = vld [vmem:[#allocation29 + $0xe00] sm:$0xff]
        %v4501 = vld [vmem:[#allocation29 + $0xe08] sm:$0xff]
        %v4502 = vld [vmem:[#allocation29 + $0xe10] sm:$0xff]
        %v4503 = vld [vmem:[#allocation29 + $0xe18] sm:$0xff]
        %v4504 = vld [vmem:[#allocation29 + $0xe20] sm:$0xff]
        %v4505 = vld [vmem:[#allocation29 + $0xe28] sm:$0xff]
        %v4506 = vld [vmem:[#allocation29 + $0xe30] sm:$0xff]
        %v4507 = vld [vmem:[#allocation29 + $0xe38] sm:$0xff]
        %v4508 = vld [vmem:[#allocation29 + $0xe40] sm:$0xff]
        %v4509 = vld [vmem:[#allocation29 + $0xe48] sm:$0xff]
        %v4510 = vld [vmem:[#allocation29 + $0xe50] sm:$0xff]
        %v4511 = vld [vmem:[#allocation29 + $0xe58] sm:$0xff]
        %v4512 = vld [vmem:[#allocation29 + $0xe60] sm:$0xff]
        %v4513 = vld [vmem:[#allocation29 + $0xe68] sm:$0xff]
        %v4514 = vld [vmem:[#allocation29 + $0xe70] sm:$0xff]
        %v4515 = vld [vmem:[#allocation29 + $0xe78] sm:$0xff]
        %v4516 = vld [vmem:[#allocation29 + $0xe80] sm:$0xff]
        %v4517 = vld [vmem:[#allocation29 + $0xe88] sm:$0xff]
        %v4518 = vld [vmem:[#allocation29 + $0xe90] sm:$0xff]
        %v4519 = vld [vmem:[#allocation29 + $0xe98] sm:$0xff]
        %v4520 = vld [vmem:[#allocation29 + $0xea0] sm:$0xff]
        %v4521 = vld [vmem:[#allocation29 + $0xea8] sm:$0xff]
        %v4522 = vld [vmem:[#allocation29 + $0xeb0] sm:$0xff]
        %v4523 = vld [vmem:[#allocation29 + $0xeb8] sm:$0xff]
        %v4524 = vld [vmem:[#allocation29 + $0xec0] sm:$0xff]
        %v4525 = vld [vmem:[#allocation29 + $0xec8] sm:$0xff]
        %v4526 = vld [vmem:[#allocation29 + $0xed0] sm:$0xff]
        %v4527 = vld [vmem:[#allocation29 + $0xed8] sm:$0xff]
        %v4528 = vld [vmem:[#allocation29 + $0xee0] sm:$0xff]
        %v4529 = vld [vmem:[#allocation29 + $0xee8] sm:$0xff]
        %v4530 = vld [vmem:[#allocation29 + $0xef0] sm:$0xff]
        %v4531 = vld [vmem:[#allocation29 + $0xef8] sm:$0xff]
        %v4532 = vld [vmem:[#allocation29 + $0xf00] sm:$0xff]
        %v4533 = vld [vmem:[#allocation29 + $0xf08] sm:$0xff]
        %v4534 = vld [vmem:[#allocation29 + $0xf10] sm:$0xff]
        %v4535 = vld [vmem:[#allocation29 + $0xf18] sm:$0xff]
        %v4536 = vld [vmem:[#allocation29 + $0xf20] sm:$0xff]
        %v4537 = vld [vmem:[#allocation29 + $0xf28] sm:$0xff]
        %v4538 = vld [vmem:[#allocation29 + $0xf30] sm:$0xff]
        %v4539 = vld [vmem:[#allocation29 + $0xf38] sm:$0xff]
        %v4540 = vld [vmem:[#allocation29 + $0xf40] sm:$0xff]
        %v4541 = vld [vmem:[#allocation29 + $0xf48] sm:$0xff]
        %v4542 = vld [vmem:[#allocation29 + $0xf50] sm:$0xff]
        %v4543 = vld [vmem:[#allocation29 + $0xf58] sm:$0xff]
        %v4544 = vld [vmem:[#allocation29 + $0xf60] sm:$0xff]
        %v4545 = vld [vmem:[#allocation29 + $0xf68] sm:$0xff]
        %v4546 = vld [vmem:[#allocation29 + $0xf70] sm:$0xff]
        %v4547 = vld [vmem:[#allocation29 + $0xf78] sm:$0xff]
        %v4548 = vld [vmem:[#allocation29 + $0xf80] sm:$0xff]
        %v4549 = vld [vmem:[#allocation29 + $0xf88] sm:$0xff]
        %v4550 = vld [vmem:[#allocation29 + $0xf90] sm:$0xff]
        %v4551 = vld [vmem:[#allocation29 + $0xf98] sm:$0xff]
        %v4552 = vld [vmem:[#allocation29 + $0xfa0] sm:$0xff]
        %v4553 = vld [vmem:[#allocation29 + $0xfa8] sm:$0xff]
        %v4554 = vld [vmem:[#allocation29 + $0xfb0] sm:$0xff]
        %v4555 = vld [vmem:[#allocation29 + $0xfb8] sm:$0xff]
        %v4556 = vld [vmem:[#allocation29 + $0xfc0] sm:$0xff]
        %v4557 = vld [vmem:[#allocation29 + $0xfc8] sm:$0xff]
        %v4558 = vld [vmem:[#allocation29 + $0xfd0] sm:$0xff]
        %v4559 = vld [vmem:[#allocation29 + $0xfd8] sm:$0xff]
        %v4560 = vld [vmem:[#allocation29 + $0xfe0] sm:$0xff]
        %v4561 = vld [vmem:[#allocation29 + $0xfe8] sm:$0xff]
        %v4562 = vld [vmem:[#allocation29 + $0xff0] sm:$0xff]
        %v4563 = vld [vmem:[#allocation29 + $0xff8] sm:$0xff]
        %v4564 = vld [vmem:[#allocation31] sm:$0xff]
        %v4566 = vlaneseq
        %v4567 = vshrl.u32 %v4566, 7
        %v4568 = vsub.s32 0, %v4567
        %v4569 = vrot.slane %v4564, %v4568
        %v4570 = vlaneseq
        %v4571 = vshrl.u32 %v4570, 7
        %v4572 = vsub.s32 1, %v4571
        %v4573 = vrot.slane %v4564, %v4572
        %v4574 = vlaneseq
        %v4575 = vshrl.u32 %v4574, 7
        %v4576 = vsub.s32 2, %v4575
        %v4577 = vrot.slane %v4564, %v4576
        %v4578 = vlaneseq
        %v4579 = vshrl.u32 %v4578, 7
        %v4580 = vsub.s32 3, %v4579
        %v4581 = vrot.slane %v4564, %v4580
        %v4582 = vlaneseq
        %v4583 = vshrl.u32 %v4582, 7
        %v4584 = vsub.s32 4, %v4583
        %v4585 = vrot.slane %v4564, %v4584
        %v4586 = vlaneseq
        %v4587 = vshrl.u32 %v4586, 7
        %v4588 = vsub.s32 5, %v4587
        %v4589 = vrot.slane %v4564, %v4588
        %v4590 = vlaneseq
        %v4591 = vshrl.u32 %v4590, 7
        %v4592 = vsub.s32 6, %v4591
        %v4593 = vrot.slane %v4564, %v4592
        %v4594 = vlaneseq
        %v4595 = vshrl.u32 %v4594, 7
        %v4596 = vsub.s32 7, %v4595
        %v4597 = vrot.slane %v4564, %v4596
        %v5118 = vunpack.c.l.b16 %v4052
        %v5119 = vunpack.c.h.b16 %v4052
        %v5120 = vunpack.c.l.b16 %v4053
        %v5121 = vunpack.c.h.b16 %v4053
        %v5122 = vunpack.c.l.b16 %v4054
        %v5123 = vunpack.c.h.b16 %v4054
        %v5124 = vunpack.c.l.b16 %v4055
        %v5125 = vunpack.c.h.b16 %v4055
        %v5126 = vunpack.c.l.b16 %v4056
        %v5127 = vunpack.c.h.b16 %v4056
        %v5128 = vunpack.c.l.b16 %v4057
        %v5129 = vunpack.c.h.b16 %v4057
        %v5130 = vunpack.c.l.b16 %v4058
        %v5131 = vunpack.c.h.b16 %v4058
        %v5132 = vunpack.c.l.b16 %v4059
        %v5133 = vunpack.c.h.b16 %v4059
        %v5134 = vunpack.c.l.b16 %v4060
        %v5135 = vunpack.c.h.b16 %v4060
        %v5136 = vunpack.c.l.b16 %v4061
        %v5137 = vunpack.c.h.b16 %v4061
        %v5138 = vunpack.c.l.b16 %v4062
        %v5139 = vunpack.c.h.b16 %v4062
        %v5140 = vunpack.c.l.b16 %v4063
        %v5141 = vunpack.c.h.b16 %v4063
        %v5142 = vunpack.c.l.b16 %v4064
        %v5143 = vunpack.c.h.b16 %v4064
        %v5144 = vunpack.c.l.b16 %v4065
        %v5145 = vunpack.c.h.b16 %v4065
        %v5146 = vunpack.c.l.b16 %v4066
        %v5147 = vunpack.c.h.b16 %v4066
        %v5148 = vunpack.c.l.b16 %v4067
        %v5149 = vunpack.c.h.b16 %v4067
        %v5150 = vunpack.c.l.b16 %v4068
        %v5151 = vunpack.c.h.b16 %v4068
        %v5152 = vunpack.c.l.b16 %v4069
        %v5153 = vunpack.c.h.b16 %v4069
        %v5154 = vunpack.c.l.b16 %v4070
        %v5155 = vunpack.c.h.b16 %v4070
        %v5156 = vunpack.c.l.b16 %v4071
        %v5157 = vunpack.c.h.b16 %v4071
        %v5158 = vunpack.c.l.b16 %v4072
        %v5159 = vunpack.c.h.b16 %v4072
        %v5160 = vunpack.c.l.b16 %v4073
        %v5161 = vunpack.c.h.b16 %v4073
        %v5162 = vunpack.c.l.b16 %v4074
        %v5163 = vunpack.c.h.b16 %v4074
        %v5164 = vunpack.c.l.b16 %v4075
        %v5165 = vunpack.c.h.b16 %v4075
        %v5166 = vunpack.c.l.b16 %v4076
        %v5167 = vunpack.c.h.b16 %v4076
        %v5168 = vunpack.c.l.b16 %v4077
        %v5169 = vunpack.c.h.b16 %v4077
        %v5170 = vunpack.c.l.b16 %v4078
        %v5171 = vunpack.c.h.b16 %v4078
        %v5172 = vunpack.c.l.b16 %v4079
        %v5173 = vunpack.c.h.b16 %v4079
        %v5174 = vunpack.c.l.b16 %v4080
        %v5175 = vunpack.c.h.b16 %v4080
        %v5176 = vunpack.c.l.b16 %v4081
        %v5177 = vunpack.c.h.b16 %v4081
        %v5178 = vunpack.c.l.b16 %v4082
        %v5179 = vunpack.c.h.b16 %v4082
        %v5180 = vunpack.c.l.b16 %v4083
        %v5181 = vunpack.c.h.b16 %v4083
        %v5182 = vunpack.c.l.b16 %v4084
        %v5183 = vunpack.c.h.b16 %v4084
        %v5184 = vunpack.c.l.b16 %v4085
        %v5185 = vunpack.c.h.b16 %v4085
        %v5186 = vunpack.c.l.b16 %v4086
        %v5187 = vunpack.c.h.b16 %v4086
        %v5188 = vunpack.c.l.b16 %v4087
        %v5189 = vunpack.c.h.b16 %v4087
        %v5190 = vunpack.c.l.b16 %v4088
        %v5191 = vunpack.c.h.b16 %v4088
        %v5192 = vunpack.c.l.b16 %v4089
        %v5193 = vunpack.c.h.b16 %v4089
        %v5194 = vunpack.c.l.b16 %v4090
        %v5195 = vunpack.c.h.b16 %v4090
        %v5196 = vunpack.c.l.b16 %v4091
        %v5197 = vunpack.c.h.b16 %v4091
        %v5198 = vunpack.c.l.b16 %v4092
        %v5199 = vunpack.c.h.b16 %v4092
        %v5200 = vunpack.c.l.b16 %v4093
        %v5201 = vunpack.c.h.b16 %v4093
        %v5202 = vunpack.c.l.b16 %v4094
        %v5203 = vunpack.c.h.b16 %v4094
        %v5204 = vunpack.c.l.b16 %v4095
        %v5205 = vunpack.c.h.b16 %v4095
        %v5206 = vunpack.c.l.b16 %v4096
        %v5207 = vunpack.c.h.b16 %v4096
        %v5208 = vunpack.c.l.b16 %v4097
        %v5209 = vunpack.c.h.b16 %v4097
        %v5210 = vunpack.c.l.b16 %v4098
        %v5211 = vunpack.c.h.b16 %v4098
        %v5212 = vunpack.c.l.b16 %v4099
        %v5213 = vunpack.c.h.b16 %v4099
        %v5214 = vunpack.c.l.b16 %v4100
        %v5215 = vunpack.c.h.b16 %v4100
        %v5216 = vunpack.c.l.b16 %v4101
        %v5217 = vunpack.c.h.b16 %v4101
        %v5218 = vunpack.c.l.b16 %v4102
        %v5219 = vunpack.c.h.b16 %v4102
        %v5220 = vunpack.c.l.b16 %v4103
        %v5221 = vunpack.c.h.b16 %v4103
        %v5222 = vunpack.c.l.b16 %v4104
        %v5223 = vunpack.c.h.b16 %v4104
        %v5224 = vunpack.c.l.b16 %v4105
        %v5225 = vunpack.c.h.b16 %v4105
        %v5226 = vunpack.c.l.b16 %v4106
        %v5227 = vunpack.c.h.b16 %v4106
        %v5228 = vunpack.c.l.b16 %v4107
        %v5229 = vunpack.c.h.b16 %v4107
        %v5230 = vunpack.c.l.b16 %v4108
        %v5231 = vunpack.c.h.b16 %v4108
        %v5232 = vunpack.c.l.b16 %v4109
        %v5233 = vunpack.c.h.b16 %v4109
        %v5234 = vunpack.c.l.b16 %v4110
        %v5235 = vunpack.c.h.b16 %v4110
        %v5236 = vunpack.c.l.b16 %v4111
        %v5237 = vunpack.c.h.b16 %v4111
        %v5238 = vunpack.c.l.b16 %v4112
        %v5239 = vunpack.c.h.b16 %v4112
        %v5240 = vunpack.c.l.b16 %v4113
        %v5241 = vunpack.c.h.b16 %v4113
        %v5242 = vunpack.c.l.b16 %v4114
        %v5243 = vunpack.c.h.b16 %v4114
        %v5244 = vunpack.c.l.b16 %v4115
        %v5245 = vunpack.c.h.b16 %v4115
        %v5246 = vunpack.c.l.b16 %v4116
        %v5247 = vunpack.c.h.b16 %v4116
        %v5248 = vunpack.c.l.b16 %v4117
        %v5249 = vunpack.c.h.b16 %v4117
        %v5250 = vunpack.c.l.b16 %v4118
        %v5251 = vunpack.c.h.b16 %v4118
        %v5252 = vunpack.c.l.b16 %v4119
        %v5253 = vunpack.c.h.b16 %v4119
        %v5254 = vunpack.c.l.b16 %v4120
        %v5255 = vunpack.c.h.b16 %v4120
        %v5256 = vunpack.c.l.b16 %v4121
        %v5257 = vunpack.c.h.b16 %v4121
        %v5258 = vunpack.c.l.b16 %v4122
        %v5259 = vunpack.c.h.b16 %v4122
        %v5260 = vunpack.c.l.b16 %v4123
        %v5261 = vunpack.c.h.b16 %v4123
        %v5262 = vunpack.c.l.b16 %v4124
        %v5263 = vunpack.c.h.b16 %v4124
        %v5264 = vunpack.c.l.b16 %v4125
        %v5265 = vunpack.c.h.b16 %v4125
        %v5266 = vunpack.c.l.b16 %v4126
        %v5267 = vunpack.c.h.b16 %v4126
        %v5268 = vunpack.c.l.b16 %v4127
        %v5269 = vunpack.c.h.b16 %v4127
        %v5270 = vunpack.c.l.b16 %v4128
        %v5271 = vunpack.c.h.b16 %v4128
        %v5272 = vunpack.c.l.b16 %v4129
        %v5273 = vunpack.c.h.b16 %v4129
        %v5274 = vunpack.c.l.b16 %v4130
        %v5275 = vunpack.c.h.b16 %v4130
        %v5276 = vunpack.c.l.b16 %v4131
        %v5277 = vunpack.c.h.b16 %v4131
        %v5278 = vunpack.c.l.b16 %v4132
        %v5279 = vunpack.c.h.b16 %v4132
        %v5280 = vunpack.c.l.b16 %v4133
        %v5281 = vunpack.c.h.b16 %v4133
        %v5282 = vunpack.c.l.b16 %v4134
        %v5283 = vunpack.c.h.b16 %v4134
        %v5284 = vunpack.c.l.b16 %v4135
        %v5285 = vunpack.c.h.b16 %v4135
        %v5286 = vunpack.c.l.b16 %v4136
        %v5287 = vunpack.c.h.b16 %v4136
        %v5288 = vunpack.c.l.b16 %v4137
        %v5289 = vunpack.c.h.b16 %v4137
        %v5290 = vunpack.c.l.b16 %v4138
        %v5291 = vunpack.c.h.b16 %v4138
        %v5292 = vunpack.c.l.b16 %v4139
        %v5293 = vunpack.c.h.b16 %v4139
        %v5294 = vunpack.c.l.b16 %v4140
        %v5295 = vunpack.c.h.b16 %v4140
        %v5296 = vunpack.c.l.b16 %v4141
        %v5297 = vunpack.c.h.b16 %v4141
        %v5298 = vunpack.c.l.b16 %v4142
        %v5299 = vunpack.c.h.b16 %v4142
        %v5300 = vunpack.c.l.b16 %v4143
        %v5301 = vunpack.c.h.b16 %v4143
        %v5302 = vunpack.c.l.b16 %v4144
        %v5303 = vunpack.c.h.b16 %v4144
        %v5304 = vunpack.c.l.b16 %v4145
        %v5305 = vunpack.c.h.b16 %v4145
        %v5306 = vunpack.c.l.b16 %v4146
        %v5307 = vunpack.c.h.b16 %v4146
        %v5308 = vunpack.c.l.b16 %v4147
        %v5309 = vunpack.c.h.b16 %v4147
        %v5310 = vunpack.c.l.b16 %v4148
        %v5311 = vunpack.c.h.b16 %v4148
        %v5312 = vunpack.c.l.b16 %v4149
        %v5313 = vunpack.c.h.b16 %v4149
        %v5314 = vunpack.c.l.b16 %v4150
        %v5315 = vunpack.c.h.b16 %v4150
        %v5316 = vunpack.c.l.b16 %v4151
        %v5317 = vunpack.c.h.b16 %v4151
        %v5318 = vunpack.c.l.b16 %v4152
        %v5319 = vunpack.c.h.b16 %v4152
        %v5320 = vunpack.c.l.b16 %v4153
        %v5321 = vunpack.c.h.b16 %v4153
        %v5322 = vunpack.c.l.b16 %v4154
        %v5323 = vunpack.c.h.b16 %v4154
        %v5324 = vunpack.c.l.b16 %v4155
        %v5325 = vunpack.c.h.b16 %v4155
        %v5326 = vunpack.c.l.b16 %v4156
        %v5327 = vunpack.c.h.b16 %v4156
        %v5328 = vunpack.c.l.b16 %v4157
        %v5329 = vunpack.c.h.b16 %v4157
        %v5330 = vunpack.c.l.b16 %v4158
        %v5331 = vunpack.c.h.b16 %v4158
        %v5332 = vunpack.c.l.b16 %v4159
        %v5333 = vunpack.c.h.b16 %v4159
        %v5334 = vunpack.c.l.b16 %v4160
        %v5335 = vunpack.c.h.b16 %v4160
        %v5336 = vunpack.c.l.b16 %v4161
        %v5337 = vunpack.c.h.b16 %v4161
        %v5338 = vunpack.c.l.b16 %v4162
        %v5339 = vunpack.c.h.b16 %v4162
        %v5340 = vunpack.c.l.b16 %v4163
        %v5341 = vunpack.c.h.b16 %v4163
        %v5342 = vunpack.c.l.b16 %v4164
        %v5343 = vunpack.c.h.b16 %v4164
        %v5344 = vunpack.c.l.b16 %v4165
        %v5345 = vunpack.c.h.b16 %v4165
        %v5346 = vunpack.c.l.b16 %v4166
        %v5347 = vunpack.c.h.b16 %v4166
        %v5348 = vunpack.c.l.b16 %v4167
        %v5349 = vunpack.c.h.b16 %v4167
        %v5350 = vunpack.c.l.b16 %v4168
        %v5351 = vunpack.c.h.b16 %v4168
        %v5352 = vunpack.c.l.b16 %v4169
        %v5353 = vunpack.c.h.b16 %v4169
        %v5354 = vunpack.c.l.b16 %v4170
        %v5355 = vunpack.c.h.b16 %v4170
        %v5356 = vunpack.c.l.b16 %v4171
        %v5357 = vunpack.c.h.b16 %v4171
        %v5358 = vunpack.c.l.b16 %v4172
        %v5359 = vunpack.c.h.b16 %v4172
        %v5360 = vunpack.c.l.b16 %v4173
        %v5361 = vunpack.c.h.b16 %v4173
        %v5362 = vunpack.c.l.b16 %v4174
        %v5363 = vunpack.c.h.b16 %v4174
        %v5364 = vunpack.c.l.b16 %v4175
        %v5365 = vunpack.c.h.b16 %v4175
        %v5366 = vunpack.c.l.b16 %v4176
        %v5367 = vunpack.c.h.b16 %v4176
        %v5368 = vunpack.c.l.b16 %v4177
        %v5369 = vunpack.c.h.b16 %v4177
        %v5370 = vunpack.c.l.b16 %v4178
        %v5371 = vunpack.c.h.b16 %v4178
        %v5372 = vunpack.c.l.b16 %v4179
        %v5373 = vunpack.c.h.b16 %v4179
        %v5374 = vunpack.c.l.b16 %v4180
        %v5375 = vunpack.c.h.b16 %v4180
        %v5376 = vunpack.c.l.b16 %v4181
        %v5377 = vunpack.c.h.b16 %v4181
        %v5378 = vunpack.c.l.b16 %v4182
        %v5379 = vunpack.c.h.b16 %v4182
        %v5380 = vunpack.c.l.b16 %v4183
        %v5381 = vunpack.c.h.b16 %v4183
        %v5382 = vunpack.c.l.b16 %v4184
        %v5383 = vunpack.c.h.b16 %v4184
        %v5384 = vunpack.c.l.b16 %v4185
        %v5385 = vunpack.c.h.b16 %v4185
        %v5386 = vunpack.c.l.b16 %v4186
        %v5387 = vunpack.c.h.b16 %v4186
        %v5388 = vunpack.c.l.b16 %v4187
        %v5389 = vunpack.c.h.b16 %v4187
        %v5390 = vunpack.c.l.b16 %v4188
        %v5391 = vunpack.c.h.b16 %v4188
        %v5392 = vunpack.c.l.b16 %v4189
        %v5393 = vunpack.c.h.b16 %v4189
        %v5394 = vunpack.c.l.b16 %v4190
        %v5395 = vunpack.c.h.b16 %v4190
        %v5396 = vunpack.c.l.b16 %v4191
        %v5397 = vunpack.c.h.b16 %v4191
        %v5398 = vunpack.c.l.b16 %v4192
        %v5399 = vunpack.c.h.b16 %v4192
        %v5400 = vunpack.c.l.b16 %v4193
        %v5401 = vunpack.c.h.b16 %v4193
        %v5402 = vunpack.c.l.b16 %v4194
        %v5403 = vunpack.c.h.b16 %v4194
        %v5404 = vunpack.c.l.b16 %v4195
        %v5405 = vunpack.c.h.b16 %v4195
        %v5406 = vunpack.c.l.b16 %v4196
        %v5407 = vunpack.c.h.b16 %v4196
        %v5408 = vunpack.c.l.b16 %v4197
        %v5409 = vunpack.c.h.b16 %v4197
        %v5410 = vunpack.c.l.b16 %v4198
        %v5411 = vunpack.c.h.b16 %v4198
        %v5412 = vunpack.c.l.b16 %v4199
        %v5413 = vunpack.c.h.b16 %v4199
        %v5414 = vunpack.c.l.b16 %v4200
        %v5415 = vunpack.c.h.b16 %v4200
        %v5416 = vunpack.c.l.b16 %v4201
        %v5417 = vunpack.c.h.b16 %v4201
        %v5418 = vunpack.c.l.b16 %v4202
        %v5419 = vunpack.c.h.b16 %v4202
        %v5420 = vunpack.c.l.b16 %v4203
        %v5421 = vunpack.c.h.b16 %v4203
        %v5422 = vunpack.c.l.b16 %v4204
        %v5423 = vunpack.c.h.b16 %v4204
        %v5424 = vunpack.c.l.b16 %v4205
        %v5425 = vunpack.c.h.b16 %v4205
        %v5426 = vunpack.c.l.b16 %v4206
        %v5427 = vunpack.c.h.b16 %v4206
        %v5428 = vunpack.c.l.b16 %v4207
        %v5429 = vunpack.c.h.b16 %v4207
        %v5430 = vunpack.c.l.b16 %v4208
        %v5431 = vunpack.c.h.b16 %v4208
        %v5432 = vunpack.c.l.b16 %v4209
        %v5433 = vunpack.c.h.b16 %v4209
        %v5434 = vunpack.c.l.b16 %v4210
        %v5435 = vunpack.c.h.b16 %v4210
        %v5436 = vunpack.c.l.b16 %v4211
        %v5437 = vunpack.c.h.b16 %v4211
        %v5438 = vunpack.c.l.b16 %v4212
        %v5439 = vunpack.c.h.b16 %v4212
        %v5440 = vunpack.c.l.b16 %v4213
        %v5441 = vunpack.c.h.b16 %v4213
        %v5442 = vunpack.c.l.b16 %v4214
        %v5443 = vunpack.c.h.b16 %v4214
        %v5444 = vunpack.c.l.b16 %v4215
        %v5445 = vunpack.c.h.b16 %v4215
        %v5446 = vunpack.c.l.b16 %v4216
        %v5447 = vunpack.c.h.b16 %v4216
        %v5448 = vunpack.c.l.b16 %v4217
        %v5449 = vunpack.c.h.b16 %v4217
        %v5450 = vunpack.c.l.b16 %v4218
        %v5451 = vunpack.c.h.b16 %v4218
        %v5452 = vunpack.c.l.b16 %v4219
        %v5453 = vunpack.c.h.b16 %v4219
        %v5454 = vunpack.c.l.b16 %v4220
        %v5455 = vunpack.c.h.b16 %v4220
        %v5456 = vunpack.c.l.b16 %v4221
        %v5457 = vunpack.c.h.b16 %v4221
        %v5458 = vunpack.c.l.b16 %v4222
        %v5459 = vunpack.c.h.b16 %v4222
        %v5460 = vunpack.c.l.b16 %v4223
        %v5461 = vunpack.c.h.b16 %v4223
        %v5462 = vunpack.c.l.b16 %v4224
        %v5463 = vunpack.c.h.b16 %v4224
        %v5464 = vunpack.c.l.b16 %v4225
        %v5465 = vunpack.c.h.b16 %v4225
        %v5466 = vunpack.c.l.b16 %v4226
        %v5467 = vunpack.c.h.b16 %v4226
        %v5468 = vunpack.c.l.b16 %v4227
        %v5469 = vunpack.c.h.b16 %v4227
        %v5470 = vunpack.c.l.b16 %v4228
        %v5471 = vunpack.c.h.b16 %v4228
        %v5472 = vunpack.c.l.b16 %v4229
        %v5473 = vunpack.c.h.b16 %v4229
        %v5474 = vunpack.c.l.b16 %v4230
        %v5475 = vunpack.c.h.b16 %v4230
        %v5476 = vunpack.c.l.b16 %v4231
        %v5477 = vunpack.c.h.b16 %v4231
        %v5478 = vunpack.c.l.b16 %v4232
        %v5479 = vunpack.c.h.b16 %v4232
        %v5480 = vunpack.c.l.b16 %v4233
        %v5481 = vunpack.c.h.b16 %v4233
        %v5482 = vunpack.c.l.b16 %v4234
        %v5483 = vunpack.c.h.b16 %v4234
        %v5484 = vunpack.c.l.b16 %v4235
        %v5485 = vunpack.c.h.b16 %v4235
        %v5486 = vunpack.c.l.b16 %v4236
        %v5487 = vunpack.c.h.b16 %v4236
        %v5488 = vunpack.c.l.b16 %v4237
        %v5489 = vunpack.c.h.b16 %v4237
        %v5490 = vunpack.c.l.b16 %v4238
        %v5491 = vunpack.c.h.b16 %v4238
        %v5492 = vunpack.c.l.b16 %v4239
        %v5493 = vunpack.c.h.b16 %v4239
        %v5494 = vunpack.c.l.b16 %v4240
        %v5495 = vunpack.c.h.b16 %v4240
        %v5496 = vunpack.c.l.b16 %v4241
        %v5497 = vunpack.c.h.b16 %v4241
        %v5498 = vunpack.c.l.b16 %v4242
        %v5499 = vunpack.c.h.b16 %v4242
        %v5500 = vunpack.c.l.b16 %v4243
        %v5501 = vunpack.c.h.b16 %v4243
        %v5502 = vunpack.c.l.b16 %v4244
        %v5503 = vunpack.c.h.b16 %v4244
        %v5504 = vunpack.c.l.b16 %v4245
        %v5505 = vunpack.c.h.b16 %v4245
        %v5506 = vunpack.c.l.b16 %v4246
        %v5507 = vunpack.c.h.b16 %v4246
        %v5508 = vunpack.c.l.b16 %v4247
        %v5509 = vunpack.c.h.b16 %v4247
        %v5510 = vunpack.c.l.b16 %v4248
        %v5511 = vunpack.c.h.b16 %v4248
        %v5512 = vunpack.c.l.b16 %v4249
        %v5513 = vunpack.c.h.b16 %v4249
        %v5514 = vunpack.c.l.b16 %v4250
        %v5515 = vunpack.c.h.b16 %v4250
        %v5516 = vunpack.c.l.b16 %v4251
        %v5517 = vunpack.c.h.b16 %v4251
        %v5518 = vunpack.c.l.b16 %v4252
        %v5519 = vunpack.c.h.b16 %v4252
        %v5520 = vunpack.c.l.b16 %v4253
        %v5521 = vunpack.c.h.b16 %v4253
        %v5522 = vunpack.c.l.b16 %v4254
        %v5523 = vunpack.c.h.b16 %v4254
        %v5524 = vunpack.c.l.b16 %v4255
        %v5525 = vunpack.c.h.b16 %v4255
        %v5526 = vunpack.c.l.b16 %v4256
        %v5527 = vunpack.c.h.b16 %v4256
        %v5528 = vunpack.c.l.b16 %v4257
        %v5529 = vunpack.c.h.b16 %v4257
        %v5530 = vunpack.c.l.b16 %v4258
        %v5531 = vunpack.c.h.b16 %v4258
        %v5532 = vunpack.c.l.b16 %v4259
        %v5533 = vunpack.c.h.b16 %v4259
        %v5534 = vunpack.c.l.b16 %v4260
        %v5535 = vunpack.c.h.b16 %v4260
        %v5536 = vunpack.c.l.b16 %v4261
        %v5537 = vunpack.c.h.b16 %v4261
        %v5538 = vunpack.c.l.b16 %v4262
        %v5539 = vunpack.c.h.b16 %v4262
        %v5540 = vunpack.c.l.b16 %v4263
        %v5541 = vunpack.c.h.b16 %v4263
        %v5542 = vunpack.c.l.b16 %v4264
        %v5543 = vunpack.c.h.b16 %v4264
        %v5544 = vunpack.c.l.b16 %v4265
        %v5545 = vunpack.c.h.b16 %v4265
        %v5546 = vunpack.c.l.b16 %v4266
        %v5547 = vunpack.c.h.b16 %v4266
        %v5548 = vunpack.c.l.b16 %v4267
        %v5549 = vunpack.c.h.b16 %v4267
        %v5550 = vunpack.c.l.b16 %v4268
        %v5551 = vunpack.c.h.b16 %v4268
        %v5552 = vunpack.c.l.b16 %v4269
        %v5553 = vunpack.c.h.b16 %v4269
        %v5554 = vunpack.c.l.b16 %v4270
        %v5555 = vunpack.c.h.b16 %v4270
        %v5556 = vunpack.c.l.b16 %v4271
        %v5557 = vunpack.c.h.b16 %v4271
        %v5558 = vunpack.c.l.b16 %v4272
        %v5559 = vunpack.c.h.b16 %v4272
        %v5560 = vunpack.c.l.b16 %v4273
        %v5561 = vunpack.c.h.b16 %v4273
        %v5562 = vunpack.c.l.b16 %v4274
        %v5563 = vunpack.c.h.b16 %v4274
        %v5564 = vunpack.c.l.b16 %v4275
        %v5565 = vunpack.c.h.b16 %v4275
        %v5566 = vunpack.c.l.b16 %v4276
        %v5567 = vunpack.c.h.b16 %v4276
        %v5568 = vunpack.c.l.b16 %v4277
        %v5569 = vunpack.c.h.b16 %v4277
        %v5570 = vunpack.c.l.b16 %v4278
        %v5571 = vunpack.c.h.b16 %v4278
        %v5572 = vunpack.c.l.b16 %v4279
        %v5573 = vunpack.c.h.b16 %v4279
        %v5574 = vunpack.c.l.b16 %v4280
        %v5575 = vunpack.c.h.b16 %v4280
        %v5576 = vunpack.c.l.b16 %v4281
        %v5577 = vunpack.c.h.b16 %v4281
        %v5578 = vunpack.c.l.b16 %v4282
        %v5579 = vunpack.c.h.b16 %v4282
        %v5580 = vunpack.c.l.b16 %v4283
        %v5581 = vunpack.c.h.b16 %v4283
        %v5582 = vunpack.c.l.b16 %v4284
        %v5583 = vunpack.c.h.b16 %v4284
        %v5584 = vunpack.c.l.b16 %v4285
        %v5585 = vunpack.c.h.b16 %v4285
        %v5586 = vunpack.c.l.b16 %v4286
        %v5587 = vunpack.c.h.b16 %v4286
        %v5588 = vunpack.c.l.b16 %v4287
        %v5589 = vunpack.c.h.b16 %v4287
        %v5590 = vunpack.c.l.b16 %v4288
        %v5591 = vunpack.c.h.b16 %v4288
        %v5592 = vunpack.c.l.b16 %v4289
        %v5593 = vunpack.c.h.b16 %v4289
        %v5594 = vunpack.c.l.b16 %v4290
        %v5595 = vunpack.c.h.b16 %v4290
        %v5596 = vunpack.c.l.b16 %v4291
        %v5597 = vunpack.c.h.b16 %v4291
        %v5598 = vunpack.c.l.b16 %v4292
        %v5599 = vunpack.c.h.b16 %v4292
        %v5600 = vunpack.c.l.b16 %v4293
        %v5601 = vunpack.c.h.b16 %v4293
        %v5602 = vunpack.c.l.b16 %v4294
        %v5603 = vunpack.c.h.b16 %v4294
        %v5604 = vunpack.c.l.b16 %v4295
        %v5605 = vunpack.c.h.b16 %v4295
        %v5606 = vunpack.c.l.b16 %v4296
        %v5607 = vunpack.c.h.b16 %v4296
        %v5608 = vunpack.c.l.b16 %v4297
        %v5609 = vunpack.c.h.b16 %v4297
        %v5610 = vunpack.c.l.b16 %v4298
        %v5611 = vunpack.c.h.b16 %v4298
        %v5612 = vunpack.c.l.b16 %v4299
        %v5613 = vunpack.c.h.b16 %v4299
        %v5614 = vunpack.c.l.b16 %v4300
        %v5615 = vunpack.c.h.b16 %v4300
        %v5616 = vunpack.c.l.b16 %v4301
        %v5617 = vunpack.c.h.b16 %v4301
        %v5618 = vunpack.c.l.b16 %v4302
        %v5619 = vunpack.c.h.b16 %v4302
        %v5620 = vunpack.c.l.b16 %v4303
        %v5621 = vunpack.c.h.b16 %v4303
        %v5622 = vunpack.c.l.b16 %v4304
        %v5623 = vunpack.c.h.b16 %v4304
        %v5624 = vunpack.c.l.b16 %v4305
        %v5625 = vunpack.c.h.b16 %v4305
        %v5626 = vunpack.c.l.b16 %v4306
        %v5627 = vunpack.c.h.b16 %v4306
        %v5628 = vunpack.c.l.b16 %v4307
        %v5629 = vunpack.c.h.b16 %v4307
        %v5630 = vunpack.c.l.b16 %v4308
        %v5631 = vunpack.c.h.b16 %v4308
        %v5632 = vunpack.c.l.b16 %v4309
        %v5633 = vunpack.c.h.b16 %v4309
        %v5634 = vunpack.c.l.b16 %v4310
        %v5635 = vunpack.c.h.b16 %v4310
        %v5636 = vunpack.c.l.b16 %v4311
        %v5637 = vunpack.c.h.b16 %v4311
        %v5638 = vunpack.c.l.b16 %v4312
        %v5639 = vunpack.c.h.b16 %v4312
        %v5640 = vunpack.c.l.b16 %v4313
        %v5641 = vunpack.c.h.b16 %v4313
        %v5642 = vunpack.c.l.b16 %v4314
        %v5643 = vunpack.c.h.b16 %v4314
        %v5644 = vunpack.c.l.b16 %v4315
        %v5645 = vunpack.c.h.b16 %v4315
        %v5646 = vunpack.c.l.b16 %v4316
        %v5647 = vunpack.c.h.b16 %v4316
        %v5648 = vunpack.c.l.b16 %v4317
        %v5649 = vunpack.c.h.b16 %v4317
        %v5650 = vunpack.c.l.b16 %v4318
        %v5651 = vunpack.c.h.b16 %v4318
        %v5652 = vunpack.c.l.b16 %v4319
        %v5653 = vunpack.c.h.b16 %v4319
        %v5654 = vunpack.c.l.b16 %v4320
        %v5655 = vunpack.c.h.b16 %v4320
        %v5656 = vunpack.c.l.b16 %v4321
        %v5657 = vunpack.c.h.b16 %v4321
        %v5658 = vunpack.c.l.b16 %v4322
        %v5659 = vunpack.c.h.b16 %v4322
        %v5660 = vunpack.c.l.b16 %v4323
        %v5661 = vunpack.c.h.b16 %v4323
        %v5662 = vunpack.c.l.b16 %v4324
        %v5663 = vunpack.c.h.b16 %v4324
        %v5664 = vunpack.c.l.b16 %v4325
        %v5665 = vunpack.c.h.b16 %v4325
        %v5666 = vunpack.c.l.b16 %v4326
        %v5667 = vunpack.c.h.b16 %v4326
        %v5668 = vunpack.c.l.b16 %v4327
        %v5669 = vunpack.c.h.b16 %v4327
        %v5670 = vunpack.c.l.b16 %v4328
        %v5671 = vunpack.c.h.b16 %v4328
        %v5672 = vunpack.c.l.b16 %v4329
        %v5673 = vunpack.c.h.b16 %v4329
        %v5674 = vunpack.c.l.b16 %v4330
        %v5675 = vunpack.c.h.b16 %v4330
        %v5676 = vunpack.c.l.b16 %v4331
        %v5677 = vunpack.c.h.b16 %v4331
        %v5678 = vunpack.c.l.b16 %v4332
        %v5679 = vunpack.c.h.b16 %v4332
        %v5680 = vunpack.c.l.b16 %v4333
        %v5681 = vunpack.c.h.b16 %v4333
        %v5682 = vunpack.c.l.b16 %v4334
        %v5683 = vunpack.c.h.b16 %v4334
        %v5684 = vunpack.c.l.b16 %v4335
        %v5685 = vunpack.c.h.b16 %v4335
        %v5686 = vunpack.c.l.b16 %v4336
        %v5687 = vunpack.c.h.b16 %v4336
        %v5688 = vunpack.c.l.b16 %v4337
        %v5689 = vunpack.c.h.b16 %v4337
        %v5690 = vunpack.c.l.b16 %v4338
        %v5691 = vunpack.c.h.b16 %v4338
        %v5692 = vunpack.c.l.b16 %v4339
        %v5693 = vunpack.c.h.b16 %v4339
        %v5694 = vunpack.c.l.b16 %v4340
        %v5695 = vunpack.c.h.b16 %v4340
        %v5696 = vunpack.c.l.b16 %v4341
        %v5697 = vunpack.c.h.b16 %v4341
        %v5698 = vunpack.c.l.b16 %v4342
        %v5699 = vunpack.c.h.b16 %v4342
        %v5700 = vunpack.c.l.b16 %v4343
        %v5701 = vunpack.c.h.b16 %v4343
        %v5702 = vunpack.c.l.b16 %v4344
        %v5703 = vunpack.c.h.b16 %v4344
        %v5704 = vunpack.c.l.b16 %v4345
        %v5705 = vunpack.c.h.b16 %v4345
        %v5706 = vunpack.c.l.b16 %v4346
        %v5707 = vunpack.c.h.b16 %v4346
        %v5708 = vunpack.c.l.b16 %v4347
        %v5709 = vunpack.c.h.b16 %v4347
        %v5710 = vunpack.c.l.b16 %v4348
        %v5711 = vunpack.c.h.b16 %v4348
        %v5712 = vunpack.c.l.b16 %v4349
        %v5713 = vunpack.c.h.b16 %v4349
        %v5714 = vunpack.c.l.b16 %v4350
        %v5715 = vunpack.c.h.b16 %v4350
        %v5716 = vunpack.c.l.b16 %v4351
        %v5717 = vunpack.c.h.b16 %v4351
        %v5718 = vunpack.c.l.b16 %v4352
        %v5719 = vunpack.c.h.b16 %v4352
        %v5720 = vunpack.c.l.b16 %v4353
        %v5721 = vunpack.c.h.b16 %v4353
        %v5722 = vunpack.c.l.b16 %v4354
        %v5723 = vunpack.c.h.b16 %v4354
        %v5724 = vunpack.c.l.b16 %v4355
        %v5725 = vunpack.c.h.b16 %v4355
        %v5726 = vunpack.c.l.b16 %v4356
        %v5727 = vunpack.c.h.b16 %v4356
        %v5728 = vunpack.c.l.b16 %v4357
        %v5729 = vunpack.c.h.b16 %v4357
        %v5730 = vunpack.c.l.b16 %v4358
        %v5731 = vunpack.c.h.b16 %v4358
        %v5732 = vunpack.c.l.b16 %v4359
        %v5733 = vunpack.c.h.b16 %v4359
        %v5734 = vunpack.c.l.b16 %v4360
        %v5735 = vunpack.c.h.b16 %v4360
        %v5736 = vunpack.c.l.b16 %v4361
        %v5737 = vunpack.c.h.b16 %v4361
        %v5738 = vunpack.c.l.b16 %v4362
        %v5739 = vunpack.c.h.b16 %v4362
        %v5740 = vunpack.c.l.b16 %v4363
        %v5741 = vunpack.c.h.b16 %v4363
        %v5742 = vunpack.c.l.b16 %v4364
        %v5743 = vunpack.c.h.b16 %v4364
        %v5744 = vunpack.c.l.b16 %v4365
        %v5745 = vunpack.c.h.b16 %v4365
        %v5746 = vunpack.c.l.b16 %v4366
        %v5747 = vunpack.c.h.b16 %v4366
        %v5748 = vunpack.c.l.b16 %v4367
        %v5749 = vunpack.c.h.b16 %v4367
        %v5750 = vunpack.c.l.b16 %v4368
        %v5751 = vunpack.c.h.b16 %v4368
        %v5752 = vunpack.c.l.b16 %v4369
        %v5753 = vunpack.c.h.b16 %v4369
        %v5754 = vunpack.c.l.b16 %v4370
        %v5755 = vunpack.c.h.b16 %v4370
        %v5756 = vunpack.c.l.b16 %v4371
        %v5757 = vunpack.c.h.b16 %v4371
        %v5758 = vunpack.c.l.b16 %v4372
        %v5759 = vunpack.c.h.b16 %v4372
        %v5760 = vunpack.c.l.b16 %v4373
        %v5761 = vunpack.c.h.b16 %v4373
        %v5762 = vunpack.c.l.b16 %v4374
        %v5763 = vunpack.c.h.b16 %v4374
        %v5764 = vunpack.c.l.b16 %v4375
        %v5765 = vunpack.c.h.b16 %v4375
        %v5766 = vunpack.c.l.b16 %v4376
        %v5767 = vunpack.c.h.b16 %v4376
        %v5768 = vunpack.c.l.b16 %v4377
        %v5769 = vunpack.c.h.b16 %v4377
        %v5770 = vunpack.c.l.b16 %v4378
        %v5771 = vunpack.c.h.b16 %v4378
        %v5772 = vunpack.c.l.b16 %v4379
        %v5773 = vunpack.c.h.b16 %v4379
        %v5774 = vunpack.c.l.b16 %v4380
        %v5775 = vunpack.c.h.b16 %v4380
        %v5776 = vunpack.c.l.b16 %v4381
        %v5777 = vunpack.c.h.b16 %v4381
        %v5778 = vunpack.c.l.b16 %v4382
        %v5779 = vunpack.c.h.b16 %v4382
        %v5780 = vunpack.c.l.b16 %v4383
        %v5781 = vunpack.c.h.b16 %v4383
        %v5782 = vunpack.c.l.b16 %v4384
        %v5783 = vunpack.c.h.b16 %v4384
        %v5784 = vunpack.c.l.b16 %v4385
        %v5785 = vunpack.c.h.b16 %v4385
        %v5786 = vunpack.c.l.b16 %v4386
        %v5787 = vunpack.c.h.b16 %v4386
        %v5788 = vunpack.c.l.b16 %v4387
        %v5789 = vunpack.c.h.b16 %v4387
        %v5790 = vunpack.c.l.b16 %v4388
        %v5791 = vunpack.c.h.b16 %v4388
        %v5792 = vunpack.c.l.b16 %v4389
        %v5793 = vunpack.c.h.b16 %v4389
        %v5794 = vunpack.c.l.b16 %v4390
        %v5795 = vunpack.c.h.b16 %v4390
        %v5796 = vunpack.c.l.b16 %v4391
        %v5797 = vunpack.c.h.b16 %v4391
        %v5798 = vunpack.c.l.b16 %v4392
        %v5799 = vunpack.c.h.b16 %v4392
        %v5800 = vunpack.c.l.b16 %v4393
        %v5801 = vunpack.c.h.b16 %v4393
        %v5802 = vunpack.c.l.b16 %v4394
        %v5803 = vunpack.c.h.b16 %v4394
        %v5804 = vunpack.c.l.b16 %v4395
        %v5805 = vunpack.c.h.b16 %v4395
        %v5806 = vunpack.c.l.b16 %v4396
        %v5807 = vunpack.c.h.b16 %v4396
        %v5808 = vunpack.c.l.b16 %v4397
        %v5809 = vunpack.c.h.b16 %v4397
        %v5810 = vunpack.c.l.b16 %v4398
        %v5811 = vunpack.c.h.b16 %v4398
        %v5812 = vunpack.c.l.b16 %v4399
        %v5813 = vunpack.c.h.b16 %v4399
        %v5814 = vunpack.c.l.b16 %v4400
        %v5815 = vunpack.c.h.b16 %v4400
        %v5816 = vunpack.c.l.b16 %v4401
        %v5817 = vunpack.c.h.b16 %v4401
        %v5818 = vunpack.c.l.b16 %v4402
        %v5819 = vunpack.c.h.b16 %v4402
        %v5820 = vunpack.c.l.b16 %v4403
        %v5821 = vunpack.c.h.b16 %v4403
        %v5822 = vunpack.c.l.b16 %v4404
        %v5823 = vunpack.c.h.b16 %v4404
        %v5824 = vunpack.c.l.b16 %v4405
        %v5825 = vunpack.c.h.b16 %v4405
        %v5826 = vunpack.c.l.b16 %v4406
        %v5827 = vunpack.c.h.b16 %v4406
        %v5828 = vunpack.c.l.b16 %v4407
        %v5829 = vunpack.c.h.b16 %v4407
        %v5830 = vunpack.c.l.b16 %v4408
        %v5831 = vunpack.c.h.b16 %v4408
        %v5832 = vunpack.c.l.b16 %v4409
        %v5833 = vunpack.c.h.b16 %v4409
        %v5834 = vunpack.c.l.b16 %v4410
        %v5835 = vunpack.c.h.b16 %v4410
        %v5836 = vunpack.c.l.b16 %v4411
        %v5837 = vunpack.c.h.b16 %v4411
        %v5838 = vunpack.c.l.b16 %v4412
        %v5839 = vunpack.c.h.b16 %v4412
        %v5840 = vunpack.c.l.b16 %v4413
        %v5841 = vunpack.c.h.b16 %v4413
        %v5842 = vunpack.c.l.b16 %v4414
        %v5843 = vunpack.c.h.b16 %v4414
        %v5844 = vunpack.c.l.b16 %v4415
        %v5845 = vunpack.c.h.b16 %v4415
        %v5846 = vunpack.c.l.b16 %v4416
        %v5847 = vunpack.c.h.b16 %v4416
        %v5848 = vunpack.c.l.b16 %v4417
        %v5849 = vunpack.c.h.b16 %v4417
        %v5850 = vunpack.c.l.b16 %v4418
        %v5851 = vunpack.c.h.b16 %v4418
        %v5852 = vunpack.c.l.b16 %v4419
        %v5853 = vunpack.c.h.b16 %v4419
        %v5854 = vunpack.c.l.b16 %v4420
        %v5855 = vunpack.c.h.b16 %v4420
        %v5856 = vunpack.c.l.b16 %v4421
        %v5857 = vunpack.c.h.b16 %v4421
        %v5858 = vunpack.c.l.b16 %v4422
        %v5859 = vunpack.c.h.b16 %v4422
        %v5860 = vunpack.c.l.b16 %v4423
        %v5861 = vunpack.c.h.b16 %v4423
        %v5862 = vunpack.c.l.b16 %v4424
        %v5863 = vunpack.c.h.b16 %v4424
        %v5864 = vunpack.c.l.b16 %v4425
        %v5865 = vunpack.c.h.b16 %v4425
        %v5866 = vunpack.c.l.b16 %v4426
        %v5867 = vunpack.c.h.b16 %v4426
        %v5868 = vunpack.c.l.b16 %v4427
        %v5869 = vunpack.c.h.b16 %v4427
        %v5870 = vunpack.c.l.b16 %v4428
        %v5871 = vunpack.c.h.b16 %v4428
        %v5872 = vunpack.c.l.b16 %v4429
        %v5873 = vunpack.c.h.b16 %v4429
        %v5874 = vunpack.c.l.b16 %v4430
        %v5875 = vunpack.c.h.b16 %v4430
        %v5876 = vunpack.c.l.b16 %v4431
        %v5877 = vunpack.c.h.b16 %v4431
        %v5878 = vunpack.c.l.b16 %v4432
        %v5879 = vunpack.c.h.b16 %v4432
        %v5880 = vunpack.c.l.b16 %v4433
        %v5881 = vunpack.c.h.b16 %v4433
        %v5882 = vunpack.c.l.b16 %v4434
        %v5883 = vunpack.c.h.b16 %v4434
        %v5884 = vunpack.c.l.b16 %v4435
        %v5885 = vunpack.c.h.b16 %v4435
        %v5886 = vunpack.c.l.b16 %v4436
        %v5887 = vunpack.c.h.b16 %v4436
        %v5888 = vunpack.c.l.b16 %v4437
        %v5889 = vunpack.c.h.b16 %v4437
        %v5890 = vunpack.c.l.b16 %v4438
        %v5891 = vunpack.c.h.b16 %v4438
        %v5892 = vunpack.c.l.b16 %v4439
        %v5893 = vunpack.c.h.b16 %v4439
        %v5894 = vunpack.c.l.b16 %v4440
        %v5895 = vunpack.c.h.b16 %v4440
        %v5896 = vunpack.c.l.b16 %v4441
        %v5897 = vunpack.c.h.b16 %v4441
        %v5898 = vunpack.c.l.b16 %v4442
        %v5899 = vunpack.c.h.b16 %v4442
        %v5900 = vunpack.c.l.b16 %v4443
        %v5901 = vunpack.c.h.b16 %v4443
        %v5902 = vunpack.c.l.b16 %v4444
        %v5903 = vunpack.c.h.b16 %v4444
        %v5904 = vunpack.c.l.b16 %v4445
        %v5905 = vunpack.c.h.b16 %v4445
        %v5906 = vunpack.c.l.b16 %v4446
        %v5907 = vunpack.c.h.b16 %v4446
        %v5908 = vunpack.c.l.b16 %v4447
        %v5909 = vunpack.c.h.b16 %v4447
        %v5910 = vunpack.c.l.b16 %v4448
        %v5911 = vunpack.c.h.b16 %v4448
        %v5912 = vunpack.c.l.b16 %v4449
        %v5913 = vunpack.c.h.b16 %v4449
        %v5914 = vunpack.c.l.b16 %v4450
        %v5915 = vunpack.c.h.b16 %v4450
        %v5916 = vunpack.c.l.b16 %v4451
        %v5917 = vunpack.c.h.b16 %v4451
        %v5918 = vunpack.c.l.b16 %v4452
        %v5919 = vunpack.c.h.b16 %v4452
        %v5920 = vunpack.c.l.b16 %v4453
        %v5921 = vunpack.c.h.b16 %v4453
        %v5922 = vunpack.c.l.b16 %v4454
        %v5923 = vunpack.c.h.b16 %v4454
        %v5924 = vunpack.c.l.b16 %v4455
        %v5925 = vunpack.c.h.b16 %v4455
        %v5926 = vunpack.c.l.b16 %v4456
        %v5927 = vunpack.c.h.b16 %v4456
        %v5928 = vunpack.c.l.b16 %v4457
        %v5929 = vunpack.c.h.b16 %v4457
        %v5930 = vunpack.c.l.b16 %v4458
        %v5931 = vunpack.c.h.b16 %v4458
        %v5932 = vunpack.c.l.b16 %v4459
        %v5933 = vunpack.c.h.b16 %v4459
        %v5934 = vunpack.c.l.b16 %v4460
        %v5935 = vunpack.c.h.b16 %v4460
        %v5936 = vunpack.c.l.b16 %v4461
        %v5937 = vunpack.c.h.b16 %v4461
        %v5938 = vunpack.c.l.b16 %v4462
        %v5939 = vunpack.c.h.b16 %v4462
        %v5940 = vunpack.c.l.b16 %v4463
        %v5941 = vunpack.c.h.b16 %v4463
        %v5942 = vunpack.c.l.b16 %v4464
        %v5943 = vunpack.c.h.b16 %v4464
        %v5944 = vunpack.c.l.b16 %v4465
        %v5945 = vunpack.c.h.b16 %v4465
        %v5946 = vunpack.c.l.b16 %v4466
        %v5947 = vunpack.c.h.b16 %v4466
        %v5948 = vunpack.c.l.b16 %v4467
        %v5949 = vunpack.c.h.b16 %v4467
        %v5950 = vunpack.c.l.b16 %v4468
        %v5951 = vunpack.c.h.b16 %v4468
        %v5952 = vunpack.c.l.b16 %v4469
        %v5953 = vunpack.c.h.b16 %v4469
        %v5954 = vunpack.c.l.b16 %v4470
        %v5955 = vunpack.c.h.b16 %v4470
        %v5956 = vunpack.c.l.b16 %v4471
        %v5957 = vunpack.c.h.b16 %v4471
        %v5958 = vunpack.c.l.b16 %v4472
        %v5959 = vunpack.c.h.b16 %v4472
        %v5960 = vunpack.c.l.b16 %v4473
        %v5961 = vunpack.c.h.b16 %v4473
        %v5962 = vunpack.c.l.b16 %v4474
        %v5963 = vunpack.c.h.b16 %v4474
        %v5964 = vunpack.c.l.b16 %v4475
        %v5965 = vunpack.c.h.b16 %v4475
        %v5966 = vunpack.c.l.b16 %v4476
        %v5967 = vunpack.c.h.b16 %v4476
        %v5968 = vunpack.c.l.b16 %v4477
        %v5969 = vunpack.c.h.b16 %v4477
        %v5970 = vunpack.c.l.b16 %v4478
        %v5971 = vunpack.c.h.b16 %v4478
        %v5972 = vunpack.c.l.b16 %v4479
        %v5973 = vunpack.c.h.b16 %v4479
        %v5974 = vunpack.c.l.b16 %v4480
        %v5975 = vunpack.c.h.b16 %v4480
        %v5976 = vunpack.c.l.b16 %v4481
        %v5977 = vunpack.c.h.b16 %v4481
        %v5978 = vunpack.c.l.b16 %v4482
        %v5979 = vunpack.c.h.b16 %v4482
        %v5980 = vunpack.c.l.b16 %v4483
        %v5981 = vunpack.c.h.b16 %v4483
        %v5982 = vunpack.c.l.b16 %v4484
        %v5983 = vunpack.c.h.b16 %v4484
        %v5984 = vunpack.c.l.b16 %v4485
        %v5985 = vunpack.c.h.b16 %v4485
        %v5986 = vunpack.c.l.b16 %v4486
        %v5987 = vunpack.c.h.b16 %v4486
        %v5988 = vunpack.c.l.b16 %v4487
        %v5989 = vunpack.c.h.b16 %v4487
        %v5990 = vunpack.c.l.b16 %v4488
        %v5991 = vunpack.c.h.b16 %v4488
        %v5992 = vunpack.c.l.b16 %v4489
        %v5993 = vunpack.c.h.b16 %v4489
        %v5994 = vunpack.c.l.b16 %v4490
        %v5995 = vunpack.c.h.b16 %v4490
        %v5996 = vunpack.c.l.b16 %v4491
        %v5997 = vunpack.c.h.b16 %v4491
        %v5998 = vunpack.c.l.b16 %v4492
        %v5999 = vunpack.c.h.b16 %v4492
        %v6000 = vunpack.c.l.b16 %v4493
        %v6001 = vunpack.c.h.b16 %v4493
        %v6002 = vunpack.c.l.b16 %v4494
        %v6003 = vunpack.c.h.b16 %v4494
        %v6004 = vunpack.c.l.b16 %v4495
        %v6005 = vunpack.c.h.b16 %v4495
        %v6006 = vunpack.c.l.b16 %v4496
        %v6007 = vunpack.c.h.b16 %v4496
        %v6008 = vunpack.c.l.b16 %v4497
        %v6009 = vunpack.c.h.b16 %v4497
        %v6010 = vunpack.c.l.b16 %v4498
        %v6011 = vunpack.c.h.b16 %v4498
        %v6012 = vunpack.c.l.b16 %v4499
        %v6013 = vunpack.c.h.b16 %v4499
        %v6014 = vunpack.c.l.b16 %v4500
        %v6015 = vunpack.c.h.b16 %v4500
        %v6016 = vunpack.c.l.b16 %v4501
        %v6017 = vunpack.c.h.b16 %v4501
        %v6018 = vunpack.c.l.b16 %v4502
        %v6019 = vunpack.c.h.b16 %v4502
        %v6020 = vunpack.c.l.b16 %v4503
        %v6021 = vunpack.c.h.b16 %v4503
        %v6022 = vunpack.c.l.b16 %v4504
        %v6023 = vunpack.c.h.b16 %v4504
        %v6024 = vunpack.c.l.b16 %v4505
        %v6025 = vunpack.c.h.b16 %v4505
        %v6026 = vunpack.c.l.b16 %v4506
        %v6027 = vunpack.c.h.b16 %v4506
        %v6028 = vunpack.c.l.b16 %v4507
        %v6029 = vunpack.c.h.b16 %v4507
        %v6030 = vunpack.c.l.b16 %v4508
        %v6031 = vunpack.c.h.b16 %v4508
        %v6032 = vunpack.c.l.b16 %v4509
        %v6033 = vunpack.c.h.b16 %v4509
        %v6034 = vunpack.c.l.b16 %v4510
        %v6035 = vunpack.c.h.b16 %v4510
        %v6036 = vunpack.c.l.b16 %v4511
        %v6037 = vunpack.c.h.b16 %v4511
        %v6038 = vunpack.c.l.b16 %v4512
        %v6039 = vunpack.c.h.b16 %v4512
        %v6040 = vunpack.c.l.b16 %v4513
        %v6041 = vunpack.c.h.b16 %v4513
        %v6042 = vunpack.c.l.b16 %v4514
        %v6043 = vunpack.c.h.b16 %v4514
        %v6044 = vunpack.c.l.b16 %v4515
        %v6045 = vunpack.c.h.b16 %v4515
        %v6046 = vunpack.c.l.b16 %v4516
        %v6047 = vunpack.c.h.b16 %v4516
        %v6048 = vunpack.c.l.b16 %v4517
        %v6049 = vunpack.c.h.b16 %v4517
        %v6050 = vunpack.c.l.b16 %v4518
        %v6051 = vunpack.c.h.b16 %v4518
        %v6052 = vunpack.c.l.b16 %v4519
        %v6053 = vunpack.c.h.b16 %v4519
        %v6054 = vunpack.c.l.b16 %v4520
        %v6055 = vunpack.c.h.b16 %v4520
        %v6056 = vunpack.c.l.b16 %v4521
        %v6057 = vunpack.c.h.b16 %v4521
        %v6058 = vunpack.c.l.b16 %v4522
        %v6059 = vunpack.c.h.b16 %v4522
        %v6060 = vunpack.c.l.b16 %v4523
        %v6061 = vunpack.c.h.b16 %v4523
        %v6062 = vunpack.c.l.b16 %v4524
        %v6063 = vunpack.c.h.b16 %v4524
        %v6064 = vunpack.c.l.b16 %v4525
        %v6065 = vunpack.c.h.b16 %v4525
        %v6066 = vunpack.c.l.b16 %v4526
        %v6067 = vunpack.c.h.b16 %v4526
        %v6068 = vunpack.c.l.b16 %v4527
        %v6069 = vunpack.c.h.b16 %v4527
        %v6070 = vunpack.c.l.b16 %v4528
        %v6071 = vunpack.c.h.b16 %v4528
        %v6072 = vunpack.c.l.b16 %v4529
        %v6073 = vunpack.c.h.b16 %v4529
        %v6074 = vunpack.c.l.b16 %v4530
        %v6075 = vunpack.c.h.b16 %v4530
        %v6076 = vunpack.c.l.b16 %v4531
        %v6077 = vunpack.c.h.b16 %v4531
        %v6078 = vunpack.c.l.b16 %v4532
        %v6079 = vunpack.c.h.b16 %v4532
        %v6080 = vunpack.c.l.b16 %v4533
        %v6081 = vunpack.c.h.b16 %v4533
        %v6082 = vunpack.c.l.b16 %v4534
        %v6083 = vunpack.c.h.b16 %v4534
        %v6084 = vunpack.c.l.b16 %v4535
        %v6085 = vunpack.c.h.b16 %v4535
        %v6086 = vunpack.c.l.b16 %v4536
        %v6087 = vunpack.c.h.b16 %v4536
        %v6088 = vunpack.c.l.b16 %v4537
        %v6089 = vunpack.c.h.b16 %v4537
        %v6090 = vunpack.c.l.b16 %v4538
        %v6091 = vunpack.c.h.b16 %v4538
        %v6092 = vunpack.c.l.b16 %v4539
        %v6093 = vunpack.c.h.b16 %v4539
        %v6094 = vunpack.c.l.b16 %v4540
        %v6095 = vunpack.c.h.b16 %v4540
        %v6096 = vunpack.c.l.b16 %v4541
        %v6097 = vunpack.c.h.b16 %v4541
        %v6098 = vunpack.c.l.b16 %v4542
        %v6099 = vunpack.c.h.b16 %v4542
        %v6100 = vunpack.c.l.b16 %v4543
        %v6101 = vunpack.c.h.b16 %v4543
        %v6102 = vunpack.c.l.b16 %v4544
        %v6103 = vunpack.c.h.b16 %v4544
        %v6104 = vunpack.c.l.b16 %v4545
        %v6105 = vunpack.c.h.b16 %v4545
        %v6106 = vunpack.c.l.b16 %v4546
        %v6107 = vunpack.c.h.b16 %v4546
        %v6108 = vunpack.c.l.b16 %v4547
        %v6109 = vunpack.c.h.b16 %v4547
        %v6110 = vunpack.c.l.b16 %v4548
        %v6111 = vunpack.c.h.b16 %v4548
        %v6112 = vunpack.c.l.b16 %v4549
        %v6113 = vunpack.c.h.b16 %v4549
        %v6114 = vunpack.c.l.b16 %v4550
        %v6115 = vunpack.c.h.b16 %v4550
        %v6116 = vunpack.c.l.b16 %v4551
        %v6117 = vunpack.c.h.b16 %v4551
        %v6118 = vunpack.c.l.b16 %v4552
        %v6119 = vunpack.c.h.b16 %v4552
        %v6120 = vunpack.c.l.b16 %v4553
        %v6121 = vunpack.c.h.b16 %v4553
        %v6122 = vunpack.c.l.b16 %v4554
        %v6123 = vunpack.c.h.b16 %v4554
        %v6124 = vunpack.c.l.b16 %v4555
        %v6125 = vunpack.c.h.b16 %v4555
        %v6126 = vunpack.c.l.b16 %v4556
        %v6127 = vunpack.c.h.b16 %v4556
        %v6128 = vunpack.c.l.b16 %v4557
        %v6129 = vunpack.c.h.b16 %v4557
        %v6130 = vunpack.c.l.b16 %v4558
        %v6131 = vunpack.c.h.b16 %v4558
        %v6132 = vunpack.c.l.b16 %v4559
        %v6133 = vunpack.c.h.b16 %v4559
        %v6134 = vunpack.c.l.b16 %v4560
        %v6135 = vunpack.c.h.b16 %v4560
        %v6136 = vunpack.c.l.b16 %v4561
        %v6137 = vunpack.c.h.b16 %v4561
        %v6138 = vunpack.c.l.b16 %v4562
        %v6139 = vunpack.c.h.b16 %v4562
        %v6140 = vunpack.c.l.b16 %v4563
        %v6141 = vunpack.c.h.b16 %v4563
        %v6142 = vpack.c.b16 %v5126, %v5118
        %v6143 = vpack.c.b16 %v5127, %v5119
        %v6144 = vpack.c.b16 %v5128, %v5120
        %v6145 = vpack.c.b16 %v5129, %v5121
        %v6146 = vpack.c.b16 %v5130, %v5122
        %v6147 = vpack.c.b16 %v5131, %v5123
        %v6148 = vpack.c.b16 %v5132, %v5124
        %v6149 = vpack.c.b16 %v5133, %v5125
        %v6150 = vpack.c.b16 %v5142, %v5134
        %v6151 = vpack.c.b16 %v5143, %v5135
        %v6152 = vpack.c.b16 %v5144, %v5136
        %v6153 = vpack.c.b16 %v5145, %v5137
        %v6154 = vpack.c.b16 %v5146, %v5138
        %v6155 = vpack.c.b16 %v5147, %v5139
        %v6156 = vpack.c.b16 %v5148, %v5140
        %v6157 = vpack.c.b16 %v5149, %v5141
        %v6158 = vpack.c.b16 %v5158, %v5150
        %v6159 = vpack.c.b16 %v5159, %v5151
        %v6160 = vpack.c.b16 %v5160, %v5152
        %v6161 = vpack.c.b16 %v5161, %v5153
        %v6162 = vpack.c.b16 %v5162, %v5154
        %v6163 = vpack.c.b16 %v5163, %v5155
        %v6164 = vpack.c.b16 %v5164, %v5156
        %v6165 = vpack.c.b16 %v5165, %v5157
        %v6166 = vpack.c.b16 %v5174, %v5166
        %v6167 = vpack.c.b16 %v5175, %v5167
        %v6168 = vpack.c.b16 %v5176, %v5168
        %v6169 = vpack.c.b16 %v5177, %v5169
        %v6170 = vpack.c.b16 %v5178, %v5170
        %v6171 = vpack.c.b16 %v5179, %v5171
        %v6172 = vpack.c.b16 %v5180, %v5172
        %v6173 = vpack.c.b16 %v5181, %v5173
        %v6174 = vpack.c.b16 %v5190, %v5182
        %v6175 = vpack.c.b16 %v5191, %v5183
        %v6176 = vpack.c.b16 %v5192, %v5184
        %v6177 = vpack.c.b16 %v5193, %v5185
        %v6178 = vpack.c.b16 %v5194, %v5186
        %v6179 = vpack.c.b16 %v5195, %v5187
        %v6180 = vpack.c.b16 %v5196, %v5188
        %v6181 = vpack.c.b16 %v5197, %v5189
        %v6182 = vpack.c.b16 %v5206, %v5198
        %v6183 = vpack.c.b16 %v5207, %v5199
        %v6184 = vpack.c.b16 %v5208, %v5200
        %v6185 = vpack.c.b16 %v5209, %v5201
        %v6186 = vpack.c.b16 %v5210, %v5202
        %v6187 = vpack.c.b16 %v5211, %v5203
        %v6188 = vpack.c.b16 %v5212, %v5204
        %v6189 = vpack.c.b16 %v5213, %v5205
        %v6190 = vpack.c.b16 %v5222, %v5214
        %v6191 = vpack.c.b16 %v5223, %v5215
        %v6192 = vpack.c.b16 %v5224, %v5216
        %v6193 = vpack.c.b16 %v5225, %v5217
        %v6194 = vpack.c.b16 %v5226, %v5218
        %v6195 = vpack.c.b16 %v5227, %v5219
        %v6196 = vpack.c.b16 %v5228, %v5220
        %v6197 = vpack.c.b16 %v5229, %v5221
        %v6198 = vpack.c.b16 %v5238, %v5230
        %v6199 = vpack.c.b16 %v5239, %v5231
        %v6200 = vpack.c.b16 %v5240, %v5232
        %v6201 = vpack.c.b16 %v5241, %v5233
        %v6202 = vpack.c.b16 %v5242, %v5234
        %v6203 = vpack.c.b16 %v5243, %v5235
        %v6204 = vpack.c.b16 %v5244, %v5236
        %v6205 = vpack.c.b16 %v5245, %v5237
        %v6206 = vpack.c.b16 %v5254, %v5246
        %v6207 = vpack.c.b16 %v5255, %v5247
        %v6208 = vpack.c.b16 %v5256, %v5248
        %v6209 = vpack.c.b16 %v5257, %v5249
        %v6210 = vpack.c.b16 %v5258, %v5250
        %v6211 = vpack.c.b16 %v5259, %v5251
        %v6212 = vpack.c.b16 %v5260, %v5252
        %v6213 = vpack.c.b16 %v5261, %v5253
        %v6214 = vpack.c.b16 %v5270, %v5262
        %v6215 = vpack.c.b16 %v5271, %v5263
        %v6216 = vpack.c.b16 %v5272, %v5264
        %v6217 = vpack.c.b16 %v5273, %v5265
        %v6218 = vpack.c.b16 %v5274, %v5266
        %v6219 = vpack.c.b16 %v5275, %v5267
        %v6220 = vpack.c.b16 %v5276, %v5268
        %v6221 = vpack.c.b16 %v5277, %v5269
        %v6222 = vpack.c.b16 %v5286, %v5278
        %v6223 = vpack.c.b16 %v5287, %v5279
        %v6224 = vpack.c.b16 %v5288, %v5280
        %v6225 = vpack.c.b16 %v5289, %v5281
        %v6226 = vpack.c.b16 %v5290, %v5282
        %v6227 = vpack.c.b16 %v5291, %v5283
        %v6228 = vpack.c.b16 %v5292, %v5284
        %v6229 = vpack.c.b16 %v5293, %v5285
        %v6230 = vpack.c.b16 %v5302, %v5294
        %v6231 = vpack.c.b16 %v5303, %v5295
        %v6232 = vpack.c.b16 %v5304, %v5296
        %v6233 = vpack.c.b16 %v5305, %v5297
        %v6234 = vpack.c.b16 %v5306, %v5298
        %v6235 = vpack.c.b16 %v5307, %v5299
        %v6236 = vpack.c.b16 %v5308, %v5300
        %v6237 = vpack.c.b16 %v5309, %v5301
        %v6238 = vpack.c.b16 %v5318, %v5310
        %v6239 = vpack.c.b16 %v5319, %v5311
        %v6240 = vpack.c.b16 %v5320, %v5312
        %v6241 = vpack.c.b16 %v5321, %v5313
        %v6242 = vpack.c.b16 %v5322, %v5314
        %v6243 = vpack.c.b16 %v5323, %v5315
        %v6244 = vpack.c.b16 %v5324, %v5316
        %v6245 = vpack.c.b16 %v5325, %v5317
        %v6246 = vpack.c.b16 %v5334, %v5326
        %v6247 = vpack.c.b16 %v5335, %v5327
        %v6248 = vpack.c.b16 %v5336, %v5328
        %v6249 = vpack.c.b16 %v5337, %v5329
        %v6250 = vpack.c.b16 %v5338, %v5330
        %v6251 = vpack.c.b16 %v5339, %v5331
        %v6252 = vpack.c.b16 %v5340, %v5332
        %v6253 = vpack.c.b16 %v5341, %v5333
        %v6254 = vpack.c.b16 %v5350, %v5342
        %v6255 = vpack.c.b16 %v5351, %v5343
        %v6256 = vpack.c.b16 %v5352, %v5344
        %v6257 = vpack.c.b16 %v5353, %v5345
        %v6258 = vpack.c.b16 %v5354, %v5346
        %v6259 = vpack.c.b16 %v5355, %v5347
        %v6260 = vpack.c.b16 %v5356, %v5348
        %v6261 = vpack.c.b16 %v5357, %v5349
        %v6262 = vpack.c.b16 %v5366, %v5358
        %v6263 = vpack.c.b16 %v5367, %v5359
        %v6264 = vpack.c.b16 %v5368, %v5360
        %v6265 = vpack.c.b16 %v5369, %v5361
        %v6266 = vpack.c.b16 %v5370, %v5362
        %v6267 = vpack.c.b16 %v5371, %v5363
        %v6268 = vpack.c.b16 %v5372, %v5364
        %v6269 = vpack.c.b16 %v5373, %v5365
        %v6270 = vpack.c.b16 %v5382, %v5374
        %v6271 = vpack.c.b16 %v5383, %v5375
        %v6272 = vpack.c.b16 %v5384, %v5376
        %v6273 = vpack.c.b16 %v5385, %v5377
        %v6274 = vpack.c.b16 %v5386, %v5378
        %v6275 = vpack.c.b16 %v5387, %v5379
        %v6276 = vpack.c.b16 %v5388, %v5380
        %v6277 = vpack.c.b16 %v5389, %v5381
        %v6278 = vpack.c.b16 %v5398, %v5390
        %v6279 = vpack.c.b16 %v5399, %v5391
        %v6280 = vpack.c.b16 %v5400, %v5392
        %v6281 = vpack.c.b16 %v5401, %v5393
        %v6282 = vpack.c.b16 %v5402, %v5394
        %v6283 = vpack.c.b16 %v5403, %v5395
        %v6284 = vpack.c.b16 %v5404, %v5396
        %v6285 = vpack.c.b16 %v5405, %v5397
        %v6286 = vpack.c.b16 %v5414, %v5406
        %v6287 = vpack.c.b16 %v5415, %v5407
        %v6288 = vpack.c.b16 %v5416, %v5408
        %v6289 = vpack.c.b16 %v5417, %v5409
        %v6290 = vpack.c.b16 %v5418, %v5410
        %v6291 = vpack.c.b16 %v5419, %v5411
        %v6292 = vpack.c.b16 %v5420, %v5412
        %v6293 = vpack.c.b16 %v5421, %v5413
        %v6294 = vpack.c.b16 %v5430, %v5422
        %v6295 = vpack.c.b16 %v5431, %v5423
        %v6296 = vpack.c.b16 %v5432, %v5424
        %v6297 = vpack.c.b16 %v5433, %v5425
        %v6298 = vpack.c.b16 %v5434, %v5426
        %v6299 = vpack.c.b16 %v5435, %v5427
        %v6300 = vpack.c.b16 %v5436, %v5428
        %v6301 = vpack.c.b16 %v5437, %v5429
        %v6302 = vpack.c.b16 %v5446, %v5438
        %v6303 = vpack.c.b16 %v5447, %v5439
        %v6304 = vpack.c.b16 %v5448, %v5440
        %v6305 = vpack.c.b16 %v5449, %v5441
        %v6306 = vpack.c.b16 %v5450, %v5442
        %v6307 = vpack.c.b16 %v5451, %v5443
        %v6308 = vpack.c.b16 %v5452, %v5444
        %v6309 = vpack.c.b16 %v5453, %v5445
        %v6310 = vpack.c.b16 %v5462, %v5454
        %v6311 = vpack.c.b16 %v5463, %v5455
        %v6312 = vpack.c.b16 %v5464, %v5456
        %v6313 = vpack.c.b16 %v5465, %v5457
        %v6314 = vpack.c.b16 %v5466, %v5458
        %v6315 = vpack.c.b16 %v5467, %v5459
        %v6316 = vpack.c.b16 %v5468, %v5460
        %v6317 = vpack.c.b16 %v5469, %v5461
        %v6318 = vpack.c.b16 %v5478, %v5470
        %v6319 = vpack.c.b16 %v5479, %v5471
        %v6320 = vpack.c.b16 %v5480, %v5472
        %v6321 = vpack.c.b16 %v5481, %v5473
        %v6322 = vpack.c.b16 %v5482, %v5474
        %v6323 = vpack.c.b16 %v5483, %v5475
        %v6324 = vpack.c.b16 %v5484, %v5476
        %v6325 = vpack.c.b16 %v5485, %v5477
        %v6326 = vpack.c.b16 %v5494, %v5486
        %v6327 = vpack.c.b16 %v5495, %v5487
        %v6328 = vpack.c.b16 %v5496, %v5488
        %v6329 = vpack.c.b16 %v5497, %v5489
        %v6330 = vpack.c.b16 %v5498, %v5490
        %v6331 = vpack.c.b16 %v5499, %v5491
        %v6332 = vpack.c.b16 %v5500, %v5492
        %v6333 = vpack.c.b16 %v5501, %v5493
        %v6334 = vpack.c.b16 %v5510, %v5502
        %v6335 = vpack.c.b16 %v5511, %v5503
        %v6336 = vpack.c.b16 %v5512, %v5504
        %v6337 = vpack.c.b16 %v5513, %v5505
        %v6338 = vpack.c.b16 %v5514, %v5506
        %v6339 = vpack.c.b16 %v5515, %v5507
        %v6340 = vpack.c.b16 %v5516, %v5508
        %v6341 = vpack.c.b16 %v5517, %v5509
        %v6342 = vpack.c.b16 %v5526, %v5518
        %v6343 = vpack.c.b16 %v5527, %v5519
        %v6344 = vpack.c.b16 %v5528, %v5520
        %v6345 = vpack.c.b16 %v5529, %v5521
        %v6346 = vpack.c.b16 %v5530, %v5522
        %v6347 = vpack.c.b16 %v5531, %v5523
        %v6348 = vpack.c.b16 %v5532, %v5524
        %v6349 = vpack.c.b16 %v5533, %v5525
        %v6350 = vpack.c.b16 %v5542, %v5534
        %v6351 = vpack.c.b16 %v5543, %v5535
        %v6352 = vpack.c.b16 %v5544, %v5536
        %v6353 = vpack.c.b16 %v5545, %v5537
        %v6354 = vpack.c.b16 %v5546, %v5538
        %v6355 = vpack.c.b16 %v5547, %v5539
        %v6356 = vpack.c.b16 %v5548, %v5540
        %v6357 = vpack.c.b16 %v5549, %v5541
        %v6358 = vpack.c.b16 %v5558, %v5550
        %v6359 = vpack.c.b16 %v5559, %v5551
        %v6360 = vpack.c.b16 %v5560, %v5552
        %v6361 = vpack.c.b16 %v5561, %v5553
        %v6362 = vpack.c.b16 %v5562, %v5554
        %v6363 = vpack.c.b16 %v5563, %v5555
        %v6364 = vpack.c.b16 %v5564, %v5556
        %v6365 = vpack.c.b16 %v5565, %v5557
        %v6366 = vpack.c.b16 %v5574, %v5566
        %v6367 = vpack.c.b16 %v5575, %v5567
        %v6368 = vpack.c.b16 %v5576, %v5568
        %v6369 = vpack.c.b16 %v5577, %v5569
        %v6370 = vpack.c.b16 %v5578, %v5570
        %v6371 = vpack.c.b16 %v5579, %v5571
        %v6372 = vpack.c.b16 %v5580, %v5572
        %v6373 = vpack.c.b16 %v5581, %v5573
        %v6374 = vpack.c.b16 %v5590, %v5582
        %v6375 = vpack.c.b16 %v5591, %v5583
        %v6376 = vpack.c.b16 %v5592, %v5584
        %v6377 = vpack.c.b16 %v5593, %v5585
        %v6378 = vpack.c.b16 %v5594, %v5586
        %v6379 = vpack.c.b16 %v5595, %v5587
        %v6380 = vpack.c.b16 %v5596, %v5588
        %v6381 = vpack.c.b16 %v5597, %v5589
        %v6382 = vpack.c.b16 %v5606, %v5598
        %v6383 = vpack.c.b16 %v5607, %v5599
        %v6384 = vpack.c.b16 %v5608, %v5600
        %v6385 = vpack.c.b16 %v5609, %v5601
        %v6386 = vpack.c.b16 %v5610, %v5602
        %v6387 = vpack.c.b16 %v5611, %v5603
        %v6388 = vpack.c.b16 %v5612, %v5604
        %v6389 = vpack.c.b16 %v5613, %v5605
        %v6390 = vpack.c.b16 %v5622, %v5614
        %v6391 = vpack.c.b16 %v5623, %v5615
        %v6392 = vpack.c.b16 %v5624, %v5616
        %v6393 = vpack.c.b16 %v5625, %v5617
        %v6394 = vpack.c.b16 %v5626, %v5618
        %v6395 = vpack.c.b16 %v5627, %v5619
        %v6396 = vpack.c.b16 %v5628, %v5620
        %v6397 = vpack.c.b16 %v5629, %v5621
        %v6398 = vpack.c.b16 %v5638, %v5630
        %v6399 = vpack.c.b16 %v5639, %v5631
        %v6400 = vpack.c.b16 %v5640, %v5632
        %v6401 = vpack.c.b16 %v5641, %v5633
        %v6402 = vpack.c.b16 %v5642, %v5634
        %v6403 = vpack.c.b16 %v5643, %v5635
        %v6404 = vpack.c.b16 %v5644, %v5636
        %v6405 = vpack.c.b16 %v5645, %v5637
        %v6406 = vpack.c.b16 %v5654, %v5646
        %v6407 = vpack.c.b16 %v5655, %v5647
        %v6408 = vpack.c.b16 %v5656, %v5648
        %v6409 = vpack.c.b16 %v5657, %v5649
        %v6410 = vpack.c.b16 %v5658, %v5650
        %v6411 = vpack.c.b16 %v5659, %v5651
        %v6412 = vpack.c.b16 %v5660, %v5652
        %v6413 = vpack.c.b16 %v5661, %v5653
        %v6414 = vpack.c.b16 %v5670, %v5662
        %v6415 = vpack.c.b16 %v5671, %v5663
        %v6416 = vpack.c.b16 %v5672, %v5664
        %v6417 = vpack.c.b16 %v5673, %v5665
        %v6418 = vpack.c.b16 %v5674, %v5666
        %v6419 = vpack.c.b16 %v5675, %v5667
        %v6420 = vpack.c.b16 %v5676, %v5668
        %v6421 = vpack.c.b16 %v5677, %v5669
        %v6422 = vpack.c.b16 %v5686, %v5678
        %v6423 = vpack.c.b16 %v5687, %v5679
        %v6424 = vpack.c.b16 %v5688, %v5680
        %v6425 = vpack.c.b16 %v5689, %v5681
        %v6426 = vpack.c.b16 %v5690, %v5682
        %v6427 = vpack.c.b16 %v5691, %v5683
        %v6428 = vpack.c.b16 %v5692, %v5684
        %v6429 = vpack.c.b16 %v5693, %v5685
        %v6430 = vpack.c.b16 %v5702, %v5694
        %v6431 = vpack.c.b16 %v5703, %v5695
        %v6432 = vpack.c.b16 %v5704, %v5696
        %v6433 = vpack.c.b16 %v5705, %v5697
        %v6434 = vpack.c.b16 %v5706, %v5698
        %v6435 = vpack.c.b16 %v5707, %v5699
        %v6436 = vpack.c.b16 %v5708, %v5700
        %v6437 = vpack.c.b16 %v5709, %v5701
        %v6438 = vpack.c.b16 %v5718, %v5710
        %v6439 = vpack.c.b16 %v5719, %v5711
        %v6440 = vpack.c.b16 %v5720, %v5712
        %v6441 = vpack.c.b16 %v5721, %v5713
        %v6442 = vpack.c.b16 %v5722, %v5714
        %v6443 = vpack.c.b16 %v5723, %v5715
        %v6444 = vpack.c.b16 %v5724, %v5716
        %v6445 = vpack.c.b16 %v5725, %v5717
        %v6446 = vpack.c.b16 %v5734, %v5726
        %v6447 = vpack.c.b16 %v5735, %v5727
        %v6448 = vpack.c.b16 %v5736, %v5728
        %v6449 = vpack.c.b16 %v5737, %v5729
        %v6450 = vpack.c.b16 %v5738, %v5730
        %v6451 = vpack.c.b16 %v5739, %v5731
        %v6452 = vpack.c.b16 %v5740, %v5732
        %v6453 = vpack.c.b16 %v5741, %v5733
        %v6454 = vpack.c.b16 %v5750, %v5742
        %v6455 = vpack.c.b16 %v5751, %v5743
        %v6456 = vpack.c.b16 %v5752, %v5744
        %v6457 = vpack.c.b16 %v5753, %v5745
        %v6458 = vpack.c.b16 %v5754, %v5746
        %v6459 = vpack.c.b16 %v5755, %v5747
        %v6460 = vpack.c.b16 %v5756, %v5748
        %v6461 = vpack.c.b16 %v5757, %v5749
        %v6462 = vpack.c.b16 %v5766, %v5758
        %v6463 = vpack.c.b16 %v5767, %v5759
        %v6464 = vpack.c.b16 %v5768, %v5760
        %v6465 = vpack.c.b16 %v5769, %v5761
        %v6466 = vpack.c.b16 %v5770, %v5762
        %v6467 = vpack.c.b16 %v5771, %v5763
        %v6468 = vpack.c.b16 %v5772, %v5764
        %v6469 = vpack.c.b16 %v5773, %v5765
        %v6470 = vpack.c.b16 %v5782, %v5774
        %v6471 = vpack.c.b16 %v5783, %v5775
        %v6472 = vpack.c.b16 %v5784, %v5776
        %v6473 = vpack.c.b16 %v5785, %v5777
        %v6474 = vpack.c.b16 %v5786, %v5778
        %v6475 = vpack.c.b16 %v5787, %v5779
        %v6476 = vpack.c.b16 %v5788, %v5780
        %v6477 = vpack.c.b16 %v5789, %v5781
        %v6478 = vpack.c.b16 %v5798, %v5790
        %v6479 = vpack.c.b16 %v5799, %v5791
        %v6480 = vpack.c.b16 %v5800, %v5792
        %v6481 = vpack.c.b16 %v5801, %v5793
        %v6482 = vpack.c.b16 %v5802, %v5794
        %v6483 = vpack.c.b16 %v5803, %v5795
        %v6484 = vpack.c.b16 %v5804, %v5796
        %v6485 = vpack.c.b16 %v5805, %v5797
        %v6486 = vpack.c.b16 %v5814, %v5806
        %v6487 = vpack.c.b16 %v5815, %v5807
        %v6488 = vpack.c.b16 %v5816, %v5808
        %v6489 = vpack.c.b16 %v5817, %v5809
        %v6490 = vpack.c.b16 %v5818, %v5810
        %v6491 = vpack.c.b16 %v5819, %v5811
        %v6492 = vpack.c.b16 %v5820, %v5812
        %v6493 = vpack.c.b16 %v5821, %v5813
        %v6494 = vpack.c.b16 %v5830, %v5822
        %v6495 = vpack.c.b16 %v5831, %v5823
        %v6496 = vpack.c.b16 %v5832, %v5824
        %v6497 = vpack.c.b16 %v5833, %v5825
        %v6498 = vpack.c.b16 %v5834, %v5826
        %v6499 = vpack.c.b16 %v5835, %v5827
        %v6500 = vpack.c.b16 %v5836, %v5828
        %v6501 = vpack.c.b16 %v5837, %v5829
        %v6502 = vpack.c.b16 %v5846, %v5838
        %v6503 = vpack.c.b16 %v5847, %v5839
        %v6504 = vpack.c.b16 %v5848, %v5840
        %v6505 = vpack.c.b16 %v5849, %v5841
        %v6506 = vpack.c.b16 %v5850, %v5842
        %v6507 = vpack.c.b16 %v5851, %v5843
        %v6508 = vpack.c.b16 %v5852, %v5844
        %v6509 = vpack.c.b16 %v5853, %v5845
        %v6510 = vpack.c.b16 %v5862, %v5854
        %v6511 = vpack.c.b16 %v5863, %v5855
        %v6512 = vpack.c.b16 %v5864, %v5856
        %v6513 = vpack.c.b16 %v5865, %v5857
        %v6514 = vpack.c.b16 %v5866, %v5858
        %v6515 = vpack.c.b16 %v5867, %v5859
        %v6516 = vpack.c.b16 %v5868, %v5860
        %v6517 = vpack.c.b16 %v5869, %v5861
        %v6518 = vpack.c.b16 %v5878, %v5870
        %v6519 = vpack.c.b16 %v5879, %v5871
        %v6520 = vpack.c.b16 %v5880, %v5872
        %v6521 = vpack.c.b16 %v5881, %v5873
        %v6522 = vpack.c.b16 %v5882, %v5874
        %v6523 = vpack.c.b16 %v5883, %v5875
        %v6524 = vpack.c.b16 %v5884, %v5876
        %v6525 = vpack.c.b16 %v5885, %v5877
        %v6526 = vpack.c.b16 %v5894, %v5886
        %v6527 = vpack.c.b16 %v5895, %v5887
        %v6528 = vpack.c.b16 %v5896, %v5888
        %v6529 = vpack.c.b16 %v5897, %v5889
        %v6530 = vpack.c.b16 %v5898, %v5890
        %v6531 = vpack.c.b16 %v5899, %v5891
        %v6532 = vpack.c.b16 %v5900, %v5892
        %v6533 = vpack.c.b16 %v5901, %v5893
        %v6534 = vpack.c.b16 %v5910, %v5902
        %v6535 = vpack.c.b16 %v5911, %v5903
        %v6536 = vpack.c.b16 %v5912, %v5904
        %v6537 = vpack.c.b16 %v5913, %v5905
        %v6538 = vpack.c.b16 %v5914, %v5906
        %v6539 = vpack.c.b16 %v5915, %v5907
        %v6540 = vpack.c.b16 %v5916, %v5908
        %v6541 = vpack.c.b16 %v5917, %v5909
        %v6542 = vpack.c.b16 %v5926, %v5918
        %v6543 = vpack.c.b16 %v5927, %v5919
        %v6544 = vpack.c.b16 %v5928, %v5920
        %v6545 = vpack.c.b16 %v5929, %v5921
        %v6546 = vpack.c.b16 %v5930, %v5922
        %v6547 = vpack.c.b16 %v5931, %v5923
        %v6548 = vpack.c.b16 %v5932, %v5924
        %v6549 = vpack.c.b16 %v5933, %v5925
        %v6550 = vpack.c.b16 %v5942, %v5934
        %v6551 = vpack.c.b16 %v5943, %v5935
        %v6552 = vpack.c.b16 %v5944, %v5936
        %v6553 = vpack.c.b16 %v5945, %v5937
        %v6554 = vpack.c.b16 %v5946, %v5938
        %v6555 = vpack.c.b16 %v5947, %v5939
        %v6556 = vpack.c.b16 %v5948, %v5940
        %v6557 = vpack.c.b16 %v5949, %v5941
        %v6558 = vpack.c.b16 %v5958, %v5950
        %v6559 = vpack.c.b16 %v5959, %v5951
        %v6560 = vpack.c.b16 %v5960, %v5952
        %v6561 = vpack.c.b16 %v5961, %v5953
        %v6562 = vpack.c.b16 %v5962, %v5954
        %v6563 = vpack.c.b16 %v5963, %v5955
        %v6564 = vpack.c.b16 %v5964, %v5956
        %v6565 = vpack.c.b16 %v5965, %v5957
        %v6566 = vpack.c.b16 %v5974, %v5966
        %v6567 = vpack.c.b16 %v5975, %v5967
        %v6568 = vpack.c.b16 %v5976, %v5968
        %v6569 = vpack.c.b16 %v5977, %v5969
        %v6570 = vpack.c.b16 %v5978, %v5970
        %v6571 = vpack.c.b16 %v5979, %v5971
        %v6572 = vpack.c.b16 %v5980, %v5972
        %v6573 = vpack.c.b16 %v5981, %v5973
        %v6574 = vpack.c.b16 %v5990, %v5982
        %v6575 = vpack.c.b16 %v5991, %v5983
        %v6576 = vpack.c.b16 %v5992, %v5984
        %v6577 = vpack.c.b16 %v5993, %v5985
        %v6578 = vpack.c.b16 %v5994, %v5986
        %v6579 = vpack.c.b16 %v5995, %v5987
        %v6580 = vpack.c.b16 %v5996, %v5988
        %v6581 = vpack.c.b16 %v5997, %v5989
        %v6582 = vpack.c.b16 %v6006, %v5998
        %v6583 = vpack.c.b16 %v6007, %v5999
        %v6584 = vpack.c.b16 %v6008, %v6000
        %v6585 = vpack.c.b16 %v6009, %v6001
        %v6586 = vpack.c.b16 %v6010, %v6002
        %v6587 = vpack.c.b16 %v6011, %v6003
        %v6588 = vpack.c.b16 %v6012, %v6004
        %v6589 = vpack.c.b16 %v6013, %v6005
        %v6590 = vpack.c.b16 %v6022, %v6014
        %v6591 = vpack.c.b16 %v6023, %v6015
        %v6592 = vpack.c.b16 %v6024, %v6016
        %v6593 = vpack.c.b16 %v6025, %v6017
        %v6594 = vpack.c.b16 %v6026, %v6018
        %v6595 = vpack.c.b16 %v6027, %v6019
        %v6596 = vpack.c.b16 %v6028, %v6020
        %v6597 = vpack.c.b16 %v6029, %v6021
        %v6598 = vpack.c.b16 %v6038, %v6030
        %v6599 = vpack.c.b16 %v6039, %v6031
        %v6600 = vpack.c.b16 %v6040, %v6032
        %v6601 = vpack.c.b16 %v6041, %v6033
        %v6602 = vpack.c.b16 %v6042, %v6034
        %v6603 = vpack.c.b16 %v6043, %v6035
        %v6604 = vpack.c.b16 %v6044, %v6036
        %v6605 = vpack.c.b16 %v6045, %v6037
        %v6606 = vpack.c.b16 %v6054, %v6046
        %v6607 = vpack.c.b16 %v6055, %v6047
        %v6608 = vpack.c.b16 %v6056, %v6048
        %v6609 = vpack.c.b16 %v6057, %v6049
        %v6610 = vpack.c.b16 %v6058, %v6050
        %v6611 = vpack.c.b16 %v6059, %v6051
        %v6612 = vpack.c.b16 %v6060, %v6052
        %v6613 = vpack.c.b16 %v6061, %v6053
        %v6614 = vpack.c.b16 %v6070, %v6062
        %v6615 = vpack.c.b16 %v6071, %v6063
        %v6616 = vpack.c.b16 %v6072, %v6064
        %v6617 = vpack.c.b16 %v6073, %v6065
        %v6618 = vpack.c.b16 %v6074, %v6066
        %v6619 = vpack.c.b16 %v6075, %v6067
        %v6620 = vpack.c.b16 %v6076, %v6068
        %v6621 = vpack.c.b16 %v6077, %v6069
        %v6622 = vpack.c.b16 %v6086, %v6078
        %v6623 = vpack.c.b16 %v6087, %v6079
        %v6624 = vpack.c.b16 %v6088, %v6080
        %v6625 = vpack.c.b16 %v6089, %v6081
        %v6626 = vpack.c.b16 %v6090, %v6082
        %v6627 = vpack.c.b16 %v6091, %v6083
        %v6628 = vpack.c.b16 %v6092, %v6084
        %v6629 = vpack.c.b16 %v6093, %v6085
        %v6630 = vpack.c.b16 %v6102, %v6094
        %v6631 = vpack.c.b16 %v6103, %v6095
        %v6632 = vpack.c.b16 %v6104, %v6096
        %v6633 = vpack.c.b16 %v6105, %v6097
        %v6634 = vpack.c.b16 %v6106, %v6098
        %v6635 = vpack.c.b16 %v6107, %v6099
        %v6636 = vpack.c.b16 %v6108, %v6100
        %v6637 = vpack.c.b16 %v6109, %v6101
        %v6638 = vpack.c.b16 %v6118, %v6110
        %v6639 = vpack.c.b16 %v6119, %v6111
        %v6640 = vpack.c.b16 %v6120, %v6112
        %v6641 = vpack.c.b16 %v6121, %v6113
        %v6642 = vpack.c.b16 %v6122, %v6114
        %v6643 = vpack.c.b16 %v6123, %v6115
        %v6644 = vpack.c.b16 %v6124, %v6116
        %v6645 = vpack.c.b16 %v6125, %v6117
        %v6646 = vpack.c.b16 %v6134, %v6126
        %v6647 = vpack.c.b16 %v6135, %v6127
        %v6648 = vpack.c.b16 %v6136, %v6128
        %v6649 = vpack.c.b16 %v6137, %v6129
        %v6650 = vpack.c.b16 %v6138, %v6130
        %v6651 = vpack.c.b16 %v6139, %v6131
        %v6652 = vpack.c.b16 %v6140, %v6132
        %v6653 = vpack.c.b16 %v6141, %v6133
        %7166 = vmatprep.subr.bf16.mxu0 %v6143
        %7167 = vmatpush1.bf16.msra.mxu0 %v6142
        %7168 = vmatprep.subr.bf16.mxu0 %v6151
        %7169 = vmatpush1.bf16.msra.mxu0 %v6150
        %7170 = vmatprep.subr.bf16.mxu0 %v6159
        %7171 = vmatpush1.bf16.msra.mxu0 %v6158
        %7172 = vmatprep.subr.bf16.mxu0 %v6167
        %7173 = vmatpush1.bf16.msra.mxu0 %v6166
        %7174 = vmatprep.subr.bf16.mxu0 %v6175
        %7175 = vmatpush1.bf16.msra.mxu0 %v6174
        %7176 = vmatprep.subr.bf16.mxu0 %v6183
        %7177 = vmatpush1.bf16.msra.mxu0 %v6182
        %7178 = vmatprep.subr.bf16.mxu0 %v6191
        %7179 = vmatpush1.bf16.msra.mxu0 %v6190
        %7180 = vmatprep.subr.bf16.mxu0 %v6199
        %7181 = vmatpush1.bf16.msra.mxu0 %v6198
        %7182 = vmatprep.subr.bf16.mxu0 %v6207
        %7183 = vmatpush1.bf16.msra.mxu0 %v6206
        %7184 = vmatprep.subr.bf16.mxu0 %v6215
        %7185 = vmatpush1.bf16.msra.mxu0 %v6214
        %7186 = vmatprep.subr.bf16.mxu0 %v6223
        %7187 = vmatpush1.bf16.msra.mxu0 %v6222
        %7188 = vmatprep.subr.bf16.mxu0 %v6231
        %7189 = vmatpush1.bf16.msra.mxu0 %v6230
        %7190 = vmatprep.subr.bf16.mxu0 %v6239
        %7191 = vmatpush1.bf16.msra.mxu0 %v6238
        %7192 = vmatprep.subr.bf16.mxu0 %v6247
        %7193 = vmatpush1.bf16.msra.mxu0 %v6246
        %7194 = vmatprep.subr.bf16.mxu0 %v6255
        %7195 = vmatpush1.bf16.msra.mxu0 %v6254
        %7196 = vmatprep.subr.bf16.mxu0 %v6263
        %7197 = vmatpush1.bf16.msra.mxu0 %v6262
        %7198 = vmatprep.mubr.bf16.mxu0 %v4045
        %7199 = vmatmul.mubr.bf16.gmra.mrb[0].mxu0 %v4044
        %v7200 = vpop.f32.mrb[0].mxu0
        %v7201 = vadd.f32 %v4569, %v7200
        %v7202 = vpop.f32.mrb[0].mxu0
        %v7203 = vadd.f32 %v4573, %v7202
        %v7204 = vpop.f32.mrb[0].mxu0
        %v7205 = vpop.f32.mrb[0].mxu0
        %7206 = vdwg.mxu0
        %7207 = vmatprep.subr.bf16.mxu0 %v6271
        %7208 = vmatpush1.bf16.msra.mxu0 %v6270
        %7209 = vmatprep.subr.bf16.mxu0 %v6279
        %7210 = vmatpush1.bf16.msra.mxu0 %v6278
        %7211 = vmatprep.subr.bf16.mxu0 %v6287
        %7212 = vmatpush1.bf16.msra.mxu0 %v6286
        %7213 = vmatprep.subr.bf16.mxu0 %v6295
        %7214 = vmatpush1.bf16.msra.mxu0 %v6294
        %7215 = vmatprep.subr.bf16.mxu0 %v6303
        %7216 = vmatpush1.bf16.msra.mxu0 %v6302
        %7217 = vmatprep.subr.bf16.mxu0 %v6311
        %7218 = vmatpush1.bf16.msra.mxu0 %v6310
        %7219 = vmatprep.subr.bf16.mxu0 %v6319
        %7220 = vmatpush1.bf16.msra.mxu0 %v6318
        %7221 = vmatprep.subr.bf16.mxu0 %v6327
        %7222 = vmatpush1.bf16.msra.mxu0 %v6326
        %7223 = vmatprep.subr.bf16.mxu0 %v6335
        %7224 = vmatpush1.bf16.msra.mxu0 %v6334
        %7225 = vmatprep.subr.bf16.mxu0 %v6343
        %7226 = vmatpush1.bf16.msra.mxu0 %v6342
        %7227 = vmatprep.subr.bf16.mxu0 %v6351
        %7228 = vmatpush1.bf16.msra.mxu0 %v6350
        %7229 = vmatprep.subr.bf16.mxu0 %v6359
        %7230 = vmatpush1.bf16.msra.mxu0 %v6358
        %7231 = vmatprep.subr.bf16.mxu0 %v6367
        %7232 = vmatpush1.bf16.msra.mxu0 %v6366
        %7233 = vmatprep.subr.bf16.mxu0 %v6375
        %7234 = vmatpush1.bf16.msra.mxu0 %v6374
        %7235 = vmatprep.subr.bf16.mxu0 %v6383
        %7236 = vmatpush1.bf16.msra.mxu0 %v6382
        %7237 = vmatprep.subr.bf16.mxu0 %v6391
        %7238 = vmatpush1.bf16.msra.mxu0 %v6390
        %7239 = vmatprep.mubr.bf16.mxu0 %v4047
        %7240 = vmatmul.mubr.bf16.gmra.mrb[0].mxu0 %v4046
        %v7241 = vpop.f32.mrb[0].mxu0
        %v7242 = vadd.f32 %v7201, %v7241
        %v7243 = vpop.f32.mrb[0].mxu0
        %v7244 = vadd.f32 %v7203, %v7243
        %v7245 = vpop.f32.mrb[0].mxu0
        %v7246 = vpop.f32.mrb[0].mxu0
        %7247 = vdwg.mxu0
        %7248 = vmatprep.subr.bf16.mxu0 %v6399
        %7249 = vmatpush1.bf16.msra.mxu0 %v6398
        %7250 = vmatprep.subr.bf16.mxu0 %v6407
        %7251 = vmatpush1.bf16.msra.mxu0 %v6406
        %7252 = vmatprep.subr.bf16.mxu0 %v6415
        %7253 = vmatpush1.bf16.msra.mxu0 %v6414
        %7254 = vmatprep.subr.bf16.mxu0 %v6423
        %7255 = vmatpush1.bf16.msra.mxu0 %v6422
        %7256 = vmatprep.subr.bf16.mxu0 %v6431
        %7257 = vmatpush1.bf16.msra.mxu0 %v6430
        %7258 = vmatprep.subr.bf16.mxu0 %v6439
        %7259 = vmatpush1.bf16.msra.mxu0 %v6438
        %7260 = vmatprep.subr.bf16.mxu0 %v6447
        %7261 = vmatpush1.bf16.msra.mxu0 %v6446
        %7262 = vmatprep.subr.bf16.mxu0 %v6455
        %7263 = vmatpush1.bf16.msra.mxu0 %v6454
        %7264 = vmatprep.subr.bf16.mxu0 %v6463
        %7265 = vmatpush1.bf16.msra.mxu0 %v6462
        %7266 = vmatprep.subr.bf16.mxu0 %v6471
        %7267 = vmatpush1.bf16.msra.mxu0 %v6470
        %7268 = vmatprep.subr.bf16.mxu0 %v6479
        %7269 = vmatpush1.bf16.msra.mxu0 %v6478
        %7270 = vmatprep.subr.bf16.mxu0 %v6487
        %7271 = vmatpush1.bf16.msra.mxu0 %v6486
        %7272 = vmatprep.subr.bf16.mxu0 %v6495
        %7273 = vmatpush1.bf16.msra.mxu0 %v6494
        %7274 = vmatprep.subr.bf16.mxu0 %v6503
        %7275 = vmatpush1.bf16.msra.mxu0 %v6502
        %7276 = vmatprep.subr.bf16.mxu0 %v6511
        %7277 = vmatpush1.bf16.msra.mxu0 %v6510
        %7278 = vmatprep.subr.bf16.mxu0 %v6519
        %7279 = vmatpush1.bf16.msra.mxu0 %v6518
        %7280 = vmatprep.mubr.bf16.mxu0 %v4049
        %7281 = vmatmul.mubr.bf16.gmra.mrb[0].mxu0 %v4048
        %v7282 = vpop.f32.mrb[0].mxu0
        %v7283 = vadd.f32 %v7242, %v7282
        %v7284 = vpop.f32.mrb[0].mxu0
        %v7285 = vadd.f32 %v7244, %v7284
        %v7286 = vpop.f32.mrb[0].mxu0
        %v7287 = vpop.f32.mrb[0].mxu0
        %7288 = vdwg.mxu0
        %7289 = vmatprep.subr.bf16.mxu0 %v6527
        %7290 = vmatpush1.bf16.msra.mxu0 %v6526
        %7291 = vmatprep.subr.bf16.mxu0 %v6535
        %7292 = vmatpush1.bf16.msra.mxu0 %v6534
        %7293 = vmatprep.subr.bf16.mxu0 %v6543
        %7294 = vmatpush1.bf16.msra.mxu0 %v6542
        %7295 = vmatprep.subr.bf16.mxu0 %v6551
        %7296 = vmatpush1.bf16.msra.mxu0 %v6550
        %7297 = vmatprep.subr.bf16.mxu0 %v6559
        %7298 = vmatpush1.bf16.msra.mxu0 %v6558
        %7299 = vmatprep.subr.bf16.mxu0 %v6567
        %7300 = vmatpush1.bf16.msra.mxu0 %v6566
        %7301 = vmatprep.subr.bf16.mxu0 %v6575
        %7302 = vmatpush1.bf16.msra.mxu0 %v6574
        %7303 = vmatprep.subr.bf16.mxu0 %v6583
        %7304 = vmatpush1.bf16.msra.mxu0 %v6582
        %7305 = vmatprep.subr.bf16.mxu0 %v6591
        %7306 = vmatpush1.bf16.msra.mxu0 %v6590
        %7307 = vmatprep.subr.bf16.mxu0 %v6599
        %7308 = vmatpush1.bf16.msra.mxu0 %v6598
        %7309 = vmatprep.subr.bf16.mxu0 %v6607
        %7310 = vmatpush1.bf16.msra.mxu0 %v6606
        %7311 = vmatprep.subr.bf16.mxu0 %v6615
        %7312 = vmatpush1.bf16.msra.mxu0 %v6614
        %7313 = vmatprep.subr.bf16.mxu0 %v6623
        %7314 = vmatpush1.bf16.msra.mxu0 %v6622
        %7315 = vmatprep.subr.bf16.mxu0 %v6631
        %7316 = vmatpush1.bf16.msra.mxu0 %v6630
        %7317 = vmatprep.subr.bf16.mxu0 %v6639
        %7318 = vmatpush1.bf16.msra.mxu0 %v6638
        %7319 = vmatprep.subr.bf16.mxu0 %v6647
        %7320 = vmatpush1.bf16.msra.mxu0 %v6646
        %7321 = vmatprep.mubr.bf16.mxu0 %v4051
        %7322 = vmatmul.mubr.bf16.gmra.mrb[0].mxu0 %v4050
        %v7323 = vpop.f32.mrb[0].mxu0
        %v7324 = vadd.f32 %v7283, %v7323
        %v7325 = vpop.f32.mrb[0].mxu0
        %v7326 = vadd.f32 %v7285, %v7325
        %v7327 = vpop.f32.mrb[0].mxu0
        %v7328 = vpop.f32.mrb[0].mxu0
        %7329 = vdwg.mxu0
        %7330 = vmatprep.subr.bf16.mxu0 %v6145
        %7331 = vmatpush1.bf16.msra.mxu0 %v6144
        %7332 = vmatprep.subr.bf16.mxu0 %v6153
        %7333 = vmatpush1.bf16.msra.mxu0 %v6152
        %7334 = vmatprep.subr.bf16.mxu0 %v6161
        %7335 = vmatpush1.bf16.msra.mxu0 %v6160
        %7336 = vmatprep.subr.bf16.mxu0 %v6169
        %7337 = vmatpush1.bf16.msra.mxu0 %v6168
        %7338 = vmatprep.subr.bf16.mxu0 %v6177
        %7339 = vmatpush1.bf16.msra.mxu0 %v6176
        %7340 = vmatprep.subr.bf16.mxu0 %v6185
        %7341 = vmatpush1.bf16.msra.mxu0 %v6184
        %7342 = vmatprep.subr.bf16.mxu0 %v6193
        %7343 = vmatpush1.bf16.msra.mxu0 %v6192
        %7344 = vmatprep.subr.bf16.mxu0 %v6201
        %7345 = vmatpush1.bf16.msra.mxu0 %v6200
        %7346 = vmatprep.subr.bf16.mxu0 %v6209
        %7347 = vmatpush1.bf16.msra.mxu0 %v6208
        %7348 = vmatprep.subr.bf16.mxu0 %v6217
        %7349 = vmatpush1.bf16.msra.mxu0 %v6216
        %7350 = vmatprep.subr.bf16.mxu0 %v6225
        %7351 = vmatpush1.bf16.msra.mxu0 %v6224
        %7352 = vmatprep.subr.bf16.mxu0 %v6233
        %7353 = vmatpush1.bf16.msra.mxu0 %v6232
        %7354 = vmatprep.subr.bf16.mxu0 %v6241
        %7355 = vmatpush1.bf16.msra.mxu0 %v6240
        %7356 = vmatprep.subr.bf16.mxu0 %v6249
        %7357 = vmatpush1.bf16.msra.mxu0 %v6248
        %7358 = vmatprep.subr.bf16.mxu0 %v6257
        %7359 = vmatpush1.bf16.msra.mxu0 %v6256
        %7360 = vmatprep.subr.bf16.mxu0 %v6265
        %7361 = vmatpush1.bf16.msra.mxu0 %v6264
        %7362 = vmatprep.mubr.bf16.mxu0 %v4045
        %7363 = vmatmul.mubr.bf16.gmra.mrb[0].mxu0 %v4044
        %v7364 = vpop.f32.mrb[0].mxu0
        %v7365 = vadd.f32 %v4577, %v7364
        %v7366 = vpop.f32.mrb[0].mxu0
        %v7367 = vadd.f32 %v4581, %v7366
        %v7368 = vpop.f32.mrb[0].mxu0
        %v7369 = vpop.f32.mrb[0].mxu0
        %7370 = vdwg.mxu0
        %7371 = vmatprep.subr.bf16.mxu0 %v6273
        %7372 = vmatpush1.bf16.msra.mxu0 %v6272
        %7373 = vmatprep.subr.bf16.mxu0 %v6281
        %7374 = vmatpush1.bf16.msra.mxu0 %v6280
        %7375 = vmatprep.subr.bf16.mxu0 %v6289
        %7376 = vmatpush1.bf16.msra.mxu0 %v6288
        %7377 = vmatprep.subr.bf16.mxu0 %v6297
        %7378 = vmatpush1.bf16.msra.mxu0 %v6296
        %7379 = vmatprep.subr.bf16.mxu0 %v6305
        %7380 = vmatpush1.bf16.msra.mxu0 %v6304
        %7381 = vmatprep.subr.bf16.mxu0 %v6313
        %7382 = vmatpush1.bf16.msra.mxu0 %v6312
        %7383 = vmatprep.subr.bf16.mxu0 %v6321
        %7384 = vmatpush1.bf16.msra.mxu0 %v6320
        %7385 = vmatprep.subr.bf16.mxu0 %v6329
        %7386 = vmatpush1.bf16.msra.mxu0 %v6328
        %7387 = vmatprep.subr.bf16.mxu0 %v6337
        %7388 = vmatpush1.bf16.msra.mxu0 %v6336
        %7389 = vmatprep.subr.bf16.mxu0 %v6345
        %7390 = vmatpush1.bf16.msra.mxu0 %v6344
        %7391 = vmatprep.subr.bf16.mxu0 %v6353
        %7392 = vmatpush1.bf16.msra.mxu0 %v6352
        %7393 = vmatprep.subr.bf16.mxu0 %v6361
        %7394 = vmatpush1.bf16.msra.mxu0 %v6360
        %7395 = vmatprep.subr.bf16.mxu0 %v6369
        %7396 = vmatpush1.bf16.msra.mxu0 %v6368
        %7397 = vmatprep.subr.bf16.mxu0 %v6377
        %7398 = vmatpush1.bf16.msra.mxu0 %v6376
        %7399 = vmatprep.subr.bf16.mxu0 %v6385
        %7400 = vmatpush1.bf16.msra.mxu0 %v6384
        %7401 = vmatprep.subr.bf16.mxu0 %v6393
        %7402 = vmatpush1.bf16.msra.mxu0 %v6392
        %7403 = vmatprep.mubr.bf16.mxu0 %v4047
        %7404 = vmatmul.mubr.bf16.gmra.mrb[0].mxu0 %v4046
        %v7405 = vpop.f32.mrb[0].mxu0
        %v7406 = vadd.f32 %v7365, %v7405
        %v7407 = vpop.f32.mrb[0].mxu0
        %v7408 = vadd.f32 %v7367, %v7407
        %v7409 = vpop.f32.mrb[0].mxu0
        %v7410 = vpop.f32.mrb[0].mxu0
        %7411 = vdwg.mxu0
        %7412 = vmatprep.subr.bf16.mxu0 %v6401
        %7413 = vmatpush1.bf16.msra.mxu0 %v6400
        %7414 = vmatprep.subr.bf16.mxu0 %v6409
        %7415 = vmatpush1.bf16.msra.mxu0 %v6408
        %7416 = vmatprep.subr.bf16.mxu0 %v6417
        %7417 = vmatpush1.bf16.msra.mxu0 %v6416
        %7418 = vmatprep.subr.bf16.mxu0 %v6425
        %7419 = vmatpush1.bf16.msra.mxu0 %v6424
        %7420 = vmatprep.subr.bf16.mxu0 %v6433
        %7421 = vmatpush1.bf16.msra.mxu0 %v6432
        %7422 = vmatprep.subr.bf16.mxu0 %v6441
        %7423 = vmatpush1.bf16.msra.mxu0 %v6440
        %7424 = vmatprep.subr.bf16.mxu0 %v6449
        %7425 = vmatpush1.bf16.msra.mxu0 %v6448
        %7426 = vmatprep.subr.bf16.mxu0 %v6457
        %7427 = vmatpush1.bf16.msra.mxu0 %v6456
        %7428 = vmatprep.subr.bf16.mxu0 %v6465
        %7429 = vmatpush1.bf16.msra.mxu0 %v6464
        %7430 = vmatprep.subr.bf16.mxu0 %v6473
        %7431 = vmatpush1.bf16.msra.mxu0 %v6472
        %7432 = vmatprep.subr.bf16.mxu0 %v6481
        %7433 = vmatpush1.bf16.msra.mxu0 %v6480
        %7434 = vmatprep.subr.bf16.mxu0 %v6489
        %7435 = vmatpush1.bf16.msra.mxu0 %v6488
        %7436 = vmatprep.subr.bf16.mxu0 %v6497
        %7437 = vmatpush1.bf16.msra.mxu0 %v6496
        %7438 = vmatprep.subr.bf16.mxu0 %v6505
        %7439 = vmatpush1.bf16.msra.mxu0 %v6504
        %7440 = vmatprep.subr.bf16.mxu0 %v6513
        %7441 = vmatpush1.bf16.msra.mxu0 %v6512
        %7442 = vmatprep.subr.bf16.mxu0 %v6521
        %7443 = vmatpush1.bf16.msra.mxu0 %v6520
        %7444 = vmatprep.mubr.bf16.mxu0 %v4049
        %7445 = vmatmul.mubr.bf16.gmra.mrb[0].mxu0 %v4048
        %v7446 = vpop.f32.mrb[0].mxu0
        %v7447 = vadd.f32 %v7406, %v7446
        %v7448 = vpop.f32.mrb[0].mxu0
        %v7449 = vadd.f32 %v7408, %v7448
        %v7450 = vpop.f32.mrb[0].mxu0
        %v7451 = vpop.f32.mrb[0].mxu0
        %7452 = vdwg.mxu0
        %7453 = vmatprep.subr.bf16.mxu0 %v6529
        %7454 = vmatpush1.bf16.msra.mxu0 %v6528
        %7455 = vmatprep.subr.bf16.mxu0 %v6537
        %7456 = vmatpush1.bf16.msra.mxu0 %v6536
        %7457 = vmatprep.subr.bf16.mxu0 %v6545
        %7458 = vmatpush1.bf16.msra.mxu0 %v6544
        %7459 = vmatprep.subr.bf16.mxu0 %v6553
        %7460 = vmatpush1.bf16.msra.mxu0 %v6552
        %7461 = vmatprep.subr.bf16.mxu0 %v6561
        %7462 = vmatpush1.bf16.msra.mxu0 %v6560
        %7463 = vmatprep.subr.bf16.mxu0 %v6569
        %7464 = vmatpush1.bf16.msra.mxu0 %v6568
        %7465 = vmatprep.subr.bf16.mxu0 %v6577
        %7466 = vmatpush1.bf16.msra.mxu0 %v6576
        %7467 = vmatprep.subr.bf16.mxu0 %v6585
        %7468 = vmatpush1.bf16.msra.mxu0 %v6584
        %7469 = vmatprep.subr.bf16.mxu0 %v6593
        %7470 = vmatpush1.bf16.msra.mxu0 %v6592
        %7471 = vmatprep.subr.bf16.mxu0 %v6601
        %7472 = vmatpush1.bf16.msra.mxu0 %v6600
        %7473 = vmatprep.subr.bf16.mxu0 %v6609
        %7474 = vmatpush1.bf16.msra.mxu0 %v6608
        %7475 = vmatprep.subr.bf16.mxu0 %v6617
        %7476 = vmatpush1.bf16.msra.mxu0 %v6616
        %7477 = vmatprep.subr.bf16.mxu0 %v6625
        %7478 = vmatpush1.bf16.msra.mxu0 %v6624
        %7479 = vmatprep.subr.bf16.mxu0 %v6633
        %7480 = vmatpush1.bf16.msra.mxu0 %v6632
        %7481 = vmatprep.subr.bf16.mxu0 %v6641
        %7482 = vmatpush1.bf16.msra.mxu0 %v6640
        %7483 = vmatprep.subr.bf16.mxu0 %v6649
        %7484 = vmatpush1.bf16.msra.mxu0 %v6648
        %7485 = vmatprep.mubr.bf16.mxu0 %v4051
        %7486 = vmatmul.mubr.bf16.gmra.mrb[0].mxu0 %v4050
        %v7487 = vpop.f32.mrb[0].mxu0
        %v7488 = vadd.f32 %v7447, %v7487
        %v7489 = vpop.f32.mrb[0].mxu0
        %v7490 = vadd.f32 %v7449, %v7489
        %v7491 = vpop.f32.mrb[0].mxu0
        %v7492 = vpop.f32.mrb[0].mxu0
        %7493 = vdwg.mxu0
        %7494 = vmatprep.subr.bf16.mxu0 %v6147
        %7495 = vmatpush1.bf16.msra.mxu0 %v6146
        %7496 = vmatprep.subr.bf16.mxu0 %v6155
        %7497 = vmatpush1.bf16.msra.mxu0 %v6154
        %7498 = vmatprep.subr.bf16.mxu0 %v6163
        %7499 = vmatpush1.bf16.msra.mxu0 %v6162
        %7500 = vmatprep.subr.bf16.mxu0 %v6171
        %7501 = vmatpush1.bf16.msra.mxu0 %v6170
        %7502 = vmatprep.subr.bf16.mxu0 %v6179
        %7503 = vmatpush1.bf16.msra.mxu0 %v6178
        %7504 = vmatprep.subr.bf16.mxu0 %v6187
        %7505 = vmatpush1.bf16.msra.mxu0 %v6186
        %7506 = vmatprep.subr.bf16.mxu0 %v6195
        %7507 = vmatpush1.bf16.msra.mxu0 %v6194
        %7508 = vmatprep.subr.bf16.mxu0 %v6203
        %7509 = vmatpush1.bf16.msra.mxu0 %v6202
        %7510 = vmatprep.subr.bf16.mxu0 %v6211
        %7511 = vmatpush1.bf16.msra.mxu0 %v6210
        %7512 = vmatprep.subr.bf16.mxu0 %v6219
        %7513 = vmatpush1.bf16.msra.mxu0 %v6218
        %7514 = vmatprep.subr.bf16.mxu0 %v6227
        %7515 = vmatpush1.bf16.msra.mxu0 %v6226
        %7516 = vmatprep.subr.bf16.mxu0 %v6235
        %7517 = vmatpush1.bf16.msra.mxu0 %v6234
        %7518 = vmatprep.subr.bf16.mxu0 %v6243
        %7519 = vmatpush1.bf16.msra.mxu0 %v6242
        %7520 = vmatprep.subr.bf16.mxu0 %v6251
        %7521 = vmatpush1.bf16.msra.mxu0 %v6250
        %7522 = vmatprep.subr.bf16.mxu0 %v6259
        %7523 = vmatpush1.bf16.msra.mxu0 %v6258
        %7524 = vmatprep.subr.bf16.mxu0 %v6267
        %7525 = vmatpush1.bf16.msra.mxu0 %v6266
        %7526 = vmatprep.mubr.bf16.mxu0 %v4045
        %7527 = vmatmul.mubr.bf16.gmra.mrb[0].mxu0 %v4044
        %v7528 = vpop.f32.mrb[0].mxu0
        %v7529 = vadd.f32 %v4585, %v7528
        %v7530 = vpop.f32.mrb[0].mxu0
        %v7531 = vadd.f32 %v4589, %v7530
        %v7532 = vpop.f32.mrb[0].mxu0
        %v7533 = vpop.f32.mrb[0].mxu0
        %7534 = vdwg.mxu0
        %7535 = vmatprep.subr.bf16.mxu0 %v6275
        %7536 = vmatpush1.bf16.msra.mxu0 %v6274
        %7537 = vmatprep.subr.bf16.mxu0 %v6283
        %7538 = vmatpush1.bf16.msra.mxu0 %v6282
        %7539 = vmatprep.subr.bf16.mxu0 %v6291
        %7540 = vmatpush1.bf16.msra.mxu0 %v6290
        %7541 = vmatprep.subr.bf16.mxu0 %v6299
        %7542 = vmatpush1.bf16.msra.mxu0 %v6298
        %7543 = vmatprep.subr.bf16.mxu0 %v6307
        %7544 = vmatpush1.bf16.msra.mxu0 %v6306
        %7545 = vmatprep.subr.bf16.mxu0 %v6315
        %7546 = vmatpush1.bf16.msra.mxu0 %v6314
        %7547 = vmatprep.subr.bf16.mxu0 %v6323
        %7548 = vmatpush1.bf16.msra.mxu0 %v6322
        %7549 = vmatprep.subr.bf16.mxu0 %v6331
        %7550 = vmatpush1.bf16.msra.mxu0 %v6330
        %7551 = vmatprep.subr.bf16.mxu0 %v6339
        %7552 = vmatpush1.bf16.msra.mxu0 %v6338
        %7553 = vmatprep.subr.bf16.mxu0 %v6347
        %7554 = vmatpush1.bf16.msra.mxu0 %v6346
        %7555 = vmatprep.subr.bf16.mxu0 %v6355
        %7556 = vmatpush1.bf16.msra.mxu0 %v6354
        %7557 = vmatprep.subr.bf16.mxu0 %v6363
        %7558 = vmatpush1.bf16.msra.mxu0 %v6362
        %7559 = vmatprep.subr.bf16.mxu0 %v6371
        %7560 = vmatpush1.bf16.msra.mxu0 %v6370
        %7561 = vmatprep.subr.bf16.mxu0 %v6379
        %7562 = vmatpush1.bf16.msra.mxu0 %v6378
        %7563 = vmatprep.subr.bf16.mxu0 %v6387
        %7564 = vmatpush1.bf16.msra.mxu0 %v6386
        %7565 = vmatprep.subr.bf16.mxu0 %v6395
        %7566 = vmatpush1.bf16.msra.mxu0 %v6394
        %7567 = vmatprep.mubr.bf16.mxu0 %v4047
        %7568 = vmatmul.mubr.bf16.gmra.mrb[0].mxu0 %v4046
        %v7569 = vpop.f32.mrb[0].mxu0
        %v7570 = vadd.f32 %v7529, %v7569
        %v7571 = vpop.f32.mrb[0].mxu0
        %v7572 = vadd.f32 %v7531, %v7571
        %v7573 = vpop.f32.mrb[0].mxu0
        %v7574 = vpop.f32.mrb[0].mxu0
        %7575 = vdwg.mxu0
        %7576 = vmatprep.subr.bf16.mxu0 %v6403
        %7577 = vmatpush1.bf16.msra.mxu0 %v6402
        %7578 = vmatprep.subr.bf16.mxu0 %v6411
        %7579 = vmatpush1.bf16.msra.mxu0 %v6410
        %7580 = vmatprep.subr.bf16.mxu0 %v6419
        %7581 = vmatpush1.bf16.msra.mxu0 %v6418
        %7582 = vmatprep.subr.bf16.mxu0 %v6427
        %7583 = vmatpush1.bf16.msra.mxu0 %v6426
        %7584 = vmatprep.subr.bf16.mxu0 %v6435
        %7585 = vmatpush1.bf16.msra.mxu0 %v6434
        %7586 = vmatprep.subr.bf16.mxu0 %v6443
        %7587 = vmatpush1.bf16.msra.mxu0 %v6442
        %7588 = vmatprep.subr.bf16.mxu0 %v6451
        %7589 = vmatpush1.bf16.msra.mxu0 %v6450
        %7590 = vmatprep.subr.bf16.mxu0 %v6459
        %7591 = vmatpush1.bf16.msra.mxu0 %v6458
        %7592 = vmatprep.subr.bf16.mxu0 %v6467
        %7593 = vmatpush1.bf16.msra.mxu0 %v6466
        %7594 = vmatprep.subr.bf16.mxu0 %v6475
        %7595 = vmatpush1.bf16.msra.mxu0 %v6474
        %7596 = vmatprep.subr.bf16.mxu0 %v6483
        %7597 = vmatpush1.bf16.msra.mxu0 %v6482
        %7598 = vmatprep.subr.bf16.mxu0 %v6491
        %7599 = vmatpush1.bf16.msra.mxu0 %v6490
        %7600 = vmatprep.subr.bf16.mxu0 %v6499
        %7601 = vmatpush1.bf16.msra.mxu0 %v6498
        %7602 = vmatprep.subr.bf16.mxu0 %v6507
        %7603 = vmatpush1.bf16.msra.mxu0 %v6506
        %7604 = vmatprep.subr.bf16.mxu0 %v6515
        %7605 = vmatpush1.bf16.msra.mxu0 %v6514
        %7606 = vmatprep.subr.bf16.mxu0 %v6523
        %7607 = vmatpush1.bf16.msra.mxu0 %v6522
        %7608 = vmatprep.mubr.bf16.mxu0 %v4049
        %7609 = vmatmul.mubr.bf16.gmra.mrb[0].mxu0 %v4048
        %v7610 = vpop.f32.mrb[0].mxu0
        %v7611 = vadd.f32 %v7570, %v7610
        %v7612 = vpop.f32.mrb[0].mxu0
        %v7613 = vadd.f32 %v7572, %v7612
        %v7614 = vpop.f32.mrb[0].mxu0
        %v7615 = vpop.f32.mrb[0].mxu0
        %7616 = vdwg.mxu0
        %7617 = vmatprep.subr.bf16.mxu0 %v6531
        %7618 = vmatpush1.bf16.msra.mxu0 %v6530
        %7619 = vmatprep.subr.bf16.mxu0 %v6539
        %7620 = vmatpush1.bf16.msra.mxu0 %v6538
        %7621 = vmatprep.subr.bf16.mxu0 %v6547
        %7622 = vmatpush1.bf16.msra.mxu0 %v6546
        %7623 = vmatprep.subr.bf16.mxu0 %v6555
        %7624 = vmatpush1.bf16.msra.mxu0 %v6554
        %7625 = vmatprep.subr.bf16.mxu0 %v6563
        %7626 = vmatpush1.bf16.msra.mxu0 %v6562
        %7627 = vmatprep.subr.bf16.mxu0 %v6571
        %7628 = vmatpush1.bf16.msra.mxu0 %v6570
        %7629 = vmatprep.subr.bf16.mxu0 %v6579
        %7630 = vmatpush1.bf16.msra.mxu0 %v6578
        %7631 = vmatprep.subr.bf16.mxu0 %v6587
        %7632 = vmatpush1.bf16.msra.mxu0 %v6586
        %7633 = vmatprep.subr.bf16.mxu0 %v6595
        %7634 = vmatpush1.bf16.msra.mxu0 %v6594
        %7635 = vmatprep.subr.bf16.mxu0 %v6603
        %7636 = vmatpush1.bf16.msra.mxu0 %v6602
        %7637 = vmatprep.subr.bf16.mxu0 %v6611
        %7638 = vmatpush1.bf16.msra.mxu0 %v6610
        %7639 = vmatprep.subr.bf16.mxu0 %v6619
        %7640 = vmatpush1.bf16.msra.mxu0 %v6618
        %7641 = vmatprep.subr.bf16.mxu0 %v6627
        %7642 = vmatpush1.bf16.msra.mxu0 %v6626
        %7643 = vmatprep.subr.bf16.mxu0 %v6635
        %7644 = vmatpush1.bf16.msra.mxu0 %v6634
        %7645 = vmatprep.subr.bf16.mxu0 %v6643
        %7646 = vmatpush1.bf16.msra.mxu0 %v6642
        %7647 = vmatprep.subr.bf16.mxu0 %v6651
        %7648 = vmatpush1.bf16.msra.mxu0 %v6650
        %7649 = vmatprep.mubr.bf16.mxu0 %v4051
        %7650 = vmatmul.mubr.bf16.gmra.mrb[0].mxu0 %v4050
        %v7651 = vpop.f32.mrb[0].mxu0
        %v7652 = vadd.f32 %v7611, %v7651
        %v7653 = vpop.f32.mrb[0].mxu0
        %v7654 = vadd.f32 %v7613, %v7653
        %v7655 = vpop.f32.mrb[0].mxu0
        %v7656 = vpop.f32.mrb[0].mxu0
        %7657 = vdwg.mxu0
        %7658 = vmatprep.subr.bf16.mxu0 %v6149
        %7659 = vmatpush1.bf16.msra.mxu0 %v6148
        %7660 = vmatprep.subr.bf16.mxu0 %v6157
        %7661 = vmatpush1.bf16.msra.mxu0 %v6156
        %7662 = vmatprep.subr.bf16.mxu0 %v6165
        %7663 = vmatpush1.bf16.msra.mxu0 %v6164
        %7664 = vmatprep.subr.bf16.mxu0 %v6173
        %7665 = vmatpush1.bf16.msra.mxu0 %v6172
        %7666 = vmatprep.subr.bf16.mxu0 %v6181
        %7667 = vmatpush1.bf16.msra.mxu0 %v6180
        %7668 = vmatprep.subr.bf16.mxu0 %v6189
        %7669 = vmatpush1.bf16.msra.mxu0 %v6188
        %7670 = vmatprep.subr.bf16.mxu0 %v6197
        %7671 = vmatpush1.bf16.msra.mxu0 %v6196
        %7672 = vmatprep.subr.bf16.mxu0 %v6205
        %7673 = vmatpush1.bf16.msra.mxu0 %v6204
        %7674 = vmatprep.subr.bf16.mxu0 %v6213
        %7675 = vmatpush1.bf16.msra.mxu0 %v6212
        %7676 = vmatprep.subr.bf16.mxu0 %v6221
        %7677 = vmatpush1.bf16.msra.mxu0 %v6220
        %7678 = vmatprep.subr.bf16.mxu0 %v6229
        %7679 = vmatpush1.bf16.msra.mxu0 %v6228
        %7680 = vmatprep.subr.bf16.mxu0 %v6237
        %7681 = vmatpush1.bf16.msra.mxu0 %v6236
        %7682 = vmatprep.subr.bf16.mxu0 %v6245
        %7683 = vmatpush1.bf16.msra.mxu0 %v6244
        %7684 = vmatprep.subr.bf16.mxu0 %v6253
        %7685 = vmatpush1.bf16.msra.mxu0 %v6252
        %7686 = vmatprep.subr.bf16.mxu0 %v6261
        %7687 = vmatpush1.bf16.msra.mxu0 %v6260
        %7688 = vmatprep.subr.bf16.mxu0 %v6269
        %7689 = vmatpush1.bf16.msra.mxu0 %v6268
        %7690 = vmatprep.mubr.bf16.mxu0 %v4045
        %7691 = vmatmul.mubr.bf16.gmra.mrb[0].mxu0 %v4044
        %v7692 = vpop.f32.mrb[0].mxu0
        %v7693 = vadd.f32 %v4593, %v7692
        %v7694 = vpop.f32.mrb[0].mxu0
        %v7695 = vadd.f32 %v4597, %v7694
        %v7696 = vpop.f32.mrb[0].mxu0
        %v7697 = vpop.f32.mrb[0].mxu0
        %7698 = vdwg.mxu0
        %7699 = vmatprep.subr.bf16.mxu0 %v6277
        %7700 = vmatpush1.bf16.msra.mxu0 %v6276
        %7701 = vmatprep.subr.bf16.mxu0 %v6285
        %7702 = vmatpush1.bf16.msra.mxu0 %v6284
        %7703 = vmatprep.subr.bf16.mxu0 %v6293
        %7704 = vmatpush1.bf16.msra.mxu0 %v6292
        %7705 = vmatprep.subr.bf16.mxu0 %v6301
        %7706 = vmatpush1.bf16.msra.mxu0 %v6300
        %7707 = vmatprep.subr.bf16.mxu0 %v6309
        %7708 = vmatpush1.bf16.msra.mxu0 %v6308
        %7709 = vmatprep.subr.bf16.mxu0 %v6317
        %7710 = vmatpush1.bf16.msra.mxu0 %v6316
        %7711 = vmatprep.subr.bf16.mxu0 %v6325
        %7712 = vmatpush1.bf16.msra.mxu0 %v6324
        %7713 = vmatprep.subr.bf16.mxu0 %v6333
        %7714 = vmatpush1.bf16.msra.mxu0 %v6332
        %7715 = vmatprep.subr.bf16.mxu0 %v6341
        %7716 = vmatpush1.bf16.msra.mxu0 %v6340
        %7717 = vmatprep.subr.bf16.mxu0 %v6349
        %7718 = vmatpush1.bf16.msra.mxu0 %v6348
        %7719 = vmatprep.subr.bf16.mxu0 %v6357
        %7720 = vmatpush1.bf16.msra.mxu0 %v6356
        %7721 = vmatprep.subr.bf16.mxu0 %v6365
        %7722 = vmatpush1.bf16.msra.mxu0 %v6364
        %7723 = vmatprep.subr.bf16.mxu0 %v6373
        %7724 = vmatpush1.bf16.msra.mxu0 %v6372
        %7725 = vmatprep.subr.bf16.mxu0 %v6381
        %7726 = vmatpush1.bf16.msra.mxu0 %v6380
        %7727 = vmatprep.subr.bf16.mxu0 %v6389
        %7728 = vmatpush1.bf16.msra.mxu0 %v6388
        %7729 = vmatprep.subr.bf16.mxu0 %v6397
        %7730 = vmatpush1.bf16.msra.mxu0 %v6396
        %7731 = vmatprep.mubr.bf16.mxu0 %v4047
        %7732 = vmatmul.mubr.bf16.gmra.mrb[0].mxu0 %v4046
        %v7733 = vpop.f32.mrb[0].mxu0
        %v7734 = vadd.f32 %v7693, %v7733
        %v7735 = vpop.f32.mrb[0].mxu0
        %v7736 = vadd.f32 %v7695, %v7735
        %v7737 = vpop.f32.mrb[0].mxu0
        %v7738 = vpop.f32.mrb[0].mxu0
        %7739 = vdwg.mxu0
        %7740 = vmatprep.subr.bf16.mxu0 %v6405
        %7741 = vmatpush1.bf16.msra.mxu0 %v6404
        %7742 = vmatprep.subr.bf16.mxu0 %v6413
        %7743 = vmatpush1.bf16.msra.mxu0 %v6412
        %7744 = vmatprep.subr.bf16.mxu0 %v6421
        %7745 = vmatpush1.bf16.msra.mxu0 %v6420
        %7746 = vmatprep.subr.bf16.mxu0 %v6429
        %7747 = vmatpush1.bf16.msra.mxu0 %v6428
        %7748 = vmatprep.subr.bf16.mxu0 %v6437
        %7749 = vmatpush1.bf16.msra.mxu0 %v6436
        %7750 = vmatprep.subr.bf16.mxu0 %v6445
        %7751 = vmatpush1.bf16.msra.mxu0 %v6444
        %7752 = vmatprep.subr.bf16.mxu0 %v6453
        %7753 = vmatpush1.bf16.msra.mxu0 %v6452
        %7754 = vmatprep.subr.bf16.mxu0 %v6461
        %7755 = vmatpush1.bf16.msra.mxu0 %v6460
        %7756 = vmatprep.subr.bf16.mxu0 %v6469
        %7757 = vmatpush1.bf16.msra.mxu0 %v6468
        %7758 = vmatprep.subr.bf16.mxu0 %v6477
        %7759 = vmatpush1.bf16.msra.mxu0 %v6476
        %7760 = vmatprep.subr.bf16.mxu0 %v6485
        %7761 = vmatpush1.bf16.msra.mxu0 %v6484
        %7762 = vmatprep.subr.bf16.mxu0 %v6493
        %7763 = vmatpush1.bf16.msra.mxu0 %v6492
        %7764 = vmatprep.subr.bf16.mxu0 %v6501
        %7765 = vmatpush1.bf16.msra.mxu0 %v6500
        %7766 = vmatprep.subr.bf16.mxu0 %v6509
        %7767 = vmatpush1.bf16.msra.mxu0 %v6508
        %7768 = vmatprep.subr.bf16.mxu0 %v6517
        %7769 = vmatpush1.bf16.msra.mxu0 %v6516
        %7770 = vmatprep.subr.bf16.mxu0 %v6525
        %7771 = vmatpush1.bf16.msra.mxu0 %v6524
        %7772 = vmatprep.mubr.bf16.mxu0 %v4049
        %7773 = vmatmul.mubr.bf16.gmra.mrb[0].mxu0 %v4048
        %v7774 = vpop.f32.mrb[0].mxu0
        %v7775 = vadd.f32 %v7734, %v7774
        %v7776 = vpop.f32.mrb[0].mxu0
        %v7777 = vadd.f32 %v7736, %v7776
        %v7778 = vpop.f32.mrb[0].mxu0
        %v7779 = vpop.f32.mrb[0].mxu0
        %7780 = vdwg.mxu0
        %7781 = vmatprep.subr.bf16.mxu0 %v6533
        %7782 = vmatpush1.bf16.msra.mxu0 %v6532
        %7783 = vmatprep.subr.bf16.mxu0 %v6541
        %7784 = vmatpush1.bf16.msra.mxu0 %v6540
        %7785 = vmatprep.subr.bf16.mxu0 %v6549
        %7786 = vmatpush1.bf16.msra.mxu0 %v6548
        %7787 = vmatprep.subr.bf16.mxu0 %v6557
        %7788 = vmatpush1.bf16.msra.mxu0 %v6556
        %7789 = vmatprep.subr.bf16.mxu0 %v6565
        %7790 = vmatpush1.bf16.msra.mxu0 %v6564
        %7791 = vmatprep.subr.bf16.mxu0 %v6573
        %7792 = vmatpush1.bf16.msra.mxu0 %v6572
        %7793 = vmatprep.subr.bf16.mxu0 %v6581
        %7794 = vmatpush1.bf16.msra.mxu0 %v6580
        %7795 = vmatprep.subr.bf16.mxu0 %v6589
        %7796 = vmatpush1.bf16.msra.mxu0 %v6588
        %7797 = vmatprep.subr.bf16.mxu0 %v6597
        %7798 = vmatpush1.bf16.msra.mxu0 %v6596
        %7799 = vmatprep.subr.bf16.mxu0 %v6605
        %7800 = vmatpush1.bf16.msra.mxu0 %v6604
        %7801 = vmatprep.subr.bf16.mxu0 %v6613
        %7802 = vmatpush1.bf16.msra.mxu0 %v6612
        %7803 = vmatprep.subr.bf16.mxu0 %v6621
        %7804 = vmatpush1.bf16.msra.mxu0 %v6620
        %7805 = vmatprep.subr.bf16.mxu0 %v6629
        %7806 = vmatpush1.bf16.msra.mxu0 %v6628
        %7807 = vmatprep.subr.bf16.mxu0 %v6637
        %7808 = vmatpush1.bf16.msra.mxu0 %v6636
        %7809 = vmatprep.subr.bf16.mxu0 %v6645
        %7810 = vmatpush1.bf16.msra.mxu0 %v6644
        %7811 = vmatprep.subr.bf16.mxu0 %v6653
        %7812 = vmatpush1.bf16.msra.mxu0 %v6652
        %7813 = vmatprep.mubr.bf16.mxu0 %v4051
        %7814 = vmatmul.mubr.bf16.gmra.mrb[0].mxu0 %v4050
        %v7815 = vpop.f32.mrb[0].mxu0
        %v7816 = vadd.f32 %v7775, %v7815
        %v7817 = vpop.f32.mrb[0].mxu0
        %v7818 = vadd.f32 %v7777, %v7817
        %v7819 = vpop.f32.mrb[0].mxu0
        %v7820 = vpop.f32.mrb[0].mxu0
        %7821 = vdwg.mxu0
        %v7822 = vtanh.pop %v7324
        %v7823 = vtanh.pop %v7326
        %v7824 = vtanh.pop %v7488
        %v7825 = vtanh.pop %v7490
        %v7826 = vtanh.pop %v7652
        %v7827 = vtanh.pop %v7654
        %v7828 = vtanh.pop %v7816
        %v7829 = vtanh.pop %v7818
        %7830 = vst [vmem:[%s852] sm:$0xff] %v7822
        %7831 = vst [vmem:[%s852 + $0x8] sm:$0xff] %v7823
        %7832 = vst [vmem:[%s852 + $0x10] sm:$0xff] %v7824
        %7833 = vst [vmem:[%s852 + $0x18] sm:$0xff] %v7825
        %7834 = vst [vmem:[%s852 + $0x20] sm:$0xff] %v7826
        %7835 = vst [vmem:[%s852 + $0x28] sm:$0xff] %v7827
        %7836 = vst [vmem:[%s852 + $0x30] sm:$0xff] %v7828
        %7837 = vst [vmem:[%s852 + $0x38] sm:$0xff] %v7829
        %s7838 = sand.u32 %s457, 1
        %s7839 = scalar_lea.sflag [#allocation4], %s7838
        %s7840 = sand.u32 %s457, 1
        %s7841 = smul.addr %s7840, 64
        %s7842 = scalar_lea.vmem [#allocation32], %s7841
        // Predicated region
        $region173: #{tpu_custom_call.1} parent=95 // pred_check
          %p7843 = pneg %p467
        $region174: #{tpu_custom_call.1} parent=95 // pred_check_branch
          %7845 = sbr.rel (%p7843) target = $region176
        $region175: #{tpu_custom_call.1} parent=95 // pred_region
          %s7847 = ssub.s32 1024, 1024
          %7848 = vsyncadd %s7839, %s7847
          %s7849 = smul.addr %s45, 8
          %s7850 = smul.addr %s7849, 128
          %s7851 = scalar_lea.hbm %s19, %s7850
          %s7853 = sshll.u32 %s7842, 4
          %s7854 = int_to_ptr.vmem [resolvable:$true] %s7853
          %7856 = dma.vmem_to_hbm [thread:$0]  %s7854, 1024, %s7851, %s7839
        $region176: #{tpu_custom_call.1} parent=95 // pred_fallthru
          _
      $region96: #{tpu_custom_call.1} parent=5 // pred_fallthru
        _
      %p7857 = scmp.le.s32.totalorder 2, %s40
      // Predicated region
      $region177: #{tpu_custom_call.1} parent=5 // pred_check
        %p7858 = pneg %p7857
      $region178: #{tpu_custom_call.1} parent=5 // pred_check_branch
        %7860 = sbr.rel (%p7858) target = $region180
      $region179: #{tpu_custom_call.1} parent=5 // pred_region
        %s7861 = ssub.s32 %s40, 2
        // Predicated region
        $region181: #{tpu_custom_call.1} parent=179 // pred_check
          %p7862 = pneg %p473
        $region182: #{tpu_custom_call.1} parent=179 // pred_check_branch
          %7864 = sbr.rel (%p7862) target = $region184
        $region183: #{tpu_custom_call.1} parent=179 // pred_region
          %s7865 = sand.u32 %s458, 1
          %s7866 = scalar_lea.sflag [#allocation4], %s7865
          %s7867 = sand.u32 %s458, 1
          %s7868 = smul.addr %s7867, 64
          %s7869 = scalar_lea.vmem [#allocation32], %s7868
          %7870 = dma.done %s7866, 1024
        $region184: #{tpu_custom_call.1} parent=179 // pred_fallthru
          _
      $region180: #{tpu_custom_call.1} parent=5 // pred_fallthru
        _
    $region6: #{tpu_custom_call.1} parent=1 // loop_footer
      %s44 = sadd.s32 1, %s40
    $region7: #{tpu_custom_call.1} parent=1 // loop_footer_branch
      %39 = sbr.rel target = $region3
    $region8: #{tpu_custom_call.1} parent=1 // loop_exit
      _
    %7871 = vsyncpa [#allocation3], 1
    %s7872 = scalar_lea.sflag [#allocation3], 1
    %7873 = vsyncpa %s7872, 1
    %7874 = vsyncpa [#allocation6], 1
    %7875 = vsyncpa [#allocation9], 1
    %7876 = vsyncpa [#allocation12], 1
    %7877 = vsyncpa [#allocation15], 1
    %7878 = vsyncpa [#allocation18], 1
    %7879 = vsyncpa [#allocation21], 1
    %7880 = vsyncpa [#allocation24], 1
    %7881 = vsyncpa [#allocation27], 1
    %7882 = vsyncpa [#allocation30], 1
    %7883 = vsyncpa [#allocation4], 1
    %s7884 = scalar_lea.sflag [#allocation4], 1
    %7885 = vsyncpa %s7884, 1

</llo_original>
